<compile_context>
chip_gen: v7x
topology: tpu7x:2x2x1
jax: 0.10.0
libtpu: 0.0.40
codegen_flags: <defaults>
</compile_context>

<pallas_src>
import math
import functools

import jax
import jax.numpy as jnp
from jax.experimental import pallas as pl
from jax.experimental.pallas import tpu as pltpu


CFG = dict(
    batch_size=2,
    in_channels=3,
    enc_c1=16,
    enc_c2=32,
    fpn_dim=32,
    num_query=8,
    num_y_steps=8,
    num_category=4,
)
HEAD_OUT_DIM = 128   # lane-dense fused cls+reg output width


# -----------------------------------------------------------------------------
# Conv kernel: in-kernel kh*kw tap accumulation (no im2col in HBM)
# -----------------------------------------------------------------------------
def _conv2d_kernel(x_ref, w_ref, b_ref, o_ref, *, kh, kw, relu, row_band):
    """x_ref: (1, Hp, Wp, Cin) padded input; o_ref: (1, Ho*Wo, Cout), stride 1."""
    Hp, Wp, Cin = x_ref.shape[1], x_ref.shape[2], x_ref.shape[3]
    Cout = o_ref.shape[2]
    Ho = Hp - kh + 1
    Wo = Wp - kw + 1
    bias = b_ref[...]                                            # (1, Cout) f32
    for r0 in range(0, Ho, row_band):                            # static unroll
        rb = min(row_band, Ho - r0)
        acc = jnp.zeros((rb * Wo, Cout), jnp.float32)
        for i in range(kh):
            for j in range(kw):
                patch = x_ref[0, r0 + i:r0 + i + rb, j:j + Wo, :]  # (rb,Wo,Cin)
                patch = patch.reshape(rb * Wo, Cin).astype(jnp.bfloat16)
                acc = acc + jnp.dot(patch, w_ref[i * kw + j],
                                    preferred_element_type=jnp.float32)
        acc = acc + bias
        if relu:
            acc = jnp.maximum(acc, 0.0)
        o_ref[0, r0 * Wo:(r0 + rb) * Wo, :] = acc.astype(o_ref.dtype)


def conv2d(x, w, b, *, kh, kw, stride, padding, relu):
    """x: (B,H,W,Cin) NHWC f32; w: (kh*kw,Cin,Cout) bf16; b: (1,Cout) f32."""
    B, H, W, Cin = x.shape
    Cout = w.shape[-1]
    xp = jnp.pad(x, ((0, 0), (padding, padding), (padding, padding), (0, 0)))
    Hp, Wp = H + 2 * padding, W + 2 * padding
    Ho_full = Hp - kh + 1
    Wo_full = Wp - kw + 1
    assert Wo_full % 8 == 0, "row-flatten reshape needs Wo multiple of 8"
    out = pl.pallas_call(
        functools.partial(_conv2d_kernel, kh=kh, kw=kw, relu=relu, row_band=8),
        out_shape=jax.ShapeDtypeStruct((B, Ho_full * Wo_full, Cout), jnp.float32),
        grid=(B,),
        in_specs=[
            pl.BlockSpec((1, Hp, Wp, Cin), lambda bi: (bi, 0, 0, 0)),
            pl.BlockSpec((kh * kw, Cin, Cout), lambda bi: (0, 0, 0)),
            pl.BlockSpec((1, Cout), lambda bi: (0, 0)),
        ],
        out_specs=pl.BlockSpec((1, Ho_full * Wo_full, Cout),
                               lambda bi: (bi, 0, 0)),
        compiler_params=pltpu.CompilerParams(
            dimension_semantics=("parallel",)),
    )(xp, w, b)
    out = out.reshape(B, Ho_full, Wo_full, Cout)
    if stride > 1:
        # TODO(synk): stride applied by a post-slice of the stride-1 result
        # (identical values); avoids in-kernel strided sublane loads. Extra MXU
        # work is negligible at these sizes.
        out = out[:, ::stride, ::stride, :]
    return out


# -----------------------------------------------------------------------------
# Coarse neck kernel: (lat2 1x1 conv) then (ms2one lower-half 1x1 conv), fused.
# The 2x nearest upsample commutes with the 1x1 convs, so it is applied outside
# on the (B, H2*W2, D) result (tiny) instead of on the full-res concat tensor.
# -----------------------------------------------------------------------------
def _coarse_neck_kernel(f2_ref, wl_ref, bl_ref, wm_ref, o_ref):
    x = f2_ref[0].astype(jnp.bfloat16)                              # (S2, C2)
    n2 = jnp.dot(x, wl_ref[...],
                 preferred_element_type=jnp.float32) + bl_ref[...]  # (S2, D)
    c2 = jnp.dot(n2.astype(jnp.bfloat16), wm_ref[...],
                 preferred_element_type=jnp.float32)                # (S2, D)
    o_ref[0] = c2.astype(o_ref.dtype)


def coarse_neck(f2_flat, w_lat, b_lat, w_ms_lo):
    B, S2, C2 = f2_flat.shape
    D = w_lat.shape[1]
    return pl.pallas_call(
        _coarse_neck_kernel,
        out_shape=jax.ShapeDtypeStruct((B, S2, D), jnp.float32),
        grid=(B,),
        in_specs=[
            pl.BlockSpec((1, S2, C2), lambda b: (b, 0, 0)),
            pl.BlockSpec((C2, D), lambda b: (0, 0)),
            pl.BlockSpec((1, D), lambda b: (0, 0)),
            pl.BlockSpec((D, D), lambda b: (0, 0)),
        ],
        out_specs=pl.BlockSpec((1, S2, D), lambda b: (b, 0, 0)),
        compiler_params=pltpu.CompilerParams(
            dimension_semantics=("parallel",)),
    )(f2_flat, w_lat, b_lat, w_ms_lo)


# -----------------------------------------------------------------------------
# Fused decoder-head kernel (one grid step per batch element)
# -----------------------------------------------------------------------------
def _head_kernel(f1_ref, c2_ref, pos_ref, qe_ref, qp_ref,
                 wlat1_ref, blat1_ref, wmhi_ref, bm_ref,
                 win_ref, bin_ref,
                 wq_ref, bq_ref, wk_ref, bk_ref, wv_ref, bv_ref,
                 wo_ref, bo_ref,
                 g1_ref, be1_ref, w1_ref, b1_ref, w2_ref, b2_ref,
                 g2_ref, be2_ref, wh_ref, bh_ref,
                 o_ref, *, scale, eps):
    # ---- neck fine path + ms2one merge (ReLU) + input_proj + pos ----
    f1 = f1_ref[0].astype(jnp.bfloat16)                             # (S, C1)
    n1 = jnp.dot(f1, wlat1_ref[...],
                 preferred_element_type=jnp.float32) + blat1_ref[...]
    merged = (jnp.dot(n1.astype(jnp.bfloat16), wmhi_ref[...],
                      preferred_element_type=jnp.float32)
              + c2_ref[0] + bm_ref[...])
    merged = jnp.maximum(merged, 0.0)                               # ms2one ReLU
    memory = (jnp.dot(merged.astype(jnp.bfloat16), win_ref[...],
                      preferred_element_type=jnp.float32)
              + bin_ref[...] + pos_ref[...])                        # (S, D)

    # ---- single-head cross attention (queries over BEV memory) ----
    q_in = qe_ref[...] + qp_ref[...]                                # (Nq, D)
    q = jnp.dot(q_in.astype(jnp.bfloat16), wq_ref[...],
                preferred_element_type=jnp.float32) + bq_ref[...]
    mem_b = memory.astype(jnp.bfloat16)
    k = jnp.dot(mem_b, wk_ref[...],
                preferred_element_type=jnp.float32) + bk_ref[...]
    v = jnp.dot(mem_b, wv_ref[...],
                preferred_element_type=jnp.float32) + bv_ref[...]

    # scores without explicit transpose: contract on D
    s = jax.lax.dot_general(q.astype(jnp.bfloat16), k.astype(jnp.bfloat16),
                            dimension_numbers=(((1,), (1,)), ((), ())),
                            preferred_element_type=jnp.float32) * scale
    m = jnp.max(s, axis=-1, keepdims=True)
    p = jnp.exp(s - m)
    l = jnp.sum(p, axis=-1, keepdims=True)
    p = p * pl.reciprocal(l, approx=True)                           # EUP slot
    o = jnp.dot(p.astype(jnp.bfloat16), v.astype(jnp.bfloat16),
                preferred_element_type=jnp.float32)                 # (Nq, D)
    attn = jnp.dot(o.astype(jnp.bfloat16), wo_ref[...],
                   preferred_element_type=jnp.float32) + bo_ref[...]

    # ---- residual + LN1 + FFN + LN2 (f32 element-wise math) ----
    h = qe_ref[...] + attn
    mu = jnp.mean(h, axis=-1, keepdims=True)
    var = jnp.mean(jnp.square(h - mu), axis=-1, keepdims=True)
    h = (h - mu) * jax.lax.rsqrt(var + eps) * g1_ref[...] + be1_ref[...]

    ffn = jnp.dot(h.astype(jnp.bfloat16), w1_ref[...],
                  preferred_element_type=jnp.float32) + b1_ref[...]
    ffn = jnp.maximum(ffn, 0.0)
    ffn = jnp.dot(ffn.astype(jnp.bfloat16), w2_ref[...],
                  preferred_element_type=jnp.float32) + b2_ref[...]
    h = h + ffn
    mu = jnp.mean(h, axis=-1, keepdims=True)
    var = jnp.mean(jnp.square(h - mu), axis=-1, keepdims=True)
    h = (h - mu) * jax.lax.rsqrt(var + eps) * g2_ref[...] + be2_ref[...]

    # ---- fused cls+reg heads, lane-dense (Nq, 128) output ----
    out = jnp.dot(h.astype(jnp.bfloat16), wh_ref[...],
                  preferred_element_type=jnp.float32) + bh_ref[...]
    o_ref[0] = out.astype(o_ref.dtype)


def head_forward(params, cfg, f1_flat, c2_up, pos):
    B, S, C1 = f1_flat.shape
    D = cfg["fpn_dim"]
    Nq = cfg["num_query"]
    scale = 1.0 / math.sqrt(D)

    operands = [
        f1_flat, c2_up, pos,
        params["query_embed"], params["query_pos"],
        params["neck_lat1"][0], params["neck_lat1"][1],
        params["ms2one_hi"], params["ms2one_b"],
        params["input_proj"][0], params["input_proj"][1],
        params["q_proj"][0], params["q_proj"][1],
        params["k_proj"][0], params["k_proj"][1],
        params["v_proj"][0], params["v_proj"][1],
        params["out_proj"][0], params["out_proj"][1],
        params["ln1"][0], params["ln1"][1],
        params["ffn1"][0], params["ffn1"][1],
        params["ffn2"][0], params["ffn2"][1],
        params["ln2"][0], params["ln2"][1],
        params["heads_w"], params["heads_b"],
    ]
    in_specs = [
        pl.BlockSpec((1, S, C1), lambda b: (b, 0, 0)),
        pl.BlockSpec((1, S, D), lambda b: (b, 0, 0)),
        pl.BlockSpec((S, D), lambda b: (0, 0)),
    ] + [pl.BlockSpec(op.shape, lambda b: (0, 0)) for op in operands[3:]]

    return pl.pallas_call(
        functools.partial(_head_kernel, scale=scale, eps=1e-5),
        out_shape=jax.ShapeDtypeStruct((B, Nq, HEAD_OUT_DIM), jnp.float32),
        grid=(B,),
        in_specs=in_specs,
        out_specs=pl.BlockSpec((1, Nq, HEAD_OUT_DIM), lambda b: (b, 0, 0)),
        compiler_params=pltpu.CompilerParams(
            dimension_semantics=("parallel",)),
    )(*operands)


# -----------------------------------------------------------------------------
# Positional encoding (SinePositionalEncoding, normalize=True) — glue math
# -----------------------------------------------------------------------------
def sine_positional_encoding(H, W, num_feats, temperature=10000.0):
    eps = 1e-6
    y = jnp.cumsum(jnp.ones((H, W), jnp.float32), axis=0)
    x = jnp.cumsum(jnp.ones((H, W), jnp.float32), axis=1)
    y = y / (y[-1:, :] + eps) * 2.0 * math.pi
    x = x / (x[:, -1:] + eps) * 2.0 * math.pi
    dim_t = temperature ** (2.0 * (jnp.arange(num_feats) // 2) / num_feats)
    pos_x = x[..., None] / dim_t
    pos_y = y[..., None] / dim_t
    pos_x = jnp.stack(
        [jnp.sin(pos_x[..., 0::2]), jnp.cos(pos_x[..., 1::2])], axis=-1
    ).reshape(H, W, num_feats)
    pos_y = jnp.stack(
        [jnp.sin(pos_y[..., 0::2]), jnp.cos(pos_y[..., 1::2])], axis=-1
    ).reshape(H, W, num_feats)
    return jnp.concatenate([pos_y, pos_x], axis=-1)   # (H, W, 2*num_feats)


# -----------------------------------------------------------------------------
# Parameter init (deterministic, synthetic weights; bf16 matmul weights)
# -----------------------------------------------------------------------------
def init_params(key, cfg):
    keys = iter(jax.random.split(key, 64))

    def wmat(kin, kout, scale=0.05):
        w = jax.random.normal(next(keys), (kin, kout), jnp.float32) * scale
        return w.astype(jnp.bfloat16)

    def conv_w(kh, kw, cin, cout, scale=0.05):
        w = jax.random.normal(next(keys), (kh * kw, cin, cout), jnp.float32)
        return (w * scale).astype(jnp.bfloat16)

    def bias(n):
        return jnp.zeros((1, n), jnp.float32)

    d = cfg["fpn_dim"]
    c1, c2 = cfg["enc_c1"], cfg["enc_c2"]
    p = {}
    # encoder (tiny backbone)
    p["enc_conv1"] = (conv_w(3, 3, cfg["in_channels"], c1), bias(c1))
    p["enc_conv2"] = (conv_w(3, 3, c1, c1), bias(c1))
    p["enc_conv3"] = (conv_w(3, 3, c1, c2), bias(c2))
    # neck (FPN laterals, 1x1)
    p["neck_lat1"] = (wmat(c1, d), bias(d))
    p["neck_lat2"] = (wmat(c2, d), bias(d))
    # ms2one fuse weight (2d, d): split into the halves applied to n1 / n2_up
    ms_w = jax.random.normal(next(keys), (2 * d, d), jnp.float32) * 0.05
    p["ms2one_hi"] = ms_w[:d].astype(jnp.bfloat16)
    p["ms2one_lo"] = ms_w[d:].astype(jnp.bfloat16)
    p["ms2one_b"] = bias(d)
    # head
    p["input_proj"] = (wmat(d, d), bias(d))
    p["query_embed"] = jax.random.normal(next(keys), (cfg["num_query"], d),
                                         jnp.float32) * 0.05
    p["query_pos"] = jax.random.normal(next(keys), (cfg["num_query"], d),
                                       jnp.float32) * 0.05
    p["q_proj"] = (wmat(d, d), bias(d))
    p["k_proj"] = (wmat(d, d), bias(d))
    p["v_proj"] = (wmat(d, d), bias(d))
    p["out_proj"] = (wmat(d, d), bias(d))
    p["ln1"] = (jnp.ones((1, d), jnp.float32), jnp.zeros((1, d), jnp.float32))
    p["ffn1"] = (wmat(d, 2 * d), bias(2 * d))
    p["ffn2"] = (wmat(2 * d, d), bias(d))
    p["ln2"] = (jnp.ones((1, d), jnp.float32), jnp.zeros((1, d), jnp.float32))
    # cls + reg heads fused into one lane-dense (d, 128) matmul; sliced outside.
    ncat, nreg = cfg["num_category"], 3 * cfg["num_y_steps"]
    assert ncat + nreg <= HEAD_OUT_DIM
    w_cls = jax.random.normal(next(keys), (d, ncat), jnp.float32) * 0.05
    w_reg = jax.random.normal(next(keys), (d, nreg), jnp.float32) * 0.05
    w_heads = jnp.zeros((d, HEAD_OUT_DIM), jnp.float32)
    w_heads = w_heads.at[:, :ncat].set(w_cls)
    w_heads = w_heads.at[:, ncat:ncat + nreg].set(w_reg)
    p["heads_w"] = w_heads.astype(jnp.bfloat16)
    p["heads_b"] = bias(HEAD_OUT_DIM)
    return p


# -----------------------------------------------------------------------------
# LATR forward (mirrors the PyTorch module's forward control-flow)
# -----------------------------------------------------------------------------
def latr_forward(params, image_nchw, _M_inv=None, is_training=True,
                 extra_dict=None):
    if extra_dict is None:
        raise ValueError("extra_dict must be provided in forward pass.")
    extra_dict["image"] = image_nchw

    # ----- encoder -----
    x = jnp.transpose(image_nchw, (0, 2, 3, 1)).astype(jnp.float32)  # -> NHWC
    w, b = params["enc_conv1"]
    f1 = conv2d(x, w, b, kh=3, kw=3, stride=2, padding=1, relu=True)
    w, b = params["enc_conv2"]
    f1 = conv2d(f1, w, b, kh=3, kw=3, stride=1, padding=1, relu=True)
    w, b = params["enc_conv3"]
    f2 = conv2d(f1, w, b, kh=3, kw=3, stride=2, padding=1, relu=True)
    out_featList = [f1, f2]

    # ----- neck coarse path (lat2 + ms2one low-half), fused kernel -----
    B, H2, W2, C2 = f2.shape
    D = params["neck_lat2"][0].shape[1]
    c2 = coarse_neck(f2.reshape(B, H2 * W2, C2),
                     params["neck_lat2"][0], params["neck_lat2"][1],
                     params["ms2one_lo"])
    # 2x nearest upsample of the coarse contribution (tiny D-channel tensor).
    c2 = c2.reshape(B, H2, W2, D)
    c2_up = jnp.repeat(jnp.repeat(c2, 2, axis=1), 2, axis=2)
    B1, H1, W1, _ = out_featList[0].shape
    c2_up = c2_up.reshape(B, H1 * W1, D)

    # ----- required-key validation (same as torch module) -----
    required_keys = ["seg_idx_label", "seg_label", "lidar2img", "pad_shape"]
    missing = [k for k in required_keys if k not in extra_dict]
    if missing:
        raise ValueError(f"Missing keys in extra_dict: {missing}")
    ground_lanes = extra_dict.get("ground_lanes", None) if is_training else None
    ground_lanes_dense = (extra_dict.get("ground_lanes_dense", None)
                          if is_training else None)
    # TODO(synk): ground_lanes / lidar2img are only consumed by the training
    # assignment + reference-point projection inside LATRHead; not modeled here.
    del ground_lanes, ground_lanes_dense

    # ----- fused head kernel (neck fine-merge + input_proj + decoder + heads) -
    pos = sine_positional_encoding(H1, W1, D // 2).reshape(H1 * W1, D)
    f1_flat = out_featList[0].reshape(B, H1 * W1, out_featList[0].shape[-1])
    head_out = head_forward(params, CFG, f1_flat, c2_up, pos)  # (B, Nq, 128)

    ncat = CFG["num_category"]
    nreg = 3 * CFG["num_y_steps"]
    cls_scores = head_out[..., :ncat]
    line_preds = head_out[..., ncat:ncat + nreg]

    return {
        "all_cls_scores": cls_scores[None],   # (num_layers=1, B, Nq, n_cat)
        "all_line_preds": line_preds[None],   # (num_layers=1, B, Nq, 3*y_steps)
    }


# -----------------------------------------------------------------------------
if __name__ == "__main__":
    key = jax.random.PRNGKey(0)
    pkey, ikey = jax.random.split(key)
    params = init_params(pkey, CFG)

    B = CFG["batch_size"]
    image = jax.random.normal(ikey, (B, 3, 32, 32), jnp.float32)  # NCHW input

    extra_dict = {
        "seg_idx_label": jnp.zeros((B, CFG["num_category"], 32, 32), jnp.float32),
        "seg_label": jnp.zeros((B, 1, 32, 32), jnp.float32),
        "lidar2img": jnp.tile(jnp.eye(4, dtype=jnp.float32)[None], (B, 1, 1)),
        "pad_shape": jnp.array([[32, 32]] * B, jnp.int32),
        "ground_lanes": jnp.zeros((B, 4, 3 * CFG["num_y_steps"]), jnp.float32),
    }

    out = latr_forward(params, image, is_training=True, extra_dict=extra_dict)
    jax.block_until_ready(out)

    assert out["all_cls_scores"].shape == (1, B, CFG["num_query"],
                                           CFG["num_category"])
    assert out["all_line_preds"].shape == (1, B, CFG["num_query"],
                                           3 * CFG["num_y_steps"])
    print("KERNEL_OK")
</pallas_src>

<mosaic_0001>
module attributes {stable_mosaic.version = 11 : i64} {
  func.func @_conv2d_kernel(%arg0: i32, %arg1: memref<1x34x34x3xf32, #tpu.memory_space<vmem>>, %arg2: memref<9x3x16xbf16, #tpu.memory_space<vmem>>, %arg3: memref<1x16xf32, #tpu.memory_space<vmem>>, %arg4: memref<1x1024x16xf32, #tpu.memory_space<vmem>>) attributes {dimension_semantics = [#tpu.dimension_semantics<parallel>], iteration_bounds = array<i64: 2>, scalar_prefetch = 0 : i64, scratch_operands = 0 : i64, tpu.core_type = #tpu.core_type<tc>, window_params = [{transform_indices = @transform_0, window_bounds = array<i64: 1, 34, 34, 3>}, {pipeline_mode = #tpu.pipeline_mode<synchronous>, transform_indices = @transform_1, window_bounds = array<i64: 9, 3, 16>}, {pipeline_mode = #tpu.pipeline_mode<synchronous>, transform_indices = @transform_2, window_bounds = array<i64: 1, 16>}, {transform_indices = @transform_3, window_bounds = array<i64: 1, 1024, 16>}]} {
    %c0 = arith.constant 0 : index
    %c0_0 = arith.constant 0 : index
    %0 = vector.load %arg3[%c0, %c0_0] : memref<1x16xf32, #tpu.memory_space<vmem>>, vector<1x16xf32>
    %cst = arith.constant 0.000000e+00 : f32
    %1 = vector.broadcast %cst : f32 to vector<256x16xf32>
    %c0_1 = arith.constant 0 : index
    %c0_2 = arith.constant 0 : index
    %c0_3 = arith.constant 0 : index
    %c0_4 = arith.constant 0 : index
    %2 = vector.load %arg1[%c0_1, %c0_2, %c0_3, %c0_4] : memref<1x34x34x3xf32, #tpu.memory_space<vmem>>, vector<1x8x32x3xf32>
    %3 = vector.shape_cast %2 : vector<1x8x32x3xf32> to vector<8x32x3xf32>
    %4 = vector.shape_cast %3 : vector<8x32x3xf32> to vector<256x3xf32>
    %5 = arith.truncf %4 : vector<256x3xf32> to vector<256x3xbf16>
    %c0_5 = arith.constant 0 : index
    %c0_6 = arith.constant 0 : index
    %c0_7 = arith.constant 0 : index
    %6 = vector.load %arg2[%c0_5, %c0_6, %c0_7] : memref<9x3x16xbf16, #tpu.memory_space<vmem>>, vector<1x3x16xbf16>
    %7 = vector.shape_cast %6 : vector<1x3x16xbf16> to vector<3x16xbf16>
    %cst_8 = arith.constant dense<0.000000e+00> : vector<256x16xf32>
    %8 = tpu.matmul %5, %7, %cst_8 {dimension_numbers = #tpu.dot_dimension_numbers<[1], [0], [0], [1], [0, 0, 1, 1], [], []>} : vector<256x3xbf16>, vector<3x16xbf16>, vector<256x16xf32> -> vector<256x16xf32>
    %9 = arith.addf %1, %8 : vector<256x16xf32>
    %c0_9 = arith.constant 0 : index
    %c0_10 = arith.constant 0 : index
    %c1 = arith.constant 1 : index
    %c0_11 = arith.constant 0 : index
    %10 = vector.load %arg1[%c0_9, %c0_10, %c1, %c0_11] : memref<1x34x34x3xf32, #tpu.memory_space<vmem>>, vector<1x8x32x3xf32>
    %11 = vector.shape_cast %10 : vector<1x8x32x3xf32> to vector<8x32x3xf32>
    %12 = vector.shape_cast %11 : vector<8x32x3xf32> to vector<256x3xf32>
    %13 = arith.truncf %12 : vector<256x3xf32> to vector<256x3xbf16>
    %c1_12 = arith.constant 1 : index
    %c0_13 = arith.constant 0 : index
    %c0_14 = arith.constant 0 : index
    %14 = vector.load %arg2[%c1_12, %c0_13, %c0_14] : memref<9x3x16xbf16, #tpu.memory_space<vmem>>, vector<1x3x16xbf16>
    %15 = vector.shape_cast %14 : vector<1x3x16xbf16> to vector<3x16xbf16>
    %cst_15 = arith.constant dense<0.000000e+00> : vector<256x16xf32>
    %16 = tpu.matmul %13, %15, %cst_15 {dimension_numbers = #tpu.dot_dimension_numbers<[1], [0], [0], [1], [0, 0, 1, 1], [], []>} : vector<256x3xbf16>, vector<3x16xbf16>, vector<256x16xf32> -> vector<256x16xf32>
    %17 = arith.addf %9, %16 : vector<256x16xf32>
    %c0_16 = arith.constant 0 : index
    %c0_17 = arith.constant 0 : index
    %c2 = arith.constant 2 : index
    %c0_18 = arith.constant 0 : index
    %18 = vector.load %arg1[%c0_16, %c0_17, %c2, %c0_18] : memref<1x34x34x3xf32, #tpu.memory_space<vmem>>, vector<1x8x32x3xf32>
    %19 = vector.shape_cast %18 : vector<1x8x32x3xf32> to vector<8x32x3xf32>
    %20 = vector.shape_cast %19 : vector<8x32x3xf32> to vector<256x3xf32>
    %21 = arith.truncf %20 : vector<256x3xf32> to vector<256x3xbf16>
    %c2_19 = arith.constant 2 : index
    %c0_20 = arith.constant 0 : index
    %c0_21 = arith.constant 0 : index
    %22 = vector.load %arg2[%c2_19, %c0_20, %c0_21] : memref<9x3x16xbf16, #tpu.memory_space<vmem>>, vector<1x3x16xbf16>
    %23 = vector.shape_cast %22 : vector<1x3x16xbf16> to vector<3x16xbf16>
    %cst_22 = arith.constant dense<0.000000e+00> : vector<256x16xf32>
    %24 = tpu.matmul %21, %23, %cst_22 {dimension_numbers = #tpu.dot_dimension_numbers<[1], [0], [0], [1], [0, 0, 1, 1], [], []>} : vector<256x3xbf16>, vector<3x16xbf16>, vector<256x16xf32> -> vector<256x16xf32>
    %25 = arith.addf %17, %24 : vector<256x16xf32>
    %c0_23 = arith.constant 0 : index
    %c1_24 = arith.constant 1 : index
    %c0_25 = arith.constant 0 : index
    %c0_26 = arith.constant 0 : index
    %26 = vector.load %arg1[%c0_23, %c1_24, %c0_25, %c0_26] : memref<1x34x34x3xf32, #tpu.memory_space<vmem>>, vector<1x8x32x3xf32>
    %27 = vector.shape_cast %26 : vector<1x8x32x3xf32> to vector<8x32x3xf32>
    %28 = vector.shape_cast %27 : vector<8x32x3xf32> to vector<256x3xf32>
    %29 = arith.truncf %28 : vector<256x3xf32> to vector<256x3xbf16>
    %c3 = arith.constant 3 : index
    %c0_27 = arith.constant 0 : index
    %c0_28 = arith.constant 0 : index
    %30 = vector.load %arg2[%c3, %c0_27, %c0_28] : memref<9x3x16xbf16, #tpu.memory_space<vmem>>, vector<1x3x16xbf16>
    %31 = vector.shape_cast %30 : vector<1x3x16xbf16> to vector<3x16xbf16>
    %cst_29 = arith.constant dense<0.000000e+00> : vector<256x16xf32>
    %32 = tpu.matmul %29, %31, %cst_29 {dimension_numbers = #tpu.dot_dimension_numbers<[1], [0], [0], [1], [0, 0, 1, 1], [], []>} : vector<256x3xbf16>, vector<3x16xbf16>, vector<256x16xf32> -> vector<256x16xf32>
    %33 = arith.addf %25, %32 : vector<256x16xf32>
    %c0_30 = arith.constant 0 : index
    %c1_31 = arith.constant 1 : index
    %c1_32 = arith.constant 1 : index
    %c0_33 = arith.constant 0 : index
    %34 = vector.load %arg1[%c0_30, %c1_31, %c1_32, %c0_33] : memref<1x34x34x3xf32, #tpu.memory_space<vmem>>, vector<1x8x32x3xf32>
    %35 = vector.shape_cast %34 : vector<1x8x32x3xf32> to vector<8x32x3xf32>
    %36 = vector.shape_cast %35 : vector<8x32x3xf32> to vector<256x3xf32>
    %37 = arith.truncf %36 : vector<256x3xf32> to vector<256x3xbf16>
    %c4 = arith.constant 4 : index
    %c0_34 = arith.constant 0 : index
    %c0_35 = arith.constant 0 : index
    %38 = vector.load %arg2[%c4, %c0_34, %c0_35] : memref<9x3x16xbf16, #tpu.memory_space<vmem>>, vector<1x3x16xbf16>
    %39 = vector.shape_cast %38 : vector<1x3x16xbf16> to vector<3x16xbf16>
    %cst_36 = arith.constant dense<0.000000e+00> : vector<256x16xf32>
    %40 = tpu.matmul %37, %39, %cst_36 {dimension_numbers = #tpu.dot_dimension_numbers<[1], [0], [0], [1], [0, 0, 1, 1], [], []>} : vector<256x3xbf16>, vector<3x16xbf16>, vector<256x16xf32> -> vector<256x16xf32>
    %41 = arith.addf %33, %40 : vector<256x16xf32>
    %c0_37 = arith.constant 0 : index
    %c1_38 = arith.constant 1 : index
    %c2_39 = arith.constant 2 : index
    %c0_40 = arith.constant 0 : index
    %42 = vector.load %arg1[%c0_37, %c1_38, %c2_39, %c0_40] : memref<1x34x34x3xf32, #tpu.memory_space<vmem>>, vector<1x8x32x3xf32>
    %43 = vector.shape_cast %42 : vector<1x8x32x3xf32> to vector<8x32x3xf32>
    %44 = vector.shape_cast %43 : vector<8x32x3xf32> to vector<256x3xf32>
    %45 = arith.truncf %44 : vector<256x3xf32> to vector<256x3xbf16>
    %c5 = arith.constant 5 : index
    %c0_41 = arith.constant 0 : index
    %c0_42 = arith.constant 0 : index
    %46 = vector.load %arg2[%c5, %c0_41, %c0_42] : memref<9x3x16xbf16, #tpu.memory_space<vmem>>, vector<1x3x16xbf16>
    %47 = vector.shape_cast %46 : vector<1x3x16xbf16> to vector<3x16xbf16>
    %cst_43 = arith.constant dense<0.000000e+00> : vector<256x16xf32>
    %48 = tpu.matmul %45, %47, %cst_43 {dimension_numbers = #tpu.dot_dimension_numbers<[1], [0], [0], [1], [0, 0, 1, 1], [], []>} : vector<256x3xbf16>, vector<3x16xbf16>, vector<256x16xf32> -> vector<256x16xf32>
    %49 = arith.addf %41, %48 : vector<256x16xf32>
    %c0_44 = arith.constant 0 : index
    %c2_45 = arith.constant 2 : index
    %c0_46 = arith.constant 0 : index
    %c0_47 = arith.constant 0 : index
    %50 = vector.load %arg1[%c0_44, %c2_45, %c0_46, %c0_47] : memref<1x34x34x3xf32, #tpu.memory_space<vmem>>, vector<1x8x32x3xf32>
    %51 = vector.shape_cast %50 : vector<1x8x32x3xf32> to vector<8x32x3xf32>
    %52 = vector.shape_cast %51 : vector<8x32x3xf32> to vector<256x3xf32>
    %53 = arith.truncf %52 : vector<256x3xf32> to vector<256x3xbf16>
    %c6 = arith.constant 6 : index
    %c0_48 = arith.constant 0 : index
    %c0_49 = arith.constant 0 : index
    %54 = vector.load %arg2[%c6, %c0_48, %c0_49] : memref<9x3x16xbf16, #tpu.memory_space<vmem>>, vector<1x3x16xbf16>
    %55 = vector.shape_cast %54 : vector<1x3x16xbf16> to vector<3x16xbf16>
    %cst_50 = arith.constant dense<0.000000e+00> : vector<256x16xf32>
    %56 = tpu.matmul %53, %55, %cst_50 {dimension_numbers = #tpu.dot_dimension_numbers<[1], [0], [0], [1], [0, 0, 1, 1], [], []>} : vector<256x3xbf16>, vector<3x16xbf16>, vector<256x16xf32> -> vector<256x16xf32>
    %57 = arith.addf %49, %56 : vector<256x16xf32>
    %c0_51 = arith.constant 0 : index
    %c2_52 = arith.constant 2 : index
    %c1_53 = arith.constant 1 : index
    %c0_54 = arith.constant 0 : index
    %58 = vector.load %arg1[%c0_51, %c2_52, %c1_53, %c0_54] : memref<1x34x34x3xf32, #tpu.memory_space<vmem>>, vector<1x8x32x3xf32>
    %59 = vector.shape_cast %58 : vector<1x8x32x3xf32> to vector<8x32x3xf32>
    %60 = vector.shape_cast %59 : vector<8x32x3xf32> to vector<256x3xf32>
    %61 = arith.truncf %60 : vector<256x3xf32> to vector<256x3xbf16>
    %c7 = arith.constant 7 : index
    %c0_55 = arith.constant 0 : index
    %c0_56 = arith.constant 0 : index
    %62 = vector.load %arg2[%c7, %c0_55, %c0_56] : memref<9x3x16xbf16, #tpu.memory_space<vmem>>, vector<1x3x16xbf16>
    %63 = vector.shape_cast %62 : vector<1x3x16xbf16> to vector<3x16xbf16>
    %cst_57 = arith.constant dense<0.000000e+00> : vector<256x16xf32>
    %64 = tpu.matmul %61, %63, %cst_57 {dimension_numbers = #tpu.dot_dimension_numbers<[1], [0], [0], [1], [0, 0, 1, 1], [], []>} : vector<256x3xbf16>, vector<3x16xbf16>, vector<256x16xf32> -> vector<256x16xf32>
    %65 = arith.addf %57, %64 : vector<256x16xf32>
    %c0_58 = arith.constant 0 : index
    %c2_59 = arith.constant 2 : index
    %c2_60 = arith.constant 2 : index
    %c0_61 = arith.constant 0 : index
    %66 = vector.load %arg1[%c0_58, %c2_59, %c2_60, %c0_61] : memref<1x34x34x3xf32, #tpu.memory_space<vmem>>, vector<1x8x32x3xf32>
    %67 = vector.shape_cast %66 : vector<1x8x32x3xf32> to vector<8x32x3xf32>
    %68 = vector.shape_cast %67 : vector<8x32x3xf32> to vector<256x3xf32>
    %69 = arith.truncf %68 : vector<256x3xf32> to vector<256x3xbf16>
    %c8 = arith.constant 8 : index
    %c0_62 = arith.constant 0 : index
    %c0_63 = arith.constant 0 : index
    %70 = vector.load %arg2[%c8, %c0_62, %c0_63] : memref<9x3x16xbf16, #tpu.memory_space<vmem>>, vector<1x3x16xbf16>
    %71 = vector.shape_cast %70 : vector<1x3x16xbf16> to vector<3x16xbf16>
    %cst_64 = arith.constant dense<0.000000e+00> : vector<256x16xf32>
    %72 = tpu.matmul %69, %71, %cst_64 {dimension_numbers = #tpu.dot_dimension_numbers<[1], [0], [0], [1], [0, 0, 1, 1], [], []>} : vector<256x3xbf16>, vector<3x16xbf16>, vector<256x16xf32> -> vector<256x16xf32>
    %73 = arith.addf %65, %72 : vector<256x16xf32>
    %74 = vector.broadcast %0 : vector<1x16xf32> to vector<256x16xf32>
    %75 = arith.addf %73, %74 : vector<256x16xf32>
    %cst_65 = arith.constant 0.000000e+00 : f32
    %76 = vector.broadcast %cst_65 : f32 to vector<256x16xf32>
    %77 = arith.maximumf %75, %76 : vector<256x16xf32>
    %c0_66 = arith.constant 0 : index
    %c0_67 = arith.constant 0 : index
    %c0_68 = arith.constant 0 : index
    %78 = vector.load %arg4[%c0_66, %c0_67, %c0_68] : memref<1x1024x16xf32, #tpu.memory_space<vmem>>, vector<1x256x16xf32>
    %79 = vector.shape_cast %78 : vector<1x256x16xf32> to vector<256x16xf32>
    %80 = vector.shape_cast %77 : vector<256x16xf32> to vector<1x256x16xf32>
    tpu.vector_store %arg4[%c0_66, %c0_67, %c0_68], %80 {strides = array<i32>} : memref<1x1024x16xf32, #tpu.memory_space<vmem>>, vector<1x256x16xf32>,
    %cst_69 = arith.constant 0.000000e+00 : f32
    %81 = vector.broadcast %cst_69 : f32 to vector<256x16xf32>
    %c0_70 = arith.constant 0 : index
    %c8_71 = arith.constant 8 : index
    %c0_72 = arith.constant 0 : index
    %c0_73 = arith.constant 0 : index
    %82 = vector.load %arg1[%c0_70, %c8_71, %c0_72, %c0_73] : memref<1x34x34x3xf32, #tpu.memory_space<vmem>>, vector<1x8x32x3xf32>
    %83 = vector.shape_cast %82 : vector<1x8x32x3xf32> to vector<8x32x3xf32>
    %84 = vector.shape_cast %83 : vector<8x32x3xf32> to vector<256x3xf32>
    %85 = arith.truncf %84 : vector<256x3xf32> to vector<256x3xbf16>
    %c0_74 = arith.constant 0 : index
    %c0_75 = arith.constant 0 : index
    %c0_76 = arith.constant 0 : index
    %86 = vector.load %arg2[%c0_74, %c0_75, %c0_76] : memref<9x3x16xbf16, #tpu.memory_space<vmem>>, vector<1x3x16xbf16>
    %87 = vector.shape_cast %86 : vector<1x3x16xbf16> to vector<3x16xbf16>
    %cst_77 = arith.constant dense<0.000000e+00> : vector<256x16xf32>
    %88 = tpu.matmul %85, %87, %cst_77 {dimension_numbers = #tpu.dot_dimension_numbers<[1], [0], [0], [1], [0, 0, 1, 1], [], []>} : vector<256x3xbf16>, vector<3x16xbf16>, vector<256x16xf32> -> vector<256x16xf32>
    %89 = arith.addf %81, %88 : vector<256x16xf32>
    %c0_78 = arith.constant 0 : index
    %c8_79 = arith.constant 8 : index
    %c1_80 = arith.constant 1 : index
    %c0_81 = arith.constant 0 : index
    %90 = vector.load %arg1[%c0_78, %c8_79, %c1_80, %c0_81] : memref<1x34x34x3xf32, #tpu.memory_space<vmem>>, vector<1x8x32x3xf32>
    %91 = vector.shape_cast %90 : vector<1x8x32x3xf32> to vector<8x32x3xf32>
    %92 = vector.shape_cast %91 : vector<8x32x3xf32> to vector<256x3xf32>
    %93 = arith.truncf %92 : vector<256x3xf32> to vector<256x3xbf16>
    %c1_82 = arith.constant 1 : index
    %c0_83 = arith.constant 0 : index
    %c0_84 = arith.constant 0 : index
    %94 = vector.load %arg2[%c1_82, %c0_83, %c0_84] : memref<9x3x16xbf16, #tpu.memory_space<vmem>>, vector<1x3x16xbf16>
    %95 = vector.shape_cast %94 : vector<1x3x16xbf16> to vector<3x16xbf16>
    %cst_85 = arith.constant dense<0.000000e+00> : vector<256x16xf32>
    %96 = tpu.matmul %93, %95, %cst_85 {dimension_numbers = #tpu.dot_dimension_numbers<[1], [0], [0], [1], [0, 0, 1, 1], [], []>} : vector<256x3xbf16>, vector<3x16xbf16>, vector<256x16xf32> -> vector<256x16xf32>
    %97 = arith.addf %89, %96 : vector<256x16xf32>
    %c0_86 = arith.constant 0 : index
    %c8_87 = arith.constant 8 : index
    %c2_88 = arith.constant 2 : index
    %c0_89 = arith.constant 0 : index
    %98 = vector.load %arg1[%c0_86, %c8_87, %c2_88, %c0_89] : memref<1x34x34x3xf32, #tpu.memory_space<vmem>>, vector<1x8x32x3xf32>
    %99 = vector.shape_cast %98 : vector<1x8x32x3xf32> to vector<8x32x3xf32>
    %100 = vector.shape_cast %99 : vector<8x32x3xf32> to vector<256x3xf32>
    %101 = arith.truncf %100 : vector<256x3xf32> to vector<256x3xbf16>
    %c2_90 = arith.constant 2 : index
    %c0_91 = arith.constant 0 : index
    %c0_92 = arith.constant 0 : index
    %102 = vector.load %arg2[%c2_90, %c0_91, %c0_92] : memref<9x3x16xbf16, #tpu.memory_space<vmem>>, vector<1x3x16xbf16>
    %103 = vector.shape_cast %102 : vector<1x3x16xbf16> to vector<3x16xbf16>
    %cst_93 = arith.constant dense<0.000000e+00> : vector<256x16xf32>
    %104 = tpu.matmul %101, %103, %cst_93 {dimension_numbers = #tpu.dot_dimension_numbers<[1], [0], [0], [1], [0, 0, 1, 1], [], []>} : vector<256x3xbf16>, vector<3x16xbf16>, vector<256x16xf32> -> vector<256x16xf32>
    %105 = arith.addf %97, %104 : vector<256x16xf32>
    %c0_94 = arith.constant 0 : index
    %c9 = arith.constant 9 : index
    %c0_95 = arith.constant 0 : index
    %c0_96 = arith.constant 0 : index
    %106 = vector.load %arg1[%c0_94, %c9, %c0_95, %c0_96] : memref<1x34x34x3xf32, #tpu.memory_space<vmem>>, vector<1x8x32x3xf32>
    %107 = vector.shape_cast %106 : vector<1x8x32x3xf32> to vector<8x32x3xf32>
    %108 = vector.shape_cast %107 : vector<8x32x3xf32> to vector<256x3xf32>
    %109 = arith.truncf %108 : vector<256x3xf32> to vector<256x3xbf16>
    %c3_97 = arith.constant 3 : index
    %c0_98 = arith.constant 0 : index
    %c0_99 = arith.constant 0 : index
    %110 = vector.load %arg2[%c3_97, %c0_98, %c0_99] : memref<9x3x16xbf16, #tpu.memory_space<vmem>>, vector<1x3x16xbf16>
    %111 = vector.shape_cast %110 : vector<1x3x16xbf16> to vector<3x16xbf16>
    %cst_100 = arith.constant dense<0.000000e+00> : vector<256x16xf32>
    %112 = tpu.matmul %109, %111, %cst_100 {dimension_numbers = #tpu.dot_dimension_numbers<[1], [0], [0], [1], [0, 0, 1, 1], [], []>} : vector<256x3xbf16>, vector<3x16xbf16>, vector<256x16xf32> -> vector<256x16xf32>
    %113 = arith.addf %105, %112 : vector<256x16xf32>
    %c0_101 = arith.constant 0 : index
    %c9_102 = arith.constant 9 : index
    %c1_103 = arith.constant 1 : index
    %c0_104 = arith.constant 0 : index
    %114 = vector.load %arg1[%c0_101, %c9_102, %c1_103, %c0_104] : memref<1x34x34x3xf32, #tpu.memory_space<vmem>>, vector<1x8x32x3xf32>
    %115 = vector.shape_cast %114 : vector<1x8x32x3xf32> to vector<8x32x3xf32>
    %116 = vector.shape_cast %115 : vector<8x32x3xf32> to vector<256x3xf32>
    %117 = arith.truncf %116 : vector<256x3xf32> to vector<256x3xbf16>
    %c4_105 = arith.constant 4 : index
    %c0_106 = arith.constant 0 : index
    %c0_107 = arith.constant 0 : index
    %118 = vector.load %arg2[%c4_105, %c0_106, %c0_107] : memref<9x3x16xbf16, #tpu.memory_space<vmem>>, vector<1x3x16xbf16>
    %119 = vector.shape_cast %118 : vector<1x3x16xbf16> to vector<3x16xbf16>
    %cst_108 = arith.constant dense<0.000000e+00> : vector<256x16xf32>
    %120 = tpu.matmul %117, %119, %cst_108 {dimension_numbers = #tpu.dot_dimension_numbers<[1], [0], [0], [1], [0, 0, 1, 1], [], []>} : vector<256x3xbf16>, vector<3x16xbf16>, vector<256x16xf32> -> vector<256x16xf32>
    %121 = arith.addf %113, %120 : vector<256x16xf32>
    %c0_109 = arith.constant 0 : index
    %c9_110 = arith.constant 9 : index
    %c2_111 = arith.constant 2 : index
    %c0_112 = arith.constant 0 : index
    %122 = vector.load %arg1[%c0_109, %c9_110, %c2_111, %c0_112] : memref<1x34x34x3xf32, #tpu.memory_space<vmem>>, vector<1x8x32x3xf32>
    %123 = vector.shape_cast %122 : vector<1x8x32x3xf32> to vector<8x32x3xf32>
    %124 = vector.shape_cast %123 : vector<8x32x3xf32> to vector<256x3xf32>
    %125 = arith.truncf %124 : vector<256x3xf32> to vector<256x3xbf16>
    %c5_113 = arith.constant 5 : index
    %c0_114 = arith.constant 0 : index
    %c0_115 = arith.constant 0 : index
    %126 = vector.load %arg2[%c5_113, %c0_114, %c0_115] : memref<9x3x16xbf16, #tpu.memory_space<vmem>>, vector<1x3x16xbf16>
    %127 = vector.shape_cast %126 : vector<1x3x16xbf16> to vector<3x16xbf16>
    %cst_116 = arith.constant dense<0.000000e+00> : vector<256x16xf32>
    %128 = tpu.matmul %125, %127, %cst_116 {dimension_numbers = #tpu.dot_dimension_numbers<[1], [0], [0], [1], [0, 0, 1, 1], [], []>} : vector<256x3xbf16>, vector<3x16xbf16>, vector<256x16xf32> -> vector<256x16xf32>
    %129 = arith.addf %121, %128 : vector<256x16xf32>
    %c0_117 = arith.constant 0 : index
    %c10 = arith.constant 10 : index
    %c0_118 = arith.constant 0 : index
    %c0_119 = arith.constant 0 : index
    %130 = vector.load %arg1[%c0_117, %c10, %c0_118, %c0_119] : memref<1x34x34x3xf32, #tpu.memory_space<vmem>>, vector<1x8x32x3xf32>
    %131 = vector.shape_cast %130 : vector<1x8x32x3xf32> to vector<8x32x3xf32>
    %132 = vector.shape_cast %131 : vector<8x32x3xf32> to vector<256x3xf32>
    %133 = arith.truncf %132 : vector<256x3xf32> to vector<256x3xbf16>
    %c6_120 = arith.constant 6 : index
    %c0_121 = arith.constant 0 : index
    %c0_122 = arith.constant 0 : index
    %134 = vector.load %arg2[%c6_120, %c0_121, %c0_122] : memref<9x3x16xbf16, #tpu.memory_space<vmem>>, vector<1x3x16xbf16>
    %135 = vector.shape_cast %134 : vector<1x3x16xbf16> to vector<3x16xbf16>
    %cst_123 = arith.constant dense<0.000000e+00> : vector<256x16xf32>
    %136 = tpu.matmul %133, %135, %cst_123 {dimension_numbers = #tpu.dot_dimension_numbers<[1], [0], [0], [1], [0, 0, 1, 1], [], []>} : vector<256x3xbf16>, vector<3x16xbf16>, vector<256x16xf32> -> vector<256x16xf32>
    %137 = arith.addf %129, %136 : vector<256x16xf32>
    %c0_124 = arith.constant 0 : index
    %c10_125 = arith.constant 10 : index
    %c1_126 = arith.constant 1 : index
    %c0_127 = arith.constant 0 : index
    %138 = vector.load %arg1[%c0_124, %c10_125, %c1_126, %c0_127] : memref<1x34x34x3xf32, #tpu.memory_space<vmem>>, vector<1x8x32x3xf32>
    %139 = vector.shape_cast %138 : vector<1x8x32x3xf32> to vector<8x32x3xf32>
    %140 = vector.shape_cast %139 : vector<8x32x3xf32> to vector<256x3xf32>
    %141 = arith.truncf %140 : vector<256x3xf32> to vector<256x3xbf16>
    %c7_128 = arith.constant 7 : index
    %c0_129 = arith.constant 0 : index
    %c0_130 = arith.constant 0 : index
    %142 = vector.load %arg2[%c7_128, %c0_129, %c0_130] : memref<9x3x16xbf16, #tpu.memory_space<vmem>>, vector<1x3x16xbf16>
    %143 = vector.shape_cast %142 : vector<1x3x16xbf16> to vector<3x16xbf16>
    %cst_131 = arith.constant dense<0.000000e+00> : vector<256x16xf32>
    %144 = tpu.matmul %141, %143, %cst_131 {dimension_numbers = #tpu.dot_dimension_numbers<[1], [0], [0], [1], [0, 0, 1, 1], [], []>} : vector<256x3xbf16>, vector<3x16xbf16>, vector<256x16xf32> -> vector<256x16xf32>
    %145 = arith.addf %137, %144 : vector<256x16xf32>
    %c0_132 = arith.constant 0 : index
    %c10_133 = arith.constant 10 : index
    %c2_134 = arith.constant 2 : index
    %c0_135 = arith.constant 0 : index
    %146 = vector.load %arg1[%c0_132, %c10_133, %c2_134, %c0_135] : memref<1x34x34x3xf32, #tpu.memory_space<vmem>>, vector<1x8x32x3xf32>
    %147 = vector.shape_cast %146 : vector<1x8x32x3xf32> to vector<8x32x3xf32>
    %148 = vector.shape_cast %147 : vector<8x32x3xf32> to vector<256x3xf32>
    %149 = arith.truncf %148 : vector<256x3xf32> to vector<256x3xbf16>
    %c8_136 = arith.constant 8 : index
    %c0_137 = arith.constant 0 : index
    %c0_138 = arith.constant 0 : index
    %150 = vector.load %arg2[%c8_136, %c0_137, %c0_138] : memref<9x3x16xbf16, #tpu.memory_space<vmem>>, vector<1x3x16xbf16>
    %151 = vector.shape_cast %150 : vector<1x3x16xbf16> to vector<3x16xbf16>
    %cst_139 = arith.constant dense<0.000000e+00> : vector<256x16xf32>
    %152 = tpu.matmul %149, %151, %cst_139 {dimension_numbers = #tpu.dot_dimension_numbers<[1], [0], [0], [1], [0, 0, 1, 1], [], []>} : vector<256x3xbf16>, vector<3x16xbf16>, vector<256x16xf32> -> vector<256x16xf32>
    %153 = arith.addf %145, %152 : vector<256x16xf32>
    %154 = vector.broadcast %0 : vector<1x16xf32> to vector<256x16xf32>
    %155 = arith.addf %153, %154 : vector<256x16xf32>
    %cst_140 = arith.constant 0.000000e+00 : f32
    %156 = vector.broadcast %cst_140 : f32 to vector<256x16xf32>
    %157 = arith.maximumf %155, %156 : vector<256x16xf32>
    %c0_141 = arith.constant 0 : index
    %c256 = arith.constant 256 : index
    %c0_142 = arith.constant 0 : index
    %158 = vector.load %arg4[%c0_141, %c256, %c0_142] : memref<1x1024x16xf32, #tpu.memory_space<vmem>>, vector<1x256x16xf32>
    %159 = vector.shape_cast %158 : vector<1x256x16xf32> to vector<256x16xf32>
    %160 = vector.shape_cast %157 : vector<256x16xf32> to vector<1x256x16xf32>
    tpu.vector_store %arg4[%c0_141, %c256, %c0_142], %160 {strides = array<i32>} : memref<1x1024x16xf32, #tpu.memory_space<vmem>>, vector<1x256x16xf32>,
    %cst_143 = arith.constant 0.000000e+00 : f32
    %161 = vector.broadcast %cst_143 : f32 to vector<256x16xf32>
    %c0_144 = arith.constant 0 : index
    %c16 = arith.constant 16 : index
    %c0_145 = arith.constant 0 : index
    %c0_146 = arith.constant 0 : index
    %162 = vector.load %arg1[%c0_144, %c16, %c0_145, %c0_146] : memref<1x34x34x3xf32, #tpu.memory_space<vmem>>, vector<1x8x32x3xf32>
    %163 = vector.shape_cast %162 : vector<1x8x32x3xf32> to vector<8x32x3xf32>
    %164 = vector.shape_cast %163 : vector<8x32x3xf32> to vector<256x3xf32>
    %165 = arith.truncf %164 : vector<256x3xf32> to vector<256x3xbf16>
    %c0_147 = arith.constant 0 : index
    %c0_148 = arith.constant 0 : index
    %c0_149 = arith.constant 0 : index
    %166 = vector.load %arg2[%c0_147, %c0_148, %c0_149] : memref<9x3x16xbf16, #tpu.memory_space<vmem>>, vector<1x3x16xbf16>
    %167 = vector.shape_cast %166 : vector<1x3x16xbf16> to vector<3x16xbf16>
    %cst_150 = arith.constant dense<0.000000e+00> : vector<256x16xf32>
    %168 = tpu.matmul %165, %167, %cst_150 {dimension_numbers = #tpu.dot_dimension_numbers<[1], [0], [0], [1], [0, 0, 1, 1], [], []>} : vector<256x3xbf16>, vector<3x16xbf16>, vector<256x16xf32> -> vector<256x16xf32>
    %169 = arith.addf %161, %168 : vector<256x16xf32>
    %c0_151 = arith.constant 0 : index
    %c16_152 = arith.constant 16 : index
    %c1_153 = arith.constant 1 : index
    %c0_154 = arith.constant 0 : index
    %170 = vector.load %arg1[%c0_151, %c16_152, %c1_153, %c0_154] : memref<1x34x34x3xf32, #tpu.memory_space<vmem>>, vector<1x8x32x3xf32>
    %171 = vector.shape_cast %170 : vector<1x8x32x3xf32> to vector<8x32x3xf32>
    %172 = vector.shape_cast %171 : vector<8x32x3xf32> to vector<256x3xf32>
    %173 = arith.truncf %172 : vector<256x3xf32> to vector<256x3xbf16>
    %c1_155 = arith.constant 1 : index
    %c0_156 = arith.constant 0 : index
    %c0_157 = arith.constant 0 : index
    %174 = vector.load %arg2[%c1_155, %c0_156, %c0_157] : memref<9x3x16xbf16, #tpu.memory_space<vmem>>, vector<1x3x16xbf16>
    %175 = vector.shape_cast %174 : vector<1x3x16xbf16> to vector<3x16xbf16>
    %cst_158 = arith.constant dense<0.000000e+00> : vector<256x16xf32>
    %176 = tpu.matmul %173, %175, %cst_158 {dimension_numbers = #tpu.dot_dimension_numbers<[1], [0], [0], [1], [0, 0, 1, 1], [], []>} : vector<256x3xbf16>, vector<3x16xbf16>, vector<256x16xf32> -> vector<256x16xf32>
    %177 = arith.addf %169, %176 : vector<256x16xf32>
    %c0_159 = arith.constant 0 : index
    %c16_160 = arith.constant 16 : index
    %c2_161 = arith.constant 2 : index
    %c0_162 = arith.constant 0 : index
    %178 = vector.load %arg1[%c0_159, %c16_160, %c2_161, %c0_162] : memref<1x34x34x3xf32, #tpu.memory_space<vmem>>, vector<1x8x32x3xf32>
    %179 = vector.shape_cast %178 : vector<1x8x32x3xf32> to vector<8x32x3xf32>
    %180 = vector.shape_cast %179 : vector<8x32x3xf32> to vector<256x3xf32>
    %181 = arith.truncf %180 : vector<256x3xf32> to vector<256x3xbf16>
    %c2_163 = arith.constant 2 : index
    %c0_164 = arith.constant 0 : index
    %c0_165 = arith.constant 0 : index
    %182 = vector.load %arg2[%c2_163, %c0_164, %c0_165] : memref<9x3x16xbf16, #tpu.memory_space<vmem>>, vector<1x3x16xbf16>
    %183 = vector.shape_cast %182 : vector<1x3x16xbf16> to vector<3x16xbf16>
    %cst_166 = arith.constant dense<0.000000e+00> : vector<256x16xf32>
    %184 = tpu.matmul %181, %183, %cst_166 {dimension_numbers = #tpu.dot_dimension_numbers<[1], [0], [0], [1], [0, 0, 1, 1], [], []>} : vector<256x3xbf16>, vector<3x16xbf16>, vector<256x16xf32> -> vector<256x16xf32>
    %185 = arith.addf %177, %184 : vector<256x16xf32>
    %c0_167 = arith.constant 0 : index
    %c17 = arith.constant 17 : index
    %c0_168 = arith.constant 0 : index
    %c0_169 = arith.constant 0 : index
    %186 = vector.load %arg1[%c0_167, %c17, %c0_168, %c0_169] : memref<1x34x34x3xf32, #tpu.memory_space<vmem>>, vector<1x8x32x3xf32>
    %187 = vector.shape_cast %186 : vector<1x8x32x3xf32> to vector<8x32x3xf32>
    %188 = vector.shape_cast %187 : vector<8x32x3xf32> to vector<256x3xf32>
    %189 = arith.truncf %188 : vector<256x3xf32> to vector<256x3xbf16>
    %c3_170 = arith.constant 3 : index
    %c0_171 = arith.constant 0 : index
    %c0_172 = arith.constant 0 : index
    %190 = vector.load %arg2[%c3_170, %c0_171, %c0_172] : memref<9x3x16xbf16, #tpu.memory_space<vmem>>, vector<1x3x16xbf16>
    %191 = vector.shape_cast %190 : vector<1x3x16xbf16> to vector<3x16xbf16>
    %cst_173 = arith.constant dense<0.000000e+00> : vector<256x16xf32>
    %192 = tpu.matmul %189, %191, %cst_173 {dimension_numbers = #tpu.dot_dimension_numbers<[1], [0], [0], [1], [0, 0, 1, 1], [], []>} : vector<256x3xbf16>, vector<3x16xbf16>, vector<256x16xf32> -> vector<256x16xf32>
    %193 = arith.addf %185, %192 : vector<256x16xf32>
    %c0_174 = arith.constant 0 : index
    %c17_175 = arith.constant 17 : index
    %c1_176 = arith.constant 1 : index
    %c0_177 = arith.constant 0 : index
    %194 = vector.load %arg1[%c0_174, %c17_175, %c1_176, %c0_177] : memref<1x34x34x3xf32, #tpu.memory_space<vmem>>, vector<1x8x32x3xf32>
    %195 = vector.shape_cast %194 : vector<1x8x32x3xf32> to vector<8x32x3xf32>
    %196 = vector.shape_cast %195 : vector<8x32x3xf32> to vector<256x3xf32>
    %197 = arith.truncf %196 : vector<256x3xf32> to vector<256x3xbf16>
    %c4_178 = arith.constant 4 : index
    %c0_179 = arith.constant 0 : index
    %c0_180 = arith.constant 0 : index
    %198 = vector.load %arg2[%c4_178, %c0_179, %c0_180] : memref<9x3x16xbf16, #tpu.memory_space<vmem>>, vector<1x3x16xbf16>
    %199 = vector.shape_cast %198 : vector<1x3x16xbf16> to vector<3x16xbf16>
    %cst_181 = arith.constant dense<0.000000e+00> : vector<256x16xf32>
    %200 = tpu.matmul %197, %199, %cst_181 {dimension_numbers = #tpu.dot_dimension_numbers<[1], [0], [0], [1], [0, 0, 1, 1], [], []>} : vector<256x3xbf16>, vector<3x16xbf16>, vector<256x16xf32> -> vector<256x16xf32>
    %201 = arith.addf %193, %200 : vector<256x16xf32>
    %c0_182 = arith.constant 0 : index
    %c17_183 = arith.constant 17 : index
    %c2_184 = arith.constant 2 : index
    %c0_185 = arith.constant 0 : index
    %202 = vector.load %arg1[%c0_182, %c17_183, %c2_184, %c0_185] : memref<1x34x34x3xf32, #tpu.memory_space<vmem>>, vector<1x8x32x3xf32>
    %203 = vector.shape_cast %202 : vector<1x8x32x3xf32> to vector<8x32x3xf32>
    %204 = vector.shape_cast %203 : vector<8x32x3xf32> to vector<256x3xf32>
    %205 = arith.truncf %204 : vector<256x3xf32> to vector<256x3xbf16>
    %c5_186 = arith.constant 5 : index
    %c0_187 = arith.constant 0 : index
    %c0_188 = arith.constant 0 : index
    %206 = vector.load %arg2[%c5_186, %c0_187, %c0_188] : memref<9x3x16xbf16, #tpu.memory_space<vmem>>, vector<1x3x16xbf16>
    %207 = vector.shape_cast %206 : vector<1x3x16xbf16> to vector<3x16xbf16>
    %cst_189 = arith.constant dense<0.000000e+00> : vector<256x16xf32>
    %208 = tpu.matmul %205, %207, %cst_189 {dimension_numbers = #tpu.dot_dimension_numbers<[1], [0], [0], [1], [0, 0, 1, 1], [], []>} : vector<256x3xbf16>, vector<3x16xbf16>, vector<256x16xf32> -> vector<256x16xf32>
    %209 = arith.addf %201, %208 : vector<256x16xf32>
    %c0_190 = arith.constant 0 : index
    %c18 = arith.constant 18 : index
    %c0_191 = arith.constant 0 : index
    %c0_192 = arith.constant 0 : index
    %210 = vector.load %arg1[%c0_190, %c18, %c0_191, %c0_192] : memref<1x34x34x3xf32, #tpu.memory_space<vmem>>, vector<1x8x32x3xf32>
    %211 = vector.shape_cast %210 : vector<1x8x32x3xf32> to vector<8x32x3xf32>
    %212 = vector.shape_cast %211 : vector<8x32x3xf32> to vector<256x3xf32>
    %213 = arith.truncf %212 : vector<256x3xf32> to vector<256x3xbf16>
    %c6_193 = arith.constant 6 : index
    %c0_194 = arith.constant 0 : index
    %c0_195 = arith.constant 0 : index
    %214 = vector.load %arg2[%c6_193, %c0_194, %c0_195] : memref<9x3x16xbf16, #tpu.memory_space<vmem>>, vector<1x3x16xbf16>
    %215 = vector.shape_cast %214 : vector<1x3x16xbf16> to vector<3x16xbf16>
    %cst_196 = arith.constant dense<0.000000e+00> : vector<256x16xf32>
    %216 = tpu.matmul %213, %215, %cst_196 {dimension_numbers = #tpu.dot_dimension_numbers<[1], [0], [0], [1], [0, 0, 1, 1], [], []>} : vector<256x3xbf16>, vector<3x16xbf16>, vector<256x16xf32> -> vector<256x16xf32>
    %217 = arith.addf %209, %216 : vector<256x16xf32>
    %c0_197 = arith.constant 0 : index
    %c18_198 = arith.constant 18 : index
    %c1_199 = arith.constant 1 : index
    %c0_200 = arith.constant 0 : index
    %218 = vector.load %arg1[%c0_197, %c18_198, %c1_199, %c0_200] : memref<1x34x34x3xf32, #tpu.memory_space<vmem>>, vector<1x8x32x3xf32>
    %219 = vector.shape_cast %218 : vector<1x8x32x3xf32> to vector<8x32x3xf32>
    %220 = vector.shape_cast %219 : vector<8x32x3xf32> to vector<256x3xf32>
    %221 = arith.truncf %220 : vector<256x3xf32> to vector<256x3xbf16>
    %c7_201 = arith.constant 7 : index
    %c0_202 = arith.constant 0 : index
    %c0_203 = arith.constant 0 : index
    %222 = vector.load %arg2[%c7_201, %c0_202, %c0_203] : memref<9x3x16xbf16, #tpu.memory_space<vmem>>, vector<1x3x16xbf16>
    %223 = vector.shape_cast %222 : vector<1x3x16xbf16> to vector<3x16xbf16>
    %cst_204 = arith.constant dense<0.000000e+00> : vector<256x16xf32>
    %224 = tpu.matmul %221, %223, %cst_204 {dimension_numbers = #tpu.dot_dimension_numbers<[1], [0], [0], [1], [0, 0, 1, 1], [], []>} : vector<256x3xbf16>, vector<3x16xbf16>, vector<256x16xf32> -> vector<256x16xf32>
    %225 = arith.addf %217, %224 : vector<256x16xf32>
    %c0_205 = arith.constant 0 : index
    %c18_206 = arith.constant 18 : index
    %c2_207 = arith.constant 2 : index
    %c0_208 = arith.constant 0 : index
    %226 = vector.load %arg1[%c0_205, %c18_206, %c2_207, %c0_208] : memref<1x34x34x3xf32, #tpu.memory_space<vmem>>, vector<1x8x32x3xf32>
    %227 = vector.shape_cast %226 : vector<1x8x32x3xf32> to vector<8x32x3xf32>
    %228 = vector.shape_cast %227 : vector<8x32x3xf32> to vector<256x3xf32>
    %229 = arith.truncf %228 : vector<256x3xf32> to vector<256x3xbf16>
    %c8_209 = arith.constant 8 : index
    %c0_210 = arith.constant 0 : index
    %c0_211 = arith.constant 0 : index
    %230 = vector.load %arg2[%c8_209, %c0_210, %c0_211] : memref<9x3x16xbf16, #tpu.memory_space<vmem>>, vector<1x3x16xbf16>
    %231 = vector.shape_cast %230 : vector<1x3x16xbf16> to vector<3x16xbf16>
    %cst_212 = arith.constant dense<0.000000e+00> : vector<256x16xf32>
    %232 = tpu.matmul %229, %231, %cst_212 {dimension_numbers = #tpu.dot_dimension_numbers<[1], [0], [0], [1], [0, 0, 1, 1], [], []>} : vector<256x3xbf16>, vector<3x16xbf16>, vector<256x16xf32> -> vector<256x16xf32>
    %233 = arith.addf %225, %232 : vector<256x16xf32>
    %234 = vector.broadcast %0 : vector<1x16xf32> to vector<256x16xf32>
    %235 = arith.addf %233, %234 : vector<256x16xf32>
    %cst_213 = arith.constant 0.000000e+00 : f32
    %236 = vector.broadcast %cst_213 : f32 to vector<256x16xf32>
    %237 = arith.maximumf %235, %236 : vector<256x16xf32>
    %c0_214 = arith.constant 0 : index
    %c512 = arith.constant 512 : index
    %c0_215 = arith.constant 0 : index
    %238 = vector.load %arg4[%c0_214, %c512, %c0_215] : memref<1x1024x16xf32, #tpu.memory_space<vmem>>, vector<1x256x16xf32>
    %239 = vector.shape_cast %238 : vector<1x256x16xf32> to vector<256x16xf32>
    %240 = vector.shape_cast %237 : vector<256x16xf32> to vector<1x256x16xf32>
    tpu.vector_store %arg4[%c0_214, %c512, %c0_215], %240 {strides = array<i32>} : memref<1x1024x16xf32, #tpu.memory_space<vmem>>, vector<1x256x16xf32>,
    %cst_216 = arith.constant 0.000000e+00 : f32
    %241 = vector.broadcast %cst_216 : f32 to vector<256x16xf32>
    %c0_217 = arith.constant 0 : index
    %c24 = arith.constant 24 : index
    %c0_218 = arith.constant 0 : index
    %c0_219 = arith.constant 0 : index
    %242 = vector.load %arg1[%c0_217, %c24, %c0_218, %c0_219] : memref<1x34x34x3xf32, #tpu.memory_space<vmem>>, vector<1x8x32x3xf32>
    %243 = vector.shape_cast %242 : vector<1x8x32x3xf32> to vector<8x32x3xf32>
    %244 = vector.shape_cast %243 : vector<8x32x3xf32> to vector<256x3xf32>
    %245 = arith.truncf %244 : vector<256x3xf32> to vector<256x3xbf16>
    %c0_220 = arith.constant 0 : index
    %c0_221 = arith.constant 0 : index
    %c0_222 = arith.constant 0 : index
    %246 = vector.load %arg2[%c0_220, %c0_221, %c0_222] : memref<9x3x16xbf16, #tpu.memory_space<vmem>>, vector<1x3x16xbf16>
    %247 = vector.shape_cast %246 : vector<1x3x16xbf16> to vector<3x16xbf16>
    %cst_223 = arith.constant dense<0.000000e+00> : vector<256x16xf32>
    %248 = tpu.matmul %245, %247, %cst_223 {dimension_numbers = #tpu.dot_dimension_numbers<[1], [0], [0], [1], [0, 0, 1, 1], [], []>} : vector<256x3xbf16>, vector<3x16xbf16>, vector<256x16xf32> -> vector<256x16xf32>
    %249 = arith.addf %241, %248 : vector<256x16xf32>
    %c0_224 = arith.constant 0 : index
    %c24_225 = arith.constant 24 : index
    %c1_226 = arith.constant 1 : index
    %c0_227 = arith.constant 0 : index
    %250 = vector.load %arg1[%c0_224, %c24_225, %c1_226, %c0_227] : memref<1x34x34x3xf32, #tpu.memory_space<vmem>>, vector<1x8x32x3xf32>
    %251 = vector.shape_cast %250 : vector<1x8x32x3xf32> to vector<8x32x3xf32>
    %252 = vector.shape_cast %251 : vector<8x32x3xf32> to vector<256x3xf32>
    %253 = arith.truncf %252 : vector<256x3xf32> to vector<256x3xbf16>
    %c1_228 = arith.constant 1 : index
    %c0_229 = arith.constant 0 : index
    %c0_230 = arith.constant 0 : index
    %254 = vector.load %arg2[%c1_228, %c0_229, %c0_230] : memref<9x3x16xbf16, #tpu.memory_space<vmem>>, vector<1x3x16xbf16>
    %255 = vector.shape_cast %254 : vector<1x3x16xbf16> to vector<3x16xbf16>
    %cst_231 = arith.constant dense<0.000000e+00> : vector<256x16xf32>
    %256 = tpu.matmul %253, %255, %cst_231 {dimension_numbers = #tpu.dot_dimension_numbers<[1], [0], [0], [1], [0, 0, 1, 1], [], []>} : vector<256x3xbf16>, vector<3x16xbf16>, vector<256x16xf32> -> vector<256x16xf32>
    %257 = arith.addf %249, %256 : vector<256x16xf32>
    %c0_232 = arith.constant 0 : index
    %c24_233 = arith.constant 24 : index
    %c2_234 = arith.constant 2 : index
    %c0_235 = arith.constant 0 : index
    %258 = vector.load %arg1[%c0_232, %c24_233, %c2_234, %c0_235] : memref<1x34x34x3xf32, #tpu.memory_space<vmem>>, vector<1x8x32x3xf32>
    %259 = vector.shape_cast %258 : vector<1x8x32x3xf32> to vector<8x32x3xf32>
    %260 = vector.shape_cast %259 : vector<8x32x3xf32> to vector<256x3xf32>
    %261 = arith.truncf %260 : vector<256x3xf32> to vector<256x3xbf16>
    %c2_236 = arith.constant 2 : index
    %c0_237 = arith.constant 0 : index
    %c0_238 = arith.constant 0 : index
    %262 = vector.load %arg2[%c2_236, %c0_237, %c0_238] : memref<9x3x16xbf16, #tpu.memory_space<vmem>>, vector<1x3x16xbf16>
    %263 = vector.shape_cast %262 : vector<1x3x16xbf16> to vector<3x16xbf16>
    %cst_239 = arith.constant dense<0.000000e+00> : vector<256x16xf32>
    %264 = tpu.matmul %261, %263, %cst_239 {dimension_numbers = #tpu.dot_dimension_numbers<[1], [0], [0], [1], [0, 0, 1, 1], [], []>} : vector<256x3xbf16>, vector<3x16xbf16>, vector<256x16xf32> -> vector<256x16xf32>
    %265 = arith.addf %257, %264 : vector<256x16xf32>
    %c0_240 = arith.constant 0 : index
    %c25 = arith.constant 25 : index
    %c0_241 = arith.constant 0 : index
    %c0_242 = arith.constant 0 : index
    %266 = vector.load %arg1[%c0_240, %c25, %c0_241, %c0_242] : memref<1x34x34x3xf32, #tpu.memory_space<vmem>>, vector<1x8x32x3xf32>
    %267 = vector.shape_cast %266 : vector<1x8x32x3xf32> to vector<8x32x3xf32>
    %268 = vector.shape_cast %267 : vector<8x32x3xf32> to vector<256x3xf32>
    %269 = arith.truncf %268 : vector<256x3xf32> to vector<256x3xbf16>
    %c3_243 = arith.constant 3 : index
    %c0_244 = arith.constant 0 : index
    %c0_245 = arith.constant 0 : index
    %270 = vector.load %arg2[%c3_243, %c0_244, %c0_245] : memref<9x3x16xbf16, #tpu.memory_space<vmem>>, vector<1x3x16xbf16>
    %271 = vector.shape_cast %270 : vector<1x3x16xbf16> to vector<3x16xbf16>
    %cst_246 = arith.constant dense<0.000000e+00> : vector<256x16xf32>
    %272 = tpu.matmul %269, %271, %cst_246 {dimension_numbers = #tpu.dot_dimension_numbers<[1], [0], [0], [1], [0, 0, 1, 1], [], []>} : vector<256x3xbf16>, vector<3x16xbf16>, vector<256x16xf32> -> vector<256x16xf32>
    %273 = arith.addf %265, %272 : vector<256x16xf32>
    %c0_247 = arith.constant 0 : index
    %c25_248 = arith.constant 25 : index
    %c1_249 = arith.constant 1 : index
    %c0_250 = arith.constant 0 : index
    %274 = vector.load %arg1[%c0_247, %c25_248, %c1_249, %c0_250] : memref<1x34x34x3xf32, #tpu.memory_space<vmem>>, vector<1x8x32x3xf32>
    %275 = vector.shape_cast %274 : vector<1x8x32x3xf32> to vector<8x32x3xf32>
    %276 = vector.shape_cast %275 : vector<8x32x3xf32> to vector<256x3xf32>
    %277 = arith.truncf %276 : vector<256x3xf32> to vector<256x3xbf16>
    %c4_251 = arith.constant 4 : index
    %c0_252 = arith.constant 0 : index
    %c0_253 = arith.constant 0 : index
    %278 = vector.load %arg2[%c4_251, %c0_252, %c0_253] : memref<9x3x16xbf16, #tpu.memory_space<vmem>>, vector<1x3x16xbf16>
    %279 = vector.shape_cast %278 : vector<1x3x16xbf16> to vector<3x16xbf16>
    %cst_254 = arith.constant dense<0.000000e+00> : vector<256x16xf32>
    %280 = tpu.matmul %277, %279, %cst_254 {dimension_numbers = #tpu.dot_dimension_numbers<[1], [0], [0], [1], [0, 0, 1, 1], [], []>} : vector<256x3xbf16>, vector<3x16xbf16>, vector<256x16xf32> -> vector<256x16xf32>
    %281 = arith.addf %273, %280 : vector<256x16xf32>
    %c0_255 = arith.constant 0 : index
    %c25_256 = arith.constant 25 : index
    %c2_257 = arith.constant 2 : index
    %c0_258 = arith.constant 0 : index
    %282 = vector.load %arg1[%c0_255, %c25_256, %c2_257, %c0_258] : memref<1x34x34x3xf32, #tpu.memory_space<vmem>>, vector<1x8x32x3xf32>
    %283 = vector.shape_cast %282 : vector<1x8x32x3xf32> to vector<8x32x3xf32>
    %284 = vector.shape_cast %283 : vector<8x32x3xf32> to vector<256x3xf32>
    %285 = arith.truncf %284 : vector<256x3xf32> to vector<256x3xbf16>
    %c5_259 = arith.constant 5 : index
    %c0_260 = arith.constant 0 : index
    %c0_261 = arith.constant 0 : index
    %286 = vector.load %arg2[%c5_259, %c0_260, %c0_261] : memref<9x3x16xbf16, #tpu.memory_space<vmem>>, vector<1x3x16xbf16>
    %287 = vector.shape_cast %286 : vector<1x3x16xbf16> to vector<3x16xbf16>
    %cst_262 = arith.constant dense<0.000000e+00> : vector<256x16xf32>
    %288 = tpu.matmul %285, %287, %cst_262 {dimension_numbers = #tpu.dot_dimension_numbers<[1], [0], [0], [1], [0, 0, 1, 1], [], []>} : vector<256x3xbf16>, vector<3x16xbf16>, vector<256x16xf32> -> vector<256x16xf32>
    %289 = arith.addf %281, %288 : vector<256x16xf32>
    %c0_263 = arith.constant 0 : index
    %c26 = arith.constant 26 : index
    %c0_264 = arith.constant 0 : index
    %c0_265 = arith.constant 0 : index
    %290 = vector.load %arg1[%c0_263, %c26, %c0_264, %c0_265] : memref<1x34x34x3xf32, #tpu.memory_space<vmem>>, vector<1x8x32x3xf32>
    %291 = vector.shape_cast %290 : vector<1x8x32x3xf32> to vector<8x32x3xf32>
    %292 = vector.shape_cast %291 : vector<8x32x3xf32> to vector<256x3xf32>
    %293 = arith.truncf %292 : vector<256x3xf32> to vector<256x3xbf16>
    %c6_266 = arith.constant 6 : index
    %c0_267 = arith.constant 0 : index
    %c0_268 = arith.constant 0 : index
    %294 = vector.load %arg2[%c6_266, %c0_267, %c0_268] : memref<9x3x16xbf16, #tpu.memory_space<vmem>>, vector<1x3x16xbf16>
    %295 = vector.shape_cast %294 : vector<1x3x16xbf16> to vector<3x16xbf16>
    %cst_269 = arith.constant dense<0.000000e+00> : vector<256x16xf32>
    %296 = tpu.matmul %293, %295, %cst_269 {dimension_numbers = #tpu.dot_dimension_numbers<[1], [0], [0], [1], [0, 0, 1, 1], [], []>} : vector<256x3xbf16>, vector<3x16xbf16>, vector<256x16xf32> -> vector<256x16xf32>
    %297 = arith.addf %289, %296 : vector<256x16xf32>
    %c0_270 = arith.constant 0 : index
    %c26_271 = arith.constant 26 : index
    %c1_272 = arith.constant 1 : index
    %c0_273 = arith.constant 0 : index
    %298 = vector.load %arg1[%c0_270, %c26_271, %c1_272, %c0_273] : memref<1x34x34x3xf32, #tpu.memory_space<vmem>>, vector<1x8x32x3xf32>
    %299 = vector.shape_cast %298 : vector<1x8x32x3xf32> to vector<8x32x3xf32>
    %300 = vector.shape_cast %299 : vector<8x32x3xf32> to vector<256x3xf32>
    %301 = arith.truncf %300 : vector<256x3xf32> to vector<256x3xbf16>
    %c7_274 = arith.constant 7 : index
    %c0_275 = arith.constant 0 : index
    %c0_276 = arith.constant 0 : index
    %302 = vector.load %arg2[%c7_274, %c0_275, %c0_276] : memref<9x3x16xbf16, #tpu.memory_space<vmem>>, vector<1x3x16xbf16>
    %303 = vector.shape_cast %302 : vector<1x3x16xbf16> to vector<3x16xbf16>
    %cst_277 = arith.constant dense<0.000000e+00> : vector<256x16xf32>
    %304 = tpu.matmul %301, %303, %cst_277 {dimension_numbers = #tpu.dot_dimension_numbers<[1], [0], [0], [1], [0, 0, 1, 1], [], []>} : vector<256x3xbf16>, vector<3x16xbf16>, vector<256x16xf32> -> vector<256x16xf32>
    %305 = arith.addf %297, %304 : vector<256x16xf32>
    %c0_278 = arith.constant 0 : index
    %c26_279 = arith.constant 26 : index
    %c2_280 = arith.constant 2 : index
    %c0_281 = arith.constant 0 : index
    %306 = vector.load %arg1[%c0_278, %c26_279, %c2_280, %c0_281] : memref<1x34x34x3xf32, #tpu.memory_space<vmem>>, vector<1x8x32x3xf32>
    %307 = vector.shape_cast %306 : vector<1x8x32x3xf32> to vector<8x32x3xf32>
    %308 = vector.shape_cast %307 : vector<8x32x3xf32> to vector<256x3xf32>
    %309 = arith.truncf %308 : vector<256x3xf32> to vector<256x3xbf16>
    %c8_282 = arith.constant 8 : index
    %c0_283 = arith.constant 0 : index
    %c0_284 = arith.constant 0 : index
    %310 = vector.load %arg2[%c8_282, %c0_283, %c0_284] : memref<9x3x16xbf16, #tpu.memory_space<vmem>>, vector<1x3x16xbf16>
    %311 = vector.shape_cast %310 : vector<1x3x16xbf16> to vector<3x16xbf16>
    %cst_285 = arith.constant dense<0.000000e+00> : vector<256x16xf32>
    %312 = tpu.matmul %309, %311, %cst_285 {dimension_numbers = #tpu.dot_dimension_numbers<[1], [0], [0], [1], [0, 0, 1, 1], [], []>} : vector<256x3xbf16>, vector<3x16xbf16>, vector<256x16xf32> -> vector<256x16xf32>
    %313 = arith.addf %305, %312 : vector<256x16xf32>
    %314 = vector.broadcast %0 : vector<1x16xf32> to vector<256x16xf32>
    %315 = arith.addf %313, %314 : vector<256x16xf32>
    %cst_286 = arith.constant 0.000000e+00 : f32
    %316 = vector.broadcast %cst_286 : f32 to vector<256x16xf32>
    %317 = arith.maximumf %315, %316 : vector<256x16xf32>
    %c0_287 = arith.constant 0 : index
    %c768 = arith.constant 768 : index
    %c0_288 = arith.constant 0 : index
    %318 = vector.load %arg4[%c0_287, %c768, %c0_288] : memref<1x1024x16xf32, #tpu.memory_space<vmem>>, vector<1x256x16xf32>
    %319 = vector.shape_cast %318 : vector<1x256x16xf32> to vector<256x16xf32>
    %320 = vector.shape_cast %317 : vector<256x16xf32> to vector<1x256x16xf32>
    tpu.vector_store %arg4[%c0_287, %c768, %c0_288], %320 {strides = array<i32>} : memref<1x1024x16xf32, #tpu.memory_space<vmem>>, vector<1x256x16xf32>,
    return
  }
  func.func @transform_0(%arg0: i32) -> (i32, i32, i32, i32) {
    %c0_i32 = arith.constant 0 : i32
    %c0_i32_0 = arith.constant 0 : i32
    %c0_i32_1 = arith.constant 0 : i32
    %c0_i32_2 = arith.constant 0 : i32
    return %arg0, %c0_i32, %c0_i32_0, %c0_i32_1 : i32, i32, i32, i32
  }
  func.func @transform_1(%arg0: i32) -> (i32, i32, i32) {
    %c0_i32 = arith.constant 0 : i32
    %c0_i32_0 = arith.constant 0 : i32
    %c0_i32_1 = arith.constant 0 : i32
    %c0_i32_2 = arith.constant 0 : i32
    return %c0_i32, %c0_i32_0, %c0_i32_1 : i32, i32, i32
  }
  func.func @transform_2(%arg0: i32) -> (i32, i32) {
    %c0_i32 = arith.constant 0 : i32
    %c0_i32_0 = arith.constant 0 : i32
    %c0_i32_1 = arith.constant 0 : i32
    return %c0_i32, %c0_i32_0 : i32, i32
  }
  func.func @transform_3(%arg0: i32) -> (i32, i32, i32) {
    %c0_i32 = arith.constant 0 : i32
    %c0_i32_0 = arith.constant 0 : i32
    %c0_i32_1 = arith.constant 0 : i32
    return %arg0, %c0_i32, %c0_i32_0 : i32, i32, i32
  }
}

</mosaic_0001>

<llo_original>
// kernel: tpu_custom_call.1
$region0: #{tpu_custom_call.1}
  #allocation0 [shape = 'u32[]', space=smem, size = 0x4, offset = 0x4, fixed_abs, tag = 'smem constant byte address 0x4 - core index']
  #allocation1 [shape = 'u32[144,128]{1,0:T(1,128)}', space=vmem, size = 0x12000, scoped, tag = 'internal scratch']
  %s0 = inlined_call_operand.vmem [shape: f32[2,34,34,3], index: 0, kind: input, shape index: {}]
  %s1 = inlined_call_operand.vmem [shape: bf16[9,3,16], index: 1, kind: input, shape index: {}]
  %s2 = inlined_call_operand.vmem [shape: f32[1,16], index: 2, kind: input, shape index: {}]
  %s3 = inlined_call_operand.vmem [shape: f32[2,1024,16], index: 3, kind: output, shape index: {}]
  %s4 = sld [smem:[#allocation0]]
  $region45: #{tpu_custom_call.1} parent=0
    _
  %s6 = ssub.s32 1, %s4
  %s7 = scalar_select 0, %s6, %s4
  loop: start=0, step=1, limit=4
  $region2: #{tpu_custom_call.1} parent=0 // loop_pre_header
    _
  $region3: #{tpu_custom_call.1} parent=0 // loop_header
    %s9 = sphi 0, %s13
    %p10 = scmp.ge.s32.totalorder %s9, 4
    %s19 = sphi 0, %s21
    %s22 = sphi 0, %s19
    %s23 = sphi 0, %s22
    %s39 = sphi 0, %s23
    %s43 = sphi 0, %s43
    %s45 = sphi 0, %s43
    %s46 = sphi 0, %s45
    %s60 = sphi 0, %s46
    %s64 = sphi 0, %s64
    %s66 = sphi 0, %s64
    %s67 = sphi 0, %s66
    %s81 = sphi 0, %s67
    %s87 = sphi 0, %s89
    %s90 = sphi 0, %s87
    %s91 = sphi 0, %s90
    %s107 = sphi 0, %s91
  $region4: #{tpu_custom_call.1} parent=0 // loop_header_branch
    %12 = sbr.rel (%p10) target = $region8
  $region5: #{tpu_custom_call.1} parent=0 // loop_body
    %s14 = ssub.s32 %s9, 1
    %s15 = ssub.s32 %s9, 2
    %s16 = sadd.s32 %s9, 1
    %s17 = ssub.s32 %s9, %s16
    %p18 = scmp.eq.s32.totalorder %s17, 0
    %s20 = sadd.s32 %s19, 1
    %s21 = scalar_select %p18, %s19, %s20
    %p24 = pneg %p18
    %p25 = scmp.eq.s32.totalorder %s9, 1
    %p26 = por %p24, %p25
    %p27 = scmp.ne.s32.totalorder %s19, %s22
    %p28 = scmp.eq.s32.totalorder %s9, 0
    %p29 = por %p27, %p28
    %p30 = scmp.ne.s32.totalorder %s19, %s22
    %p31 = scmp.eq.s32.totalorder %s14, 1
    %p32 = por %p30, %p31
    %p33 = scmp.ne.s32.totalorder %s22, %s23
    %p34 = scmp.eq.s32.totalorder %s14, 0
    %p35 = por %p33, %p34
    %p36 = scmp.ne.s32.totalorder %s22, %s23
    %p37 = scmp.eq.s32.totalorder %s15, 1
    %p38 = por %p36, %p37
    %p40 = scmp.ne.s32.totalorder %s23, %s39
    %p41 = scmp.eq.s32.totalorder %s15, 0
    %p42 = por %p40, %p41
    %s44 = sadd.s32 %s43, 1
    %p47 = scmp.eq.s32.totalorder %s9, 1
    %p48 = scmp.ne.s32.totalorder %s43, %s45
    %p49 = scmp.eq.s32.totalorder %s9, 0
    %p50 = por %p48, %p49
    %p51 = scmp.ne.s32.totalorder %s43, %s45
    %p52 = scmp.eq.s32.totalorder %s14, 1
    %p53 = por %p51, %p52
    %p54 = scmp.ne.s32.totalorder %s45, %s46
    %p55 = scmp.eq.s32.totalorder %s14, 0
    %p56 = por %p54, %p55
    %p57 = scmp.ne.s32.totalorder %s45, %s46
    %p58 = scmp.eq.s32.totalorder %s15, 1
    %p59 = por %p57, %p58
    %p61 = scmp.ne.s32.totalorder %s46, %s60
    %p62 = scmp.eq.s32.totalorder %s15, 0
    %p63 = por %p61, %p62
    %s65 = sadd.s32 %s64, 1
    %p68 = scmp.eq.s32.totalorder %s9, 1
    %p69 = scmp.ne.s32.totalorder %s64, %s66
    %p70 = scmp.eq.s32.totalorder %s9, 0
    %p71 = por %p69, %p70
    %p72 = scmp.ne.s32.totalorder %s64, %s66
    %p73 = scmp.eq.s32.totalorder %s14, 1
    %p74 = por %p72, %p73
    %p75 = scmp.ne.s32.totalorder %s66, %s67
    %p76 = scmp.eq.s32.totalorder %s14, 0
    %p77 = por %p75, %p76
    %p78 = scmp.ne.s32.totalorder %s66, %s67
    %p79 = scmp.eq.s32.totalorder %s15, 1
    %p80 = por %p78, %p79
    %p82 = scmp.ne.s32.totalorder %s67, %s81
    %p83 = scmp.eq.s32.totalorder %s15, 0
    %p84 = por %p82, %p83
    %s85 = ssub.s32 %s9, %s16
    %p86 = scmp.eq.s32.totalorder %s85, 0
    %s88 = sadd.s32 %s87, 1
    %s89 = scalar_select %p86, %s87, %s88
    %p92 = pneg %p86
    %p93 = scmp.eq.s32.totalorder %s9, 1
    %p94 = por %p92, %p93
    %p95 = scmp.ne.s32.totalorder %s87, %s90
    %p96 = scmp.eq.s32.totalorder %s9, 0
    %p97 = por %p95, %p96
    %p98 = scmp.ne.s32.totalorder %s87, %s90
    %p99 = scmp.eq.s32.totalorder %s14, 1
    %p100 = por %p98, %p99
    %p101 = scmp.ne.s32.totalorder %s90, %s91
    %p102 = scmp.eq.s32.totalorder %s14, 0
    %p103 = por %p101, %p102
    %p104 = scmp.ne.s32.totalorder %s90, %s91
    %p105 = scmp.eq.s32.totalorder %s15, 1
    %p106 = por %p104, %p105
    %p108 = scmp.ne.s32.totalorder %s91, %s107
    %p109 = scmp.eq.s32.totalorder %s15, 0
    %p110 = por %p108, %p109
    %p111 = scmp.le.s32.totalorder 1, %s9
    %p112 = scmp.lt.s32.totalorder %s9, 3
    %p113 = pnand %p111, %p112
    %p114 = pneg %p113
    // Predicated region
    $region9: #{tpu_custom_call.1} parent=5 // pred_check
      _
    $region10: #{tpu_custom_call.1} parent=5 // pred_check_branch
      %116 = sbr.rel (%p113) target = $region12
    $region11: #{tpu_custom_call.1} parent=5 // pred_region
      %s117 = ssub.s32 %s9, 1
      // Predicated region
      $region13: #{tpu_custom_call.1} parent=11 // pred_check
        %p118 = pneg %p56
      $region14: #{tpu_custom_call.1} parent=11 // pred_check_branch
        %120 = sbr.rel (%p118) target = $region16
      $region15: #{tpu_custom_call.1} parent=11 // pred_region
        _
      $region16: #{tpu_custom_call.1} parent=11 // pred_fallthru
        _
      // Predicated region
      $region17: #{tpu_custom_call.1} parent=11 // pred_check
        %p121 = pneg %p77
      $region18: #{tpu_custom_call.1} parent=11 // pred_check_branch
        %123 = sbr.rel (%p121) target = $region20
      $region19: #{tpu_custom_call.1} parent=11 // pred_region
        _
      $region20: #{tpu_custom_call.1} parent=11 // pred_fallthru
        _
    $region12: #{tpu_custom_call.1} parent=5 // pred_fallthru
      _
    %p124 = scmp.lt.s32.totalorder %s9, 2
    // Predicated region
    $region21: #{tpu_custom_call.1} parent=5 // pred_check
      %p125 = pneg %p124
    $region22: #{tpu_custom_call.1} parent=5 // pred_check_branch
      %127 = sbr.rel (%p125) target = $region24
    $region23: #{tpu_custom_call.1} parent=5 // pred_region
      // Predicated region
      $region25: #{tpu_custom_call.1} parent=23 // pred_check
        %p128 = pneg %p29
      $region26: #{tpu_custom_call.1} parent=23 // pred_check_branch
        %130 = sbr.rel (%p128) target = $region28
      $region27: #{tpu_custom_call.1} parent=23 // pred_region
        %p131 = scmp.lt.s32.totalorder %s9, 1
        %s132 = scalar_select %p131, %s9, 1
        %s133 = smul.addr %s132, 170
        %s134 = smul.addr %s133, 8
        %s135 = scalar_lea.vmem %s0, %s134
      $region28: #{tpu_custom_call.1} parent=23 // pred_fallthru
        _
    $region24: #{tpu_custom_call.1} parent=5 // pred_fallthru
      _
    %p136 = scmp.le.s32.totalorder 1, %s9
    %p137 = scmp.lt.s32.totalorder %s9, 3
    %p138 = pnand %p136, %p137
    %p139 = pneg %p138
    // Predicated region
    $region29: #{tpu_custom_call.1} parent=5 // pred_check
      _
    $region30: #{tpu_custom_call.1} parent=5 // pred_check_branch
      %141 = sbr.rel (%p138) target = $region32
    $region31: #{tpu_custom_call.1} parent=5 // pred_region
      %s142 = ssub.s32 %s9, 1
      %p143 = scmp.lt.s32.totalorder %s14, 1
      %s144 = scalar_select %p143, %s14, 1
      %s145 = smul.addr %s144, 170
      %s146 = smul.addr %s145, 8
      %s147 = scalar_lea.vmem %s0, %s146
      %p148 = pneg %p35
      %p149 = pneg %p32
      %p150 = pneg %p56
      %p151 = pneg %p53
      %p152 = pneg %p77
      %p153 = pneg %p74
      %p154 = pneg %p103
      %p155 = pneg %p100
      %p156 = scmp.lt.s32.totalorder %s14, 1
      %s157 = scalar_select %p156, %s14, 1
      %s158 = smul.addr %s157, 128
      %s159 = smul.addr %s158, 8
      %s160 = scalar_lea.vmem %s3, %s159
      %p161 = scmp.lt.s32.totalorder %s14, 1
      %s162 = scalar_select %p161, %s14, 1
      %s163 = smul.addr %s162, 170
      %s164 = smul.addr %s163, 8
      %s165 = scalar_lea.vmem %s0, %s164
      %p166 = scmp.lt.s32.totalorder %s14, 1
      %s167 = scalar_select %p166, %s14, 1
      %s168 = smul.addr %s167, 128
      %s169 = smul.addr %s168, 8
      %s170 = scalar_lea.vmem %s3, %s169
      %v172 = vld [vmem:[%s2] sm:$0x1]
      %v173 = vld [vmem:[%s165] sm:$0xff]
      %v174 = vld [vmem:[%s165 + $0x8] sm:$0xff]
      %v175 = vld [vmem:[%s165 + $0x10] sm:$0xff]
      %v176 = vld [vmem:[%s165 + $0x18] sm:$0xff]
      %v177 = vld [vmem:[%s165 + $0x28] sm:$0xff]
      %v178 = vld [vmem:[%s165 + $0x30] sm:$0xff]
      %v179 = vld [vmem:[%s165 + $0x38] sm:$0xff]
      %v180 = vld [vmem:[%s165 + $0x40] sm:$0xff]
      %v181 = vld [vmem:[%s165 + $0x50] sm:$0xff]
      %v182 = vld [vmem:[%s165 + $0x58] sm:$0xff]
      %v183 = vld [vmem:[%s165 + $0x60] sm:$0xff]
      %v184 = vld [vmem:[%s165 + $0x68] sm:$0xff]
      %v185 = vld [vmem:[%s165 + $0x78] sm:$0xff]
      %v186 = vld [vmem:[%s165 + $0x80] sm:$0xff]
      %v187 = vld [vmem:[%s165 + $0x88] sm:$0xff]
      %v188 = vld [vmem:[%s165 + $0x90] sm:$0xff]
      %v189 = vld [vmem:[%s165 + $0xa0] sm:$0xff]
      %v190 = vld [vmem:[%s165 + $0xa8] sm:$0xff]
      %v191 = vld [vmem:[%s165 + $0xb0] sm:$0xff]
      %v192 = vld [vmem:[%s165 + $0xb8] sm:$0xff]
      %v193 = vld [vmem:[%s165 + $0xc8] sm:$0xff]
      %v194 = vld [vmem:[%s165 + $0xd0] sm:$0xff]
      %v195 = vld [vmem:[%s165 + $0xd8] sm:$0xff]
      %v196 = vld [vmem:[%s165 + $0xe0] sm:$0xff]
      %v197 = vld [vmem:[%s165 + $0xf0] sm:$0xff]
      %v198 = vld [vmem:[%s165 + $0xf8] sm:$0xff]
      %v199 = vld [vmem:[%s165 + $0x100] sm:$0xff]
      %v200 = vld [vmem:[%s165 + $0x108] sm:$0xff]
      %v201 = vld [vmem:[%s165 + $0x118] sm:$0xff]
      %v202 = vld [vmem:[%s165 + $0x120] sm:$0xff]
      %v203 = vld [vmem:[%s165 + $0x128] sm:$0xff]
      %v204 = vld [vmem:[%s165 + $0x130] sm:$0xff]
      %v205 = vpack.c.bf16 %v174, %v173
      %v206 = vpack.c.bf16 %v176, %v175
      %v207 = vpack.c.bf16 %v178, %v177
      %v208 = vpack.c.bf16 %v180, %v179
      %v209 = vpack.c.bf16 %v182, %v181
      %v210 = vpack.c.bf16 %v184, %v183
      %v211 = vpack.c.bf16 %v186, %v185
      %v212 = vpack.c.bf16 %v188, %v187
      %v213 = vpack.c.bf16 %v190, %v189
      %v214 = vpack.c.bf16 %v192, %v191
      %v215 = vpack.c.bf16 %v194, %v193
      %v216 = vpack.c.bf16 %v196, %v195
      %v217 = vpack.c.bf16 %v198, %v197
      %v218 = vpack.c.bf16 %v200, %v199
      %v219 = vpack.c.bf16 %v202, %v201
      %v220 = vpack.c.bf16 %v204, %v203
      %v221 = vld [vmem:[%s1] sm:$0x3]
      %v222 = vld [vmem:[%s165 + $0x1] sm:$0xff]
      %v223 = vld [vmem:[%s165 + $0x9] sm:$0xff]
      %v224 = vld [vmem:[%s165 + $0x11] sm:$0xff]
      %v225 = vld [vmem:[%s165 + $0x19] sm:$0xff]
      %v226 = vld [vmem:[%s165 + $0x29] sm:$0xff]
      %v227 = vld [vmem:[%s165 + $0x31] sm:$0xff]
      %v228 = vld [vmem:[%s165 + $0x39] sm:$0xff]
      %v229 = vld [vmem:[%s165 + $0x41] sm:$0xff]
      %v230 = vld [vmem:[%s165 + $0x51] sm:$0xff]
      %v231 = vld [vmem:[%s165 + $0x59] sm:$0xff]
      %v232 = vld [vmem:[%s165 + $0x61] sm:$0xff]
      %v233 = vld [vmem:[%s165 + $0x69] sm:$0xff]
      %v234 = vld [vmem:[%s165 + $0x79] sm:$0xff]
      %v235 = vld [vmem:[%s165 + $0x81] sm:$0xff]
      %v236 = vld [vmem:[%s165 + $0x89] sm:$0xff]
      %v237 = vld [vmem:[%s165 + $0x91] sm:$0xff]
      %v238 = vld [vmem:[%s165 + $0xa1] sm:$0xff]
      %v239 = vld [vmem:[%s165 + $0xa9] sm:$0xff]
      %v240 = vld [vmem:[%s165 + $0xb1] sm:$0xff]
      %v241 = vld [vmem:[%s165 + $0xb9] sm:$0xff]
      %v242 = vld [vmem:[%s165 + $0xc9] sm:$0xff]
      %v243 = vld [vmem:[%s165 + $0xd1] sm:$0xff]
      %v244 = vld [vmem:[%s165 + $0xd9] sm:$0xff]
      %v245 = vld [vmem:[%s165 + $0xe1] sm:$0xff]
      %v246 = vld [vmem:[%s165 + $0xf1] sm:$0xff]
      %v247 = vld [vmem:[%s165 + $0xf9] sm:$0xff]
      %v248 = vld [vmem:[%s165 + $0x101] sm:$0xff]
      %v249 = vld [vmem:[%s165 + $0x109] sm:$0xff]
      %v250 = vld [vmem:[%s165 + $0x119] sm:$0xff]
      %v251 = vld [vmem:[%s165 + $0x121] sm:$0xff]
      %v252 = vld [vmem:[%s165 + $0x129] sm:$0xff]
      %v253 = vld [vmem:[%s165 + $0x131] sm:$0xff]
      %v254 = vpack.c.bf16 %v223, %v222
      %v255 = vpack.c.bf16 %v225, %v224
      %v256 = vpack.c.bf16 %v227, %v226
      %v257 = vpack.c.bf16 %v229, %v228
      %v258 = vpack.c.bf16 %v231, %v230
      %v259 = vpack.c.bf16 %v233, %v232
      %v260 = vpack.c.bf16 %v235, %v234
      %v261 = vpack.c.bf16 %v237, %v236
      %v262 = vpack.c.bf16 %v239, %v238
      %v263 = vpack.c.bf16 %v241, %v240
      %v264 = vpack.c.bf16 %v243, %v242
      %v265 = vpack.c.bf16 %v245, %v244
      %v266 = vpack.c.bf16 %v247, %v246
      %v267 = vpack.c.bf16 %v249, %v248
      %v268 = vpack.c.bf16 %v251, %v250
      %v269 = vpack.c.bf16 %v253, %v252
      %s270 = scalar_lea.vmem %s1, 2
      %v271 = vld [vmem:[%s270] sm:$0x3]
      %vm272 = vcmask 23552
      %v274 = vsel %vm272, %v254, 0
      %v277 = vsel %vm272, %v255, 0
      %v280 = vsel %vm272, %v256, 0
      %v283 = vsel %vm272, %v257, 0
      %v286 = vsel %vm272, %v258, 0
      %v289 = vsel %vm272, %v259, 0
      %v292 = vsel %vm272, %v260, 0
      %v295 = vsel %vm272, %v261, 0
      %v298 = vsel %vm272, %v262, 0
      %v301 = vsel %vm272, %v263, 0
      %v304 = vsel %vm272, %v264, 0
      %v307 = vsel %vm272, %v265, 0
      %v310 = vsel %vm272, %v266, 0
      %v313 = vsel %vm272, %v267, 0
      %v316 = vsel %vm272, %v268, 0
      %v319 = vsel %vm272, %v269, 0
      %vm321 = vcmask 1040384
      %vm322 = vcmask 1041408
      %v323 = vsel %vm321, 4294967295, 65535
      %v324 = vsel %vm322, %v323, 0
      %v326 = vand.u32 %v271, %v324
      %328 = vmatprep.subr.bf16.mxu0 0
      %329 = vmatpush1.bf16.msra.mxu0 %v326
      %330 = vmatprep.subr.bf16.mxu0 0
      %331 = vmatpush1.bf16.msra.mxu0 0
      %332 = vmatprep.subr.bf16.mxu0 0
      %333 = vmatpush1.bf16.msra.mxu0 0
      %334 = vmatprep.subr.bf16.mxu0 0
      %335 = vmatpush1.bf16.msra.mxu0 0
      %336 = vmatprep.subr.bf16.mxu0 0
      %337 = vmatpush1.bf16.msra.mxu0 0
      %338 = vmatprep.subr.bf16.mxu0 0
      %339 = vmatpush1.bf16.msra.mxu0 0
      %340 = vmatprep.subr.bf16.mxu0 0
      %341 = vmatpush1.bf16.msra.mxu0 0
      %342 = vmatprep.subr.bf16.mxu0 0
      %343 = vmatpush1.bf16.msra.mxu0 0
      %344 = vmatprep.subr.bf16.mxu0 0
      %345 = vmatpush1.bf16.msra.mxu0 0
      %346 = vmatprep.subr.bf16.mxu0 0
      %347 = vmatpush1.bf16.msra.mxu0 0
      %348 = vmatprep.subr.bf16.mxu0 0
      %349 = vmatpush1.bf16.msra.mxu0 0
      %350 = vmatprep.subr.bf16.mxu0 0
      %351 = vmatpush1.bf16.msra.mxu0 0
      %352 = vmatprep.subr.bf16.mxu0 0
      %353 = vmatpush1.bf16.msra.mxu0 0
      %354 = vmatprep.subr.bf16.mxu0 0
      %355 = vmatpush1.bf16.msra.mxu0 0
      %356 = vmatprep.subr.bf16.mxu0 0
      %357 = vmatpush1.bf16.msra.mxu0 0
      %358 = vmatprep.subr.bf16.mxu0 0
      %359 = vmatpush1.bf16.msra.mxu0 0
      %360 = vmatprep.mubr.bf16.mxu0 0
      %361 = vmatmul.mubr.bf16.gmra.mrb[0].mxu0 %v274
      %v362 = vpop.f32.mrb[0].mxu0
      %v363 = vadd.f32 0.0, %v362
      %v364 = vpop.f32.mrb[0].mxu0
      %v365 = vpop.f32.mrb[0].mxu0
      %v366 = vadd.f32 0.0, %v365
      %v367 = vpop.f32.mrb[0].mxu0
      %368 = vmatprep.mubr.bf16.mxu0 0
      %369 = vmatmul.mubr.bf16.gmra.mrb[0].mxu0 %v277
      %v370 = vpop.f32.mrb[0].mxu0
      %v371 = vadd.f32 0.0, %v370
      %v372 = vpop.f32.mrb[0].mxu0
      %v373 = vpop.f32.mrb[0].mxu0
      %v374 = vadd.f32 0.0, %v373
      %v375 = vpop.f32.mrb[0].mxu0
      %376 = vmatprep.mubr.bf16.mxu0 0
      %377 = vmatmul.mubr.bf16.gmra.mrb[0].mxu0 %v280
      %v378 = vpop.f32.mrb[0].mxu0
      %v379 = vadd.f32 0.0, %v378
      %v380 = vpop.f32.mrb[0].mxu0
      %v381 = vpop.f32.mrb[0].mxu0
      %v382 = vadd.f32 0.0, %v381
      %v383 = vpop.f32.mrb[0].mxu0
      %384 = vmatprep.mubr.bf16.mxu0 0
      %385 = vmatmul.mubr.bf16.gmra.mrb[0].mxu0 %v283
      %v386 = vpop.f32.mrb[0].mxu0
      %v387 = vadd.f32 0.0, %v386
      %v388 = vpop.f32.mrb[0].mxu0
      %v389 = vpop.f32.mrb[0].mxu0
      %v390 = vadd.f32 0.0, %v389
      %v391 = vpop.f32.mrb[0].mxu0
      %392 = vmatprep.mubr.bf16.mxu0 0
      %393 = vmatmul.mubr.bf16.gmra.mrb[0].mxu0 %v286
      %v394 = vpop.f32.mrb[0].mxu0
      %v395 = vadd.f32 0.0, %v394
      %v396 = vpop.f32.mrb[0].mxu0
      %v397 = vpop.f32.mrb[0].mxu0
      %v398 = vadd.f32 0.0, %v397
      %v399 = vpop.f32.mrb[0].mxu0
      %400 = vmatprep.mubr.bf16.mxu0 0
      %401 = vmatmul.mubr.bf16.gmra.mrb[0].mxu0 %v289
      %v402 = vpop.f32.mrb[0].mxu0
      %v403 = vadd.f32 0.0, %v402
      %v404 = vpop.f32.mrb[0].mxu0
      %v405 = vpop.f32.mrb[0].mxu0
      %v406 = vadd.f32 0.0, %v405
      %v407 = vpop.f32.mrb[0].mxu0
      %408 = vmatprep.mubr.bf16.mxu0 0
      %409 = vmatmul.mubr.bf16.gmra.mrb[0].mxu0 %v292
      %v410 = vpop.f32.mrb[0].mxu0
      %v411 = vadd.f32 0.0, %v410
      %v412 = vpop.f32.mrb[0].mxu0
      %v413 = vpop.f32.mrb[0].mxu0
      %v414 = vadd.f32 0.0, %v413
      %v415 = vpop.f32.mrb[0].mxu0
      %416 = vmatprep.mubr.bf16.mxu0 0
      %417 = vmatmul.mubr.bf16.gmra.mrb[0].mxu0 %v295
      %v418 = vpop.f32.mrb[0].mxu0
      %v419 = vadd.f32 0.0, %v418
      %v420 = vpop.f32.mrb[0].mxu0
      %v421 = vpop.f32.mrb[0].mxu0
      %v422 = vadd.f32 0.0, %v421
      %v423 = vpop.f32.mrb[0].mxu0
      %424 = vmatprep.mubr.bf16.mxu0 0
      %425 = vmatmul.mubr.bf16.gmra.mrb[0].mxu0 %v298
      %v426 = vpop.f32.mrb[0].mxu0
      %v427 = vadd.f32 0.0, %v426
      %v428 = vpop.f32.mrb[0].mxu0
      %v429 = vpop.f32.mrb[0].mxu0
      %v430 = vadd.f32 0.0, %v429
      %v431 = vpop.f32.mrb[0].mxu0
      %432 = vmatprep.mubr.bf16.mxu0 0
      %433 = vmatmul.mubr.bf16.gmra.mrb[0].mxu0 %v301
      %v434 = vpop.f32.mrb[0].mxu0
      %v435 = vadd.f32 0.0, %v434
      %v436 = vpop.f32.mrb[0].mxu0
      %v437 = vpop.f32.mrb[0].mxu0
      %v438 = vadd.f32 0.0, %v437
      %v439 = vpop.f32.mrb[0].mxu0
      %440 = vmatprep.mubr.bf16.mxu0 0
      %441 = vmatmul.mubr.bf16.gmra.mrb[0].mxu0 %v304
      %v442 = vpop.f32.mrb[0].mxu0
      %v443 = vadd.f32 0.0, %v442
      %v444 = vpop.f32.mrb[0].mxu0
      %v445 = vpop.f32.mrb[0].mxu0
      %v446 = vadd.f32 0.0, %v445
      %v447 = vpop.f32.mrb[0].mxu0
      %448 = vmatprep.mubr.bf16.mxu0 0
      %449 = vmatmul.mubr.bf16.gmra.mrb[0].mxu0 %v307
      %v450 = vpop.f32.mrb[0].mxu0
      %v451 = vadd.f32 0.0, %v450
      %v452 = vpop.f32.mrb[0].mxu0
      %v453 = vpop.f32.mrb[0].mxu0
      %v454 = vadd.f32 0.0, %v453
      %v455 = vpop.f32.mrb[0].mxu0
      %456 = vmatprep.mubr.bf16.mxu0 0
      %457 = vmatmul.mubr.bf16.gmra.mrb[0].mxu0 %v310
      %v458 = vpop.f32.mrb[0].mxu0
      %v459 = vadd.f32 0.0, %v458
      %v460 = vpop.f32.mrb[0].mxu0
      %v461 = vpop.f32.mrb[0].mxu0
      %v462 = vadd.f32 0.0, %v461
      %v463 = vpop.f32.mrb[0].mxu0
      %464 = vmatprep.mubr.bf16.mxu0 0
      %465 = vmatmul.mubr.bf16.gmra.mrb[0].mxu0 %v313
      %v466 = vpop.f32.mrb[0].mxu0
      %v467 = vadd.f32 0.0, %v466
      %v468 = vpop.f32.mrb[0].mxu0
      %v469 = vpop.f32.mrb[0].mxu0
      %v470 = vadd.f32 0.0, %v469
      %v471 = vpop.f32.mrb[0].mxu0
      %472 = vmatprep.mubr.bf16.mxu0 0
      %473 = vmatmul.mubr.bf16.gmra.mrb[0].mxu0 %v316
      %v474 = vpop.f32.mrb[0].mxu0
      %v475 = vadd.f32 0.0, %v474
      %v476 = vpop.f32.mrb[0].mxu0
      %v477 = vpop.f32.mrb[0].mxu0
      %v478 = vadd.f32 0.0, %v477
      %v479 = vpop.f32.mrb[0].mxu0
      %480 = vmatprep.mubr.bf16.mxu0 0
      %481 = vmatmul.mubr.bf16.gmra.mrb[0].mxu0 %v319
      %v482 = vpop.f32.mrb[0].mxu0
      %v483 = vadd.f32 0.0, %v482
      %v484 = vpop.f32.mrb[0].mxu0
      %v485 = vpop.f32.mrb[0].mxu0
      %v486 = vadd.f32 0.0, %v485
      %v487 = vpop.f32.mrb[0].mxu0
      %488 = vdwg.mxu0
      %v490 = vsel %vm272, %v205, 0
      %v493 = vsel %vm272, %v206, 0
      %v496 = vsel %vm272, %v207, 0
      %v499 = vsel %vm272, %v208, 0
      %v502 = vsel %vm272, %v209, 0
      %v505 = vsel %vm272, %v210, 0
      %v508 = vsel %vm272, %v211, 0
      %v511 = vsel %vm272, %v212, 0
      %v514 = vsel %vm272, %v213, 0
      %v517 = vsel %vm272, %v214, 0
      %v520 = vsel %vm272, %v215, 0
      %v523 = vsel %vm272, %v216, 0
      %v526 = vsel %vm272, %v217, 0
      %v529 = vsel %vm272, %v218, 0
      %v532 = vsel %vm272, %v219, 0
      %v535 = vsel %vm272, %v220, 0
      %v538 = vand.u32 %v221, %v324
      %540 = vmatprep.subr.bf16.mxu0 0
      %541 = vmatpush1.bf16.msra.mxu0 %v538
      %542 = vmatprep.subr.bf16.mxu0 0
      %543 = vmatpush1.bf16.msra.mxu0 0
      %544 = vmatprep.subr.bf16.mxu0 0
      %545 = vmatpush1.bf16.msra.mxu0 0
      %546 = vmatprep.subr.bf16.mxu0 0
      %547 = vmatpush1.bf16.msra.mxu0 0
      %548 = vmatprep.subr.bf16.mxu0 0
      %549 = vmatpush1.bf16.msra.mxu0 0
      %550 = vmatprep.subr.bf16.mxu0 0
      %551 = vmatpush1.bf16.msra.mxu0 0
      %552 = vmatprep.subr.bf16.mxu0 0
      %553 = vmatpush1.bf16.msra.mxu0 0
      %554 = vmatprep.subr.bf16.mxu0 0
      %555 = vmatpush1.bf16.msra.mxu0 0
      %556 = vmatprep.subr.bf16.mxu0 0
      %557 = vmatpush1.bf16.msra.mxu0 0
      %558 = vmatprep.subr.bf16.mxu0 0
      %559 = vmatpush1.bf16.msra.mxu0 0
      %560 = vmatprep.subr.bf16.mxu0 0
      %561 = vmatpush1.bf16.msra.mxu0 0
      %562 = vmatprep.subr.bf16.mxu0 0
      %563 = vmatpush1.bf16.msra.mxu0 0
      %564 = vmatprep.subr.bf16.mxu0 0
      %565 = vmatpush1.bf16.msra.mxu0 0
      %566 = vmatprep.subr.bf16.mxu0 0
      %567 = vmatpush1.bf16.msra.mxu0 0
      %568 = vmatprep.subr.bf16.mxu0 0
      %569 = vmatpush1.bf16.msra.mxu0 0
      %570 = vmatprep.subr.bf16.mxu0 0
      %571 = vmatpush1.bf16.msra.mxu0 0
      %572 = vmatprep.mubr.bf16.mxu0 0
      %573 = vmatmul.mubr.bf16.gmra.mrb[0].mxu0 %v490
      %v574 = vpop.f32.mrb[0].mxu0
      %v575 = vadd.f32 %v363, %v574
      %v576 = vpop.f32.mrb[0].mxu0
      %v577 = vpop.f32.mrb[0].mxu0
      %v578 = vadd.f32 %v366, %v577
      %v579 = vpop.f32.mrb[0].mxu0
      %580 = vmatprep.mubr.bf16.mxu0 0
      %581 = vmatmul.mubr.bf16.gmra.mrb[0].mxu0 %v493
      %v582 = vpop.f32.mrb[0].mxu0
      %v583 = vadd.f32 %v371, %v582
      %v584 = vpop.f32.mrb[0].mxu0
      %v585 = vpop.f32.mrb[0].mxu0
      %v586 = vadd.f32 %v374, %v585
      %v587 = vpop.f32.mrb[0].mxu0
      %588 = vmatprep.mubr.bf16.mxu0 0
      %589 = vmatmul.mubr.bf16.gmra.mrb[0].mxu0 %v496
      %v590 = vpop.f32.mrb[0].mxu0
      %v591 = vadd.f32 %v379, %v590
      %v592 = vpop.f32.mrb[0].mxu0
      %v593 = vpop.f32.mrb[0].mxu0
      %v594 = vadd.f32 %v382, %v593
      %v595 = vpop.f32.mrb[0].mxu0
      %596 = vmatprep.mubr.bf16.mxu0 0
      %597 = vmatmul.mubr.bf16.gmra.mrb[0].mxu0 %v499
      %v598 = vpop.f32.mrb[0].mxu0
      %v599 = vadd.f32 %v387, %v598
      %v600 = vpop.f32.mrb[0].mxu0
      %v601 = vpop.f32.mrb[0].mxu0
      %v602 = vadd.f32 %v390, %v601
      %v603 = vpop.f32.mrb[0].mxu0
      %604 = vmatprep.mubr.bf16.mxu0 0
      %605 = vmatmul.mubr.bf16.gmra.mrb[0].mxu0 %v502
      %v606 = vpop.f32.mrb[0].mxu0
      %v607 = vadd.f32 %v395, %v606
      %v608 = vpop.f32.mrb[0].mxu0
      %v609 = vpop.f32.mrb[0].mxu0
      %v610 = vadd.f32 %v398, %v609
      %v611 = vpop.f32.mrb[0].mxu0
      %612 = vmatprep.mubr.bf16.mxu0 0
      %613 = vmatmul.mubr.bf16.gmra.mrb[0].mxu0 %v505
      %v614 = vpop.f32.mrb[0].mxu0
      %v615 = vadd.f32 %v403, %v614
      %v616 = vpop.f32.mrb[0].mxu0
      %v617 = vpop.f32.mrb[0].mxu0
      %v618 = vadd.f32 %v406, %v617
      %v619 = vpop.f32.mrb[0].mxu0
      %620 = vmatprep.mubr.bf16.mxu0 0
      %621 = vmatmul.mubr.bf16.gmra.mrb[0].mxu0 %v508
      %v622 = vpop.f32.mrb[0].mxu0
      %v623 = vadd.f32 %v411, %v622
      %v624 = vpop.f32.mrb[0].mxu0
      %v625 = vpop.f32.mrb[0].mxu0
      %v626 = vadd.f32 %v414, %v625
      %v627 = vpop.f32.mrb[0].mxu0
      %628 = vmatprep.mubr.bf16.mxu0 0
      %629 = vmatmul.mubr.bf16.gmra.mrb[0].mxu0 %v511
      %v630 = vpop.f32.mrb[0].mxu0
      %v631 = vadd.f32 %v419, %v630
      %v632 = vpop.f32.mrb[0].mxu0
      %v633 = vpop.f32.mrb[0].mxu0
      %v634 = vadd.f32 %v422, %v633
      %v635 = vpop.f32.mrb[0].mxu0
      %636 = vmatprep.mubr.bf16.mxu0 0
      %637 = vmatmul.mubr.bf16.gmra.mrb[0].mxu0 %v514
      %v638 = vpop.f32.mrb[0].mxu0
      %v639 = vadd.f32 %v427, %v638
      %v640 = vpop.f32.mrb[0].mxu0
      %v641 = vpop.f32.mrb[0].mxu0
      %v642 = vadd.f32 %v430, %v641
      %v643 = vpop.f32.mrb[0].mxu0
      %644 = vmatprep.mubr.bf16.mxu0 0
      %645 = vmatmul.mubr.bf16.gmra.mrb[0].mxu0 %v517
      %v646 = vpop.f32.mrb[0].mxu0
      %v647 = vadd.f32 %v435, %v646
      %v648 = vpop.f32.mrb[0].mxu0
      %v649 = vpop.f32.mrb[0].mxu0
      %v650 = vadd.f32 %v438, %v649
      %v651 = vpop.f32.mrb[0].mxu0
      %652 = vmatprep.mubr.bf16.mxu0 0
      %653 = vmatmul.mubr.bf16.gmra.mrb[0].mxu0 %v520
      %v654 = vpop.f32.mrb[0].mxu0
      %v655 = vadd.f32 %v443, %v654
      %v656 = vpop.f32.mrb[0].mxu0
      %v657 = vpop.f32.mrb[0].mxu0
      %v658 = vadd.f32 %v446, %v657
      %v659 = vpop.f32.mrb[0].mxu0
      %660 = vmatprep.mubr.bf16.mxu0 0
      %661 = vmatmul.mubr.bf16.gmra.mrb[0].mxu0 %v523
      %v662 = vpop.f32.mrb[0].mxu0
      %v663 = vadd.f32 %v451, %v662
      %v664 = vpop.f32.mrb[0].mxu0
      %v665 = vpop.f32.mrb[0].mxu0
      %v666 = vadd.f32 %v454, %v665
      %v667 = vpop.f32.mrb[0].mxu0
      %668 = vmatprep.mubr.bf16.mxu0 0
      %669 = vmatmul.mubr.bf16.gmra.mrb[0].mxu0 %v526
      %v670 = vpop.f32.mrb[0].mxu0
      %v671 = vadd.f32 %v459, %v670
      %v672 = vpop.f32.mrb[0].mxu0
      %v673 = vpop.f32.mrb[0].mxu0
      %v674 = vadd.f32 %v462, %v673
      %v675 = vpop.f32.mrb[0].mxu0
      %676 = vmatprep.mubr.bf16.mxu0 0
      %677 = vmatmul.mubr.bf16.gmra.mrb[0].mxu0 %v529
      %v678 = vpop.f32.mrb[0].mxu0
      %v679 = vadd.f32 %v467, %v678
      %v680 = vpop.f32.mrb[0].mxu0
      %v681 = vpop.f32.mrb[0].mxu0
      %v682 = vadd.f32 %v470, %v681
      %v683 = vpop.f32.mrb[0].mxu0
      %684 = vmatprep.mubr.bf16.mxu0 0
      %685 = vmatmul.mubr.bf16.gmra.mrb[0].mxu0 %v532
      %v686 = vpop.f32.mrb[0].mxu0
      %v687 = vadd.f32 %v475, %v686
      %v688 = vpop.f32.mrb[0].mxu0
      %v689 = vpop.f32.mrb[0].mxu0
      %v690 = vadd.f32 %v478, %v689
      %v691 = vpop.f32.mrb[0].mxu0
      %692 = vmatprep.mubr.bf16.mxu0 0
      %693 = vmatmul.mubr.bf16.gmra.mrb[0].mxu0 %v535
      %v694 = vpop.f32.mrb[0].mxu0
      %v695 = vadd.f32 %v483, %v694
      %v696 = vpop.f32.mrb[0].mxu0
      %v697 = vpop.f32.mrb[0].mxu0
      %v698 = vadd.f32 %v486, %v697
      %v699 = vpop.f32.mrb[0].mxu0
      %700 = vdwg.mxu0
      %v701 = vld [vmem:[%s165 + $0x2] sm:$0xff]
      %v702 = vld [vmem:[%s165 + $0xa] sm:$0xff]
      %v703 = vld [vmem:[%s165 + $0x12] sm:$0xff]
      %v704 = vld [vmem:[%s165 + $0x1a] sm:$0xff]
      %v705 = vld [vmem:[%s165 + $0x2a] sm:$0xff]
      %v706 = vld [vmem:[%s165 + $0x32] sm:$0xff]
      %v707 = vld [vmem:[%s165 + $0x3a] sm:$0xff]
      %v708 = vld [vmem:[%s165 + $0x42] sm:$0xff]
      %v709 = vld [vmem:[%s165 + $0x52] sm:$0xff]
      %v710 = vld [vmem:[%s165 + $0x5a] sm:$0xff]
      %v711 = vld [vmem:[%s165 + $0x62] sm:$0xff]
      %v712 = vld [vmem:[%s165 + $0x6a] sm:$0xff]
      %v713 = vld [vmem:[%s165 + $0x7a] sm:$0xff]
      %v714 = vld [vmem:[%s165 + $0x82] sm:$0xff]
      %v715 = vld [vmem:[%s165 + $0x8a] sm:$0xff]
      %v716 = vld [vmem:[%s165 + $0x92] sm:$0xff]
      %v717 = vld [vmem:[%s165 + $0xa2] sm:$0xff]
      %v718 = vld [vmem:[%s165 + $0xaa] sm:$0xff]
      %v719 = vld [vmem:[%s165 + $0xb2] sm:$0xff]
      %v720 = vld [vmem:[%s165 + $0xba] sm:$0xff]
      %v721 = vld [vmem:[%s165 + $0xca] sm:$0xff]
      %v722 = vld [vmem:[%s165 + $0xd2] sm:$0xff]
      %v723 = vld [vmem:[%s165 + $0xda] sm:$0xff]
      %v724 = vld [vmem:[%s165 + $0xe2] sm:$0xff]
      %v725 = vld [vmem:[%s165 + $0xf2] sm:$0xff]
      %v726 = vld [vmem:[%s165 + $0xfa] sm:$0xff]
      %v727 = vld [vmem:[%s165 + $0x102] sm:$0xff]
      %v728 = vld [vmem:[%s165 + $0x10a] sm:$0xff]
      %v729 = vld [vmem:[%s165 + $0x11a] sm:$0xff]
      %v730 = vld [vmem:[%s165 + $0x122] sm:$0xff]
      %v731 = vld [vmem:[%s165 + $0x12a] sm:$0xff]
      %v732 = vld [vmem:[%s165 + $0x132] sm:$0xff]
      %v733 = vpack.c.bf16 %v702, %v701
      %v734 = vpack.c.bf16 %v704, %v703
      %v735 = vpack.c.bf16 %v706, %v705
      %v736 = vpack.c.bf16 %v708, %v707
      %v737 = vpack.c.bf16 %v710, %v709
      %v738 = vpack.c.bf16 %v712, %v711
      %v739 = vpack.c.bf16 %v714, %v713
      %v740 = vpack.c.bf16 %v716, %v715
      %v741 = vpack.c.bf16 %v718, %v717
      %v742 = vpack.c.bf16 %v720, %v719
      %v743 = vpack.c.bf16 %v722, %v721
      %v744 = vpack.c.bf16 %v724, %v723
      %v745 = vpack.c.bf16 %v726, %v725
      %v746 = vpack.c.bf16 %v728, %v727
      %v747 = vpack.c.bf16 %v730, %v729
      %v748 = vpack.c.bf16 %v732, %v731
      %s749 = scalar_lea.vmem %s1, 4
      %v750 = vld [vmem:[%s749] sm:$0x3]
      %v752 = vsel %vm272, %v733, 0
      %v755 = vsel %vm272, %v734, 0
      %v758 = vsel %vm272, %v735, 0
      %v761 = vsel %vm272, %v736, 0
      %v764 = vsel %vm272, %v737, 0
      %v767 = vsel %vm272, %v738, 0
      %v770 = vsel %vm272, %v739, 0
      %v773 = vsel %vm272, %v740, 0
      %v776 = vsel %vm272, %v741, 0
      %v779 = vsel %vm272, %v742, 0
      %v782 = vsel %vm272, %v743, 0
      %v785 = vsel %vm272, %v744, 0
      %v788 = vsel %vm272, %v745, 0
      %v791 = vsel %vm272, %v746, 0
      %v794 = vsel %vm272, %v747, 0
      %v797 = vsel %vm272, %v748, 0
      %v800 = vand.u32 %v750, %v324
      %802 = vmatprep.subr.bf16.mxu0 0
      %803 = vmatpush1.bf16.msra.mxu0 %v800
      %804 = vmatprep.subr.bf16.mxu0 0
      %805 = vmatpush1.bf16.msra.mxu0 0
      %806 = vmatprep.subr.bf16.mxu0 0
      %807 = vmatpush1.bf16.msra.mxu0 0
      %808 = vmatprep.subr.bf16.mxu0 0
      %809 = vmatpush1.bf16.msra.mxu0 0
      %810 = vmatprep.subr.bf16.mxu0 0
      %811 = vmatpush1.bf16.msra.mxu0 0
      %812 = vmatprep.subr.bf16.mxu0 0
      %813 = vmatpush1.bf16.msra.mxu0 0
      %814 = vmatprep.subr.bf16.mxu0 0
      %815 = vmatpush1.bf16.msra.mxu0 0
      %816 = vmatprep.subr.bf16.mxu0 0
      %817 = vmatpush1.bf16.msra.mxu0 0
      %818 = vmatprep.subr.bf16.mxu0 0
      %819 = vmatpush1.bf16.msra.mxu0 0
      %820 = vmatprep.subr.bf16.mxu0 0
      %821 = vmatpush1.bf16.msra.mxu0 0
      %822 = vmatprep.subr.bf16.mxu0 0
      %823 = vmatpush1.bf16.msra.mxu0 0
      %824 = vmatprep.subr.bf16.mxu0 0
      %825 = vmatpush1.bf16.msra.mxu0 0
      %826 = vmatprep.subr.bf16.mxu0 0
      %827 = vmatpush1.bf16.msra.mxu0 0
      %828 = vmatprep.subr.bf16.mxu0 0
      %829 = vmatpush1.bf16.msra.mxu0 0
      %830 = vmatprep.subr.bf16.mxu0 0
      %831 = vmatpush1.bf16.msra.mxu0 0
      %832 = vmatprep.subr.bf16.mxu0 0
      %833 = vmatpush1.bf16.msra.mxu0 0
      %834 = vmatprep.mubr.bf16.mxu0 0
      %835 = vmatmul.mubr.bf16.gmra.mrb[0].mxu0 %v752
      %v836 = vpop.f32.mrb[0].mxu0
      %v837 = vadd.f32 0.0, %v836
      %v838 = vpop.f32.mrb[0].mxu0
      %v839 = vpop.f32.mrb[0].mxu0
      %v840 = vadd.f32 0.0, %v839
      %v841 = vpop.f32.mrb[0].mxu0
      %842 = vmatprep.mubr.bf16.mxu0 0
      %843 = vmatmul.mubr.bf16.gmra.mrb[0].mxu0 %v755
      %v844 = vpop.f32.mrb[0].mxu0
      %v845 = vadd.f32 0.0, %v844
      %v846 = vpop.f32.mrb[0].mxu0
      %v847 = vpop.f32.mrb[0].mxu0
      %v848 = vadd.f32 0.0, %v847
      %v849 = vpop.f32.mrb[0].mxu0
      %850 = vmatprep.mubr.bf16.mxu0 0
      %851 = vmatmul.mubr.bf16.gmra.mrb[0].mxu0 %v758
      %v852 = vpop.f32.mrb[0].mxu0
      %v853 = vadd.f32 0.0, %v852
      %v854 = vpop.f32.mrb[0].mxu0
      %v855 = vpop.f32.mrb[0].mxu0
      %v856 = vadd.f32 0.0, %v855
      %v857 = vpop.f32.mrb[0].mxu0
      %858 = vmatprep.mubr.bf16.mxu0 0
      %859 = vmatmul.mubr.bf16.gmra.mrb[0].mxu0 %v761
      %v860 = vpop.f32.mrb[0].mxu0
      %v861 = vadd.f32 0.0, %v860
      %v862 = vpop.f32.mrb[0].mxu0
      %v863 = vpop.f32.mrb[0].mxu0
      %v864 = vadd.f32 0.0, %v863
      %v865 = vpop.f32.mrb[0].mxu0
      %866 = vmatprep.mubr.bf16.mxu0 0
      %867 = vmatmul.mubr.bf16.gmra.mrb[0].mxu0 %v764
      %v868 = vpop.f32.mrb[0].mxu0
      %v869 = vadd.f32 0.0, %v868
      %v870 = vpop.f32.mrb[0].mxu0
      %v871 = vpop.f32.mrb[0].mxu0
      %v872 = vadd.f32 0.0, %v871
      %v873 = vpop.f32.mrb[0].mxu0
      %874 = vmatprep.mubr.bf16.mxu0 0
      %875 = vmatmul.mubr.bf16.gmra.mrb[0].mxu0 %v767
      %v876 = vpop.f32.mrb[0].mxu0
      %v877 = vadd.f32 0.0, %v876
      %v878 = vpop.f32.mrb[0].mxu0
      %v879 = vpop.f32.mrb[0].mxu0
      %v880 = vadd.f32 0.0, %v879
      %v881 = vpop.f32.mrb[0].mxu0
      %882 = vmatprep.mubr.bf16.mxu0 0
      %883 = vmatmul.mubr.bf16.gmra.mrb[0].mxu0 %v770
      %v884 = vpop.f32.mrb[0].mxu0
      %v885 = vadd.f32 0.0, %v884
      %v886 = vpop.f32.mrb[0].mxu0
      %v887 = vpop.f32.mrb[0].mxu0
      %v888 = vadd.f32 0.0, %v887
      %v889 = vpop.f32.mrb[0].mxu0
      %890 = vmatprep.mubr.bf16.mxu0 0
      %891 = vmatmul.mubr.bf16.gmra.mrb[0].mxu0 %v773
      %v892 = vpop.f32.mrb[0].mxu0
      %v893 = vadd.f32 0.0, %v892
      %v894 = vpop.f32.mrb[0].mxu0
      %v895 = vpop.f32.mrb[0].mxu0
      %v896 = vadd.f32 0.0, %v895
      %v897 = vpop.f32.mrb[0].mxu0
      %898 = vmatprep.mubr.bf16.mxu0 0
      %899 = vmatmul.mubr.bf16.gmra.mrb[0].mxu0 %v776
      %v900 = vpop.f32.mrb[0].mxu0
      %v901 = vadd.f32 0.0, %v900
      %v902 = vpop.f32.mrb[0].mxu0
      %v903 = vpop.f32.mrb[0].mxu0
      %v904 = vadd.f32 0.0, %v903
      %v905 = vpop.f32.mrb[0].mxu0
      %906 = vmatprep.mubr.bf16.mxu0 0
      %907 = vmatmul.mubr.bf16.gmra.mrb[0].mxu0 %v779
      %v908 = vpop.f32.mrb[0].mxu0
      %v909 = vadd.f32 0.0, %v908
      %v910 = vpop.f32.mrb[0].mxu0
      %v911 = vpop.f32.mrb[0].mxu0
      %v912 = vadd.f32 0.0, %v911
      %v913 = vpop.f32.mrb[0].mxu0
      %914 = vmatprep.mubr.bf16.mxu0 0
      %915 = vmatmul.mubr.bf16.gmra.mrb[0].mxu0 %v782
      %v916 = vpop.f32.mrb[0].mxu0
      %v917 = vadd.f32 0.0, %v916
      %v918 = vpop.f32.mrb[0].mxu0
      %v919 = vpop.f32.mrb[0].mxu0
      %v920 = vadd.f32 0.0, %v919
      %v921 = vpop.f32.mrb[0].mxu0
      %922 = vmatprep.mubr.bf16.mxu0 0
      %923 = vmatmul.mubr.bf16.gmra.mrb[0].mxu0 %v785
      %v924 = vpop.f32.mrb[0].mxu0
      %v925 = vadd.f32 0.0, %v924
      %v926 = vpop.f32.mrb[0].mxu0
      %v927 = vpop.f32.mrb[0].mxu0
      %v928 = vadd.f32 0.0, %v927
      %v929 = vpop.f32.mrb[0].mxu0
      %930 = vmatprep.mubr.bf16.mxu0 0
      %931 = vmatmul.mubr.bf16.gmra.mrb[0].mxu0 %v788
      %v932 = vpop.f32.mrb[0].mxu0
      %v933 = vadd.f32 0.0, %v932
      %v934 = vpop.f32.mrb[0].mxu0
      %v935 = vpop.f32.mrb[0].mxu0
      %v936 = vadd.f32 0.0, %v935
      %v937 = vpop.f32.mrb[0].mxu0
      %938 = vmatprep.mubr.bf16.mxu0 0
      %939 = vmatmul.mubr.bf16.gmra.mrb[0].mxu0 %v791
      %v940 = vpop.f32.mrb[0].mxu0
      %v941 = vadd.f32 0.0, %v940
      %v942 = vpop.f32.mrb[0].mxu0
      %v943 = vpop.f32.mrb[0].mxu0
      %v944 = vadd.f32 0.0, %v943
      %v945 = vpop.f32.mrb[0].mxu0
      %946 = vmatprep.mubr.bf16.mxu0 0
      %947 = vmatmul.mubr.bf16.gmra.mrb[0].mxu0 %v794
      %v948 = vpop.f32.mrb[0].mxu0
      %v949 = vadd.f32 0.0, %v948
      %v950 = vpop.f32.mrb[0].mxu0
      %v951 = vpop.f32.mrb[0].mxu0
      %v952 = vadd.f32 0.0, %v951
      %v953 = vpop.f32.mrb[0].mxu0
      %954 = vmatprep.mubr.bf16.mxu0 0
      %955 = vmatmul.mubr.bf16.gmra.mrb[0].mxu0 %v797
      %v956 = vpop.f32.mrb[0].mxu0
      %v957 = vadd.f32 0.0, %v956
      %v958 = vpop.f32.mrb[0].mxu0
      %v959 = vpop.f32.mrb[0].mxu0
      %v960 = vadd.f32 0.0, %v959
      %v961 = vpop.f32.mrb[0].mxu0
      %962 = vdwg.mxu0
      %v963 = vadd.f32 %v575, %v837
      %v964 = vadd.f32 %v578, %v840
      %v965 = vadd.f32 %v583, %v845
      %v966 = vadd.f32 %v586, %v848
      %v967 = vadd.f32 %v591, %v853
      %v968 = vadd.f32 %v594, %v856
      %v969 = vadd.f32 %v599, %v861
      %v970 = vadd.f32 %v602, %v864
      %v971 = vadd.f32 %v607, %v869
      %v972 = vadd.f32 %v610, %v872
      %v973 = vadd.f32 %v615, %v877
      %v974 = vadd.f32 %v618, %v880
      %v975 = vadd.f32 %v623, %v885
      %v976 = vadd.f32 %v626, %v888
      %v977 = vadd.f32 %v631, %v893
      %v978 = vadd.f32 %v634, %v896
      %v979 = vadd.f32 %v639, %v901
      %v980 = vadd.f32 %v642, %v904
      %v981 = vadd.f32 %v647, %v909
      %v982 = vadd.f32 %v650, %v912
      %v983 = vadd.f32 %v655, %v917
      %v984 = vadd.f32 %v658, %v920
      %v985 = vadd.f32 %v663, %v925
      %v986 = vadd.f32 %v666, %v928
      %v987 = vadd.f32 %v671, %v933
      %v988 = vadd.f32 %v674, %v936
      %v989 = vadd.f32 %v679, %v941
      %v990 = vadd.f32 %v682, %v944
      %v991 = vadd.f32 %v687, %v949
      %v992 = vadd.f32 %v690, %v952
      %v993 = vadd.f32 %v695, %v957
      %v994 = vadd.f32 %v698, %v960
      %s995 = scalar_lea.vmem %s165, 40
      %v996 = vld [vmem:[%s995] sm:$0xff]
      %v997 = vld [vmem:[%s995 + $0x8] sm:$0xff]
      %v998 = vld [vmem:[%s995 + $0x10] sm:$0xff]
      %v999 = vld [vmem:[%s995 + $0x18] sm:$0xff]
      %v1000 = vld [vmem:[%s995 + $0x28] sm:$0xff]
      %v1001 = vld [vmem:[%s995 + $0x30] sm:$0xff]
      %v1002 = vld [vmem:[%s995 + $0x38] sm:$0xff]
      %v1003 = vld [vmem:[%s995 + $0x40] sm:$0xff]
      %v1004 = vld [vmem:[%s995 + $0x50] sm:$0xff]
      %v1005 = vld [vmem:[%s995 + $0x58] sm:$0xff]
      %v1006 = vld [vmem:[%s995 + $0x60] sm:$0xff]
      %v1007 = vld [vmem:[%s995 + $0x68] sm:$0xff]
      %v1008 = vld [vmem:[%s995 + $0x78] sm:$0xff]
      %v1009 = vld [vmem:[%s995 + $0x80] sm:$0xff]
      %v1010 = vld [vmem:[%s995 + $0x88] sm:$0xff]
      %v1011 = vld [vmem:[%s995 + $0x90] sm:$0xff]
      %v1012 = vld [vmem:[%s995 + $0xa0] sm:$0xff]
      %v1013 = vld [vmem:[%s995 + $0xa8] sm:$0xff]
      %v1014 = vld [vmem:[%s995 + $0xb0] sm:$0xff]
      %v1015 = vld [vmem:[%s995 + $0xb8] sm:$0xff]
      %v1016 = vld [vmem:[%s995 + $0xc8] sm:$0xff]
      %v1017 = vld [vmem:[%s995 + $0xd0] sm:$0xff]
      %v1018 = vld [vmem:[%s995 + $0xd8] sm:$0xff]
      %v1019 = vld [vmem:[%s995 + $0xe0] sm:$0xff]
      %v1020 = vld [vmem:[%s995 + $0xf0] sm:$0xff]
      %v1021 = vld [vmem:[%s995 + $0xf8] sm:$0xff]
      %v1022 = vld [vmem:[%s995 + $0x100] sm:$0xff]
      %v1023 = vld [vmem:[%s995 + $0x108] sm:$0xff]
      %v1024 = vld [vmem:[%s995 + $0x118] sm:$0xff]
      %v1025 = vld [vmem:[%s995 + $0x120] sm:$0xff]
      %v1026 = vld [vmem:[%s995 + $0x128] sm:$0xff]
      %v1027 = vld [vmem:[%s995 + $0x130] sm:$0xff]
      %v1028 = vpack.c.bf16 %v997, %v996
      %v1029 = vpack.c.bf16 %v999, %v998
      %v1030 = vpack.c.bf16 %v1001, %v1000
      %v1031 = vpack.c.bf16 %v1003, %v1002
      %v1032 = vpack.c.bf16 %v1005, %v1004
      %v1033 = vpack.c.bf16 %v1007, %v1006
      %v1034 = vpack.c.bf16 %v1009, %v1008
      %v1035 = vpack.c.bf16 %v1011, %v1010
      %v1036 = vpack.c.bf16 %v1013, %v1012
      %v1037 = vpack.c.bf16 %v1015, %v1014
      %v1038 = vpack.c.bf16 %v1017, %v1016
      %v1039 = vpack.c.bf16 %v1019, %v1018
      %v1040 = vpack.c.bf16 %v1021, %v1020
      %v1041 = vpack.c.bf16 %v1023, %v1022
      %v1042 = vpack.c.bf16 %v1025, %v1024
      %v1043 = vpack.c.bf16 %v1027, %v1026
      %s1044 = scalar_lea.vmem %s1, 6
      %v1045 = vld [vmem:[%s1044] sm:$0x3]
      %v1047 = vsel %vm272, %v1028, 0
      %v1050 = vsel %vm272, %v1029, 0
      %v1053 = vsel %vm272, %v1030, 0
      %v1056 = vsel %vm272, %v1031, 0
      %v1059 = vsel %vm272, %v1032, 0
      %v1062 = vsel %vm272, %v1033, 0
      %v1065 = vsel %vm272, %v1034, 0
      %v1068 = vsel %vm272, %v1035, 0
      %v1071 = vsel %vm272, %v1036, 0
      %v1074 = vsel %vm272, %v1037, 0
      %v1077 = vsel %vm272, %v1038, 0
      %v1080 = vsel %vm272, %v1039, 0
      %v1083 = vsel %vm272, %v1040, 0
      %v1086 = vsel %vm272, %v1041, 0
      %v1089 = vsel %vm272, %v1042, 0
      %v1092 = vsel %vm272, %v1043, 0
      %v1095 = vand.u32 %v1045, %v324
      %1097 = vmatprep.subr.bf16.mxu0 0
      %1098 = vmatpush1.bf16.msra.mxu0 %v1095
      %1099 = vmatprep.subr.bf16.mxu0 0
      %1100 = vmatpush1.bf16.msra.mxu0 0
      %1101 = vmatprep.subr.bf16.mxu0 0
      %1102 = vmatpush1.bf16.msra.mxu0 0
      %1103 = vmatprep.subr.bf16.mxu0 0
      %1104 = vmatpush1.bf16.msra.mxu0 0
      %1105 = vmatprep.subr.bf16.mxu0 0
      %1106 = vmatpush1.bf16.msra.mxu0 0
      %1107 = vmatprep.subr.bf16.mxu0 0
      %1108 = vmatpush1.bf16.msra.mxu0 0
      %1109 = vmatprep.subr.bf16.mxu0 0
      %1110 = vmatpush1.bf16.msra.mxu0 0
      %1111 = vmatprep.subr.bf16.mxu0 0
      %1112 = vmatpush1.bf16.msra.mxu0 0
      %1113 = vmatprep.subr.bf16.mxu0 0
      %1114 = vmatpush1.bf16.msra.mxu0 0
      %1115 = vmatprep.subr.bf16.mxu0 0
      %1116 = vmatpush1.bf16.msra.mxu0 0
      %1117 = vmatprep.subr.bf16.mxu0 0
      %1118 = vmatpush1.bf16.msra.mxu0 0
      %1119 = vmatprep.subr.bf16.mxu0 0
      %1120 = vmatpush1.bf16.msra.mxu0 0
      %1121 = vmatprep.subr.bf16.mxu0 0
      %1122 = vmatpush1.bf16.msra.mxu0 0
      %1123 = vmatprep.subr.bf16.mxu0 0
      %1124 = vmatpush1.bf16.msra.mxu0 0
      %1125 = vmatprep.subr.bf16.mxu0 0
      %1126 = vmatpush1.bf16.msra.mxu0 0
      %1127 = vmatprep.subr.bf16.mxu0 0
      %1128 = vmatpush1.bf16.msra.mxu0 0
      %1129 = vmatprep.mubr.bf16.mxu0 0
      %1130 = vmatmul.mubr.bf16.gmra.mrb[0].mxu0 %v1047
      %v1131 = vpop.f32.mrb[0].mxu0
      %v1132 = vadd.f32 0.0, %v1131
      %v1133 = vpop.f32.mrb[0].mxu0
      %v1134 = vpop.f32.mrb[0].mxu0
      %v1135 = vadd.f32 0.0, %v1134
      %v1136 = vpop.f32.mrb[0].mxu0
      %1137 = vmatprep.mubr.bf16.mxu0 0
      %1138 = vmatmul.mubr.bf16.gmra.mrb[0].mxu0 %v1050
      %v1139 = vpop.f32.mrb[0].mxu0
      %v1140 = vadd.f32 0.0, %v1139
      %v1141 = vpop.f32.mrb[0].mxu0
      %v1142 = vpop.f32.mrb[0].mxu0
      %v1143 = vadd.f32 0.0, %v1142
      %v1144 = vpop.f32.mrb[0].mxu0
      %1145 = vmatprep.mubr.bf16.mxu0 0
      %1146 = vmatmul.mubr.bf16.gmra.mrb[0].mxu0 %v1053
      %v1147 = vpop.f32.mrb[0].mxu0
      %v1148 = vadd.f32 0.0, %v1147
      %v1149 = vpop.f32.mrb[0].mxu0
      %v1150 = vpop.f32.mrb[0].mxu0
      %v1151 = vadd.f32 0.0, %v1150
      %v1152 = vpop.f32.mrb[0].mxu0
      %1153 = vmatprep.mubr.bf16.mxu0 0
      %1154 = vmatmul.mubr.bf16.gmra.mrb[0].mxu0 %v1056
      %v1155 = vpop.f32.mrb[0].mxu0
      %v1156 = vadd.f32 0.0, %v1155
      %v1157 = vpop.f32.mrb[0].mxu0
      %v1158 = vpop.f32.mrb[0].mxu0
      %v1159 = vadd.f32 0.0, %v1158
      %v1160 = vpop.f32.mrb[0].mxu0
      %1161 = vmatprep.mubr.bf16.mxu0 0
      %1162 = vmatmul.mubr.bf16.gmra.mrb[0].mxu0 %v1059
      %v1163 = vpop.f32.mrb[0].mxu0
      %v1164 = vadd.f32 0.0, %v1163
      %v1165 = vpop.f32.mrb[0].mxu0
      %v1166 = vpop.f32.mrb[0].mxu0
      %v1167 = vadd.f32 0.0, %v1166
      %v1168 = vpop.f32.mrb[0].mxu0
      %1169 = vmatprep.mubr.bf16.mxu0 0
      %1170 = vmatmul.mubr.bf16.gmra.mrb[0].mxu0 %v1062
      %v1171 = vpop.f32.mrb[0].mxu0
      %v1172 = vadd.f32 0.0, %v1171
      %v1173 = vpop.f32.mrb[0].mxu0
      %v1174 = vpop.f32.mrb[0].mxu0
      %v1175 = vadd.f32 0.0, %v1174
      %v1176 = vpop.f32.mrb[0].mxu0
      %1177 = vmatprep.mubr.bf16.mxu0 0
      %1178 = vmatmul.mubr.bf16.gmra.mrb[0].mxu0 %v1065
      %v1179 = vpop.f32.mrb[0].mxu0
      %v1180 = vadd.f32 0.0, %v1179
      %v1181 = vpop.f32.mrb[0].mxu0
      %v1182 = vpop.f32.mrb[0].mxu0
      %v1183 = vadd.f32 0.0, %v1182
      %v1184 = vpop.f32.mrb[0].mxu0
      %1185 = vmatprep.mubr.bf16.mxu0 0
      %1186 = vmatmul.mubr.bf16.gmra.mrb[0].mxu0 %v1068
      %v1187 = vpop.f32.mrb[0].mxu0
      %v1188 = vadd.f32 0.0, %v1187
      %v1189 = vpop.f32.mrb[0].mxu0
      %v1190 = vpop.f32.mrb[0].mxu0
      %v1191 = vadd.f32 0.0, %v1190
      %v1192 = vpop.f32.mrb[0].mxu0
      %1193 = vmatprep.mubr.bf16.mxu0 0
      %1194 = vmatmul.mubr.bf16.gmra.mrb[0].mxu0 %v1071
      %v1195 = vpop.f32.mrb[0].mxu0
      %v1196 = vadd.f32 0.0, %v1195
      %v1197 = vpop.f32.mrb[0].mxu0
      %v1198 = vpop.f32.mrb[0].mxu0
      %v1199 = vadd.f32 0.0, %v1198
      %v1200 = vpop.f32.mrb[0].mxu0
      %1201 = vmatprep.mubr.bf16.mxu0 0
      %1202 = vmatmul.mubr.bf16.gmra.mrb[0].mxu0 %v1074
      %v1203 = vpop.f32.mrb[0].mxu0
      %v1204 = vadd.f32 0.0, %v1203
      %v1205 = vpop.f32.mrb[0].mxu0
      %v1206 = vpop.f32.mrb[0].mxu0
      %v1207 = vadd.f32 0.0, %v1206
      %v1208 = vpop.f32.mrb[0].mxu0
      %1209 = vmatprep.mubr.bf16.mxu0 0
      %1210 = vmatmul.mubr.bf16.gmra.mrb[0].mxu0 %v1077
      %v1211 = vpop.f32.mrb[0].mxu0
      %v1212 = vadd.f32 0.0, %v1211
      %v1213 = vpop.f32.mrb[0].mxu0
      %v1214 = vpop.f32.mrb[0].mxu0
      %v1215 = vadd.f32 0.0, %v1214
      %v1216 = vpop.f32.mrb[0].mxu0
      %1217 = vmatprep.mubr.bf16.mxu0 0
      %1218 = vmatmul.mubr.bf16.gmra.mrb[0].mxu0 %v1080
      %v1219 = vpop.f32.mrb[0].mxu0
      %v1220 = vadd.f32 0.0, %v1219
      %v1221 = vpop.f32.mrb[0].mxu0
      %v1222 = vpop.f32.mrb[0].mxu0
      %v1223 = vadd.f32 0.0, %v1222
      %v1224 = vpop.f32.mrb[0].mxu0
      %1225 = vmatprep.mubr.bf16.mxu0 0
      %1226 = vmatmul.mubr.bf16.gmra.mrb[0].mxu0 %v1083
      %v1227 = vpop.f32.mrb[0].mxu0
      %v1228 = vadd.f32 0.0, %v1227
      %v1229 = vpop.f32.mrb[0].mxu0
      %v1230 = vpop.f32.mrb[0].mxu0
      %v1231 = vadd.f32 0.0, %v1230
      %v1232 = vpop.f32.mrb[0].mxu0
      %1233 = vmatprep.mubr.bf16.mxu0 0
      %1234 = vmatmul.mubr.bf16.gmra.mrb[0].mxu0 %v1086
      %v1235 = vpop.f32.mrb[0].mxu0
      %v1236 = vadd.f32 0.0, %v1235
      %v1237 = vpop.f32.mrb[0].mxu0
      %v1238 = vpop.f32.mrb[0].mxu0
      %v1239 = vadd.f32 0.0, %v1238
      %v1240 = vpop.f32.mrb[0].mxu0
      %1241 = vmatprep.mubr.bf16.mxu0 0
      %1242 = vmatmul.mubr.bf16.gmra.mrb[0].mxu0 %v1089
      %v1243 = vpop.f32.mrb[0].mxu0
      %v1244 = vadd.f32 0.0, %v1243
      %v1245 = vpop.f32.mrb[0].mxu0
      %v1246 = vpop.f32.mrb[0].mxu0
      %v1247 = vadd.f32 0.0, %v1246
      %v1248 = vpop.f32.mrb[0].mxu0
      %1249 = vmatprep.mubr.bf16.mxu0 0
      %1250 = vmatmul.mubr.bf16.gmra.mrb[0].mxu0 %v1092
      %v1251 = vpop.f32.mrb[0].mxu0
      %v1252 = vadd.f32 0.0, %v1251
      %v1253 = vpop.f32.mrb[0].mxu0
      %v1254 = vpop.f32.mrb[0].mxu0
      %v1255 = vadd.f32 0.0, %v1254
      %v1256 = vpop.f32.mrb[0].mxu0
      %1257 = vdwg.mxu0
      %v1258 = vadd.f32 %v963, %v1132
      %v1259 = vadd.f32 %v964, %v1135
      %v1260 = vadd.f32 %v965, %v1140
      %v1261 = vadd.f32 %v966, %v1143
      %v1262 = vadd.f32 %v967, %v1148
      %v1263 = vadd.f32 %v968, %v1151
      %v1264 = vadd.f32 %v969, %v1156
      %v1265 = vadd.f32 %v970, %v1159
      %v1266 = vadd.f32 %v971, %v1164
      %v1267 = vadd.f32 %v972, %v1167
      %v1268 = vadd.f32 %v973, %v1172
      %v1269 = vadd.f32 %v974, %v1175
      %v1270 = vadd.f32 %v975, %v1180
      %v1271 = vadd.f32 %v976, %v1183
      %v1272 = vadd.f32 %v977, %v1188
      %v1273 = vadd.f32 %v978, %v1191
      %v1274 = vadd.f32 %v979, %v1196
      %v1275 = vadd.f32 %v980, %v1199
      %v1276 = vadd.f32 %v981, %v1204
      %v1277 = vadd.f32 %v982, %v1207
      %v1278 = vadd.f32 %v983, %v1212
      %v1279 = vadd.f32 %v984, %v1215
      %v1280 = vadd.f32 %v985, %v1220
      %v1281 = vadd.f32 %v986, %v1223
      %v1282 = vadd.f32 %v987, %v1228
      %v1283 = vadd.f32 %v988, %v1231
      %v1284 = vadd.f32 %v989, %v1236
      %v1285 = vadd.f32 %v990, %v1239
      %v1286 = vadd.f32 %v991, %v1244
      %v1287 = vadd.f32 %v992, %v1247
      %v1288 = vadd.f32 %v993, %v1252
      %v1289 = vadd.f32 %v994, %v1255
      %v1290 = vld [vmem:[%s995 + $0x1] sm:$0xff]
      %v1291 = vld [vmem:[%s995 + $0x9] sm:$0xff]
      %v1292 = vld [vmem:[%s995 + $0x11] sm:$0xff]
      %v1293 = vld [vmem:[%s995 + $0x19] sm:$0xff]
      %v1294 = vld [vmem:[%s995 + $0x29] sm:$0xff]
      %v1295 = vld [vmem:[%s995 + $0x31] sm:$0xff]
      %v1296 = vld [vmem:[%s995 + $0x39] sm:$0xff]
      %v1297 = vld [vmem:[%s995 + $0x41] sm:$0xff]
      %v1298 = vld [vmem:[%s995 + $0x51] sm:$0xff]
      %v1299 = vld [vmem:[%s995 + $0x59] sm:$0xff]
      %v1300 = vld [vmem:[%s995 + $0x61] sm:$0xff]
      %v1301 = vld [vmem:[%s995 + $0x69] sm:$0xff]
      %v1302 = vld [vmem:[%s995 + $0x79] sm:$0xff]
      %v1303 = vld [vmem:[%s995 + $0x81] sm:$0xff]
      %v1304 = vld [vmem:[%s995 + $0x89] sm:$0xff]
      %v1305 = vld [vmem:[%s995 + $0x91] sm:$0xff]
      %v1306 = vld [vmem:[%s995 + $0xa1] sm:$0xff]
      %v1307 = vld [vmem:[%s995 + $0xa9] sm:$0xff]
      %v1308 = vld [vmem:[%s995 + $0xb1] sm:$0xff]
      %v1309 = vld [vmem:[%s995 + $0xb9] sm:$0xff]
      %v1310 = vld [vmem:[%s995 + $0xc9] sm:$0xff]
      %v1311 = vld [vmem:[%s995 + $0xd1] sm:$0xff]
      %v1312 = vld [vmem:[%s995 + $0xd9] sm:$0xff]
      %v1313 = vld [vmem:[%s995 + $0xe1] sm:$0xff]
      %v1314 = vld [vmem:[%s995 + $0xf1] sm:$0xff]
      %v1315 = vld [vmem:[%s995 + $0xf9] sm:$0xff]
      %v1316 = vld [vmem:[%s995 + $0x101] sm:$0xff]
      %v1317 = vld [vmem:[%s995 + $0x109] sm:$0xff]
      %v1318 = vld [vmem:[%s995 + $0x119] sm:$0xff]
      %v1319 = vld [vmem:[%s995 + $0x121] sm:$0xff]
      %v1320 = vld [vmem:[%s995 + $0x129] sm:$0xff]
      %v1321 = vld [vmem:[%s995 + $0x131] sm:$0xff]
      %v1322 = vpack.c.bf16 %v1291, %v1290
      %v1323 = vpack.c.bf16 %v1293, %v1292
      %v1324 = vpack.c.bf16 %v1295, %v1294
      %v1325 = vpack.c.bf16 %v1297, %v1296
      %v1326 = vpack.c.bf16 %v1299, %v1298
      %v1327 = vpack.c.bf16 %v1301, %v1300
      %v1328 = vpack.c.bf16 %v1303, %v1302
      %v1329 = vpack.c.bf16 %v1305, %v1304
      %v1330 = vpack.c.bf16 %v1307, %v1306
      %v1331 = vpack.c.bf16 %v1309, %v1308
      %v1332 = vpack.c.bf16 %v1311, %v1310
      %v1333 = vpack.c.bf16 %v1313, %v1312
      %v1334 = vpack.c.bf16 %v1315, %v1314
      %v1335 = vpack.c.bf16 %v1317, %v1316
      %v1336 = vpack.c.bf16 %v1319, %v1318
      %v1337 = vpack.c.bf16 %v1321, %v1320
      %s1338 = scalar_lea.vmem %s1, 8
      %v1339 = vld [vmem:[%s1338] sm:$0x3]
      %v1341 = vsel %vm272, %v1322, 0
      %v1344 = vsel %vm272, %v1323, 0
      %v1347 = vsel %vm272, %v1324, 0
      %v1350 = vsel %vm272, %v1325, 0
      %v1353 = vsel %vm272, %v1326, 0
      %v1356 = vsel %vm272, %v1327, 0
      %v1359 = vsel %vm272, %v1328, 0
      %v1362 = vsel %vm272, %v1329, 0
      %v1365 = vsel %vm272, %v1330, 0
      %v1368 = vsel %vm272, %v1331, 0
      %v1371 = vsel %vm272, %v1332, 0
      %v1374 = vsel %vm272, %v1333, 0
      %v1377 = vsel %vm272, %v1334, 0
      %v1380 = vsel %vm272, %v1335, 0
      %v1383 = vsel %vm272, %v1336, 0
      %v1386 = vsel %vm272, %v1337, 0
      %v1389 = vand.u32 %v1339, %v324
      %1391 = vmatprep.subr.bf16.mxu0 0
      %1392 = vmatpush1.bf16.msra.mxu0 %v1389
      %1393 = vmatprep.subr.bf16.mxu0 0
      %1394 = vmatpush1.bf16.msra.mxu0 0
      %1395 = vmatprep.subr.bf16.mxu0 0
      %1396 = vmatpush1.bf16.msra.mxu0 0
      %1397 = vmatprep.subr.bf16.mxu0 0
      %1398 = vmatpush1.bf16.msra.mxu0 0
      %1399 = vmatprep.subr.bf16.mxu0 0
      %1400 = vmatpush1.bf16.msra.mxu0 0
      %1401 = vmatprep.subr.bf16.mxu0 0
      %1402 = vmatpush1.bf16.msra.mxu0 0
      %1403 = vmatprep.subr.bf16.mxu0 0
      %1404 = vmatpush1.bf16.msra.mxu0 0
      %1405 = vmatprep.subr.bf16.mxu0 0
      %1406 = vmatpush1.bf16.msra.mxu0 0
      %1407 = vmatprep.subr.bf16.mxu0 0
      %1408 = vmatpush1.bf16.msra.mxu0 0
      %1409 = vmatprep.subr.bf16.mxu0 0
      %1410 = vmatpush1.bf16.msra.mxu0 0
      %1411 = vmatprep.subr.bf16.mxu0 0
      %1412 = vmatpush1.bf16.msra.mxu0 0
      %1413 = vmatprep.subr.bf16.mxu0 0
      %1414 = vmatpush1.bf16.msra.mxu0 0
      %1415 = vmatprep.subr.bf16.mxu0 0
      %1416 = vmatpush1.bf16.msra.mxu0 0
      %1417 = vmatprep.subr.bf16.mxu0 0
      %1418 = vmatpush1.bf16.msra.mxu0 0
      %1419 = vmatprep.subr.bf16.mxu0 0
      %1420 = vmatpush1.bf16.msra.mxu0 0
      %1421 = vmatprep.subr.bf16.mxu0 0
      %1422 = vmatpush1.bf16.msra.mxu0 0
      %1423 = vmatprep.mubr.bf16.mxu0 0
      %1424 = vmatmul.mubr.bf16.gmra.mrb[0].mxu0 %v1341
      %v1425 = vpop.f32.mrb[0].mxu0
      %v1426 = vadd.f32 0.0, %v1425
      %v1427 = vpop.f32.mrb[0].mxu0
      %v1428 = vpop.f32.mrb[0].mxu0
      %v1429 = vadd.f32 0.0, %v1428
      %v1430 = vpop.f32.mrb[0].mxu0
      %1431 = vmatprep.mubr.bf16.mxu0 0
      %1432 = vmatmul.mubr.bf16.gmra.mrb[0].mxu0 %v1344
      %v1433 = vpop.f32.mrb[0].mxu0
      %v1434 = vadd.f32 0.0, %v1433
      %v1435 = vpop.f32.mrb[0].mxu0
      %v1436 = vpop.f32.mrb[0].mxu0
      %v1437 = vadd.f32 0.0, %v1436
      %v1438 = vpop.f32.mrb[0].mxu0
      %1439 = vmatprep.mubr.bf16.mxu0 0
      %1440 = vmatmul.mubr.bf16.gmra.mrb[0].mxu0 %v1347
      %v1441 = vpop.f32.mrb[0].mxu0
      %v1442 = vadd.f32 0.0, %v1441
      %v1443 = vpop.f32.mrb[0].mxu0
      %v1444 = vpop.f32.mrb[0].mxu0
      %v1445 = vadd.f32 0.0, %v1444
      %v1446 = vpop.f32.mrb[0].mxu0
      %1447 = vmatprep.mubr.bf16.mxu0 0
      %1448 = vmatmul.mubr.bf16.gmra.mrb[0].mxu0 %v1350
      %v1449 = vpop.f32.mrb[0].mxu0
      %v1450 = vadd.f32 0.0, %v1449
      %v1451 = vpop.f32.mrb[0].mxu0
      %v1452 = vpop.f32.mrb[0].mxu0
      %v1453 = vadd.f32 0.0, %v1452
      %v1454 = vpop.f32.mrb[0].mxu0
      %1455 = vmatprep.mubr.bf16.mxu0 0
      %1456 = vmatmul.mubr.bf16.gmra.mrb[0].mxu0 %v1353
      %v1457 = vpop.f32.mrb[0].mxu0
      %v1458 = vadd.f32 0.0, %v1457
      %v1459 = vpop.f32.mrb[0].mxu0
      %v1460 = vpop.f32.mrb[0].mxu0
      %v1461 = vadd.f32 0.0, %v1460
      %v1462 = vpop.f32.mrb[0].mxu0
      %1463 = vmatprep.mubr.bf16.mxu0 0
      %1464 = vmatmul.mubr.bf16.gmra.mrb[0].mxu0 %v1356
      %v1465 = vpop.f32.mrb[0].mxu0
      %v1466 = vadd.f32 0.0, %v1465
      %v1467 = vpop.f32.mrb[0].mxu0
      %v1468 = vpop.f32.mrb[0].mxu0
      %v1469 = vadd.f32 0.0, %v1468
      %v1470 = vpop.f32.mrb[0].mxu0
      %1471 = vmatprep.mubr.bf16.mxu0 0
      %1472 = vmatmul.mubr.bf16.gmra.mrb[0].mxu0 %v1359
      %v1473 = vpop.f32.mrb[0].mxu0
      %v1474 = vadd.f32 0.0, %v1473
      %v1475 = vpop.f32.mrb[0].mxu0
      %v1476 = vpop.f32.mrb[0].mxu0
      %v1477 = vadd.f32 0.0, %v1476
      %v1478 = vpop.f32.mrb[0].mxu0
      %1479 = vmatprep.mubr.bf16.mxu0 0
      %1480 = vmatmul.mubr.bf16.gmra.mrb[0].mxu0 %v1362
      %v1481 = vpop.f32.mrb[0].mxu0
      %v1482 = vadd.f32 0.0, %v1481
      %v1483 = vpop.f32.mrb[0].mxu0
      %v1484 = vpop.f32.mrb[0].mxu0
      %v1485 = vadd.f32 0.0, %v1484
      %v1486 = vpop.f32.mrb[0].mxu0
      %1487 = vmatprep.mubr.bf16.mxu0 0
      %1488 = vmatmul.mubr.bf16.gmra.mrb[0].mxu0 %v1365
      %v1489 = vpop.f32.mrb[0].mxu0
      %v1490 = vadd.f32 0.0, %v1489
      %v1491 = vpop.f32.mrb[0].mxu0
      %v1492 = vpop.f32.mrb[0].mxu0
      %v1493 = vadd.f32 0.0, %v1492
      %v1494 = vpop.f32.mrb[0].mxu0
      %1495 = vmatprep.mubr.bf16.mxu0 0
      %1496 = vmatmul.mubr.bf16.gmra.mrb[0].mxu0 %v1368
      %v1497 = vpop.f32.mrb[0].mxu0
      %v1498 = vadd.f32 0.0, %v1497
      %v1499 = vpop.f32.mrb[0].mxu0
      %v1500 = vpop.f32.mrb[0].mxu0
      %v1501 = vadd.f32 0.0, %v1500
      %v1502 = vpop.f32.mrb[0].mxu0
      %1503 = vmatprep.mubr.bf16.mxu0 0
      %1504 = vmatmul.mubr.bf16.gmra.mrb[0].mxu0 %v1371
      %v1505 = vpop.f32.mrb[0].mxu0
      %v1506 = vadd.f32 0.0, %v1505
      %v1507 = vpop.f32.mrb[0].mxu0
      %v1508 = vpop.f32.mrb[0].mxu0
      %v1509 = vadd.f32 0.0, %v1508
      %v1510 = vpop.f32.mrb[0].mxu0
      %1511 = vmatprep.mubr.bf16.mxu0 0
      %1512 = vmatmul.mubr.bf16.gmra.mrb[0].mxu0 %v1374
      %v1513 = vpop.f32.mrb[0].mxu0
      %v1514 = vadd.f32 0.0, %v1513
      %v1515 = vpop.f32.mrb[0].mxu0
      %v1516 = vpop.f32.mrb[0].mxu0
      %v1517 = vadd.f32 0.0, %v1516
      %v1518 = vpop.f32.mrb[0].mxu0
      %1519 = vmatprep.mubr.bf16.mxu0 0
      %1520 = vmatmul.mubr.bf16.gmra.mrb[0].mxu0 %v1377
      %v1521 = vpop.f32.mrb[0].mxu0
      %v1522 = vadd.f32 0.0, %v1521
      %v1523 = vpop.f32.mrb[0].mxu0
      %v1524 = vpop.f32.mrb[0].mxu0
      %v1525 = vadd.f32 0.0, %v1524
      %v1526 = vpop.f32.mrb[0].mxu0
      %1527 = vmatprep.mubr.bf16.mxu0 0
      %1528 = vmatmul.mubr.bf16.gmra.mrb[0].mxu0 %v1380
      %v1529 = vpop.f32.mrb[0].mxu0
      %v1530 = vadd.f32 0.0, %v1529
      %v1531 = vpop.f32.mrb[0].mxu0
      %v1532 = vpop.f32.mrb[0].mxu0
      %v1533 = vadd.f32 0.0, %v1532
      %v1534 = vpop.f32.mrb[0].mxu0
      %1535 = vmatprep.mubr.bf16.mxu0 0
      %1536 = vmatmul.mubr.bf16.gmra.mrb[0].mxu0 %v1383
      %v1537 = vpop.f32.mrb[0].mxu0
      %v1538 = vadd.f32 0.0, %v1537
      %v1539 = vpop.f32.mrb[0].mxu0
      %v1540 = vpop.f32.mrb[0].mxu0
      %v1541 = vadd.f32 0.0, %v1540
      %v1542 = vpop.f32.mrb[0].mxu0
      %1543 = vmatprep.mubr.bf16.mxu0 0
      %1544 = vmatmul.mubr.bf16.gmra.mrb[0].mxu0 %v1386
      %v1545 = vpop.f32.mrb[0].mxu0
      %v1546 = vadd.f32 0.0, %v1545
      %v1547 = vpop.f32.mrb[0].mxu0
      %v1548 = vpop.f32.mrb[0].mxu0
      %v1549 = vadd.f32 0.0, %v1548
      %v1550 = vpop.f32.mrb[0].mxu0
      %1551 = vdwg.mxu0
      %v1552 = vadd.f32 %v1258, %v1426
      %v1553 = vadd.f32 %v1259, %v1429
      %v1554 = vadd.f32 %v1260, %v1434
      %v1555 = vadd.f32 %v1261, %v1437
      %v1556 = vadd.f32 %v1262, %v1442
      %v1557 = vadd.f32 %v1263, %v1445
      %v1558 = vadd.f32 %v1264, %v1450
      %v1559 = vadd.f32 %v1265, %v1453
      %v1560 = vadd.f32 %v1266, %v1458
      %v1561 = vadd.f32 %v1267, %v1461
      %v1562 = vadd.f32 %v1268, %v1466
      %v1563 = vadd.f32 %v1269, %v1469
      %v1564 = vadd.f32 %v1270, %v1474
      %v1565 = vadd.f32 %v1271, %v1477
      %v1566 = vadd.f32 %v1272, %v1482
      %v1567 = vadd.f32 %v1273, %v1485
      %v1568 = vadd.f32 %v1274, %v1490
      %v1569 = vadd.f32 %v1275, %v1493
      %v1570 = vadd.f32 %v1276, %v1498
      %v1571 = vadd.f32 %v1277, %v1501
      %v1572 = vadd.f32 %v1278, %v1506
      %v1573 = vadd.f32 %v1279, %v1509
      %v1574 = vadd.f32 %v1280, %v1514
      %v1575 = vadd.f32 %v1281, %v1517
      %v1576 = vadd.f32 %v1282, %v1522
      %v1577 = vadd.f32 %v1283, %v1525
      %v1578 = vadd.f32 %v1284, %v1530
      %v1579 = vadd.f32 %v1285, %v1533
      %v1580 = vadd.f32 %v1286, %v1538
      %v1581 = vadd.f32 %v1287, %v1541
      %v1582 = vadd.f32 %v1288, %v1546
      %v1583 = vadd.f32 %v1289, %v1549
      %v1584 = vld [vmem:[%s995 + $0x2] sm:$0xff]
      %v1585 = vld [vmem:[%s995 + $0xa] sm:$0xff]
      %v1586 = vld [vmem:[%s995 + $0x12] sm:$0xff]
      %v1587 = vld [vmem:[%s995 + $0x1a] sm:$0xff]
      %v1588 = vld [vmem:[%s995 + $0x2a] sm:$0xff]
      %v1589 = vld [vmem:[%s995 + $0x32] sm:$0xff]
      %v1590 = vld [vmem:[%s995 + $0x3a] sm:$0xff]
      %v1591 = vld [vmem:[%s995 + $0x42] sm:$0xff]
      %v1592 = vld [vmem:[%s995 + $0x52] sm:$0xff]
      %v1593 = vld [vmem:[%s995 + $0x5a] sm:$0xff]
      %v1594 = vld [vmem:[%s995 + $0x62] sm:$0xff]
      %v1595 = vld [vmem:[%s995 + $0x6a] sm:$0xff]
      %v1596 = vld [vmem:[%s995 + $0x7a] sm:$0xff]
      %v1597 = vld [vmem:[%s995 + $0x82] sm:$0xff]
      %v1598 = vld [vmem:[%s995 + $0x8a] sm:$0xff]
      %v1599 = vld [vmem:[%s995 + $0x92] sm:$0xff]
      %v1600 = vld [vmem:[%s995 + $0xa2] sm:$0xff]
      %v1601 = vld [vmem:[%s995 + $0xaa] sm:$0xff]
      %v1602 = vld [vmem:[%s995 + $0xb2] sm:$0xff]
      %v1603 = vld [vmem:[%s995 + $0xba] sm:$0xff]
      %v1604 = vld [vmem:[%s995 + $0xca] sm:$0xff]
      %v1605 = vld [vmem:[%s995 + $0xd2] sm:$0xff]
      %v1606 = vld [vmem:[%s995 + $0xda] sm:$0xff]
      %v1607 = vld [vmem:[%s995 + $0xe2] sm:$0xff]
      %v1608 = vld [vmem:[%s995 + $0xf2] sm:$0xff]
      %v1609 = vld [vmem:[%s995 + $0xfa] sm:$0xff]
      %v1610 = vld [vmem:[%s995 + $0x102] sm:$0xff]
      %v1611 = vld [vmem:[%s995 + $0x10a] sm:$0xff]
      %v1612 = vld [vmem:[%s995 + $0x11a] sm:$0xff]
      %v1613 = vld [vmem:[%s995 + $0x122] sm:$0xff]
      %v1614 = vld [vmem:[%s995 + $0x12a] sm:$0xff]
      %v1615 = vld [vmem:[%s995 + $0x132] sm:$0xff]
      %v1616 = vpack.c.bf16 %v1585, %v1584
      %v1617 = vpack.c.bf16 %v1587, %v1586
      %v1618 = vpack.c.bf16 %v1589, %v1588
      %v1619 = vpack.c.bf16 %v1591, %v1590
      %v1620 = vpack.c.bf16 %v1593, %v1592
      %v1621 = vpack.c.bf16 %v1595, %v1594
      %v1622 = vpack.c.bf16 %v1597, %v1596
      %v1623 = vpack.c.bf16 %v1599, %v1598
      %v1624 = vpack.c.bf16 %v1601, %v1600
      %v1625 = vpack.c.bf16 %v1603, %v1602
      %v1626 = vpack.c.bf16 %v1605, %v1604
      %v1627 = vpack.c.bf16 %v1607, %v1606
      %v1628 = vpack.c.bf16 %v1609, %v1608
      %v1629 = vpack.c.bf16 %v1611, %v1610
      %v1630 = vpack.c.bf16 %v1613, %v1612
      %v1631 = vpack.c.bf16 %v1615, %v1614
      %s1632 = scalar_lea.vmem %s1, 10
      %v1633 = vld [vmem:[%s1632] sm:$0x3]
      %v1635 = vsel %vm272, %v1616, 0
      %v1638 = vsel %vm272, %v1617, 0
      %v1641 = vsel %vm272, %v1618, 0
      %v1644 = vsel %vm272, %v1619, 0
      %v1647 = vsel %vm272, %v1620, 0
      %v1650 = vsel %vm272, %v1621, 0
      %v1653 = vsel %vm272, %v1622, 0
      %v1656 = vsel %vm272, %v1623, 0
      %v1659 = vsel %vm272, %v1624, 0
      %v1662 = vsel %vm272, %v1625, 0
      %v1665 = vsel %vm272, %v1626, 0
      %v1668 = vsel %vm272, %v1627, 0
      %v1671 = vsel %vm272, %v1628, 0
      %v1674 = vsel %vm272, %v1629, 0
      %v1677 = vsel %vm272, %v1630, 0
      %v1680 = vsel %vm272, %v1631, 0
      %v1683 = vand.u32 %v1633, %v324
      %1685 = vmatprep.subr.bf16.mxu0 0
      %1686 = vmatpush1.bf16.msra.mxu0 %v1683
      %1687 = vmatprep.subr.bf16.mxu0 0
      %1688 = vmatpush1.bf16.msra.mxu0 0
      %1689 = vmatprep.subr.bf16.mxu0 0
      %1690 = vmatpush1.bf16.msra.mxu0 0
      %1691 = vmatprep.subr.bf16.mxu0 0
      %1692 = vmatpush1.bf16.msra.mxu0 0
      %1693 = vmatprep.subr.bf16.mxu0 0
      %1694 = vmatpush1.bf16.msra.mxu0 0
      %1695 = vmatprep.subr.bf16.mxu0 0
      %1696 = vmatpush1.bf16.msra.mxu0 0
      %1697 = vmatprep.subr.bf16.mxu0 0
      %1698 = vmatpush1.bf16.msra.mxu0 0
      %1699 = vmatprep.subr.bf16.mxu0 0
      %1700 = vmatpush1.bf16.msra.mxu0 0
      %1701 = vmatprep.subr.bf16.mxu0 0
      %1702 = vmatpush1.bf16.msra.mxu0 0
      %1703 = vmatprep.subr.bf16.mxu0 0
      %1704 = vmatpush1.bf16.msra.mxu0 0
      %1705 = vmatprep.subr.bf16.mxu0 0
      %1706 = vmatpush1.bf16.msra.mxu0 0
      %1707 = vmatprep.subr.bf16.mxu0 0
      %1708 = vmatpush1.bf16.msra.mxu0 0
      %1709 = vmatprep.subr.bf16.mxu0 0
      %1710 = vmatpush1.bf16.msra.mxu0 0
      %1711 = vmatprep.subr.bf16.mxu0 0
      %1712 = vmatpush1.bf16.msra.mxu0 0
      %1713 = vmatprep.subr.bf16.mxu0 0
      %1714 = vmatpush1.bf16.msra.mxu0 0
      %1715 = vmatprep.subr.bf16.mxu0 0
      %1716 = vmatpush1.bf16.msra.mxu0 0
      %1717 = vmatprep.mubr.bf16.mxu0 0
      %1718 = vmatmul.mubr.bf16.gmra.mrb[0].mxu0 %v1635
      %v1719 = vpop.f32.mrb[0].mxu0
      %v1720 = vadd.f32 0.0, %v1719
      %v1721 = vpop.f32.mrb[0].mxu0
      %v1722 = vpop.f32.mrb[0].mxu0
      %v1723 = vadd.f32 0.0, %v1722
      %v1724 = vpop.f32.mrb[0].mxu0
      %1725 = vmatprep.mubr.bf16.mxu0 0
      %1726 = vmatmul.mubr.bf16.gmra.mrb[0].mxu0 %v1638
      %v1727 = vpop.f32.mrb[0].mxu0
      %v1728 = vadd.f32 0.0, %v1727
      %v1729 = vpop.f32.mrb[0].mxu0
      %v1730 = vpop.f32.mrb[0].mxu0
      %v1731 = vadd.f32 0.0, %v1730
      %v1732 = vpop.f32.mrb[0].mxu0
      %1733 = vmatprep.mubr.bf16.mxu0 0
      %1734 = vmatmul.mubr.bf16.gmra.mrb[0].mxu0 %v1641
      %v1735 = vpop.f32.mrb[0].mxu0
      %v1736 = vadd.f32 0.0, %v1735
      %v1737 = vpop.f32.mrb[0].mxu0
      %v1738 = vpop.f32.mrb[0].mxu0
      %v1739 = vadd.f32 0.0, %v1738
      %v1740 = vpop.f32.mrb[0].mxu0
      %1741 = vmatprep.mubr.bf16.mxu0 0
      %1742 = vmatmul.mubr.bf16.gmra.mrb[0].mxu0 %v1644
      %v1743 = vpop.f32.mrb[0].mxu0
      %v1744 = vadd.f32 0.0, %v1743
      %v1745 = vpop.f32.mrb[0].mxu0
      %v1746 = vpop.f32.mrb[0].mxu0
      %v1747 = vadd.f32 0.0, %v1746
      %v1748 = vpop.f32.mrb[0].mxu0
      %1749 = vmatprep.mubr.bf16.mxu0 0
      %1750 = vmatmul.mubr.bf16.gmra.mrb[0].mxu0 %v1647
      %v1751 = vpop.f32.mrb[0].mxu0
      %v1752 = vadd.f32 0.0, %v1751
      %v1753 = vpop.f32.mrb[0].mxu0
      %v1754 = vpop.f32.mrb[0].mxu0
      %v1755 = vadd.f32 0.0, %v1754
      %v1756 = vpop.f32.mrb[0].mxu0
      %1757 = vmatprep.mubr.bf16.mxu0 0
      %1758 = vmatmul.mubr.bf16.gmra.mrb[0].mxu0 %v1650
      %v1759 = vpop.f32.mrb[0].mxu0
      %v1760 = vadd.f32 0.0, %v1759
      %v1761 = vpop.f32.mrb[0].mxu0
      %v1762 = vpop.f32.mrb[0].mxu0
      %v1763 = vadd.f32 0.0, %v1762
      %v1764 = vpop.f32.mrb[0].mxu0
      %1765 = vmatprep.mubr.bf16.mxu0 0
      %1766 = vmatmul.mubr.bf16.gmra.mrb[0].mxu0 %v1653
      %v1767 = vpop.f32.mrb[0].mxu0
      %v1768 = vadd.f32 0.0, %v1767
      %v1769 = vpop.f32.mrb[0].mxu0
      %v1770 = vpop.f32.mrb[0].mxu0
      %v1771 = vadd.f32 0.0, %v1770
      %v1772 = vpop.f32.mrb[0].mxu0
      %1773 = vmatprep.mubr.bf16.mxu0 0
      %1774 = vmatmul.mubr.bf16.gmra.mrb[0].mxu0 %v1656
      %v1775 = vpop.f32.mrb[0].mxu0
      %v1776 = vadd.f32 0.0, %v1775
      %v1777 = vpop.f32.mrb[0].mxu0
      %v1778 = vpop.f32.mrb[0].mxu0
      %v1779 = vadd.f32 0.0, %v1778
      %v1780 = vpop.f32.mrb[0].mxu0
      %1781 = vmatprep.mubr.bf16.mxu0 0
      %1782 = vmatmul.mubr.bf16.gmra.mrb[0].mxu0 %v1659
      %v1783 = vpop.f32.mrb[0].mxu0
      %v1784 = vadd.f32 0.0, %v1783
      %v1785 = vpop.f32.mrb[0].mxu0
      %v1786 = vpop.f32.mrb[0].mxu0
      %v1787 = vadd.f32 0.0, %v1786
      %v1788 = vpop.f32.mrb[0].mxu0
      %1789 = vmatprep.mubr.bf16.mxu0 0
      %1790 = vmatmul.mubr.bf16.gmra.mrb[0].mxu0 %v1662
      %v1791 = vpop.f32.mrb[0].mxu0
      %v1792 = vadd.f32 0.0, %v1791
      %v1793 = vpop.f32.mrb[0].mxu0
      %v1794 = vpop.f32.mrb[0].mxu0
      %v1795 = vadd.f32 0.0, %v1794
      %v1796 = vpop.f32.mrb[0].mxu0
      %1797 = vmatprep.mubr.bf16.mxu0 0
      %1798 = vmatmul.mubr.bf16.gmra.mrb[0].mxu0 %v1665
      %v1799 = vpop.f32.mrb[0].mxu0
      %v1800 = vadd.f32 0.0, %v1799
      %v1801 = vpop.f32.mrb[0].mxu0
      %v1802 = vpop.f32.mrb[0].mxu0
      %v1803 = vadd.f32 0.0, %v1802
      %v1804 = vpop.f32.mrb[0].mxu0
      %1805 = vmatprep.mubr.bf16.mxu0 0
      %1806 = vmatmul.mubr.bf16.gmra.mrb[0].mxu0 %v1668
      %v1807 = vpop.f32.mrb[0].mxu0
      %v1808 = vadd.f32 0.0, %v1807
      %v1809 = vpop.f32.mrb[0].mxu0
      %v1810 = vpop.f32.mrb[0].mxu0
      %v1811 = vadd.f32 0.0, %v1810
      %v1812 = vpop.f32.mrb[0].mxu0
      %1813 = vmatprep.mubr.bf16.mxu0 0
      %1814 = vmatmul.mubr.bf16.gmra.mrb[0].mxu0 %v1671
      %v1815 = vpop.f32.mrb[0].mxu0
      %v1816 = vadd.f32 0.0, %v1815
      %v1817 = vpop.f32.mrb[0].mxu0
      %v1818 = vpop.f32.mrb[0].mxu0
      %v1819 = vadd.f32 0.0, %v1818
      %v1820 = vpop.f32.mrb[0].mxu0
      %1821 = vmatprep.mubr.bf16.mxu0 0
      %1822 = vmatmul.mubr.bf16.gmra.mrb[0].mxu0 %v1674
      %v1823 = vpop.f32.mrb[0].mxu0
      %v1824 = vadd.f32 0.0, %v1823
      %v1825 = vpop.f32.mrb[0].mxu0
      %v1826 = vpop.f32.mrb[0].mxu0
      %v1827 = vadd.f32 0.0, %v1826
      %v1828 = vpop.f32.mrb[0].mxu0
      %1829 = vmatprep.mubr.bf16.mxu0 0
      %1830 = vmatmul.mubr.bf16.gmra.mrb[0].mxu0 %v1677
      %v1831 = vpop.f32.mrb[0].mxu0
      %v1832 = vadd.f32 0.0, %v1831
      %v1833 = vpop.f32.mrb[0].mxu0
      %v1834 = vpop.f32.mrb[0].mxu0
      %v1835 = vadd.f32 0.0, %v1834
      %v1836 = vpop.f32.mrb[0].mxu0
      %1837 = vmatprep.mubr.bf16.mxu0 0
      %1838 = vmatmul.mubr.bf16.gmra.mrb[0].mxu0 %v1680
      %v1839 = vpop.f32.mrb[0].mxu0
      %v1840 = vadd.f32 0.0, %v1839
      %v1841 = vpop.f32.mrb[0].mxu0
      %v1842 = vpop.f32.mrb[0].mxu0
      %v1843 = vadd.f32 0.0, %v1842
      %v1844 = vpop.f32.mrb[0].mxu0
      %1845 = vdwg.mxu0
      %v1846 = vadd.f32 %v1552, %v1720
      %v1847 = vadd.f32 %v1553, %v1723
      %v1848 = vadd.f32 %v1554, %v1728
      %v1849 = vadd.f32 %v1555, %v1731
      %v1850 = vadd.f32 %v1556, %v1736
      %v1851 = vadd.f32 %v1557, %v1739
      %v1852 = vadd.f32 %v1558, %v1744
      %v1853 = vadd.f32 %v1559, %v1747
      %v1854 = vadd.f32 %v1560, %v1752
      %v1855 = vadd.f32 %v1561, %v1755
      %v1856 = vadd.f32 %v1562, %v1760
      %v1857 = vadd.f32 %v1563, %v1763
      %v1858 = vadd.f32 %v1564, %v1768
      %v1859 = vadd.f32 %v1565, %v1771
      %v1860 = vadd.f32 %v1566, %v1776
      %v1861 = vadd.f32 %v1567, %v1779
      %v1862 = vadd.f32 %v1568, %v1784
      %v1863 = vadd.f32 %v1569, %v1787
      %v1864 = vadd.f32 %v1570, %v1792
      %v1865 = vadd.f32 %v1571, %v1795
      %v1866 = vadd.f32 %v1572, %v1800
      %v1867 = vadd.f32 %v1573, %v1803
      %v1868 = vadd.f32 %v1574, %v1808
      %v1869 = vadd.f32 %v1575, %v1811
      %v1870 = vadd.f32 %v1576, %v1816
      %v1871 = vadd.f32 %v1577, %v1819
      %v1872 = vadd.f32 %v1578, %v1824
      %v1873 = vadd.f32 %v1579, %v1827
      %v1874 = vadd.f32 %v1580, %v1832
      %v1875 = vadd.f32 %v1581, %v1835
      %v1876 = vadd.f32 %v1582, %v1840
      %v1877 = vadd.f32 %v1583, %v1843
      %s1878 = scalar_lea.vmem %s165, 80
      %v1879 = vld [vmem:[%s1878] sm:$0xff]
      %v1880 = vld [vmem:[%s1878 + $0x8] sm:$0xff]
      %v1881 = vld [vmem:[%s1878 + $0x10] sm:$0xff]
      %v1882 = vld [vmem:[%s1878 + $0x18] sm:$0xff]
      %v1883 = vld [vmem:[%s1878 + $0x28] sm:$0xff]
      %v1884 = vld [vmem:[%s1878 + $0x30] sm:$0xff]
      %v1885 = vld [vmem:[%s1878 + $0x38] sm:$0xff]
      %v1886 = vld [vmem:[%s1878 + $0x40] sm:$0xff]
      %v1887 = vld [vmem:[%s1878 + $0x50] sm:$0xff]
      %v1888 = vld [vmem:[%s1878 + $0x58] sm:$0xff]
      %v1889 = vld [vmem:[%s1878 + $0x60] sm:$0xff]
      %v1890 = vld [vmem:[%s1878 + $0x68] sm:$0xff]
      %v1891 = vld [vmem:[%s1878 + $0x78] sm:$0xff]
      %v1892 = vld [vmem:[%s1878 + $0x80] sm:$0xff]
      %v1893 = vld [vmem:[%s1878 + $0x88] sm:$0xff]
      %v1894 = vld [vmem:[%s1878 + $0x90] sm:$0xff]
      %v1895 = vld [vmem:[%s1878 + $0xa0] sm:$0xff]
      %v1896 = vld [vmem:[%s1878 + $0xa8] sm:$0xff]
      %v1897 = vld [vmem:[%s1878 + $0xb0] sm:$0xff]
      %v1898 = vld [vmem:[%s1878 + $0xb8] sm:$0xff]
      %v1899 = vld [vmem:[%s1878 + $0xc8] sm:$0xff]
      %v1900 = vld [vmem:[%s1878 + $0xd0] sm:$0xff]
      %v1901 = vld [vmem:[%s1878 + $0xd8] sm:$0xff]
      %v1902 = vld [vmem:[%s1878 + $0xe0] sm:$0xff]
      %v1903 = vld [vmem:[%s1878 + $0xf0] sm:$0xff]
      %v1904 = vld [vmem:[%s1878 + $0xf8] sm:$0xff]
      %v1905 = vld [vmem:[%s1878 + $0x100] sm:$0xff]
      %v1906 = vld [vmem:[%s1878 + $0x108] sm:$0xff]
      %v1907 = vld [vmem:[%s1878 + $0x118] sm:$0xff]
      %v1908 = vld [vmem:[%s1878 + $0x120] sm:$0xff]
      %v1909 = vld [vmem:[%s1878 + $0x128] sm:$0xff]
      %v1910 = vld [vmem:[%s1878 + $0x130] sm:$0xff]
      %v1911 = vpack.c.bf16 %v1880, %v1879
      %v1912 = vpack.c.bf16 %v1882, %v1881
      %v1913 = vpack.c.bf16 %v1884, %v1883
      %v1914 = vpack.c.bf16 %v1886, %v1885
      %v1915 = vpack.c.bf16 %v1888, %v1887
      %v1916 = vpack.c.bf16 %v1890, %v1889
      %v1917 = vpack.c.bf16 %v1892, %v1891
      %v1918 = vpack.c.bf16 %v1894, %v1893
      %v1919 = vpack.c.bf16 %v1896, %v1895
      %v1920 = vpack.c.bf16 %v1898, %v1897
      %v1921 = vpack.c.bf16 %v1900, %v1899
      %v1922 = vpack.c.bf16 %v1902, %v1901
      %v1923 = vpack.c.bf16 %v1904, %v1903
      %v1924 = vpack.c.bf16 %v1906, %v1905
      %v1925 = vpack.c.bf16 %v1908, %v1907
      %v1926 = vpack.c.bf16 %v1910, %v1909
      %s1927 = scalar_lea.vmem %s1, 12
      %v1928 = vld [vmem:[%s1927] sm:$0x3]
      %v1930 = vsel %vm272, %v1911, 0
      %v1933 = vsel %vm272, %v1912, 0
      %v1936 = vsel %vm272, %v1913, 0
      %v1939 = vsel %vm272, %v1914, 0
      %v1942 = vsel %vm272, %v1915, 0
      %v1945 = vsel %vm272, %v1916, 0
      %v1948 = vsel %vm272, %v1917, 0
      %v1951 = vsel %vm272, %v1918, 0
      %v1954 = vsel %vm272, %v1919, 0
      %v1957 = vsel %vm272, %v1920, 0
      %v1960 = vsel %vm272, %v1921, 0
      %v1963 = vsel %vm272, %v1922, 0
      %v1966 = vsel %vm272, %v1923, 0
      %v1969 = vsel %vm272, %v1924, 0
      %v1972 = vsel %vm272, %v1925, 0
      %v1975 = vsel %vm272, %v1926, 0
      %v1978 = vand.u32 %v1928, %v324
      %1980 = vmatprep.subr.bf16.mxu0 0
      %1981 = vmatpush1.bf16.msra.mxu0 %v1978
      %1982 = vmatprep.subr.bf16.mxu0 0
      %1983 = vmatpush1.bf16.msra.mxu0 0
      %1984 = vmatprep.subr.bf16.mxu0 0
      %1985 = vmatpush1.bf16.msra.mxu0 0
      %1986 = vmatprep.subr.bf16.mxu0 0
      %1987 = vmatpush1.bf16.msra.mxu0 0
      %1988 = vmatprep.subr.bf16.mxu0 0
      %1989 = vmatpush1.bf16.msra.mxu0 0
      %1990 = vmatprep.subr.bf16.mxu0 0
      %1991 = vmatpush1.bf16.msra.mxu0 0
      %1992 = vmatprep.subr.bf16.mxu0 0
      %1993 = vmatpush1.bf16.msra.mxu0 0
      %1994 = vmatprep.subr.bf16.mxu0 0
      %1995 = vmatpush1.bf16.msra.mxu0 0
      %1996 = vmatprep.subr.bf16.mxu0 0
      %1997 = vmatpush1.bf16.msra.mxu0 0
      %1998 = vmatprep.subr.bf16.mxu0 0
      %1999 = vmatpush1.bf16.msra.mxu0 0
      %2000 = vmatprep.subr.bf16.mxu0 0
      %2001 = vmatpush1.bf16.msra.mxu0 0
      %2002 = vmatprep.subr.bf16.mxu0 0
      %2003 = vmatpush1.bf16.msra.mxu0 0
      %2004 = vmatprep.subr.bf16.mxu0 0
      %2005 = vmatpush1.bf16.msra.mxu0 0
      %2006 = vmatprep.subr.bf16.mxu0 0
      %2007 = vmatpush1.bf16.msra.mxu0 0
      %2008 = vmatprep.subr.bf16.mxu0 0
      %2009 = vmatpush1.bf16.msra.mxu0 0
      %2010 = vmatprep.subr.bf16.mxu0 0
      %2011 = vmatpush1.bf16.msra.mxu0 0
      %2012 = vmatprep.mubr.bf16.mxu0 0
      %2013 = vmatmul.mubr.bf16.gmra.mrb[0].mxu0 %v1930
      %v2014 = vpop.f32.mrb[0].mxu0
      %v2015 = vadd.f32 0.0, %v2014
      %v2016 = vpop.f32.mrb[0].mxu0
      %v2017 = vpop.f32.mrb[0].mxu0
      %v2018 = vadd.f32 0.0, %v2017
      %v2019 = vpop.f32.mrb[0].mxu0
      %2020 = vmatprep.mubr.bf16.mxu0 0
      %2021 = vmatmul.mubr.bf16.gmra.mrb[0].mxu0 %v1933
      %v2022 = vpop.f32.mrb[0].mxu0
      %v2023 = vadd.f32 0.0, %v2022
      %v2024 = vpop.f32.mrb[0].mxu0
      %v2025 = vpop.f32.mrb[0].mxu0
      %v2026 = vadd.f32 0.0, %v2025
      %v2027 = vpop.f32.mrb[0].mxu0
      %2028 = vmatprep.mubr.bf16.mxu0 0
      %2029 = vmatmul.mubr.bf16.gmra.mrb[0].mxu0 %v1936
      %v2030 = vpop.f32.mrb[0].mxu0
      %v2031 = vadd.f32 0.0, %v2030
      %v2032 = vpop.f32.mrb[0].mxu0
      %v2033 = vpop.f32.mrb[0].mxu0
      %v2034 = vadd.f32 0.0, %v2033
      %v2035 = vpop.f32.mrb[0].mxu0
      %2036 = vmatprep.mubr.bf16.mxu0 0
      %2037 = vmatmul.mubr.bf16.gmra.mrb[0].mxu0 %v1939
      %v2038 = vpop.f32.mrb[0].mxu0
      %v2039 = vadd.f32 0.0, %v2038
      %v2040 = vpop.f32.mrb[0].mxu0
      %v2041 = vpop.f32.mrb[0].mxu0
      %v2042 = vadd.f32 0.0, %v2041
      %v2043 = vpop.f32.mrb[0].mxu0
      %2044 = vmatprep.mubr.bf16.mxu0 0
      %2045 = vmatmul.mubr.bf16.gmra.mrb[0].mxu0 %v1942
      %v2046 = vpop.f32.mrb[0].mxu0
      %v2047 = vadd.f32 0.0, %v2046
      %v2048 = vpop.f32.mrb[0].mxu0
      %v2049 = vpop.f32.mrb[0].mxu0
      %v2050 = vadd.f32 0.0, %v2049
      %v2051 = vpop.f32.mrb[0].mxu0
      %2052 = vmatprep.mubr.bf16.mxu0 0
      %2053 = vmatmul.mubr.bf16.gmra.mrb[0].mxu0 %v1945
      %v2054 = vpop.f32.mrb[0].mxu0
      %v2055 = vadd.f32 0.0, %v2054
      %v2056 = vpop.f32.mrb[0].mxu0
      %v2057 = vpop.f32.mrb[0].mxu0
      %v2058 = vadd.f32 0.0, %v2057
      %v2059 = vpop.f32.mrb[0].mxu0
      %2060 = vmatprep.mubr.bf16.mxu0 0
      %2061 = vmatmul.mubr.bf16.gmra.mrb[0].mxu0 %v1948
      %v2062 = vpop.f32.mrb[0].mxu0
      %v2063 = vadd.f32 0.0, %v2062
      %v2064 = vpop.f32.mrb[0].mxu0
      %v2065 = vpop.f32.mrb[0].mxu0
      %v2066 = vadd.f32 0.0, %v2065
      %v2067 = vpop.f32.mrb[0].mxu0
      %2068 = vmatprep.mubr.bf16.mxu0 0
      %2069 = vmatmul.mubr.bf16.gmra.mrb[0].mxu0 %v1951
      %v2070 = vpop.f32.mrb[0].mxu0
      %v2071 = vadd.f32 0.0, %v2070
      %v2072 = vpop.f32.mrb[0].mxu0
      %v2073 = vpop.f32.mrb[0].mxu0
      %v2074 = vadd.f32 0.0, %v2073
      %v2075 = vpop.f32.mrb[0].mxu0
      %2076 = vmatprep.mubr.bf16.mxu0 0
      %2077 = vmatmul.mubr.bf16.gmra.mrb[0].mxu0 %v1954
      %v2078 = vpop.f32.mrb[0].mxu0
      %v2079 = vadd.f32 0.0, %v2078
      %v2080 = vpop.f32.mrb[0].mxu0
      %v2081 = vpop.f32.mrb[0].mxu0
      %v2082 = vadd.f32 0.0, %v2081
      %v2083 = vpop.f32.mrb[0].mxu0
      %2084 = vmatprep.mubr.bf16.mxu0 0
      %2085 = vmatmul.mubr.bf16.gmra.mrb[0].mxu0 %v1957
      %v2086 = vpop.f32.mrb[0].mxu0
      %v2087 = vadd.f32 0.0, %v2086
      %v2088 = vpop.f32.mrb[0].mxu0
      %v2089 = vpop.f32.mrb[0].mxu0
      %v2090 = vadd.f32 0.0, %v2089
      %v2091 = vpop.f32.mrb[0].mxu0
      %2092 = vmatprep.mubr.bf16.mxu0 0
      %2093 = vmatmul.mubr.bf16.gmra.mrb[0].mxu0 %v1960
      %v2094 = vpop.f32.mrb[0].mxu0
      %v2095 = vadd.f32 0.0, %v2094
      %v2096 = vpop.f32.mrb[0].mxu0
      %v2097 = vpop.f32.mrb[0].mxu0
      %v2098 = vadd.f32 0.0, %v2097
      %v2099 = vpop.f32.mrb[0].mxu0
      %2100 = vmatprep.mubr.bf16.mxu0 0
      %2101 = vmatmul.mubr.bf16.gmra.mrb[0].mxu0 %v1963
      %v2102 = vpop.f32.mrb[0].mxu0
      %v2103 = vadd.f32 0.0, %v2102
      %v2104 = vpop.f32.mrb[0].mxu0
      %v2105 = vpop.f32.mrb[0].mxu0
      %v2106 = vadd.f32 0.0, %v2105
      %v2107 = vpop.f32.mrb[0].mxu0
      %2108 = vmatprep.mubr.bf16.mxu0 0
      %2109 = vmatmul.mubr.bf16.gmra.mrb[0].mxu0 %v1966
      %v2110 = vpop.f32.mrb[0].mxu0
      %v2111 = vadd.f32 0.0, %v2110
      %v2112 = vpop.f32.mrb[0].mxu0
      %v2113 = vpop.f32.mrb[0].mxu0
      %v2114 = vadd.f32 0.0, %v2113
      %v2115 = vpop.f32.mrb[0].mxu0
      %2116 = vmatprep.mubr.bf16.mxu0 0
      %2117 = vmatmul.mubr.bf16.gmra.mrb[0].mxu0 %v1969
      %v2118 = vpop.f32.mrb[0].mxu0
      %v2119 = vadd.f32 0.0, %v2118
      %v2120 = vpop.f32.mrb[0].mxu0
      %v2121 = vpop.f32.mrb[0].mxu0
      %v2122 = vadd.f32 0.0, %v2121
      %v2123 = vpop.f32.mrb[0].mxu0
      %2124 = vmatprep.mubr.bf16.mxu0 0
      %2125 = vmatmul.mubr.bf16.gmra.mrb[0].mxu0 %v1972
      %v2126 = vpop.f32.mrb[0].mxu0
      %v2127 = vadd.f32 0.0, %v2126
      %v2128 = vpop.f32.mrb[0].mxu0
      %v2129 = vpop.f32.mrb[0].mxu0
      %v2130 = vadd.f32 0.0, %v2129
      %v2131 = vpop.f32.mrb[0].mxu0
      %2132 = vmatprep.mubr.bf16.mxu0 0
      %2133 = vmatmul.mubr.bf16.gmra.mrb[0].mxu0 %v1975
      %v2134 = vpop.f32.mrb[0].mxu0
      %v2135 = vadd.f32 0.0, %v2134
      %v2136 = vpop.f32.mrb[0].mxu0
      %v2137 = vpop.f32.mrb[0].mxu0
      %v2138 = vadd.f32 0.0, %v2137
      %v2139 = vpop.f32.mrb[0].mxu0
      %2140 = vdwg.mxu0
      %v2141 = vadd.f32 %v1846, %v2015
      %v2142 = vadd.f32 %v1847, %v2018
      %v2143 = vadd.f32 %v1848, %v2023
      %v2144 = vadd.f32 %v1849, %v2026
      %v2145 = vadd.f32 %v1850, %v2031
      %v2146 = vadd.f32 %v1851, %v2034
      %v2147 = vadd.f32 %v1852, %v2039
      %v2148 = vadd.f32 %v1853, %v2042
      %v2149 = vadd.f32 %v1854, %v2047
      %v2150 = vadd.f32 %v1855, %v2050
      %v2151 = vadd.f32 %v1856, %v2055
      %v2152 = vadd.f32 %v1857, %v2058
      %v2153 = vadd.f32 %v1858, %v2063
      %v2154 = vadd.f32 %v1859, %v2066
      %v2155 = vadd.f32 %v1860, %v2071
      %v2156 = vadd.f32 %v1861, %v2074
      %v2157 = vadd.f32 %v1862, %v2079
      %v2158 = vadd.f32 %v1863, %v2082
      %v2159 = vadd.f32 %v1864, %v2087
      %v2160 = vadd.f32 %v1865, %v2090
      %v2161 = vadd.f32 %v1866, %v2095
      %v2162 = vadd.f32 %v1867, %v2098
      %v2163 = vadd.f32 %v1868, %v2103
      %v2164 = vadd.f32 %v1869, %v2106
      %v2165 = vadd.f32 %v1870, %v2111
      %v2166 = vadd.f32 %v1871, %v2114
      %v2167 = vadd.f32 %v1872, %v2119
      %v2168 = vadd.f32 %v1873, %v2122
      %v2169 = vadd.f32 %v1874, %v2127
      %v2170 = vadd.f32 %v1875, %v2130
      %v2171 = vadd.f32 %v1876, %v2135
      %v2172 = vadd.f32 %v1877, %v2138
      %v2173 = vld [vmem:[%s1878 + $0x1] sm:$0xff]
      %v2174 = vld [vmem:[%s1878 + $0x9] sm:$0xff]
      %v2175 = vld [vmem:[%s1878 + $0x11] sm:$0xff]
      %v2176 = vld [vmem:[%s1878 + $0x19] sm:$0xff]
      %v2177 = vld [vmem:[%s1878 + $0x29] sm:$0xff]
      %v2178 = vld [vmem:[%s1878 + $0x31] sm:$0xff]
      %v2179 = vld [vmem:[%s1878 + $0x39] sm:$0xff]
      %v2180 = vld [vmem:[%s1878 + $0x41] sm:$0xff]
      %v2181 = vld [vmem:[%s1878 + $0x51] sm:$0xff]
      %v2182 = vld [vmem:[%s1878 + $0x59] sm:$0xff]
      %v2183 = vld [vmem:[%s1878 + $0x61] sm:$0xff]
      %v2184 = vld [vmem:[%s1878 + $0x69] sm:$0xff]
      %v2185 = vld [vmem:[%s1878 + $0x79] sm:$0xff]
      %v2186 = vld [vmem:[%s1878 + $0x81] sm:$0xff]
      %v2187 = vld [vmem:[%s1878 + $0x89] sm:$0xff]
      %v2188 = vld [vmem:[%s1878 + $0x91] sm:$0xff]
      %v2189 = vld [vmem:[%s1878 + $0xa1] sm:$0xff]
      %v2190 = vld [vmem:[%s1878 + $0xa9] sm:$0xff]
      %v2191 = vld [vmem:[%s1878 + $0xb1] sm:$0xff]
      %v2192 = vld [vmem:[%s1878 + $0xb9] sm:$0xff]
      %v2193 = vld [vmem:[%s1878 + $0xc9] sm:$0xff]
      %v2194 = vld [vmem:[%s1878 + $0xd1] sm:$0xff]
      %v2195 = vld [vmem:[%s1878 + $0xd9] sm:$0xff]
      %v2196 = vld [vmem:[%s1878 + $0xe1] sm:$0xff]
      %v2197 = vld [vmem:[%s1878 + $0xf1] sm:$0xff]
      %v2198 = vld [vmem:[%s1878 + $0xf9] sm:$0xff]
      %v2199 = vld [vmem:[%s1878 + $0x101] sm:$0xff]
      %v2200 = vld [vmem:[%s1878 + $0x109] sm:$0xff]
      %v2201 = vld [vmem:[%s1878 + $0x119] sm:$0xff]
      %v2202 = vld [vmem:[%s1878 + $0x121] sm:$0xff]
      %v2203 = vld [vmem:[%s1878 + $0x129] sm:$0xff]
      %v2204 = vld [vmem:[%s1878 + $0x131] sm:$0xff]
      %v2205 = vpack.c.bf16 %v2174, %v2173
      %v2206 = vpack.c.bf16 %v2176, %v2175
      %v2207 = vpack.c.bf16 %v2178, %v2177
      %v2208 = vpack.c.bf16 %v2180, %v2179
      %v2209 = vpack.c.bf16 %v2182, %v2181
      %v2210 = vpack.c.bf16 %v2184, %v2183
      %v2211 = vpack.c.bf16 %v2186, %v2185
      %v2212 = vpack.c.bf16 %v2188, %v2187
      %v2213 = vpack.c.bf16 %v2190, %v2189
      %v2214 = vpack.c.bf16 %v2192, %v2191
      %v2215 = vpack.c.bf16 %v2194, %v2193
      %v2216 = vpack.c.bf16 %v2196, %v2195
      %v2217 = vpack.c.bf16 %v2198, %v2197
      %v2218 = vpack.c.bf16 %v2200, %v2199
      %v2219 = vpack.c.bf16 %v2202, %v2201
      %v2220 = vpack.c.bf16 %v2204, %v2203
      %s2221 = scalar_lea.vmem %s1, 14
      %v2222 = vld [vmem:[%s2221] sm:$0x3]
      %v2224 = vsel %vm272, %v2205, 0
      %v2227 = vsel %vm272, %v2206, 0
      %v2230 = vsel %vm272, %v2207, 0
      %v2233 = vsel %vm272, %v2208, 0
      %v2236 = vsel %vm272, %v2209, 0
      %v2239 = vsel %vm272, %v2210, 0
      %v2242 = vsel %vm272, %v2211, 0
      %v2245 = vsel %vm272, %v2212, 0
      %v2248 = vsel %vm272, %v2213, 0
      %v2251 = vsel %vm272, %v2214, 0
      %v2254 = vsel %vm272, %v2215, 0
      %v2257 = vsel %vm272, %v2216, 0
      %v2260 = vsel %vm272, %v2217, 0
      %v2263 = vsel %vm272, %v2218, 0
      %v2266 = vsel %vm272, %v2219, 0
      %v2269 = vsel %vm272, %v2220, 0
      %v2272 = vand.u32 %v2222, %v324
      %2274 = vmatprep.subr.bf16.mxu0 0
      %2275 = vmatpush1.bf16.msra.mxu0 %v2272
      %2276 = vmatprep.subr.bf16.mxu0 0
      %2277 = vmatpush1.bf16.msra.mxu0 0
      %2278 = vmatprep.subr.bf16.mxu0 0
      %2279 = vmatpush1.bf16.msra.mxu0 0
      %2280 = vmatprep.subr.bf16.mxu0 0
      %2281 = vmatpush1.bf16.msra.mxu0 0
      %2282 = vmatprep.subr.bf16.mxu0 0
      %2283 = vmatpush1.bf16.msra.mxu0 0
      %2284 = vmatprep.subr.bf16.mxu0 0
      %2285 = vmatpush1.bf16.msra.mxu0 0
      %2286 = vmatprep.subr.bf16.mxu0 0
      %2287 = vmatpush1.bf16.msra.mxu0 0
      %2288 = vmatprep.subr.bf16.mxu0 0
      %2289 = vmatpush1.bf16.msra.mxu0 0
      %2290 = vmatprep.subr.bf16.mxu0 0
      %2291 = vmatpush1.bf16.msra.mxu0 0
      %2292 = vmatprep.subr.bf16.mxu0 0
      %2293 = vmatpush1.bf16.msra.mxu0 0
      %2294 = vmatprep.subr.bf16.mxu0 0
      %2295 = vmatpush1.bf16.msra.mxu0 0
      %2296 = vmatprep.subr.bf16.mxu0 0
      %2297 = vmatpush1.bf16.msra.mxu0 0
      %2298 = vmatprep.subr.bf16.mxu0 0
      %2299 = vmatpush1.bf16.msra.mxu0 0
      %2300 = vmatprep.subr.bf16.mxu0 0
      %2301 = vmatpush1.bf16.msra.mxu0 0
      %2302 = vmatprep.subr.bf16.mxu0 0
      %2303 = vmatpush1.bf16.msra.mxu0 0
      %2304 = vmatprep.subr.bf16.mxu0 0
      %2305 = vmatpush1.bf16.msra.mxu0 0
      %2306 = vmatprep.mubr.bf16.mxu0 0
      %2307 = vmatmul.mubr.bf16.gmra.mrb[0].mxu0 %v2224
      %v2308 = vpop.f32.mrb[0].mxu0
      %v2309 = vadd.f32 0.0, %v2308
      %v2310 = vpop.f32.mrb[0].mxu0
      %v2311 = vpop.f32.mrb[0].mxu0
      %v2312 = vadd.f32 0.0, %v2311
      %v2313 = vpop.f32.mrb[0].mxu0
      %2314 = vmatprep.mubr.bf16.mxu0 0
      %2315 = vmatmul.mubr.bf16.gmra.mrb[0].mxu0 %v2227
      %v2316 = vpop.f32.mrb[0].mxu0
      %v2317 = vadd.f32 0.0, %v2316
      %v2318 = vpop.f32.mrb[0].mxu0
      %v2319 = vpop.f32.mrb[0].mxu0
      %v2320 = vadd.f32 0.0, %v2319
      %v2321 = vpop.f32.mrb[0].mxu0
      %2322 = vmatprep.mubr.bf16.mxu0 0
      %2323 = vmatmul.mubr.bf16.gmra.mrb[0].mxu0 %v2230
      %v2324 = vpop.f32.mrb[0].mxu0
      %v2325 = vadd.f32 0.0, %v2324
      %v2326 = vpop.f32.mrb[0].mxu0
      %v2327 = vpop.f32.mrb[0].mxu0
      %v2328 = vadd.f32 0.0, %v2327
      %v2329 = vpop.f32.mrb[0].mxu0
      %2330 = vmatprep.mubr.bf16.mxu0 0
      %2331 = vmatmul.mubr.bf16.gmra.mrb[0].mxu0 %v2233
      %v2332 = vpop.f32.mrb[0].mxu0
      %v2333 = vadd.f32 0.0, %v2332
      %v2334 = vpop.f32.mrb[0].mxu0
      %v2335 = vpop.f32.mrb[0].mxu0
      %v2336 = vadd.f32 0.0, %v2335
      %v2337 = vpop.f32.mrb[0].mxu0
      %2338 = vmatprep.mubr.bf16.mxu0 0
      %2339 = vmatmul.mubr.bf16.gmra.mrb[0].mxu0 %v2236
      %v2340 = vpop.f32.mrb[0].mxu0
      %v2341 = vadd.f32 0.0, %v2340
      %v2342 = vpop.f32.mrb[0].mxu0
      %v2343 = vpop.f32.mrb[0].mxu0
      %v2344 = vadd.f32 0.0, %v2343
      %v2345 = vpop.f32.mrb[0].mxu0
      %2346 = vmatprep.mubr.bf16.mxu0 0
      %2347 = vmatmul.mubr.bf16.gmra.mrb[0].mxu0 %v2239
      %v2348 = vpop.f32.mrb[0].mxu0
      %v2349 = vadd.f32 0.0, %v2348
      %v2350 = vpop.f32.mrb[0].mxu0
      %v2351 = vpop.f32.mrb[0].mxu0
      %v2352 = vadd.f32 0.0, %v2351
      %v2353 = vpop.f32.mrb[0].mxu0
      %2354 = vmatprep.mubr.bf16.mxu0 0
      %2355 = vmatmul.mubr.bf16.gmra.mrb[0].mxu0 %v2242
      %v2356 = vpop.f32.mrb[0].mxu0
      %v2357 = vadd.f32 0.0, %v2356
      %v2358 = vpop.f32.mrb[0].mxu0
      %v2359 = vpop.f32.mrb[0].mxu0
      %v2360 = vadd.f32 0.0, %v2359
      %v2361 = vpop.f32.mrb[0].mxu0
      %2362 = vmatprep.mubr.bf16.mxu0 0
      %2363 = vmatmul.mubr.bf16.gmra.mrb[0].mxu0 %v2245
      %v2364 = vpop.f32.mrb[0].mxu0
      %v2365 = vadd.f32 0.0, %v2364
      %v2366 = vpop.f32.mrb[0].mxu0
      %v2367 = vpop.f32.mrb[0].mxu0
      %v2368 = vadd.f32 0.0, %v2367
      %v2369 = vpop.f32.mrb[0].mxu0
      %2370 = vmatprep.mubr.bf16.mxu0 0
      %2371 = vmatmul.mubr.bf16.gmra.mrb[0].mxu0 %v2248
      %v2372 = vpop.f32.mrb[0].mxu0
      %v2373 = vadd.f32 0.0, %v2372
      %v2374 = vpop.f32.mrb[0].mxu0
      %v2375 = vpop.f32.mrb[0].mxu0
      %v2376 = vadd.f32 0.0, %v2375
      %v2377 = vpop.f32.mrb[0].mxu0
      %2378 = vmatprep.mubr.bf16.mxu0 0
      %2379 = vmatmul.mubr.bf16.gmra.mrb[0].mxu0 %v2251
      %v2380 = vpop.f32.mrb[0].mxu0
      %v2381 = vadd.f32 0.0, %v2380
      %v2382 = vpop.f32.mrb[0].mxu0
      %v2383 = vpop.f32.mrb[0].mxu0
      %v2384 = vadd.f32 0.0, %v2383
      %v2385 = vpop.f32.mrb[0].mxu0
      %2386 = vmatprep.mubr.bf16.mxu0 0
      %2387 = vmatmul.mubr.bf16.gmra.mrb[0].mxu0 %v2254
      %v2388 = vpop.f32.mrb[0].mxu0
      %v2389 = vadd.f32 0.0, %v2388
      %v2390 = vpop.f32.mrb[0].mxu0
      %v2391 = vpop.f32.mrb[0].mxu0
      %v2392 = vadd.f32 0.0, %v2391
      %v2393 = vpop.f32.mrb[0].mxu0
      %2394 = vmatprep.mubr.bf16.mxu0 0
      %2395 = vmatmul.mubr.bf16.gmra.mrb[0].mxu0 %v2257
      %v2396 = vpop.f32.mrb[0].mxu0
      %v2397 = vadd.f32 0.0, %v2396
      %v2398 = vpop.f32.mrb[0].mxu0
      %v2399 = vpop.f32.mrb[0].mxu0
      %v2400 = vadd.f32 0.0, %v2399
      %v2401 = vpop.f32.mrb[0].mxu0
      %2402 = vmatprep.mubr.bf16.mxu0 0
      %2403 = vmatmul.mubr.bf16.gmra.mrb[0].mxu0 %v2260
      %v2404 = vpop.f32.mrb[0].mxu0
      %v2405 = vadd.f32 0.0, %v2404
      %v2406 = vpop.f32.mrb[0].mxu0
      %v2407 = vpop.f32.mrb[0].mxu0
      %v2408 = vadd.f32 0.0, %v2407
      %v2409 = vpop.f32.mrb[0].mxu0
      %2410 = vmatprep.mubr.bf16.mxu0 0
      %2411 = vmatmul.mubr.bf16.gmra.mrb[0].mxu0 %v2263
      %v2412 = vpop.f32.mrb[0].mxu0
      %v2413 = vadd.f32 0.0, %v2412
      %v2414 = vpop.f32.mrb[0].mxu0
      %v2415 = vpop.f32.mrb[0].mxu0
      %v2416 = vadd.f32 0.0, %v2415
      %v2417 = vpop.f32.mrb[0].mxu0
      %2418 = vmatprep.mubr.bf16.mxu0 0
      %2419 = vmatmul.mubr.bf16.gmra.mrb[0].mxu0 %v2266
      %v2420 = vpop.f32.mrb[0].mxu0
      %v2421 = vadd.f32 0.0, %v2420
      %v2422 = vpop.f32.mrb[0].mxu0
      %v2423 = vpop.f32.mrb[0].mxu0
      %v2424 = vadd.f32 0.0, %v2423
      %v2425 = vpop.f32.mrb[0].mxu0
      %2426 = vmatprep.mubr.bf16.mxu0 0
      %2427 = vmatmul.mubr.bf16.gmra.mrb[0].mxu0 %v2269
      %v2428 = vpop.f32.mrb[0].mxu0
      %v2429 = vadd.f32 0.0, %v2428
      %v2430 = vpop.f32.mrb[0].mxu0
      %v2431 = vpop.f32.mrb[0].mxu0
      %v2432 = vadd.f32 0.0, %v2431
      %v2433 = vpop.f32.mrb[0].mxu0
      %2434 = vdwg.mxu0
      %v2435 = vadd.f32 %v2141, %v2309
      %v2436 = vadd.f32 %v2142, %v2312
      %v2437 = vadd.f32 %v2143, %v2317
      %v2438 = vadd.f32 %v2144, %v2320
      %v2439 = vadd.f32 %v2145, %v2325
      %v2440 = vadd.f32 %v2146, %v2328
      %v2441 = vadd.f32 %v2147, %v2333
      %v2442 = vadd.f32 %v2148, %v2336
      %v2443 = vadd.f32 %v2149, %v2341
      %v2444 = vadd.f32 %v2150, %v2344
      %v2445 = vadd.f32 %v2151, %v2349
      %v2446 = vadd.f32 %v2152, %v2352
      %v2447 = vadd.f32 %v2153, %v2357
      %v2448 = vadd.f32 %v2154, %v2360
      %v2449 = vadd.f32 %v2155, %v2365
      %v2450 = vadd.f32 %v2156, %v2368
      %v2451 = vadd.f32 %v2157, %v2373
      %v2452 = vadd.f32 %v2158, %v2376
      %v2453 = vadd.f32 %v2159, %v2381
      %v2454 = vadd.f32 %v2160, %v2384
      %v2455 = vadd.f32 %v2161, %v2389
      %v2456 = vadd.f32 %v2162, %v2392
      %v2457 = vadd.f32 %v2163, %v2397
      %v2458 = vadd.f32 %v2164, %v2400
      %v2459 = vadd.f32 %v2165, %v2405
      %v2460 = vadd.f32 %v2166, %v2408
      %v2461 = vadd.f32 %v2167, %v2413
      %v2462 = vadd.f32 %v2168, %v2416
      %v2463 = vadd.f32 %v2169, %v2421
      %v2464 = vadd.f32 %v2170, %v2424
      %v2465 = vadd.f32 %v2171, %v2429
      %v2466 = vadd.f32 %v2172, %v2432
      %v2467 = vld [vmem:[%s1878 + $0x2] sm:$0xff]
      %v2468 = vld [vmem:[%s1878 + $0xa] sm:$0xff]
      %v2469 = vld [vmem:[%s1878 + $0x12] sm:$0xff]
      %v2470 = vld [vmem:[%s1878 + $0x1a] sm:$0xff]
      %v2471 = vld [vmem:[%s1878 + $0x2a] sm:$0xff]
      %v2472 = vld [vmem:[%s1878 + $0x32] sm:$0xff]
      %v2473 = vld [vmem:[%s1878 + $0x3a] sm:$0xff]
      %v2474 = vld [vmem:[%s1878 + $0x42] sm:$0xff]
      %v2475 = vld [vmem:[%s1878 + $0x52] sm:$0xff]
      %v2476 = vld [vmem:[%s1878 + $0x5a] sm:$0xff]
      %v2477 = vld [vmem:[%s1878 + $0x62] sm:$0xff]
      %v2478 = vld [vmem:[%s1878 + $0x6a] sm:$0xff]
      %v2479 = vld [vmem:[%s1878 + $0x7a] sm:$0xff]
      %v2480 = vld [vmem:[%s1878 + $0x82] sm:$0xff]
      %v2481 = vld [vmem:[%s1878 + $0x8a] sm:$0xff]
      %v2482 = vld [vmem:[%s1878 + $0x92] sm:$0xff]
      %v2483 = vld [vmem:[%s1878 + $0xa2] sm:$0xff]
      %v2484 = vld [vmem:[%s1878 + $0xaa] sm:$0xff]
      %v2485 = vld [vmem:[%s1878 + $0xb2] sm:$0xff]
      %v2486 = vld [vmem:[%s1878 + $0xba] sm:$0xff]
      %v2487 = vld [vmem:[%s1878 + $0xca] sm:$0xff]
      %v2488 = vld [vmem:[%s1878 + $0xd2] sm:$0xff]
      %v2489 = vld [vmem:[%s1878 + $0xda] sm:$0xff]
      %v2490 = vld [vmem:[%s1878 + $0xe2] sm:$0xff]
      %v2491 = vld [vmem:[%s1878 + $0xf2] sm:$0xff]
      %v2492 = vld [vmem:[%s1878 + $0xfa] sm:$0xff]
      %v2493 = vld [vmem:[%s1878 + $0x102] sm:$0xff]
      %v2494 = vld [vmem:[%s1878 + $0x10a] sm:$0xff]
      %v2495 = vld [vmem:[%s1878 + $0x11a] sm:$0xff]
      %v2496 = vld [vmem:[%s1878 + $0x122] sm:$0xff]
      %v2497 = vld [vmem:[%s1878 + $0x12a] sm:$0xff]
      %v2498 = vld [vmem:[%s1878 + $0x132] sm:$0xff]
      %v2499 = vpack.c.bf16 %v2468, %v2467
      %v2500 = vpack.c.bf16 %v2470, %v2469
      %v2501 = vpack.c.bf16 %v2472, %v2471
      %v2502 = vpack.c.bf16 %v2474, %v2473
      %v2503 = vpack.c.bf16 %v2476, %v2475
      %v2504 = vpack.c.bf16 %v2478, %v2477
      %v2505 = vpack.c.bf16 %v2480, %v2479
      %v2506 = vpack.c.bf16 %v2482, %v2481
      %v2507 = vpack.c.bf16 %v2484, %v2483
      %v2508 = vpack.c.bf16 %v2486, %v2485
      %v2509 = vpack.c.bf16 %v2488, %v2487
      %v2510 = vpack.c.bf16 %v2490, %v2489
      %v2511 = vpack.c.bf16 %v2492, %v2491
      %v2512 = vpack.c.bf16 %v2494, %v2493
      %v2513 = vpack.c.bf16 %v2496, %v2495
      %v2514 = vpack.c.bf16 %v2498, %v2497
      %s2515 = scalar_lea.vmem %s1, 16
      %v2516 = vld [vmem:[%s2515] sm:$0x3]
      %v2518 = vsel %vm272, %v2499, 0
      %v2521 = vsel %vm272, %v2500, 0
      %v2524 = vsel %vm272, %v2501, 0
      %v2527 = vsel %vm272, %v2502, 0
      %v2530 = vsel %vm272, %v2503, 0
      %v2533 = vsel %vm272, %v2504, 0
      %v2536 = vsel %vm272, %v2505, 0
      %v2539 = vsel %vm272, %v2506, 0
      %v2542 = vsel %vm272, %v2507, 0
      %v2545 = vsel %vm272, %v2508, 0
      %v2548 = vsel %vm272, %v2509, 0
      %v2551 = vsel %vm272, %v2510, 0
      %v2554 = vsel %vm272, %v2511, 0
      %v2557 = vsel %vm272, %v2512, 0
      %v2560 = vsel %vm272, %v2513, 0
      %v2563 = vsel %vm272, %v2514, 0
      %v2566 = vand.u32 %v2516, %v324
      %2568 = vmatprep.subr.bf16.mxu0 0
      %2569 = vmatpush1.bf16.msra.mxu0 %v2566
      %2570 = vmatprep.subr.bf16.mxu0 0
      %2571 = vmatpush1.bf16.msra.mxu0 0
      %2572 = vmatprep.subr.bf16.mxu0 0
      %2573 = vmatpush1.bf16.msra.mxu0 0
      %2574 = vmatprep.subr.bf16.mxu0 0
      %2575 = vmatpush1.bf16.msra.mxu0 0
      %2576 = vmatprep.subr.bf16.mxu0 0
      %2577 = vmatpush1.bf16.msra.mxu0 0
      %2578 = vmatprep.subr.bf16.mxu0 0
      %2579 = vmatpush1.bf16.msra.mxu0 0
      %2580 = vmatprep.subr.bf16.mxu0 0
      %2581 = vmatpush1.bf16.msra.mxu0 0
      %2582 = vmatprep.subr.bf16.mxu0 0
      %2583 = vmatpush1.bf16.msra.mxu0 0
      %2584 = vmatprep.subr.bf16.mxu0 0
      %2585 = vmatpush1.bf16.msra.mxu0 0
      %2586 = vmatprep.subr.bf16.mxu0 0
      %2587 = vmatpush1.bf16.msra.mxu0 0
      %2588 = vmatprep.subr.bf16.mxu0 0
      %2589 = vmatpush1.bf16.msra.mxu0 0
      %2590 = vmatprep.subr.bf16.mxu0 0
      %2591 = vmatpush1.bf16.msra.mxu0 0
      %2592 = vmatprep.subr.bf16.mxu0 0
      %2593 = vmatpush1.bf16.msra.mxu0 0
      %2594 = vmatprep.subr.bf16.mxu0 0
      %2595 = vmatpush1.bf16.msra.mxu0 0
      %2596 = vmatprep.subr.bf16.mxu0 0
      %2597 = vmatpush1.bf16.msra.mxu0 0
      %2598 = vmatprep.subr.bf16.mxu0 0
      %2599 = vmatpush1.bf16.msra.mxu0 0
      %2600 = vmatprep.mubr.bf16.mxu0 0
      %2601 = vmatmul.mubr.bf16.gmra.mrb[0].mxu0 %v2518
      %v2602 = vpop.f32.mrb[0].mxu0
      %v2603 = vadd.f32 0.0, %v2602
      %v2604 = vpop.f32.mrb[0].mxu0
      %v2605 = vpop.f32.mrb[0].mxu0
      %v2606 = vadd.f32 0.0, %v2605
      %v2607 = vpop.f32.mrb[0].mxu0
      %2608 = vmatprep.mubr.bf16.mxu0 0
      %2609 = vmatmul.mubr.bf16.gmra.mrb[0].mxu0 %v2521
      %v2610 = vpop.f32.mrb[0].mxu0
      %v2611 = vadd.f32 0.0, %v2610
      %v2612 = vpop.f32.mrb[0].mxu0
      %v2613 = vpop.f32.mrb[0].mxu0
      %v2614 = vadd.f32 0.0, %v2613
      %v2615 = vpop.f32.mrb[0].mxu0
      %2616 = vmatprep.mubr.bf16.mxu0 0
      %2617 = vmatmul.mubr.bf16.gmra.mrb[0].mxu0 %v2524
      %v2618 = vpop.f32.mrb[0].mxu0
      %v2619 = vadd.f32 0.0, %v2618
      %v2620 = vpop.f32.mrb[0].mxu0
      %v2621 = vpop.f32.mrb[0].mxu0
      %v2622 = vadd.f32 0.0, %v2621
      %v2623 = vpop.f32.mrb[0].mxu0
      %2624 = vmatprep.mubr.bf16.mxu0 0
      %2625 = vmatmul.mubr.bf16.gmra.mrb[0].mxu0 %v2527
      %v2626 = vpop.f32.mrb[0].mxu0
      %v2627 = vadd.f32 0.0, %v2626
      %v2628 = vpop.f32.mrb[0].mxu0
      %v2629 = vpop.f32.mrb[0].mxu0
      %v2630 = vadd.f32 0.0, %v2629
      %v2631 = vpop.f32.mrb[0].mxu0
      %2632 = vmatprep.mubr.bf16.mxu0 0
      %2633 = vmatmul.mubr.bf16.gmra.mrb[0].mxu0 %v2530
      %v2634 = vpop.f32.mrb[0].mxu0
      %v2635 = vadd.f32 0.0, %v2634
      %v2636 = vpop.f32.mrb[0].mxu0
      %v2637 = vpop.f32.mrb[0].mxu0
      %v2638 = vadd.f32 0.0, %v2637
      %v2639 = vpop.f32.mrb[0].mxu0
      %2640 = vmatprep.mubr.bf16.mxu0 0
      %2641 = vmatmul.mubr.bf16.gmra.mrb[0].mxu0 %v2533
      %v2642 = vpop.f32.mrb[0].mxu0
      %v2643 = vadd.f32 0.0, %v2642
      %v2644 = vpop.f32.mrb[0].mxu0
      %v2645 = vpop.f32.mrb[0].mxu0
      %v2646 = vadd.f32 0.0, %v2645
      %v2647 = vpop.f32.mrb[0].mxu0
      %2648 = vmatprep.mubr.bf16.mxu0 0
      %2649 = vmatmul.mubr.bf16.gmra.mrb[0].mxu0 %v2536
      %v2650 = vpop.f32.mrb[0].mxu0
      %v2651 = vadd.f32 0.0, %v2650
      %v2652 = vpop.f32.mrb[0].mxu0
      %v2653 = vpop.f32.mrb[0].mxu0
      %v2654 = vadd.f32 0.0, %v2653
      %v2655 = vpop.f32.mrb[0].mxu0
      %2656 = vmatprep.mubr.bf16.mxu0 0
      %2657 = vmatmul.mubr.bf16.gmra.mrb[0].mxu0 %v2539
      %v2658 = vpop.f32.mrb[0].mxu0
      %v2659 = vadd.f32 0.0, %v2658
      %v2660 = vpop.f32.mrb[0].mxu0
      %v2661 = vpop.f32.mrb[0].mxu0
      %v2662 = vadd.f32 0.0, %v2661
      %v2663 = vpop.f32.mrb[0].mxu0
      %2664 = vmatprep.mubr.bf16.mxu0 0
      %2665 = vmatmul.mubr.bf16.gmra.mrb[0].mxu0 %v2542
      %v2666 = vpop.f32.mrb[0].mxu0
      %v2667 = vadd.f32 0.0, %v2666
      %v2668 = vpop.f32.mrb[0].mxu0
      %v2669 = vpop.f32.mrb[0].mxu0
      %v2670 = vadd.f32 0.0, %v2669
      %v2671 = vpop.f32.mrb[0].mxu0
      %2672 = vmatprep.mubr.bf16.mxu0 0
      %2673 = vmatmul.mubr.bf16.gmra.mrb[0].mxu0 %v2545
      %v2674 = vpop.f32.mrb[0].mxu0
      %v2675 = vadd.f32 0.0, %v2674
      %v2676 = vpop.f32.mrb[0].mxu0
      %v2677 = vpop.f32.mrb[0].mxu0
      %v2678 = vadd.f32 0.0, %v2677
      %v2679 = vpop.f32.mrb[0].mxu0
      %2680 = vmatprep.mubr.bf16.mxu0 0
      %2681 = vmatmul.mubr.bf16.gmra.mrb[0].mxu0 %v2548
      %v2682 = vpop.f32.mrb[0].mxu0
      %v2683 = vadd.f32 0.0, %v2682
      %v2684 = vpop.f32.mrb[0].mxu0
      %v2685 = vpop.f32.mrb[0].mxu0
      %v2686 = vadd.f32 0.0, %v2685
      %v2687 = vpop.f32.mrb[0].mxu0
      %2688 = vmatprep.mubr.bf16.mxu0 0
      %2689 = vmatmul.mubr.bf16.gmra.mrb[0].mxu0 %v2551
      %v2690 = vpop.f32.mrb[0].mxu0
      %v2691 = vadd.f32 0.0, %v2690
      %v2692 = vpop.f32.mrb[0].mxu0
      %v2693 = vpop.f32.mrb[0].mxu0
      %v2694 = vadd.f32 0.0, %v2693
      %v2695 = vpop.f32.mrb[0].mxu0
      %2696 = vmatprep.mubr.bf16.mxu0 0
      %2697 = vmatmul.mubr.bf16.gmra.mrb[0].mxu0 %v2554
      %v2698 = vpop.f32.mrb[0].mxu0
      %v2699 = vadd.f32 0.0, %v2698
      %v2700 = vpop.f32.mrb[0].mxu0
      %v2701 = vpop.f32.mrb[0].mxu0
      %v2702 = vadd.f32 0.0, %v2701
      %v2703 = vpop.f32.mrb[0].mxu0
      %2704 = vmatprep.mubr.bf16.mxu0 0
      %2705 = vmatmul.mubr.bf16.gmra.mrb[0].mxu0 %v2557
      %v2706 = vpop.f32.mrb[0].mxu0
      %v2707 = vadd.f32 0.0, %v2706
      %v2708 = vpop.f32.mrb[0].mxu0
      %v2709 = vpop.f32.mrb[0].mxu0
      %v2710 = vadd.f32 0.0, %v2709
      %v2711 = vpop.f32.mrb[0].mxu0
      %2712 = vmatprep.mubr.bf16.mxu0 0
      %2713 = vmatmul.mubr.bf16.gmra.mrb[0].mxu0 %v2560
      %v2714 = vpop.f32.mrb[0].mxu0
      %v2715 = vadd.f32 0.0, %v2714
      %v2716 = vpop.f32.mrb[0].mxu0
      %v2717 = vpop.f32.mrb[0].mxu0
      %v2718 = vadd.f32 0.0, %v2717
      %v2719 = vpop.f32.mrb[0].mxu0
      %2720 = vmatprep.mubr.bf16.mxu0 0
      %2721 = vmatmul.mubr.bf16.gmra.mrb[0].mxu0 %v2563
      %v2722 = vpop.f32.mrb[0].mxu0
      %v2723 = vadd.f32 0.0, %v2722
      %v2724 = vpop.f32.mrb[0].mxu0
      %v2725 = vpop.f32.mrb[0].mxu0
      %v2726 = vadd.f32 0.0, %v2725
      %v2727 = vpop.f32.mrb[0].mxu0
      %2728 = vdwg.mxu0
      %v2729 = vadd.f32 %v2435, %v2603
      %v2730 = vadd.f32 %v2436, %v2606
      %v2731 = vadd.f32 %v2437, %v2611
      %v2732 = vadd.f32 %v2438, %v2614
      %v2733 = vadd.f32 %v2439, %v2619
      %v2734 = vadd.f32 %v2440, %v2622
      %v2735 = vadd.f32 %v2441, %v2627
      %v2736 = vadd.f32 %v2442, %v2630
      %v2737 = vadd.f32 %v2443, %v2635
      %v2738 = vadd.f32 %v2444, %v2638
      %v2739 = vadd.f32 %v2445, %v2643
      %v2740 = vadd.f32 %v2446, %v2646
      %v2741 = vadd.f32 %v2447, %v2651
      %v2742 = vadd.f32 %v2448, %v2654
      %v2743 = vadd.f32 %v2449, %v2659
      %v2744 = vadd.f32 %v2450, %v2662
      %v2745 = vadd.f32 %v2451, %v2667
      %v2746 = vadd.f32 %v2452, %v2670
      %v2747 = vadd.f32 %v2453, %v2675
      %v2748 = vadd.f32 %v2454, %v2678
      %v2749 = vadd.f32 %v2455, %v2683
      %v2750 = vadd.f32 %v2456, %v2686
      %v2751 = vadd.f32 %v2457, %v2691
      %v2752 = vadd.f32 %v2458, %v2694
      %v2753 = vadd.f32 %v2459, %v2699
      %v2754 = vadd.f32 %v2460, %v2702
      %v2755 = vadd.f32 %v2461, %v2707
      %v2756 = vadd.f32 %v2462, %v2710
      %v2757 = vadd.f32 %v2463, %v2715
      %v2758 = vadd.f32 %v2464, %v2718
      %v2759 = vadd.f32 %v2465, %v2723
      %v2760 = vadd.f32 %v2466, %v2726
      %v2762 = vlaneseq
      %v2763 = vshrl.u32 %v2762, 7
      %v2764 = vsub.s32 0, %v2763
      %v2765 = vrot.slane %v172, %v2764
      %v2767 = vadd.f32 %v2729, %v2765
      %v2768 = vadd.f32 %v2730, %v2765
      %v2769 = vadd.f32 %v2731, %v2765
      %v2770 = vadd.f32 %v2732, %v2765
      %v2771 = vadd.f32 %v2733, %v2765
      %v2772 = vadd.f32 %v2734, %v2765
      %v2773 = vadd.f32 %v2735, %v2765
      %v2774 = vadd.f32 %v2736, %v2765
      %v2775 = vadd.f32 %v2737, %v2765
      %v2776 = vadd.f32 %v2738, %v2765
      %v2777 = vadd.f32 %v2739, %v2765
      %v2778 = vadd.f32 %v2740, %v2765
      %v2779 = vadd.f32 %v2741, %v2765
      %v2780 = vadd.f32 %v2742, %v2765
      %v2781 = vadd.f32 %v2743, %v2765
      %v2782 = vadd.f32 %v2744, %v2765
      %v2783 = vadd.f32 %v2745, %v2765
      %v2784 = vadd.f32 %v2746, %v2765
      %v2785 = vadd.f32 %v2747, %v2765
      %v2786 = vadd.f32 %v2748, %v2765
      %v2787 = vadd.f32 %v2749, %v2765
      %v2788 = vadd.f32 %v2750, %v2765
      %v2789 = vadd.f32 %v2751, %v2765
      %v2790 = vadd.f32 %v2752, %v2765
      %v2791 = vadd.f32 %v2753, %v2765
      %v2792 = vadd.f32 %v2754, %v2765
      %v2793 = vadd.f32 %v2755, %v2765
      %v2794 = vadd.f32 %v2756, %v2765
      %v2795 = vadd.f32 %v2757, %v2765
      %v2796 = vadd.f32 %v2758, %v2765
      %v2797 = vadd.f32 %v2759, %v2765
      %v2798 = vadd.f32 %v2760, %v2765
      %v2799 = vmax.f32 %v2767, 0.0
      %v2800 = vmax.f32 %v2768, 0.0
      %v2801 = vmax.f32 %v2769, 0.0
      %v2802 = vmax.f32 %v2770, 0.0
      %v2803 = vmax.f32 %v2771, 0.0
      %v2804 = vmax.f32 %v2772, 0.0
      %v2805 = vmax.f32 %v2773, 0.0
      %v2806 = vmax.f32 %v2774, 0.0
      %v2807 = vmax.f32 %v2775, 0.0
      %v2808 = vmax.f32 %v2776, 0.0
      %v2809 = vmax.f32 %v2777, 0.0
      %v2810 = vmax.f32 %v2778, 0.0
      %v2811 = vmax.f32 %v2779, 0.0
      %v2812 = vmax.f32 %v2780, 0.0
      %v2813 = vmax.f32 %v2781, 0.0
      %v2814 = vmax.f32 %v2782, 0.0
      %v2815 = vmax.f32 %v2783, 0.0
      %v2816 = vmax.f32 %v2784, 0.0
      %v2817 = vmax.f32 %v2785, 0.0
      %v2818 = vmax.f32 %v2786, 0.0
      %v2819 = vmax.f32 %v2787, 0.0
      %v2820 = vmax.f32 %v2788, 0.0
      %v2821 = vmax.f32 %v2789, 0.0
      %v2822 = vmax.f32 %v2790, 0.0
      %v2823 = vmax.f32 %v2791, 0.0
      %v2824 = vmax.f32 %v2792, 0.0
      %v2825 = vmax.f32 %v2793, 0.0
      %v2826 = vmax.f32 %v2794, 0.0
      %v2827 = vmax.f32 %v2795, 0.0
      %v2828 = vmax.f32 %v2796, 0.0
      %v2829 = vmax.f32 %v2797, 0.0
      %v2830 = vmax.f32 %v2798, 0.0
      %vm2831 = vcmask 130048
      %2832 = vst.msk [vmem:[%s170] sm:$0xff] %vm2831, %v2799
      %2833 = vst.msk [vmem:[%s170 + $0x8] sm:$0xff] %vm2831, %v2800
      %2834 = vst.msk [vmem:[%s170 + $0x10] sm:$0xff] %vm2831, %v2801
      %2835 = vst.msk [vmem:[%s170 + $0x18] sm:$0xff] %vm2831, %v2802
      %2836 = vst.msk [vmem:[%s170 + $0x20] sm:$0xff] %vm2831, %v2803
      %2837 = vst.msk [vmem:[%s170 + $0x28] sm:$0xff] %vm2831, %v2804
      %2838 = vst.msk [vmem:[%s170 + $0x30] sm:$0xff] %vm2831, %v2805
      %2839 = vst.msk [vmem:[%s170 + $0x38] sm:$0xff] %vm2831, %v2806
      %2840 = vst.msk [vmem:[%s170 + $0x40] sm:$0xff] %vm2831, %v2807
      %2841 = vst.msk [vmem:[%s170 + $0x48] sm:$0xff] %vm2831, %v2808
      %2842 = vst.msk [vmem:[%s170 + $0x50] sm:$0xff] %vm2831, %v2809
      %2843 = vst.msk [vmem:[%s170 + $0x58] sm:$0xff] %vm2831, %v2810
      %2844 = vst.msk [vmem:[%s170 + $0x60] sm:$0xff] %vm2831, %v2811
      %2845 = vst.msk [vmem:[%s170 + $0x68] sm:$0xff] %vm2831, %v2812
      %2846 = vst.msk [vmem:[%s170 + $0x70] sm:$0xff] %vm2831, %v2813
      %2847 = vst.msk [vmem:[%s170 + $0x78] sm:$0xff] %vm2831, %v2814
      %2848 = vst.msk [vmem:[%s170 + $0x80] sm:$0xff] %vm2831, %v2815
      %2849 = vst.msk [vmem:[%s170 + $0x88] sm:$0xff] %vm2831, %v2816
      %2850 = vst.msk [vmem:[%s170 + $0x90] sm:$0xff] %vm2831, %v2817
      %2851 = vst.msk [vmem:[%s170 + $0x98] sm:$0xff] %vm2831, %v2818
      %2852 = vst.msk [vmem:[%s170 + $0xa0] sm:$0xff] %vm2831, %v2819
      %2853 = vst.msk [vmem:[%s170 + $0xa8] sm:$0xff] %vm2831, %v2820
      %2854 = vst.msk [vmem:[%s170 + $0xb0] sm:$0xff] %vm2831, %v2821
      %2855 = vst.msk [vmem:[%s170 + $0xb8] sm:$0xff] %vm2831, %v2822
      %2856 = vst.msk [vmem:[%s170 + $0xc0] sm:$0xff] %vm2831, %v2823
      %2857 = vst.msk [vmem:[%s170 + $0xc8] sm:$0xff] %vm2831, %v2824
      %2858 = vst.msk [vmem:[%s170 + $0xd0] sm:$0xff] %vm2831, %v2825
      %2859 = vst.msk [vmem:[%s170 + $0xd8] sm:$0xff] %vm2831, %v2826
      %2860 = vst.msk [vmem:[%s170 + $0xe0] sm:$0xff] %vm2831, %v2827
      %2861 = vst.msk [vmem:[%s170 + $0xe8] sm:$0xff] %vm2831, %v2828
      %2862 = vst.msk [vmem:[%s170 + $0xf0] sm:$0xff] %vm2831, %v2829
      %2863 = vst.msk [vmem:[%s170 + $0xf8] sm:$0xff] %vm2831, %v2830
      %s2864 = scalar_lea.vmem %s165, 320
      %v2865 = vld [vmem:[%s2864] sm:$0xff]
      %v2866 = vld [vmem:[%s2864 + $0x8] sm:$0xff]
      %v2867 = vld [vmem:[%s2864 + $0x10] sm:$0xff]
      %v2868 = vld [vmem:[%s2864 + $0x18] sm:$0xff]
      %v2869 = vld [vmem:[%s2864 + $0x28] sm:$0xff]
      %v2870 = vld [vmem:[%s2864 + $0x30] sm:$0xff]
      %v2871 = vld [vmem:[%s2864 + $0x38] sm:$0xff]
      %v2872 = vld [vmem:[%s2864 + $0x40] sm:$0xff]
      %v2873 = vld [vmem:[%s2864 + $0x50] sm:$0xff]
      %v2874 = vld [vmem:[%s2864 + $0x58] sm:$0xff]
      %v2875 = vld [vmem:[%s2864 + $0x60] sm:$0xff]
      %v2876 = vld [vmem:[%s2864 + $0x68] sm:$0xff]
      %v2877 = vld [vmem:[%s2864 + $0x78] sm:$0xff]
      %v2878 = vld [vmem:[%s2864 + $0x80] sm:$0xff]
      %v2879 = vld [vmem:[%s2864 + $0x88] sm:$0xff]
      %v2880 = vld [vmem:[%s2864 + $0x90] sm:$0xff]
      %v2881 = vld [vmem:[%s2864 + $0xa0] sm:$0xff]
      %v2882 = vld [vmem:[%s2864 + $0xa8] sm:$0xff]
      %v2883 = vld [vmem:[%s2864 + $0xb0] sm:$0xff]
      %v2884 = vld [vmem:[%s2864 + $0xb8] sm:$0xff]
      %v2885 = vld [vmem:[%s2864 + $0xc8] sm:$0xff]
      %v2886 = vld [vmem:[%s2864 + $0xd0] sm:$0xff]
      %v2887 = vld [vmem:[%s2864 + $0xd8] sm:$0xff]
      %v2888 = vld [vmem:[%s2864 + $0xe0] sm:$0xff]
      %v2889 = vld [vmem:[%s2864 + $0xf0] sm:$0xff]
      %v2890 = vld [vmem:[%s2864 + $0xf8] sm:$0xff]
      %v2891 = vld [vmem:[%s2864 + $0x100] sm:$0xff]
      %v2892 = vld [vmem:[%s2864 + $0x108] sm:$0xff]
      %v2893 = vld [vmem:[%s2864 + $0x118] sm:$0xff]
      %v2894 = vld [vmem:[%s2864 + $0x120] sm:$0xff]
      %v2895 = vld [vmem:[%s2864 + $0x128] sm:$0xff]
      %v2896 = vld [vmem:[%s2864 + $0x130] sm:$0xff]
      %v2897 = vpack.c.bf16 %v2866, %v2865
      %v2898 = vpack.c.bf16 %v2868, %v2867
      %v2899 = vpack.c.bf16 %v2870, %v2869
      %v2900 = vpack.c.bf16 %v2872, %v2871
      %v2901 = vpack.c.bf16 %v2874, %v2873
      %v2902 = vpack.c.bf16 %v2876, %v2875
      %v2903 = vpack.c.bf16 %v2878, %v2877
      %v2904 = vpack.c.bf16 %v2880, %v2879
      %v2905 = vpack.c.bf16 %v2882, %v2881
      %v2906 = vpack.c.bf16 %v2884, %v2883
      %v2907 = vpack.c.bf16 %v2886, %v2885
      %v2908 = vpack.c.bf16 %v2888, %v2887
      %v2909 = vpack.c.bf16 %v2890, %v2889
      %v2910 = vpack.c.bf16 %v2892, %v2891
      %v2911 = vpack.c.bf16 %v2894, %v2893
      %v2912 = vpack.c.bf16 %v2896, %v2895
      %v2913 = vld [vmem:[%s1] sm:$0x3]
      %v2914 = vld [vmem:[%s2864 + $0x1] sm:$0xff]
      %v2915 = vld [vmem:[%s2864 + $0x9] sm:$0xff]
      %v2916 = vld [vmem:[%s2864 + $0x11] sm:$0xff]
      %v2917 = vld [vmem:[%s2864 + $0x19] sm:$0xff]
      %v2918 = vld [vmem:[%s2864 + $0x29] sm:$0xff]
      %v2919 = vld [vmem:[%s2864 + $0x31] sm:$0xff]
      %v2920 = vld [vmem:[%s2864 + $0x39] sm:$0xff]
      %v2921 = vld [vmem:[%s2864 + $0x41] sm:$0xff]
      %v2922 = vld [vmem:[%s2864 + $0x51] sm:$0xff]
      %v2923 = vld [vmem:[%s2864 + $0x59] sm:$0xff]
      %v2924 = vld [vmem:[%s2864 + $0x61] sm:$0xff]
      %v2925 = vld [vmem:[%s2864 + $0x69] sm:$0xff]
      %v2926 = vld [vmem:[%s2864 + $0x79] sm:$0xff]
      %v2927 = vld [vmem:[%s2864 + $0x81] sm:$0xff]
      %v2928 = vld [vmem:[%s2864 + $0x89] sm:$0xff]
      %v2929 = vld [vmem:[%s2864 + $0x91] sm:$0xff]
      %v2930 = vld [vmem:[%s2864 + $0xa1] sm:$0xff]
      %v2931 = vld [vmem:[%s2864 + $0xa9] sm:$0xff]
      %v2932 = vld [vmem:[%s2864 + $0xb1] sm:$0xff]
      %v2933 = vld [vmem:[%s2864 + $0xb9] sm:$0xff]
      %v2934 = vld [vmem:[%s2864 + $0xc9] sm:$0xff]
      %v2935 = vld [vmem:[%s2864 + $0xd1] sm:$0xff]
      %v2936 = vld [vmem:[%s2864 + $0xd9] sm:$0xff]
      %v2937 = vld [vmem:[%s2864 + $0xe1] sm:$0xff]
      %v2938 = vld [vmem:[%s2864 + $0xf1] sm:$0xff]
      %v2939 = vld [vmem:[%s2864 + $0xf9] sm:$0xff]
      %v2940 = vld [vmem:[%s2864 + $0x101] sm:$0xff]
      %v2941 = vld [vmem:[%s2864 + $0x109] sm:$0xff]
      %v2942 = vld [vmem:[%s2864 + $0x119] sm:$0xff]
      %v2943 = vld [vmem:[%s2864 + $0x121] sm:$0xff]
      %v2944 = vld [vmem:[%s2864 + $0x129] sm:$0xff]
      %v2945 = vld [vmem:[%s2864 + $0x131] sm:$0xff]
      %v2946 = vpack.c.bf16 %v2915, %v2914
      %v2947 = vpack.c.bf16 %v2917, %v2916
      %v2948 = vpack.c.bf16 %v2919, %v2918
      %v2949 = vpack.c.bf16 %v2921, %v2920
      %v2950 = vpack.c.bf16 %v2923, %v2922
      %v2951 = vpack.c.bf16 %v2925, %v2924
      %v2952 = vpack.c.bf16 %v2927, %v2926
      %v2953 = vpack.c.bf16 %v2929, %v2928
      %v2954 = vpack.c.bf16 %v2931, %v2930
      %v2955 = vpack.c.bf16 %v2933, %v2932
      %v2956 = vpack.c.bf16 %v2935, %v2934
      %v2957 = vpack.c.bf16 %v2937, %v2936
      %v2958 = vpack.c.bf16 %v2939, %v2938
      %v2959 = vpack.c.bf16 %v2941, %v2940
      %v2960 = vpack.c.bf16 %v2943, %v2942
      %v2961 = vpack.c.bf16 %v2945, %v2944
      %v2962 = vld [vmem:[%s270] sm:$0x3]
      %v2964 = vsel %vm272, %v2946, 0
      %v2967 = vsel %vm272, %v2947, 0
      %v2970 = vsel %vm272, %v2948, 0
      %v2973 = vsel %vm272, %v2949, 0
      %v2976 = vsel %vm272, %v2950, 0
      %v2979 = vsel %vm272, %v2951, 0
      %v2982 = vsel %vm272, %v2952, 0
      %v2985 = vsel %vm272, %v2953, 0
      %v2988 = vsel %vm272, %v2954, 0
      %v2991 = vsel %vm272, %v2955, 0
      %v2994 = vsel %vm272, %v2956, 0
      %v2997 = vsel %vm272, %v2957, 0
      %v3000 = vsel %vm272, %v2958, 0
      %v3003 = vsel %vm272, %v2959, 0
      %v3006 = vsel %vm272, %v2960, 0
      %v3009 = vsel %vm272, %v2961, 0
      %v3012 = vand.u32 %v2962, %v324
      %3014 = vmatprep.subr.bf16.mxu0 0
      %3015 = vmatpush1.bf16.msra.mxu0 %v3012
      %3016 = vmatprep.subr.bf16.mxu0 0
      %3017 = vmatpush1.bf16.msra.mxu0 0
      %3018 = vmatprep.subr.bf16.mxu0 0
      %3019 = vmatpush1.bf16.msra.mxu0 0
      %3020 = vmatprep.subr.bf16.mxu0 0
      %3021 = vmatpush1.bf16.msra.mxu0 0
      %3022 = vmatprep.subr.bf16.mxu0 0
      %3023 = vmatpush1.bf16.msra.mxu0 0
      %3024 = vmatprep.subr.bf16.mxu0 0
      %3025 = vmatpush1.bf16.msra.mxu0 0
      %3026 = vmatprep.subr.bf16.mxu0 0
      %3027 = vmatpush1.bf16.msra.mxu0 0
      %3028 = vmatprep.subr.bf16.mxu0 0
      %3029 = vmatpush1.bf16.msra.mxu0 0
      %3030 = vmatprep.subr.bf16.mxu0 0
      %3031 = vmatpush1.bf16.msra.mxu0 0
      %3032 = vmatprep.subr.bf16.mxu0 0
      %3033 = vmatpush1.bf16.msra.mxu0 0
      %3034 = vmatprep.subr.bf16.mxu0 0
      %3035 = vmatpush1.bf16.msra.mxu0 0
      %3036 = vmatprep.subr.bf16.mxu0 0
      %3037 = vmatpush1.bf16.msra.mxu0 0
      %3038 = vmatprep.subr.bf16.mxu0 0
      %3039 = vmatpush1.bf16.msra.mxu0 0
      %3040 = vmatprep.subr.bf16.mxu0 0
      %3041 = vmatpush1.bf16.msra.mxu0 0
      %3042 = vmatprep.subr.bf16.mxu0 0
      %3043 = vmatpush1.bf16.msra.mxu0 0
      %3044 = vmatprep.subr.bf16.mxu0 0
      %3045 = vmatpush1.bf16.msra.mxu0 0
      %3046 = vmatprep.mubr.bf16.mxu0 0
      %3047 = vmatmul.mubr.bf16.gmra.mrb[0].mxu0 %v2964
      %v3048 = vpop.f32.mrb[0].mxu0
      %v3049 = vadd.f32 0.0, %v3048
      %v3050 = vpop.f32.mrb[0].mxu0
      %v3051 = vpop.f32.mrb[0].mxu0
      %v3052 = vadd.f32 0.0, %v3051
      %v3053 = vpop.f32.mrb[0].mxu0
      %3054 = vmatprep.mubr.bf16.mxu0 0
      %3055 = vmatmul.mubr.bf16.gmra.mrb[0].mxu0 %v2967
      %v3056 = vpop.f32.mrb[0].mxu0
      %v3057 = vadd.f32 0.0, %v3056
      %v3058 = vpop.f32.mrb[0].mxu0
      %v3059 = vpop.f32.mrb[0].mxu0
      %v3060 = vadd.f32 0.0, %v3059
      %v3061 = vpop.f32.mrb[0].mxu0
      %3062 = vmatprep.mubr.bf16.mxu0 0
      %3063 = vmatmul.mubr.bf16.gmra.mrb[0].mxu0 %v2970
      %v3064 = vpop.f32.mrb[0].mxu0
      %v3065 = vadd.f32 0.0, %v3064
      %v3066 = vpop.f32.mrb[0].mxu0
      %v3067 = vpop.f32.mrb[0].mxu0
      %v3068 = vadd.f32 0.0, %v3067
      %v3069 = vpop.f32.mrb[0].mxu0
      %3070 = vmatprep.mubr.bf16.mxu0 0
      %3071 = vmatmul.mubr.bf16.gmra.mrb[0].mxu0 %v2973
      %v3072 = vpop.f32.mrb[0].mxu0
      %v3073 = vadd.f32 0.0, %v3072
      %v3074 = vpop.f32.mrb[0].mxu0
      %v3075 = vpop.f32.mrb[0].mxu0
      %v3076 = vadd.f32 0.0, %v3075
      %v3077 = vpop.f32.mrb[0].mxu0
      %3078 = vmatprep.mubr.bf16.mxu0 0
      %3079 = vmatmul.mubr.bf16.gmra.mrb[0].mxu0 %v2976
      %v3080 = vpop.f32.mrb[0].mxu0
      %v3081 = vadd.f32 0.0, %v3080
      %v3082 = vpop.f32.mrb[0].mxu0
      %v3083 = vpop.f32.mrb[0].mxu0
      %v3084 = vadd.f32 0.0, %v3083
      %v3085 = vpop.f32.mrb[0].mxu0
      %3086 = vmatprep.mubr.bf16.mxu0 0
      %3087 = vmatmul.mubr.bf16.gmra.mrb[0].mxu0 %v2979
      %v3088 = vpop.f32.mrb[0].mxu0
      %v3089 = vadd.f32 0.0, %v3088
      %v3090 = vpop.f32.mrb[0].mxu0
      %v3091 = vpop.f32.mrb[0].mxu0
      %v3092 = vadd.f32 0.0, %v3091
      %v3093 = vpop.f32.mrb[0].mxu0
      %3094 = vmatprep.mubr.bf16.mxu0 0
      %3095 = vmatmul.mubr.bf16.gmra.mrb[0].mxu0 %v2982
      %v3096 = vpop.f32.mrb[0].mxu0
      %v3097 = vadd.f32 0.0, %v3096
      %v3098 = vpop.f32.mrb[0].mxu0
      %v3099 = vpop.f32.mrb[0].mxu0
      %v3100 = vadd.f32 0.0, %v3099
      %v3101 = vpop.f32.mrb[0].mxu0
      %3102 = vmatprep.mubr.bf16.mxu0 0
      %3103 = vmatmul.mubr.bf16.gmra.mrb[0].mxu0 %v2985
      %v3104 = vpop.f32.mrb[0].mxu0
      %v3105 = vadd.f32 0.0, %v3104
      %v3106 = vpop.f32.mrb[0].mxu0
      %v3107 = vpop.f32.mrb[0].mxu0
      %v3108 = vadd.f32 0.0, %v3107
      %v3109 = vpop.f32.mrb[0].mxu0
      %3110 = vmatprep.mubr.bf16.mxu0 0
      %3111 = vmatmul.mubr.bf16.gmra.mrb[0].mxu0 %v2988
      %v3112 = vpop.f32.mrb[0].mxu0
      %v3113 = vadd.f32 0.0, %v3112
      %v3114 = vpop.f32.mrb[0].mxu0
      %v3115 = vpop.f32.mrb[0].mxu0
      %v3116 = vadd.f32 0.0, %v3115
      %v3117 = vpop.f32.mrb[0].mxu0
      %3118 = vmatprep.mubr.bf16.mxu0 0
      %3119 = vmatmul.mubr.bf16.gmra.mrb[0].mxu0 %v2991
      %v3120 = vpop.f32.mrb[0].mxu0
      %v3121 = vadd.f32 0.0, %v3120
      %v3122 = vpop.f32.mrb[0].mxu0
      %v3123 = vpop.f32.mrb[0].mxu0
      %v3124 = vadd.f32 0.0, %v3123
      %v3125 = vpop.f32.mrb[0].mxu0
      %3126 = vmatprep.mubr.bf16.mxu0 0
      %3127 = vmatmul.mubr.bf16.gmra.mrb[0].mxu0 %v2994
      %v3128 = vpop.f32.mrb[0].mxu0
      %v3129 = vadd.f32 0.0, %v3128
      %v3130 = vpop.f32.mrb[0].mxu0
      %v3131 = vpop.f32.mrb[0].mxu0
      %v3132 = vadd.f32 0.0, %v3131
      %v3133 = vpop.f32.mrb[0].mxu0
      %3134 = vmatprep.mubr.bf16.mxu0 0
      %3135 = vmatmul.mubr.bf16.gmra.mrb[0].mxu0 %v2997
      %v3136 = vpop.f32.mrb[0].mxu0
      %v3137 = vadd.f32 0.0, %v3136
      %v3138 = vpop.f32.mrb[0].mxu0
      %v3139 = vpop.f32.mrb[0].mxu0
      %v3140 = vadd.f32 0.0, %v3139
      %v3141 = vpop.f32.mrb[0].mxu0
      %3142 = vmatprep.mubr.bf16.mxu0 0
      %3143 = vmatmul.mubr.bf16.gmra.mrb[0].mxu0 %v3000
      %v3144 = vpop.f32.mrb[0].mxu0
      %v3145 = vadd.f32 0.0, %v3144
      %v3146 = vpop.f32.mrb[0].mxu0
      %v3147 = vpop.f32.mrb[0].mxu0
      %v3148 = vadd.f32 0.0, %v3147
      %v3149 = vpop.f32.mrb[0].mxu0
      %3150 = vmatprep.mubr.bf16.mxu0 0
      %3151 = vmatmul.mubr.bf16.gmra.mrb[0].mxu0 %v3003
      %v3152 = vpop.f32.mrb[0].mxu0
      %v3153 = vadd.f32 0.0, %v3152
      %v3154 = vpop.f32.mrb[0].mxu0
      %v3155 = vpop.f32.mrb[0].mxu0
      %v3156 = vadd.f32 0.0, %v3155
      %v3157 = vpop.f32.mrb[0].mxu0
      %3158 = vmatprep.mubr.bf16.mxu0 0
      %3159 = vmatmul.mubr.bf16.gmra.mrb[0].mxu0 %v3006
      %v3160 = vpop.f32.mrb[0].mxu0
      %v3161 = vadd.f32 0.0, %v3160
      %v3162 = vpop.f32.mrb[0].mxu0
      %v3163 = vpop.f32.mrb[0].mxu0
      %v3164 = vadd.f32 0.0, %v3163
      %v3165 = vpop.f32.mrb[0].mxu0
      %3166 = vmatprep.mubr.bf16.mxu0 0
      %3167 = vmatmul.mubr.bf16.gmra.mrb[0].mxu0 %v3009
      %v3168 = vpop.f32.mrb[0].mxu0
      %v3169 = vadd.f32 0.0, %v3168
      %v3170 = vpop.f32.mrb[0].mxu0
      %v3171 = vpop.f32.mrb[0].mxu0
      %v3172 = vadd.f32 0.0, %v3171
      %v3173 = vpop.f32.mrb[0].mxu0
      %3174 = vdwg.mxu0
      %v3176 = vsel %vm272, %v2897, 0
      %v3179 = vsel %vm272, %v2898, 0
      %v3182 = vsel %vm272, %v2899, 0
      %v3185 = vsel %vm272, %v2900, 0
      %v3188 = vsel %vm272, %v2901, 0
      %v3191 = vsel %vm272, %v2902, 0
      %v3194 = vsel %vm272, %v2903, 0
      %v3197 = vsel %vm272, %v2904, 0
      %v3200 = vsel %vm272, %v2905, 0
      %v3203 = vsel %vm272, %v2906, 0
      %v3206 = vsel %vm272, %v2907, 0
      %v3209 = vsel %vm272, %v2908, 0
      %v3212 = vsel %vm272, %v2909, 0
      %v3215 = vsel %vm272, %v2910, 0
      %v3218 = vsel %vm272, %v2911, 0
      %v3221 = vsel %vm272, %v2912, 0
      %v3224 = vand.u32 %v2913, %v324
      %3226 = vmatprep.subr.bf16.mxu0 0
      %3227 = vmatpush1.bf16.msra.mxu0 %v3224
      %3228 = vmatprep.subr.bf16.mxu0 0
      %3229 = vmatpush1.bf16.msra.mxu0 0
      %3230 = vmatprep.subr.bf16.mxu0 0
      %3231 = vmatpush1.bf16.msra.mxu0 0
      %3232 = vmatprep.subr.bf16.mxu0 0
      %3233 = vmatpush1.bf16.msra.mxu0 0
      %3234 = vmatprep.subr.bf16.mxu0 0
      %3235 = vmatpush1.bf16.msra.mxu0 0
      %3236 = vmatprep.subr.bf16.mxu0 0
      %3237 = vmatpush1.bf16.msra.mxu0 0
      %3238 = vmatprep.subr.bf16.mxu0 0
      %3239 = vmatpush1.bf16.msra.mxu0 0
      %3240 = vmatprep.subr.bf16.mxu0 0
      %3241 = vmatpush1.bf16.msra.mxu0 0
      %3242 = vmatprep.subr.bf16.mxu0 0
      %3243 = vmatpush1.bf16.msra.mxu0 0
      %3244 = vmatprep.subr.bf16.mxu0 0
      %3245 = vmatpush1.bf16.msra.mxu0 0
      %3246 = vmatprep.subr.bf16.mxu0 0
      %3247 = vmatpush1.bf16.msra.mxu0 0
      %3248 = vmatprep.subr.bf16.mxu0 0
      %3249 = vmatpush1.bf16.msra.mxu0 0
      %3250 = vmatprep.subr.bf16.mxu0 0
      %3251 = vmatpush1.bf16.msra.mxu0 0
      %3252 = vmatprep.subr.bf16.mxu0 0
      %3253 = vmatpush1.bf16.msra.mxu0 0
      %3254 = vmatprep.subr.bf16.mxu0 0
      %3255 = vmatpush1.bf16.msra.mxu0 0
      %3256 = vmatprep.subr.bf16.mxu0 0
      %3257 = vmatpush1.bf16.msra.mxu0 0
      %3258 = vmatprep.mubr.bf16.mxu0 0
      %3259 = vmatmul.mubr.bf16.gmra.mrb[0].mxu0 %v3176
      %v3260 = vpop.f32.mrb[0].mxu0
      %v3261 = vadd.f32 %v3049, %v3260
      %v3262 = vpop.f32.mrb[0].mxu0
      %v3263 = vpop.f32.mrb[0].mxu0
      %v3264 = vadd.f32 %v3052, %v3263
      %v3265 = vpop.f32.mrb[0].mxu0
      %3266 = vmatprep.mubr.bf16.mxu0 0
      %3267 = vmatmul.mubr.bf16.gmra.mrb[0].mxu0 %v3179
      %v3268 = vpop.f32.mrb[0].mxu0
      %v3269 = vadd.f32 %v3057, %v3268
      %v3270 = vpop.f32.mrb[0].mxu0
      %v3271 = vpop.f32.mrb[0].mxu0
      %v3272 = vadd.f32 %v3060, %v3271
      %v3273 = vpop.f32.mrb[0].mxu0
      %3274 = vmatprep.mubr.bf16.mxu0 0
      %3275 = vmatmul.mubr.bf16.gmra.mrb[0].mxu0 %v3182
      %v3276 = vpop.f32.mrb[0].mxu0
      %v3277 = vadd.f32 %v3065, %v3276
      %v3278 = vpop.f32.mrb[0].mxu0
      %v3279 = vpop.f32.mrb[0].mxu0
      %v3280 = vadd.f32 %v3068, %v3279
      %v3281 = vpop.f32.mrb[0].mxu0
      %3282 = vmatprep.mubr.bf16.mxu0 0
      %3283 = vmatmul.mubr.bf16.gmra.mrb[0].mxu0 %v3185
      %v3284 = vpop.f32.mrb[0].mxu0
      %v3285 = vadd.f32 %v3073, %v3284
      %v3286 = vpop.f32.mrb[0].mxu0
      %v3287 = vpop.f32.mrb[0].mxu0
      %v3288 = vadd.f32 %v3076, %v3287
      %v3289 = vpop.f32.mrb[0].mxu0
      %3290 = vmatprep.mubr.bf16.mxu0 0
      %3291 = vmatmul.mubr.bf16.gmra.mrb[0].mxu0 %v3188
      %v3292 = vpop.f32.mrb[0].mxu0
      %v3293 = vadd.f32 %v3081, %v3292
      %v3294 = vpop.f32.mrb[0].mxu0
      %v3295 = vpop.f32.mrb[0].mxu0
      %v3296 = vadd.f32 %v3084, %v3295
      %v3297 = vpop.f32.mrb[0].mxu0
      %3298 = vmatprep.mubr.bf16.mxu0 0
      %3299 = vmatmul.mubr.bf16.gmra.mrb[0].mxu0 %v3191
      %v3300 = vpop.f32.mrb[0].mxu0
      %v3301 = vadd.f32 %v3089, %v3300
      %v3302 = vpop.f32.mrb[0].mxu0
      %v3303 = vpop.f32.mrb[0].mxu0
      %v3304 = vadd.f32 %v3092, %v3303
      %v3305 = vpop.f32.mrb[0].mxu0
      %3306 = vmatprep.mubr.bf16.mxu0 0
      %3307 = vmatmul.mubr.bf16.gmra.mrb[0].mxu0 %v3194
      %v3308 = vpop.f32.mrb[0].mxu0
      %v3309 = vadd.f32 %v3097, %v3308
      %v3310 = vpop.f32.mrb[0].mxu0
      %v3311 = vpop.f32.mrb[0].mxu0
      %v3312 = vadd.f32 %v3100, %v3311
      %v3313 = vpop.f32.mrb[0].mxu0
      %3314 = vmatprep.mubr.bf16.mxu0 0
      %3315 = vmatmul.mubr.bf16.gmra.mrb[0].mxu0 %v3197
      %v3316 = vpop.f32.mrb[0].mxu0
      %v3317 = vadd.f32 %v3105, %v3316
      %v3318 = vpop.f32.mrb[0].mxu0
      %v3319 = vpop.f32.mrb[0].mxu0
      %v3320 = vadd.f32 %v3108, %v3319
      %v3321 = vpop.f32.mrb[0].mxu0
      %3322 = vmatprep.mubr.bf16.mxu0 0
      %3323 = vmatmul.mubr.bf16.gmra.mrb[0].mxu0 %v3200
      %v3324 = vpop.f32.mrb[0].mxu0
      %v3325 = vadd.f32 %v3113, %v3324
      %v3326 = vpop.f32.mrb[0].mxu0
      %v3327 = vpop.f32.mrb[0].mxu0
      %v3328 = vadd.f32 %v3116, %v3327
      %v3329 = vpop.f32.mrb[0].mxu0
      %3330 = vmatprep.mubr.bf16.mxu0 0
      %3331 = vmatmul.mubr.bf16.gmra.mrb[0].mxu0 %v3203
      %v3332 = vpop.f32.mrb[0].mxu0
      %v3333 = vadd.f32 %v3121, %v3332
      %v3334 = vpop.f32.mrb[0].mxu0
      %v3335 = vpop.f32.mrb[0].mxu0
      %v3336 = vadd.f32 %v3124, %v3335
      %v3337 = vpop.f32.mrb[0].mxu0
      %3338 = vmatprep.mubr.bf16.mxu0 0
      %3339 = vmatmul.mubr.bf16.gmra.mrb[0].mxu0 %v3206
      %v3340 = vpop.f32.mrb[0].mxu0
      %v3341 = vadd.f32 %v3129, %v3340
      %v3342 = vpop.f32.mrb[0].mxu0
      %v3343 = vpop.f32.mrb[0].mxu0
      %v3344 = vadd.f32 %v3132, %v3343
      %v3345 = vpop.f32.mrb[0].mxu0
      %3346 = vmatprep.mubr.bf16.mxu0 0
      %3347 = vmatmul.mubr.bf16.gmra.mrb[0].mxu0 %v3209
      %v3348 = vpop.f32.mrb[0].mxu0
      %v3349 = vadd.f32 %v3137, %v3348
      %v3350 = vpop.f32.mrb[0].mxu0
      %v3351 = vpop.f32.mrb[0].mxu0
      %v3352 = vadd.f32 %v3140, %v3351
      %v3353 = vpop.f32.mrb[0].mxu0
      %3354 = vmatprep.mubr.bf16.mxu0 0
      %3355 = vmatmul.mubr.bf16.gmra.mrb[0].mxu0 %v3212
      %v3356 = vpop.f32.mrb[0].mxu0
      %v3357 = vadd.f32 %v3145, %v3356
      %v3358 = vpop.f32.mrb[0].mxu0
      %v3359 = vpop.f32.mrb[0].mxu0
      %v3360 = vadd.f32 %v3148, %v3359
      %v3361 = vpop.f32.mrb[0].mxu0
      %3362 = vmatprep.mubr.bf16.mxu0 0
      %3363 = vmatmul.mubr.bf16.gmra.mrb[0].mxu0 %v3215
      %v3364 = vpop.f32.mrb[0].mxu0
      %v3365 = vadd.f32 %v3153, %v3364
      %v3366 = vpop.f32.mrb[0].mxu0
      %v3367 = vpop.f32.mrb[0].mxu0
      %v3368 = vadd.f32 %v3156, %v3367
      %v3369 = vpop.f32.mrb[0].mxu0
      %3370 = vmatprep.mubr.bf16.mxu0 0
      %3371 = vmatmul.mubr.bf16.gmra.mrb[0].mxu0 %v3218
      %v3372 = vpop.f32.mrb[0].mxu0
      %v3373 = vadd.f32 %v3161, %v3372
      %v3374 = vpop.f32.mrb[0].mxu0
      %v3375 = vpop.f32.mrb[0].mxu0
      %v3376 = vadd.f32 %v3164, %v3375
      %v3377 = vpop.f32.mrb[0].mxu0
      %3378 = vmatprep.mubr.bf16.mxu0 0
      %3379 = vmatmul.mubr.bf16.gmra.mrb[0].mxu0 %v3221
      %v3380 = vpop.f32.mrb[0].mxu0
      %v3381 = vadd.f32 %v3169, %v3380
      %v3382 = vpop.f32.mrb[0].mxu0
      %v3383 = vpop.f32.mrb[0].mxu0
      %v3384 = vadd.f32 %v3172, %v3383
      %v3385 = vpop.f32.mrb[0].mxu0
      %3386 = vdwg.mxu0
      %v3387 = vld [vmem:[%s2864 + $0x2] sm:$0xff]
      %v3388 = vld [vmem:[%s2864 + $0xa] sm:$0xff]
      %v3389 = vld [vmem:[%s2864 + $0x12] sm:$0xff]
      %v3390 = vld [vmem:[%s2864 + $0x1a] sm:$0xff]
      %v3391 = vld [vmem:[%s2864 + $0x2a] sm:$0xff]
      %v3392 = vld [vmem:[%s2864 + $0x32] sm:$0xff]
      %v3393 = vld [vmem:[%s2864 + $0x3a] sm:$0xff]
      %v3394 = vld [vmem:[%s2864 + $0x42] sm:$0xff]
      %v3395 = vld [vmem:[%s2864 + $0x52] sm:$0xff]
      %v3396 = vld [vmem:[%s2864 + $0x5a] sm:$0xff]
      %v3397 = vld [vmem:[%s2864 + $0x62] sm:$0xff]
      %v3398 = vld [vmem:[%s2864 + $0x6a] sm:$0xff]
      %v3399 = vld [vmem:[%s2864 + $0x7a] sm:$0xff]
      %v3400 = vld [vmem:[%s2864 + $0x82] sm:$0xff]
      %v3401 = vld [vmem:[%s2864 + $0x8a] sm:$0xff]
      %v3402 = vld [vmem:[%s2864 + $0x92] sm:$0xff]
      %v3403 = vld [vmem:[%s2864 + $0xa2] sm:$0xff]
      %v3404 = vld [vmem:[%s2864 + $0xaa] sm:$0xff]
      %v3405 = vld [vmem:[%s2864 + $0xb2] sm:$0xff]
      %v3406 = vld [vmem:[%s2864 + $0xba] sm:$0xff]
      %v3407 = vld [vmem:[%s2864 + $0xca] sm:$0xff]
      %v3408 = vld [vmem:[%s2864 + $0xd2] sm:$0xff]
      %v3409 = vld [vmem:[%s2864 + $0xda] sm:$0xff]
      %v3410 = vld [vmem:[%s2864 + $0xe2] sm:$0xff]
      %v3411 = vld [vmem:[%s2864 + $0xf2] sm:$0xff]
      %v3412 = vld [vmem:[%s2864 + $0xfa] sm:$0xff]
      %v3413 = vld [vmem:[%s2864 + $0x102] sm:$0xff]
      %v3414 = vld [vmem:[%s2864 + $0x10a] sm:$0xff]
      %v3415 = vld [vmem:[%s2864 + $0x11a] sm:$0xff]
      %v3416 = vld [vmem:[%s2864 + $0x122] sm:$0xff]
      %v3417 = vld [vmem:[%s2864 + $0x12a] sm:$0xff]
      %v3418 = vld [vmem:[%s2864 + $0x132] sm:$0xff]
      %v3419 = vpack.c.bf16 %v3388, %v3387
      %v3420 = vpack.c.bf16 %v3390, %v3389
      %v3421 = vpack.c.bf16 %v3392, %v3391
      %v3422 = vpack.c.bf16 %v3394, %v3393
      %v3423 = vpack.c.bf16 %v3396, %v3395
      %v3424 = vpack.c.bf16 %v3398, %v3397
      %v3425 = vpack.c.bf16 %v3400, %v3399
      %v3426 = vpack.c.bf16 %v3402, %v3401
      %v3427 = vpack.c.bf16 %v3404, %v3403
      %v3428 = vpack.c.bf16 %v3406, %v3405
      %v3429 = vpack.c.bf16 %v3408, %v3407
      %v3430 = vpack.c.bf16 %v3410, %v3409
      %v3431 = vpack.c.bf16 %v3412, %v3411
      %v3432 = vpack.c.bf16 %v3414, %v3413
      %v3433 = vpack.c.bf16 %v3416, %v3415
      %v3434 = vpack.c.bf16 %v3418, %v3417
      %v3435 = vld [vmem:[%s749] sm:$0x3]
      %v3437 = vsel %vm272, %v3419, 0
      %v3440 = vsel %vm272, %v3420, 0
      %v3443 = vsel %vm272, %v3421, 0
      %v3446 = vsel %vm272, %v3422, 0
      %v3449 = vsel %vm272, %v3423, 0
      %v3452 = vsel %vm272, %v3424, 0
      %v3455 = vsel %vm272, %v3425, 0
      %v3458 = vsel %vm272, %v3426, 0
      %v3461 = vsel %vm272, %v3427, 0
      %v3464 = vsel %vm272, %v3428, 0
      %v3467 = vsel %vm272, %v3429, 0
      %v3470 = vsel %vm272, %v3430, 0
      %v3473 = vsel %vm272, %v3431, 0
      %v3476 = vsel %vm272, %v3432, 0
      %v3479 = vsel %vm272, %v3433, 0
      %v3482 = vsel %vm272, %v3434, 0
      %v3485 = vand.u32 %v3435, %v324
      %3487 = vmatprep.subr.bf16.mxu0 0
      %3488 = vmatpush1.bf16.msra.mxu0 %v3485
      %3489 = vmatprep.subr.bf16.mxu0 0
      %3490 = vmatpush1.bf16.msra.mxu0 0
      %3491 = vmatprep.subr.bf16.mxu0 0
      %3492 = vmatpush1.bf16.msra.mxu0 0
      %3493 = vmatprep.subr.bf16.mxu0 0
      %3494 = vmatpush1.bf16.msra.mxu0 0
      %3495 = vmatprep.subr.bf16.mxu0 0
      %3496 = vmatpush1.bf16.msra.mxu0 0
      %3497 = vmatprep.subr.bf16.mxu0 0
      %3498 = vmatpush1.bf16.msra.mxu0 0
      %3499 = vmatprep.subr.bf16.mxu0 0
      %3500 = vmatpush1.bf16.msra.mxu0 0
      %3501 = vmatprep.subr.bf16.mxu0 0
      %3502 = vmatpush1.bf16.msra.mxu0 0
      %3503 = vmatprep.subr.bf16.mxu0 0
      %3504 = vmatpush1.bf16.msra.mxu0 0
      %3505 = vmatprep.subr.bf16.mxu0 0
      %3506 = vmatpush1.bf16.msra.mxu0 0
      %3507 = vmatprep.subr.bf16.mxu0 0
      %3508 = vmatpush1.bf16.msra.mxu0 0
      %3509 = vmatprep.subr.bf16.mxu0 0
      %3510 = vmatpush1.bf16.msra.mxu0 0
      %3511 = vmatprep.subr.bf16.mxu0 0
      %3512 = vmatpush1.bf16.msra.mxu0 0
      %3513 = vmatprep.subr.bf16.mxu0 0
      %3514 = vmatpush1.bf16.msra.mxu0 0
      %3515 = vmatprep.subr.bf16.mxu0 0
      %3516 = vmatpush1.bf16.msra.mxu0 0
      %3517 = vmatprep.subr.bf16.mxu0 0
      %3518 = vmatpush1.bf16.msra.mxu0 0
      %3519 = vmatprep.mubr.bf16.mxu0 0
      %3520 = vmatmul.mubr.bf16.gmra.mrb[0].mxu0 %v3437
      %v3521 = vpop.f32.mrb[0].mxu0
      %v3522 = vadd.f32 0.0, %v3521
      %v3523 = vpop.f32.mrb[0].mxu0
      %v3524 = vpop.f32.mrb[0].mxu0
      %v3525 = vadd.f32 0.0, %v3524
      %v3526 = vpop.f32.mrb[0].mxu0
      %3527 = vmatprep.mubr.bf16.mxu0 0
      %3528 = vmatmul.mubr.bf16.gmra.mrb[0].mxu0 %v3440
      %v3529 = vpop.f32.mrb[0].mxu0
      %v3530 = vadd.f32 0.0, %v3529
      %v3531 = vpop.f32.mrb[0].mxu0
      %v3532 = vpop.f32.mrb[0].mxu0
      %v3533 = vadd.f32 0.0, %v3532
      %v3534 = vpop.f32.mrb[0].mxu0
      %3535 = vmatprep.mubr.bf16.mxu0 0
      %3536 = vmatmul.mubr.bf16.gmra.mrb[0].mxu0 %v3443
      %v3537 = vpop.f32.mrb[0].mxu0
      %v3538 = vadd.f32 0.0, %v3537
      %v3539 = vpop.f32.mrb[0].mxu0
      %v3540 = vpop.f32.mrb[0].mxu0
      %v3541 = vadd.f32 0.0, %v3540
      %v3542 = vpop.f32.mrb[0].mxu0
      %3543 = vmatprep.mubr.bf16.mxu0 0
      %3544 = vmatmul.mubr.bf16.gmra.mrb[0].mxu0 %v3446
      %v3545 = vpop.f32.mrb[0].mxu0
      %v3546 = vadd.f32 0.0, %v3545
      %v3547 = vpop.f32.mrb[0].mxu0
      %v3548 = vpop.f32.mrb[0].mxu0
      %v3549 = vadd.f32 0.0, %v3548
      %v3550 = vpop.f32.mrb[0].mxu0
      %3551 = vmatprep.mubr.bf16.mxu0 0
      %3552 = vmatmul.mubr.bf16.gmra.mrb[0].mxu0 %v3449
      %v3553 = vpop.f32.mrb[0].mxu0
      %v3554 = vadd.f32 0.0, %v3553
      %v3555 = vpop.f32.mrb[0].mxu0
      %v3556 = vpop.f32.mrb[0].mxu0
      %v3557 = vadd.f32 0.0, %v3556
      %v3558 = vpop.f32.mrb[0].mxu0
      %3559 = vmatprep.mubr.bf16.mxu0 0
      %3560 = vmatmul.mubr.bf16.gmra.mrb[0].mxu0 %v3452
      %v3561 = vpop.f32.mrb[0].mxu0
      %v3562 = vadd.f32 0.0, %v3561
      %v3563 = vpop.f32.mrb[0].mxu0
      %v3564 = vpop.f32.mrb[0].mxu0
      %v3565 = vadd.f32 0.0, %v3564
      %v3566 = vpop.f32.mrb[0].mxu0
      %3567 = vmatprep.mubr.bf16.mxu0 0
      %3568 = vmatmul.mubr.bf16.gmra.mrb[0].mxu0 %v3455
      %v3569 = vpop.f32.mrb[0].mxu0
      %v3570 = vadd.f32 0.0, %v3569
      %v3571 = vpop.f32.mrb[0].mxu0
      %v3572 = vpop.f32.mrb[0].mxu0
      %v3573 = vadd.f32 0.0, %v3572
      %v3574 = vpop.f32.mrb[0].mxu0
      %3575 = vmatprep.mubr.bf16.mxu0 0
      %3576 = vmatmul.mubr.bf16.gmra.mrb[0].mxu0 %v3458
      %v3577 = vpop.f32.mrb[0].mxu0
      %v3578 = vadd.f32 0.0, %v3577
      %v3579 = vpop.f32.mrb[0].mxu0
      %v3580 = vpop.f32.mrb[0].mxu0
      %v3581 = vadd.f32 0.0, %v3580
      %v3582 = vpop.f32.mrb[0].mxu0
      %3583 = vmatprep.mubr.bf16.mxu0 0
      %3584 = vmatmul.mubr.bf16.gmra.mrb[0].mxu0 %v3461
      %v3585 = vpop.f32.mrb[0].mxu0
      %v3586 = vadd.f32 0.0, %v3585
      %v3587 = vpop.f32.mrb[0].mxu0
      %v3588 = vpop.f32.mrb[0].mxu0
      %v3589 = vadd.f32 0.0, %v3588
      %v3590 = vpop.f32.mrb[0].mxu0
      %3591 = vmatprep.mubr.bf16.mxu0 0
      %3592 = vmatmul.mubr.bf16.gmra.mrb[0].mxu0 %v3464
      %v3593 = vpop.f32.mrb[0].mxu0
      %v3594 = vadd.f32 0.0, %v3593
      %v3595 = vpop.f32.mrb[0].mxu0
      %v3596 = vpop.f32.mrb[0].mxu0
      %v3597 = vadd.f32 0.0, %v3596
      %v3598 = vpop.f32.mrb[0].mxu0
      %3599 = vmatprep.mubr.bf16.mxu0 0
      %3600 = vmatmul.mubr.bf16.gmra.mrb[0].mxu0 %v3467
      %v3601 = vpop.f32.mrb[0].mxu0
      %v3602 = vadd.f32 0.0, %v3601
      %v3603 = vpop.f32.mrb[0].mxu0
      %v3604 = vpop.f32.mrb[0].mxu0
      %v3605 = vadd.f32 0.0, %v3604
      %v3606 = vpop.f32.mrb[0].mxu0
      %3607 = vmatprep.mubr.bf16.mxu0 0
      %3608 = vmatmul.mubr.bf16.gmra.mrb[0].mxu0 %v3470
      %v3609 = vpop.f32.mrb[0].mxu0
      %v3610 = vadd.f32 0.0, %v3609
      %v3611 = vpop.f32.mrb[0].mxu0
      %v3612 = vpop.f32.mrb[0].mxu0
      %v3613 = vadd.f32 0.0, %v3612
      %v3614 = vpop.f32.mrb[0].mxu0
      %3615 = vmatprep.mubr.bf16.mxu0 0
      %3616 = vmatmul.mubr.bf16.gmra.mrb[0].mxu0 %v3473
      %v3617 = vpop.f32.mrb[0].mxu0
      %v3618 = vadd.f32 0.0, %v3617
      %v3619 = vpop.f32.mrb[0].mxu0
      %v3620 = vpop.f32.mrb[0].mxu0
      %v3621 = vadd.f32 0.0, %v3620
      %v3622 = vpop.f32.mrb[0].mxu0
      %3623 = vmatprep.mubr.bf16.mxu0 0
      %3624 = vmatmul.mubr.bf16.gmra.mrb[0].mxu0 %v3476
      %v3625 = vpop.f32.mrb[0].mxu0
      %v3626 = vadd.f32 0.0, %v3625
      %v3627 = vpop.f32.mrb[0].mxu0
      %v3628 = vpop.f32.mrb[0].mxu0
      %v3629 = vadd.f32 0.0, %v3628
      %v3630 = vpop.f32.mrb[0].mxu0
      %3631 = vmatprep.mubr.bf16.mxu0 0
      %3632 = vmatmul.mubr.bf16.gmra.mrb[0].mxu0 %v3479
      %v3633 = vpop.f32.mrb[0].mxu0
      %v3634 = vadd.f32 0.0, %v3633
      %v3635 = vpop.f32.mrb[0].mxu0
      %v3636 = vpop.f32.mrb[0].mxu0
      %v3637 = vadd.f32 0.0, %v3636
      %v3638 = vpop.f32.mrb[0].mxu0
      %3639 = vmatprep.mubr.bf16.mxu0 0
      %3640 = vmatmul.mubr.bf16.gmra.mrb[0].mxu0 %v3482
      %v3641 = vpop.f32.mrb[0].mxu0
      %v3642 = vadd.f32 0.0, %v3641
      %v3643 = vpop.f32.mrb[0].mxu0
      %v3644 = vpop.f32.mrb[0].mxu0
      %v3645 = vadd.f32 0.0, %v3644
      %v3646 = vpop.f32.mrb[0].mxu0
      %3647 = vdwg.mxu0
      %v3648 = vadd.f32 %v3261, %v3522
      %v3649 = vadd.f32 %v3264, %v3525
      %v3650 = vadd.f32 %v3269, %v3530
      %v3651 = vadd.f32 %v3272, %v3533
      %v3652 = vadd.f32 %v3277, %v3538
      %v3653 = vadd.f32 %v3280, %v3541
      %v3654 = vadd.f32 %v3285, %v3546
      %v3655 = vadd.f32 %v3288, %v3549
      %v3656 = vadd.f32 %v3293, %v3554
      %v3657 = vadd.f32 %v3296, %v3557
      %v3658 = vadd.f32 %v3301, %v3562
      %v3659 = vadd.f32 %v3304, %v3565
      %v3660 = vadd.f32 %v3309, %v3570
      %v3661 = vadd.f32 %v3312, %v3573
      %v3662 = vadd.f32 %v3317, %v3578
      %v3663 = vadd.f32 %v3320, %v3581
      %v3664 = vadd.f32 %v3325, %v3586
      %v3665 = vadd.f32 %v3328, %v3589
      %v3666 = vadd.f32 %v3333, %v3594
      %v3667 = vadd.f32 %v3336, %v3597
      %v3668 = vadd.f32 %v3341, %v3602
      %v3669 = vadd.f32 %v3344, %v3605
      %v3670 = vadd.f32 %v3349, %v3610
      %v3671 = vadd.f32 %v3352, %v3613
      %v3672 = vadd.f32 %v3357, %v3618
      %v3673 = vadd.f32 %v3360, %v3621
      %v3674 = vadd.f32 %v3365, %v3626
      %v3675 = vadd.f32 %v3368, %v3629
      %v3676 = vadd.f32 %v3373, %v3634
      %v3677 = vadd.f32 %v3376, %v3637
      %v3678 = vadd.f32 %v3381, %v3642
      %v3679 = vadd.f32 %v3384, %v3645
      %s3680 = scalar_lea.vmem %s165, 360
      %v3681 = vld [vmem:[%s3680] sm:$0xff]
      %v3682 = vld [vmem:[%s3680 + $0x8] sm:$0xff]
      %v3683 = vld [vmem:[%s3680 + $0x10] sm:$0xff]
      %v3684 = vld [vmem:[%s3680 + $0x18] sm:$0xff]
      %v3685 = vld [vmem:[%s3680 + $0x28] sm:$0xff]
      %v3686 = vld [vmem:[%s3680 + $0x30] sm:$0xff]
      %v3687 = vld [vmem:[%s3680 + $0x38] sm:$0xff]
      %v3688 = vld [vmem:[%s3680 + $0x40] sm:$0xff]
      %v3689 = vld [vmem:[%s3680 + $0x50] sm:$0xff]
      %v3690 = vld [vmem:[%s3680 + $0x58] sm:$0xff]
      %v3691 = vld [vmem:[%s3680 + $0x60] sm:$0xff]
      %v3692 = vld [vmem:[%s3680 + $0x68] sm:$0xff]
      %v3693 = vld [vmem:[%s3680 + $0x78] sm:$0xff]
      %v3694 = vld [vmem:[%s3680 + $0x80] sm:$0xff]
      %v3695 = vld [vmem:[%s3680 + $0x88] sm:$0xff]
      %v3696 = vld [vmem:[%s3680 + $0x90] sm:$0xff]
      %v3697 = vld [vmem:[%s3680 + $0xa0] sm:$0xff]
      %v3698 = vld [vmem:[%s3680 + $0xa8] sm:$0xff]
      %v3699 = vld [vmem:[%s3680 + $0xb0] sm:$0xff]
      %v3700 = vld [vmem:[%s3680 + $0xb8] sm:$0xff]
      %v3701 = vld [vmem:[%s3680 + $0xc8] sm:$0xff]
      %v3702 = vld [vmem:[%s3680 + $0xd0] sm:$0xff]
      %v3703 = vld [vmem:[%s3680 + $0xd8] sm:$0xff]
      %v3704 = vld [vmem:[%s3680 + $0xe0] sm:$0xff]
      %v3705 = vld [vmem:[%s3680 + $0xf0] sm:$0xff]
      %v3706 = vld [vmem:[%s3680 + $0xf8] sm:$0xff]
      %v3707 = vld [vmem:[%s3680 + $0x100] sm:$0xff]
      %v3708 = vld [vmem:[%s3680 + $0x108] sm:$0xff]
      %v3709 = vld [vmem:[%s3680 + $0x118] sm:$0xff]
      %v3710 = vld [vmem:[%s3680 + $0x120] sm:$0xff]
      %v3711 = vld [vmem:[%s3680 + $0x128] sm:$0xff]
      %v3712 = vld [vmem:[%s3680 + $0x130] sm:$0xff]
      %v3713 = vpack.c.bf16 %v3682, %v3681
      %v3714 = vpack.c.bf16 %v3684, %v3683
      %v3715 = vpack.c.bf16 %v3686, %v3685
      %v3716 = vpack.c.bf16 %v3688, %v3687
      %v3717 = vpack.c.bf16 %v3690, %v3689
      %v3718 = vpack.c.bf16 %v3692, %v3691
      %v3719 = vpack.c.bf16 %v3694, %v3693
      %v3720 = vpack.c.bf16 %v3696, %v3695
      %v3721 = vpack.c.bf16 %v3698, %v3697
      %v3722 = vpack.c.bf16 %v3700, %v3699
      %v3723 = vpack.c.bf16 %v3702, %v3701
      %v3724 = vpack.c.bf16 %v3704, %v3703
      %v3725 = vpack.c.bf16 %v3706, %v3705
      %v3726 = vpack.c.bf16 %v3708, %v3707
      %v3727 = vpack.c.bf16 %v3710, %v3709
      %v3728 = vpack.c.bf16 %v3712, %v3711
      %v3729 = vld [vmem:[%s1044] sm:$0x3]
      %v3731 = vsel %vm272, %v3713, 0
      %v3734 = vsel %vm272, %v3714, 0
      %v3737 = vsel %vm272, %v3715, 0
      %v3740 = vsel %vm272, %v3716, 0
      %v3743 = vsel %vm272, %v3717, 0
      %v3746 = vsel %vm272, %v3718, 0
      %v3749 = vsel %vm272, %v3719, 0
      %v3752 = vsel %vm272, %v3720, 0
      %v3755 = vsel %vm272, %v3721, 0
      %v3758 = vsel %vm272, %v3722, 0
      %v3761 = vsel %vm272, %v3723, 0
      %v3764 = vsel %vm272, %v3724, 0
      %v3767 = vsel %vm272, %v3725, 0
      %v3770 = vsel %vm272, %v3726, 0
      %v3773 = vsel %vm272, %v3727, 0
      %v3776 = vsel %vm272, %v3728, 0
      %v3779 = vand.u32 %v3729, %v324
      %3781 = vmatprep.subr.bf16.mxu0 0
      %3782 = vmatpush1.bf16.msra.mxu0 %v3779
      %3783 = vmatprep.subr.bf16.mxu0 0
      %3784 = vmatpush1.bf16.msra.mxu0 0
      %3785 = vmatprep.subr.bf16.mxu0 0
      %3786 = vmatpush1.bf16.msra.mxu0 0
      %3787 = vmatprep.subr.bf16.mxu0 0
      %3788 = vmatpush1.bf16.msra.mxu0 0
      %3789 = vmatprep.subr.bf16.mxu0 0
      %3790 = vmatpush1.bf16.msra.mxu0 0
      %3791 = vmatprep.subr.bf16.mxu0 0
      %3792 = vmatpush1.bf16.msra.mxu0 0
      %3793 = vmatprep.subr.bf16.mxu0 0
      %3794 = vmatpush1.bf16.msra.mxu0 0
      %3795 = vmatprep.subr.bf16.mxu0 0
      %3796 = vmatpush1.bf16.msra.mxu0 0
      %3797 = vmatprep.subr.bf16.mxu0 0
      %3798 = vmatpush1.bf16.msra.mxu0 0
      %3799 = vmatprep.subr.bf16.mxu0 0
      %3800 = vmatpush1.bf16.msra.mxu0 0
      %3801 = vmatprep.subr.bf16.mxu0 0
      %3802 = vmatpush1.bf16.msra.mxu0 0
      %3803 = vmatprep.subr.bf16.mxu0 0
      %3804 = vmatpush1.bf16.msra.mxu0 0
      %3805 = vmatprep.subr.bf16.mxu0 0
      %3806 = vmatpush1.bf16.msra.mxu0 0
      %3807 = vmatprep.subr.bf16.mxu0 0
      %3808 = vmatpush1.bf16.msra.mxu0 0
      %3809 = vmatprep.subr.bf16.mxu0 0
      %3810 = vmatpush1.bf16.msra.mxu0 0
      %3811 = vmatprep.subr.bf16.mxu0 0
      %3812 = vmatpush1.bf16.msra.mxu0 0
      %3813 = vmatprep.mubr.bf16.mxu0 0
      %3814 = vmatmul.mubr.bf16.gmra.mrb[0].mxu0 %v3731
      %v3815 = vpop.f32.mrb[0].mxu0
      %v3816 = vadd.f32 0.0, %v3815
      %v3817 = vpop.f32.mrb[0].mxu0
      %v3818 = vpop.f32.mrb[0].mxu0
      %v3819 = vadd.f32 0.0, %v3818
      %v3820 = vpop.f32.mrb[0].mxu0
      %3821 = vmatprep.mubr.bf16.mxu0 0
      %3822 = vmatmul.mubr.bf16.gmra.mrb[0].mxu0 %v3734
      %v3823 = vpop.f32.mrb[0].mxu0
      %v3824 = vadd.f32 0.0, %v3823
      %v3825 = vpop.f32.mrb[0].mxu0
      %v3826 = vpop.f32.mrb[0].mxu0
      %v3827 = vadd.f32 0.0, %v3826
      %v3828 = vpop.f32.mrb[0].mxu0
      %3829 = vmatprep.mubr.bf16.mxu0 0
      %3830 = vmatmul.mubr.bf16.gmra.mrb[0].mxu0 %v3737
      %v3831 = vpop.f32.mrb[0].mxu0
      %v3832 = vadd.f32 0.0, %v3831
      %v3833 = vpop.f32.mrb[0].mxu0
      %v3834 = vpop.f32.mrb[0].mxu0
      %v3835 = vadd.f32 0.0, %v3834
      %v3836 = vpop.f32.mrb[0].mxu0
      %3837 = vmatprep.mubr.bf16.mxu0 0
      %3838 = vmatmul.mubr.bf16.gmra.mrb[0].mxu0 %v3740
      %v3839 = vpop.f32.mrb[0].mxu0
      %v3840 = vadd.f32 0.0, %v3839
      %v3841 = vpop.f32.mrb[0].mxu0
      %v3842 = vpop.f32.mrb[0].mxu0
      %v3843 = vadd.f32 0.0, %v3842
      %v3844 = vpop.f32.mrb[0].mxu0
      %3845 = vmatprep.mubr.bf16.mxu0 0
      %3846 = vmatmul.mubr.bf16.gmra.mrb[0].mxu0 %v3743
      %v3847 = vpop.f32.mrb[0].mxu0
      %v3848 = vadd.f32 0.0, %v3847
      %v3849 = vpop.f32.mrb[0].mxu0
      %v3850 = vpop.f32.mrb[0].mxu0
      %v3851 = vadd.f32 0.0, %v3850
      %v3852 = vpop.f32.mrb[0].mxu0
      %3853 = vmatprep.mubr.bf16.mxu0 0
      %3854 = vmatmul.mubr.bf16.gmra.mrb[0].mxu0 %v3746
      %v3855 = vpop.f32.mrb[0].mxu0
      %v3856 = vadd.f32 0.0, %v3855
      %v3857 = vpop.f32.mrb[0].mxu0
      %v3858 = vpop.f32.mrb[0].mxu0
      %v3859 = vadd.f32 0.0, %v3858
      %v3860 = vpop.f32.mrb[0].mxu0
      %3861 = vmatprep.mubr.bf16.mxu0 0
      %3862 = vmatmul.mubr.bf16.gmra.mrb[0].mxu0 %v3749
      %v3863 = vpop.f32.mrb[0].mxu0
      %v3864 = vadd.f32 0.0, %v3863
      %v3865 = vpop.f32.mrb[0].mxu0
      %v3866 = vpop.f32.mrb[0].mxu0
      %v3867 = vadd.f32 0.0, %v3866
      %v3868 = vpop.f32.mrb[0].mxu0
      %3869 = vmatprep.mubr.bf16.mxu0 0
      %3870 = vmatmul.mubr.bf16.gmra.mrb[0].mxu0 %v3752
      %v3871 = vpop.f32.mrb[0].mxu0
      %v3872 = vadd.f32 0.0, %v3871
      %v3873 = vpop.f32.mrb[0].mxu0
      %v3874 = vpop.f32.mrb[0].mxu0
      %v3875 = vadd.f32 0.0, %v3874
      %v3876 = vpop.f32.mrb[0].mxu0
      %3877 = vmatprep.mubr.bf16.mxu0 0
      %3878 = vmatmul.mubr.bf16.gmra.mrb[0].mxu0 %v3755
      %v3879 = vpop.f32.mrb[0].mxu0
      %v3880 = vadd.f32 0.0, %v3879
      %v3881 = vpop.f32.mrb[0].mxu0
      %v3882 = vpop.f32.mrb[0].mxu0
      %v3883 = vadd.f32 0.0, %v3882
      %v3884 = vpop.f32.mrb[0].mxu0
      %3885 = vmatprep.mubr.bf16.mxu0 0
      %3886 = vmatmul.mubr.bf16.gmra.mrb[0].mxu0 %v3758
      %v3887 = vpop.f32.mrb[0].mxu0
      %v3888 = vadd.f32 0.0, %v3887
      %v3889 = vpop.f32.mrb[0].mxu0
      %v3890 = vpop.f32.mrb[0].mxu0
      %v3891 = vadd.f32 0.0, %v3890
      %v3892 = vpop.f32.mrb[0].mxu0
      %3893 = vmatprep.mubr.bf16.mxu0 0
      %3894 = vmatmul.mubr.bf16.gmra.mrb[0].mxu0 %v3761
      %v3895 = vpop.f32.mrb[0].mxu0
      %v3896 = vadd.f32 0.0, %v3895
      %v3897 = vpop.f32.mrb[0].mxu0
      %v3898 = vpop.f32.mrb[0].mxu0
      %v3899 = vadd.f32 0.0, %v3898
      %v3900 = vpop.f32.mrb[0].mxu0
      %3901 = vmatprep.mubr.bf16.mxu0 0
      %3902 = vmatmul.mubr.bf16.gmra.mrb[0].mxu0 %v3764
      %v3903 = vpop.f32.mrb[0].mxu0
      %v3904 = vadd.f32 0.0, %v3903
      %v3905 = vpop.f32.mrb[0].mxu0
      %v3906 = vpop.f32.mrb[0].mxu0
      %v3907 = vadd.f32 0.0, %v3906
      %v3908 = vpop.f32.mrb[0].mxu0
      %3909 = vmatprep.mubr.bf16.mxu0 0
      %3910 = vmatmul.mubr.bf16.gmra.mrb[0].mxu0 %v3767
      %v3911 = vpop.f32.mrb[0].mxu0
      %v3912 = vadd.f32 0.0, %v3911
      %v3913 = vpop.f32.mrb[0].mxu0
      %v3914 = vpop.f32.mrb[0].mxu0
      %v3915 = vadd.f32 0.0, %v3914
      %v3916 = vpop.f32.mrb[0].mxu0
      %3917 = vmatprep.mubr.bf16.mxu0 0
      %3918 = vmatmul.mubr.bf16.gmra.mrb[0].mxu0 %v3770
      %v3919 = vpop.f32.mrb[0].mxu0
      %v3920 = vadd.f32 0.0, %v3919
      %v3921 = vpop.f32.mrb[0].mxu0
      %v3922 = vpop.f32.mrb[0].mxu0
      %v3923 = vadd.f32 0.0, %v3922
      %v3924 = vpop.f32.mrb[0].mxu0
      %3925 = vmatprep.mubr.bf16.mxu0 0
      %3926 = vmatmul.mubr.bf16.gmra.mrb[0].mxu0 %v3773
      %v3927 = vpop.f32.mrb[0].mxu0
      %v3928 = vadd.f32 0.0, %v3927
      %v3929 = vpop.f32.mrb[0].mxu0
      %v3930 = vpop.f32.mrb[0].mxu0
      %v3931 = vadd.f32 0.0, %v3930
      %v3932 = vpop.f32.mrb[0].mxu0
      %3933 = vmatprep.mubr.bf16.mxu0 0
      %3934 = vmatmul.mubr.bf16.gmra.mrb[0].mxu0 %v3776
      %v3935 = vpop.f32.mrb[0].mxu0
      %v3936 = vadd.f32 0.0, %v3935
      %v3937 = vpop.f32.mrb[0].mxu0
      %v3938 = vpop.f32.mrb[0].mxu0
      %v3939 = vadd.f32 0.0, %v3938
      %v3940 = vpop.f32.mrb[0].mxu0
      %3941 = vdwg.mxu0
      %v3942 = vadd.f32 %v3648, %v3816
      %v3943 = vadd.f32 %v3649, %v3819
      %v3944 = vadd.f32 %v3650, %v3824
      %v3945 = vadd.f32 %v3651, %v3827
      %v3946 = vadd.f32 %v3652, %v3832
      %v3947 = vadd.f32 %v3653, %v3835
      %v3948 = vadd.f32 %v3654, %v3840
      %v3949 = vadd.f32 %v3655, %v3843
      %v3950 = vadd.f32 %v3656, %v3848
      %v3951 = vadd.f32 %v3657, %v3851
      %v3952 = vadd.f32 %v3658, %v3856
      %v3953 = vadd.f32 %v3659, %v3859
      %v3954 = vadd.f32 %v3660, %v3864
      %v3955 = vadd.f32 %v3661, %v3867
      %v3956 = vadd.f32 %v3662, %v3872
      %v3957 = vadd.f32 %v3663, %v3875
      %v3958 = vadd.f32 %v3664, %v3880
      %v3959 = vadd.f32 %v3665, %v3883
      %v3960 = vadd.f32 %v3666, %v3888
      %v3961 = vadd.f32 %v3667, %v3891
      %v3962 = vadd.f32 %v3668, %v3896
      %v3963 = vadd.f32 %v3669, %v3899
      %v3964 = vadd.f32 %v3670, %v3904
      %v3965 = vadd.f32 %v3671, %v3907
      %v3966 = vadd.f32 %v3672, %v3912
      %v3967 = vadd.f32 %v3673, %v3915
      %v3968 = vadd.f32 %v3674, %v3920
      %v3969 = vadd.f32 %v3675, %v3923
      %v3970 = vadd.f32 %v3676, %v3928
      %v3971 = vadd.f32 %v3677, %v3931
      %v3972 = vadd.f32 %v3678, %v3936
      %v3973 = vadd.f32 %v3679, %v3939
      %v3974 = vld [vmem:[%s3680 + $0x1] sm:$0xff]
      %v3975 = vld [vmem:[%s3680 + $0x9] sm:$0xff]
      %v3976 = vld [vmem:[%s3680 + $0x11] sm:$0xff]
      %v3977 = vld [vmem:[%s3680 + $0x19] sm:$0xff]
      %v3978 = vld [vmem:[%s3680 + $0x29] sm:$0xff]
      %v3979 = vld [vmem:[%s3680 + $0x31] sm:$0xff]
      %v3980 = vld [vmem:[%s3680 + $0x39] sm:$0xff]
      %v3981 = vld [vmem:[%s3680 + $0x41] sm:$0xff]
      %v3982 = vld [vmem:[%s3680 + $0x51] sm:$0xff]
      %v3983 = vld [vmem:[%s3680 + $0x59] sm:$0xff]
      %v3984 = vld [vmem:[%s3680 + $0x61] sm:$0xff]
      %v3985 = vld [vmem:[%s3680 + $0x69] sm:$0xff]
      %v3986 = vld [vmem:[%s3680 + $0x79] sm:$0xff]
      %v3987 = vld [vmem:[%s3680 + $0x81] sm:$0xff]
      %v3988 = vld [vmem:[%s3680 + $0x89] sm:$0xff]
      %v3989 = vld [vmem:[%s3680 + $0x91] sm:$0xff]
      %v3990 = vld [vmem:[%s3680 + $0xa1] sm:$0xff]
      %v3991 = vld [vmem:[%s3680 + $0xa9] sm:$0xff]
      %v3992 = vld [vmem:[%s3680 + $0xb1] sm:$0xff]
      %v3993 = vld [vmem:[%s3680 + $0xb9] sm:$0xff]
      %v3994 = vld [vmem:[%s3680 + $0xc9] sm:$0xff]
      %v3995 = vld [vmem:[%s3680 + $0xd1] sm:$0xff]
      %v3996 = vld [vmem:[%s3680 + $0xd9] sm:$0xff]
      %v3997 = vld [vmem:[%s3680 + $0xe1] sm:$0xff]
      %v3998 = vld [vmem:[%s3680 + $0xf1] sm:$0xff]
      %v3999 = vld [vmem:[%s3680 + $0xf9] sm:$0xff]
      %v4000 = vld [vmem:[%s3680 + $0x101] sm:$0xff]
      %v4001 = vld [vmem:[%s3680 + $0x109] sm:$0xff]
      %v4002 = vld [vmem:[%s3680 + $0x119] sm:$0xff]
      %v4003 = vld [vmem:[%s3680 + $0x121] sm:$0xff]
      %v4004 = vld [vmem:[%s3680 + $0x129] sm:$0xff]
      %v4005 = vld [vmem:[%s3680 + $0x131] sm:$0xff]
      %v4006 = vpack.c.bf16 %v3975, %v3974
      %v4007 = vpack.c.bf16 %v3977, %v3976
      %v4008 = vpack.c.bf16 %v3979, %v3978
      %v4009 = vpack.c.bf16 %v3981, %v3980
      %v4010 = vpack.c.bf16 %v3983, %v3982
      %v4011 = vpack.c.bf16 %v3985, %v3984
      %v4012 = vpack.c.bf16 %v3987, %v3986
      %v4013 = vpack.c.bf16 %v3989, %v3988
      %v4014 = vpack.c.bf16 %v3991, %v3990
      %v4015 = vpack.c.bf16 %v3993, %v3992
      %v4016 = vpack.c.bf16 %v3995, %v3994
      %v4017 = vpack.c.bf16 %v3997, %v3996
      %v4018 = vpack.c.bf16 %v3999, %v3998
      %v4019 = vpack.c.bf16 %v4001, %v4000
      %v4020 = vpack.c.bf16 %v4003, %v4002
      %v4021 = vpack.c.bf16 %v4005, %v4004
      %v4022 = vld [vmem:[%s1338] sm:$0x3]
      %v4024 = vsel %vm272, %v4006, 0
      %v4027 = vsel %vm272, %v4007, 0
      %v4030 = vsel %vm272, %v4008, 0
      %v4033 = vsel %vm272, %v4009, 0
      %v4036 = vsel %vm272, %v4010, 0
      %v4039 = vsel %vm272, %v4011, 0
      %v4042 = vsel %vm272, %v4012, 0
      %v4045 = vsel %vm272, %v4013, 0
      %v4048 = vsel %vm272, %v4014, 0
      %v4051 = vsel %vm272, %v4015, 0
      %v4054 = vsel %vm272, %v4016, 0
      %v4057 = vsel %vm272, %v4017, 0
      %v4060 = vsel %vm272, %v4018, 0
      %v4063 = vsel %vm272, %v4019, 0
      %v4066 = vsel %vm272, %v4020, 0
      %v4069 = vsel %vm272, %v4021, 0
      %v4072 = vand.u32 %v4022, %v324
      %4074 = vmatprep.subr.bf16.mxu0 0
      %4075 = vmatpush1.bf16.msra.mxu0 %v4072
      %4076 = vmatprep.subr.bf16.mxu0 0
      %4077 = vmatpush1.bf16.msra.mxu0 0
      %4078 = vmatprep.subr.bf16.mxu0 0
      %4079 = vmatpush1.bf16.msra.mxu0 0
      %4080 = vmatprep.subr.bf16.mxu0 0
      %4081 = vmatpush1.bf16.msra.mxu0 0
      %4082 = vmatprep.subr.bf16.mxu0 0
      %4083 = vmatpush1.bf16.msra.mxu0 0
      %4084 = vmatprep.subr.bf16.mxu0 0
      %4085 = vmatpush1.bf16.msra.mxu0 0
      %4086 = vmatprep.subr.bf16.mxu0 0
      %4087 = vmatpush1.bf16.msra.mxu0 0
      %4088 = vmatprep.subr.bf16.mxu0 0
      %4089 = vmatpush1.bf16.msra.mxu0 0
      %4090 = vmatprep.subr.bf16.mxu0 0
      %4091 = vmatpush1.bf16.msra.mxu0 0
      %4092 = vmatprep.subr.bf16.mxu0 0
      %4093 = vmatpush1.bf16.msra.mxu0 0
      %4094 = vmatprep.subr.bf16.mxu0 0
      %4095 = vmatpush1.bf16.msra.mxu0 0
      %4096 = vmatprep.subr.bf16.mxu0 0
      %4097 = vmatpush1.bf16.msra.mxu0 0
      %4098 = vmatprep.subr.bf16.mxu0 0
      %4099 = vmatpush1.bf16.msra.mxu0 0
      %4100 = vmatprep.subr.bf16.mxu0 0
      %4101 = vmatpush1.bf16.msra.mxu0 0
      %4102 = vmatprep.subr.bf16.mxu0 0
      %4103 = vmatpush1.bf16.msra.mxu0 0
      %4104 = vmatprep.subr.bf16.mxu0 0
      %4105 = vmatpush1.bf16.msra.mxu0 0
      %4106 = vmatprep.mubr.bf16.mxu0 0
      %4107 = vmatmul.mubr.bf16.gmra.mrb[0].mxu0 %v4024
      %v4108 = vpop.f32.mrb[0].mxu0
      %v4109 = vadd.f32 0.0, %v4108
      %v4110 = vpop.f32.mrb[0].mxu0
      %v4111 = vpop.f32.mrb[0].mxu0
      %v4112 = vadd.f32 0.0, %v4111
      %v4113 = vpop.f32.mrb[0].mxu0
      %4114 = vmatprep.mubr.bf16.mxu0 0
      %4115 = vmatmul.mubr.bf16.gmra.mrb[0].mxu0 %v4027
      %v4116 = vpop.f32.mrb[0].mxu0
      %v4117 = vadd.f32 0.0, %v4116
      %v4118 = vpop.f32.mrb[0].mxu0
      %v4119 = vpop.f32.mrb[0].mxu0
      %v4120 = vadd.f32 0.0, %v4119
      %v4121 = vpop.f32.mrb[0].mxu0
      %4122 = vmatprep.mubr.bf16.mxu0 0
      %4123 = vmatmul.mubr.bf16.gmra.mrb[0].mxu0 %v4030
      %v4124 = vpop.f32.mrb[0].mxu0
      %v4125 = vadd.f32 0.0, %v4124
      %v4126 = vpop.f32.mrb[0].mxu0
      %v4127 = vpop.f32.mrb[0].mxu0
      %v4128 = vadd.f32 0.0, %v4127
      %v4129 = vpop.f32.mrb[0].mxu0
      %4130 = vmatprep.mubr.bf16.mxu0 0
      %4131 = vmatmul.mubr.bf16.gmra.mrb[0].mxu0 %v4033
      %v4132 = vpop.f32.mrb[0].mxu0
      %v4133 = vadd.f32 0.0, %v4132
      %v4134 = vpop.f32.mrb[0].mxu0
      %v4135 = vpop.f32.mrb[0].mxu0
      %v4136 = vadd.f32 0.0, %v4135
      %v4137 = vpop.f32.mrb[0].mxu0
      %4138 = vmatprep.mubr.bf16.mxu0 0
      %4139 = vmatmul.mubr.bf16.gmra.mrb[0].mxu0 %v4036
      %v4140 = vpop.f32.mrb[0].mxu0
      %v4141 = vadd.f32 0.0, %v4140
      %v4142 = vpop.f32.mrb[0].mxu0
      %v4143 = vpop.f32.mrb[0].mxu0
      %v4144 = vadd.f32 0.0, %v4143
      %v4145 = vpop.f32.mrb[0].mxu0
      %4146 = vmatprep.mubr.bf16.mxu0 0
      %4147 = vmatmul.mubr.bf16.gmra.mrb[0].mxu0 %v4039
      %v4148 = vpop.f32.mrb[0].mxu0
      %v4149 = vadd.f32 0.0, %v4148
      %v4150 = vpop.f32.mrb[0].mxu0
      %v4151 = vpop.f32.mrb[0].mxu0
      %v4152 = vadd.f32 0.0, %v4151
      %v4153 = vpop.f32.mrb[0].mxu0
      %4154 = vmatprep.mubr.bf16.mxu0 0
      %4155 = vmatmul.mubr.bf16.gmra.mrb[0].mxu0 %v4042
      %v4156 = vpop.f32.mrb[0].mxu0
      %v4157 = vadd.f32 0.0, %v4156
      %v4158 = vpop.f32.mrb[0].mxu0
      %v4159 = vpop.f32.mrb[0].mxu0
      %v4160 = vadd.f32 0.0, %v4159
      %v4161 = vpop.f32.mrb[0].mxu0
      %4162 = vmatprep.mubr.bf16.mxu0 0
      %4163 = vmatmul.mubr.bf16.gmra.mrb[0].mxu0 %v4045
      %v4164 = vpop.f32.mrb[0].mxu0
      %v4165 = vadd.f32 0.0, %v4164
      %v4166 = vpop.f32.mrb[0].mxu0
      %v4167 = vpop.f32.mrb[0].mxu0
      %v4168 = vadd.f32 0.0, %v4167
      %v4169 = vpop.f32.mrb[0].mxu0
      %4170 = vmatprep.mubr.bf16.mxu0 0
      %4171 = vmatmul.mubr.bf16.gmra.mrb[0].mxu0 %v4048
      %v4172 = vpop.f32.mrb[0].mxu0
      %v4173 = vadd.f32 0.0, %v4172
      %v4174 = vpop.f32.mrb[0].mxu0
      %v4175 = vpop.f32.mrb[0].mxu0
      %v4176 = vadd.f32 0.0, %v4175
      %v4177 = vpop.f32.mrb[0].mxu0
      %4178 = vmatprep.mubr.bf16.mxu0 0
      %4179 = vmatmul.mubr.bf16.gmra.mrb[0].mxu0 %v4051
      %v4180 = vpop.f32.mrb[0].mxu0
      %v4181 = vadd.f32 0.0, %v4180
      %v4182 = vpop.f32.mrb[0].mxu0
      %v4183 = vpop.f32.mrb[0].mxu0
      %v4184 = vadd.f32 0.0, %v4183
      %v4185 = vpop.f32.mrb[0].mxu0
      %4186 = vmatprep.mubr.bf16.mxu0 0
      %4187 = vmatmul.mubr.bf16.gmra.mrb[0].mxu0 %v4054
      %v4188 = vpop.f32.mrb[0].mxu0
      %v4189 = vadd.f32 0.0, %v4188
      %v4190 = vpop.f32.mrb[0].mxu0
      %v4191 = vpop.f32.mrb[0].mxu0
      %v4192 = vadd.f32 0.0, %v4191
      %v4193 = vpop.f32.mrb[0].mxu0
      %4194 = vmatprep.mubr.bf16.mxu0 0
      %4195 = vmatmul.mubr.bf16.gmra.mrb[0].mxu0 %v4057
      %v4196 = vpop.f32.mrb[0].mxu0
      %v4197 = vadd.f32 0.0, %v4196
      %v4198 = vpop.f32.mrb[0].mxu0
      %v4199 = vpop.f32.mrb[0].mxu0
      %v4200 = vadd.f32 0.0, %v4199
      %v4201 = vpop.f32.mrb[0].mxu0
      %4202 = vmatprep.mubr.bf16.mxu0 0
      %4203 = vmatmul.mubr.bf16.gmra.mrb[0].mxu0 %v4060
      %v4204 = vpop.f32.mrb[0].mxu0
      %v4205 = vadd.f32 0.0, %v4204
      %v4206 = vpop.f32.mrb[0].mxu0
      %v4207 = vpop.f32.mrb[0].mxu0
      %v4208 = vadd.f32 0.0, %v4207
      %v4209 = vpop.f32.mrb[0].mxu0
      %4210 = vmatprep.mubr.bf16.mxu0 0
      %4211 = vmatmul.mubr.bf16.gmra.mrb[0].mxu0 %v4063
      %v4212 = vpop.f32.mrb[0].mxu0
      %v4213 = vadd.f32 0.0, %v4212
      %v4214 = vpop.f32.mrb[0].mxu0
      %v4215 = vpop.f32.mrb[0].mxu0
      %v4216 = vadd.f32 0.0, %v4215
      %v4217 = vpop.f32.mrb[0].mxu0
      %4218 = vmatprep.mubr.bf16.mxu0 0
      %4219 = vmatmul.mubr.bf16.gmra.mrb[0].mxu0 %v4066
      %v4220 = vpop.f32.mrb[0].mxu0
      %v4221 = vadd.f32 0.0, %v4220
      %v4222 = vpop.f32.mrb[0].mxu0
      %v4223 = vpop.f32.mrb[0].mxu0
      %v4224 = vadd.f32 0.0, %v4223
      %v4225 = vpop.f32.mrb[0].mxu0
      %4226 = vmatprep.mubr.bf16.mxu0 0
      %4227 = vmatmul.mubr.bf16.gmra.mrb[0].mxu0 %v4069
      %v4228 = vpop.f32.mrb[0].mxu0
      %v4229 = vadd.f32 0.0, %v4228
      %v4230 = vpop.f32.mrb[0].mxu0
      %v4231 = vpop.f32.mrb[0].mxu0
      %v4232 = vadd.f32 0.0, %v4231
      %v4233 = vpop.f32.mrb[0].mxu0
      %4234 = vdwg.mxu0
      %v4235 = vadd.f32 %v3942, %v4109
      %v4236 = vadd.f32 %v3943, %v4112
      %v4237 = vadd.f32 %v3944, %v4117
      %v4238 = vadd.f32 %v3945, %v4120
      %v4239 = vadd.f32 %v3946, %v4125
      %v4240 = vadd.f32 %v3947, %v4128
      %v4241 = vadd.f32 %v3948, %v4133
      %v4242 = vadd.f32 %v3949, %v4136
      %v4243 = vadd.f32 %v3950, %v4141
      %v4244 = vadd.f32 %v3951, %v4144
      %v4245 = vadd.f32 %v3952, %v4149
      %v4246 = vadd.f32 %v3953, %v4152
      %v4247 = vadd.f32 %v3954, %v4157
      %v4248 = vadd.f32 %v3955, %v4160
      %v4249 = vadd.f32 %v3956, %v4165
      %v4250 = vadd.f32 %v3957, %v4168
      %v4251 = vadd.f32 %v3958, %v4173
      %v4252 = vadd.f32 %v3959, %v4176
      %v4253 = vadd.f32 %v3960, %v4181
      %v4254 = vadd.f32 %v3961, %v4184
      %v4255 = vadd.f32 %v3962, %v4189
      %v4256 = vadd.f32 %v3963, %v4192
      %v4257 = vadd.f32 %v3964, %v4197
      %v4258 = vadd.f32 %v3965, %v4200
      %v4259 = vadd.f32 %v3966, %v4205
      %v4260 = vadd.f32 %v3967, %v4208
      %v4261 = vadd.f32 %v3968, %v4213
      %v4262 = vadd.f32 %v3969, %v4216
      %v4263 = vadd.f32 %v3970, %v4221
      %v4264 = vadd.f32 %v3971, %v4224
      %v4265 = vadd.f32 %v3972, %v4229
      %v4266 = vadd.f32 %v3973, %v4232
      %v4267 = vld [vmem:[%s3680 + $0x2] sm:$0xff]
      %v4268 = vld [vmem:[%s3680 + $0xa] sm:$0xff]
      %v4269 = vld [vmem:[%s3680 + $0x12] sm:$0xff]
      %v4270 = vld [vmem:[%s3680 + $0x1a] sm:$0xff]
      %v4271 = vld [vmem:[%s3680 + $0x2a] sm:$0xff]
      %v4272 = vld [vmem:[%s3680 + $0x32] sm:$0xff]
      %v4273 = vld [vmem:[%s3680 + $0x3a] sm:$0xff]
      %v4274 = vld [vmem:[%s3680 + $0x42] sm:$0xff]
      %v4275 = vld [vmem:[%s3680 + $0x52] sm:$0xff]
      %v4276 = vld [vmem:[%s3680 + $0x5a] sm:$0xff]
      %v4277 = vld [vmem:[%s3680 + $0x62] sm:$0xff]
      %v4278 = vld [vmem:[%s3680 + $0x6a] sm:$0xff]
      %v4279 = vld [vmem:[%s3680 + $0x7a] sm:$0xff]
      %v4280 = vld [vmem:[%s3680 + $0x82] sm:$0xff]
      %v4281 = vld [vmem:[%s3680 + $0x8a] sm:$0xff]
      %v4282 = vld [vmem:[%s3680 + $0x92] sm:$0xff]
      %v4283 = vld [vmem:[%s3680 + $0xa2] sm:$0xff]
      %v4284 = vld [vmem:[%s3680 + $0xaa] sm:$0xff]
      %v4285 = vld [vmem:[%s3680 + $0xb2] sm:$0xff]
      %v4286 = vld [vmem:[%s3680 + $0xba] sm:$0xff]
      %v4287 = vld [vmem:[%s3680 + $0xca] sm:$0xff]
      %v4288 = vld [vmem:[%s3680 + $0xd2] sm:$0xff]
      %v4289 = vld [vmem:[%s3680 + $0xda] sm:$0xff]
      %v4290 = vld [vmem:[%s3680 + $0xe2] sm:$0xff]
      %v4291 = vld [vmem:[%s3680 + $0xf2] sm:$0xff]
      %v4292 = vld [vmem:[%s3680 + $0xfa] sm:$0xff]
      %v4293 = vld [vmem:[%s3680 + $0x102] sm:$0xff]
      %v4294 = vld [vmem:[%s3680 + $0x10a] sm:$0xff]
      %v4295 = vld [vmem:[%s3680 + $0x11a] sm:$0xff]
      %v4296 = vld [vmem:[%s3680 + $0x122] sm:$0xff]
      %v4297 = vld [vmem:[%s3680 + $0x12a] sm:$0xff]
      %v4298 = vld [vmem:[%s3680 + $0x132] sm:$0xff]
      %v4299 = vpack.c.bf16 %v4268, %v4267
      %v4300 = vpack.c.bf16 %v4270, %v4269
      %v4301 = vpack.c.bf16 %v4272, %v4271
      %v4302 = vpack.c.bf16 %v4274, %v4273
      %v4303 = vpack.c.bf16 %v4276, %v4275
      %v4304 = vpack.c.bf16 %v4278, %v4277
      %v4305 = vpack.c.bf16 %v4280, %v4279
      %v4306 = vpack.c.bf16 %v4282, %v4281
      %v4307 = vpack.c.bf16 %v4284, %v4283
      %v4308 = vpack.c.bf16 %v4286, %v4285
      %v4309 = vpack.c.bf16 %v4288, %v4287
      %v4310 = vpack.c.bf16 %v4290, %v4289
      %v4311 = vpack.c.bf16 %v4292, %v4291
      %v4312 = vpack.c.bf16 %v4294, %v4293
      %v4313 = vpack.c.bf16 %v4296, %v4295
      %v4314 = vpack.c.bf16 %v4298, %v4297
      %v4315 = vld [vmem:[%s1632] sm:$0x3]
      %v4317 = vsel %vm272, %v4299, 0
      %v4320 = vsel %vm272, %v4300, 0
      %v4323 = vsel %vm272, %v4301, 0
      %v4326 = vsel %vm272, %v4302, 0
      %v4329 = vsel %vm272, %v4303, 0
      %v4332 = vsel %vm272, %v4304, 0
      %v4335 = vsel %vm272, %v4305, 0
      %v4338 = vsel %vm272, %v4306, 0
      %v4341 = vsel %vm272, %v4307, 0
      %v4344 = vsel %vm272, %v4308, 0
      %v4347 = vsel %vm272, %v4309, 0
      %v4350 = vsel %vm272, %v4310, 0
      %v4353 = vsel %vm272, %v4311, 0
      %v4356 = vsel %vm272, %v4312, 0
      %v4359 = vsel %vm272, %v4313, 0
      %v4362 = vsel %vm272, %v4314, 0
      %v4365 = vand.u32 %v4315, %v324
      %4367 = vmatprep.subr.bf16.mxu0 0
      %4368 = vmatpush1.bf16.msra.mxu0 %v4365
      %4369 = vmatprep.subr.bf16.mxu0 0
      %4370 = vmatpush1.bf16.msra.mxu0 0
      %4371 = vmatprep.subr.bf16.mxu0 0
      %4372 = vmatpush1.bf16.msra.mxu0 0
      %4373 = vmatprep.subr.bf16.mxu0 0
      %4374 = vmatpush1.bf16.msra.mxu0 0
      %4375 = vmatprep.subr.bf16.mxu0 0
      %4376 = vmatpush1.bf16.msra.mxu0 0
      %4377 = vmatprep.subr.bf16.mxu0 0
      %4378 = vmatpush1.bf16.msra.mxu0 0
      %4379 = vmatprep.subr.bf16.mxu0 0
      %4380 = vmatpush1.bf16.msra.mxu0 0
      %4381 = vmatprep.subr.bf16.mxu0 0
      %4382 = vmatpush1.bf16.msra.mxu0 0
      %4383 = vmatprep.subr.bf16.mxu0 0
      %4384 = vmatpush1.bf16.msra.mxu0 0
      %4385 = vmatprep.subr.bf16.mxu0 0
      %4386 = vmatpush1.bf16.msra.mxu0 0
      %4387 = vmatprep.subr.bf16.mxu0 0
      %4388 = vmatpush1.bf16.msra.mxu0 0
      %4389 = vmatprep.subr.bf16.mxu0 0
      %4390 = vmatpush1.bf16.msra.mxu0 0
      %4391 = vmatprep.subr.bf16.mxu0 0
      %4392 = vmatpush1.bf16.msra.mxu0 0
      %4393 = vmatprep.subr.bf16.mxu0 0
      %4394 = vmatpush1.bf16.msra.mxu0 0
      %4395 = vmatprep.subr.bf16.mxu0 0
      %4396 = vmatpush1.bf16.msra.mxu0 0
      %4397 = vmatprep.subr.bf16.mxu0 0
      %4398 = vmatpush1.bf16.msra.mxu0 0
      %4399 = vmatprep.mubr.bf16.mxu0 0
      %4400 = vmatmul.mubr.bf16.gmra.mrb[0].mxu0 %v4317
      %v4401 = vpop.f32.mrb[0].mxu0
      %v4402 = vadd.f32 0.0, %v4401
      %v4403 = vpop.f32.mrb[0].mxu0
      %v4404 = vpop.f32.mrb[0].mxu0
      %v4405 = vadd.f32 0.0, %v4404
      %v4406 = vpop.f32.mrb[0].mxu0
      %4407 = vmatprep.mubr.bf16.mxu0 0
      %4408 = vmatmul.mubr.bf16.gmra.mrb[0].mxu0 %v4320
      %v4409 = vpop.f32.mrb[0].mxu0
      %v4410 = vadd.f32 0.0, %v4409
      %v4411 = vpop.f32.mrb[0].mxu0
      %v4412 = vpop.f32.mrb[0].mxu0
      %v4413 = vadd.f32 0.0, %v4412
      %v4414 = vpop.f32.mrb[0].mxu0
      %4415 = vmatprep.mubr.bf16.mxu0 0
      %4416 = vmatmul.mubr.bf16.gmra.mrb[0].mxu0 %v4323
      %v4417 = vpop.f32.mrb[0].mxu0
      %v4418 = vadd.f32 0.0, %v4417
      %v4419 = vpop.f32.mrb[0].mxu0
      %v4420 = vpop.f32.mrb[0].mxu0
      %v4421 = vadd.f32 0.0, %v4420
      %v4422 = vpop.f32.mrb[0].mxu0
      %4423 = vmatprep.mubr.bf16.mxu0 0
      %4424 = vmatmul.mubr.bf16.gmra.mrb[0].mxu0 %v4326
      %v4425 = vpop.f32.mrb[0].mxu0
      %v4426 = vadd.f32 0.0, %v4425
      %v4427 = vpop.f32.mrb[0].mxu0
      %v4428 = vpop.f32.mrb[0].mxu0
      %v4429 = vadd.f32 0.0, %v4428
      %v4430 = vpop.f32.mrb[0].mxu0
      %4431 = vmatprep.mubr.bf16.mxu0 0
      %4432 = vmatmul.mubr.bf16.gmra.mrb[0].mxu0 %v4329
      %v4433 = vpop.f32.mrb[0].mxu0
      %v4434 = vadd.f32 0.0, %v4433
      %v4435 = vpop.f32.mrb[0].mxu0
      %v4436 = vpop.f32.mrb[0].mxu0
      %v4437 = vadd.f32 0.0, %v4436
      %v4438 = vpop.f32.mrb[0].mxu0
      %4439 = vmatprep.mubr.bf16.mxu0 0
      %4440 = vmatmul.mubr.bf16.gmra.mrb[0].mxu0 %v4332
      %v4441 = vpop.f32.mrb[0].mxu0
      %v4442 = vadd.f32 0.0, %v4441
      %v4443 = vpop.f32.mrb[0].mxu0
      %v4444 = vpop.f32.mrb[0].mxu0
      %v4445 = vadd.f32 0.0, %v4444
      %v4446 = vpop.f32.mrb[0].mxu0
      %4447 = vmatprep.mubr.bf16.mxu0 0
      %4448 = vmatmul.mubr.bf16.gmra.mrb[0].mxu0 %v4335
      %v4449 = vpop.f32.mrb[0].mxu0
      %v4450 = vadd.f32 0.0, %v4449
      %v4451 = vpop.f32.mrb[0].mxu0
      %v4452 = vpop.f32.mrb[0].mxu0
      %v4453 = vadd.f32 0.0, %v4452
      %v4454 = vpop.f32.mrb[0].mxu0
      %4455 = vmatprep.mubr.bf16.mxu0 0
      %4456 = vmatmul.mubr.bf16.gmra.mrb[0].mxu0 %v4338
      %v4457 = vpop.f32.mrb[0].mxu0
      %v4458 = vadd.f32 0.0, %v4457
      %v4459 = vpop.f32.mrb[0].mxu0
      %v4460 = vpop.f32.mrb[0].mxu0
      %v4461 = vadd.f32 0.0, %v4460
      %v4462 = vpop.f32.mrb[0].mxu0
      %4463 = vmatprep.mubr.bf16.mxu0 0
      %4464 = vmatmul.mubr.bf16.gmra.mrb[0].mxu0 %v4341
      %v4465 = vpop.f32.mrb[0].mxu0
      %v4466 = vadd.f32 0.0, %v4465
      %v4467 = vpop.f32.mrb[0].mxu0
      %v4468 = vpop.f32.mrb[0].mxu0
      %v4469 = vadd.f32 0.0, %v4468
      %v4470 = vpop.f32.mrb[0].mxu0
      %4471 = vmatprep.mubr.bf16.mxu0 0
      %4472 = vmatmul.mubr.bf16.gmra.mrb[0].mxu0 %v4344
      %v4473 = vpop.f32.mrb[0].mxu0
      %v4474 = vadd.f32 0.0, %v4473
      %v4475 = vpop.f32.mrb[0].mxu0
      %v4476 = vpop.f32.mrb[0].mxu0
      %v4477 = vadd.f32 0.0, %v4476
      %v4478 = vpop.f32.mrb[0].mxu0
      %4479 = vmatprep.mubr.bf16.mxu0 0
      %4480 = vmatmul.mubr.bf16.gmra.mrb[0].mxu0 %v4347
      %v4481 = vpop.f32.mrb[0].mxu0
      %v4482 = vadd.f32 0.0, %v4481
      %v4483 = vpop.f32.mrb[0].mxu0
      %v4484 = vpop.f32.mrb[0].mxu0
      %v4485 = vadd.f32 0.0, %v4484
      %v4486 = vpop.f32.mrb[0].mxu0
      %4487 = vmatprep.mubr.bf16.mxu0 0
      %4488 = vmatmul.mubr.bf16.gmra.mrb[0].mxu0 %v4350
      %v4489 = vpop.f32.mrb[0].mxu0
      %v4490 = vadd.f32 0.0, %v4489
      %v4491 = vpop.f32.mrb[0].mxu0
      %v4492 = vpop.f32.mrb[0].mxu0
      %v4493 = vadd.f32 0.0, %v4492
      %v4494 = vpop.f32.mrb[0].mxu0
      %4495 = vmatprep.mubr.bf16.mxu0 0
      %4496 = vmatmul.mubr.bf16.gmra.mrb[0].mxu0 %v4353
      %v4497 = vpop.f32.mrb[0].mxu0
      %v4498 = vadd.f32 0.0, %v4497
      %v4499 = vpop.f32.mrb[0].mxu0
      %v4500 = vpop.f32.mrb[0].mxu0
      %v4501 = vadd.f32 0.0, %v4500
      %v4502 = vpop.f32.mrb[0].mxu0
      %4503 = vmatprep.mubr.bf16.mxu0 0
      %4504 = vmatmul.mubr.bf16.gmra.mrb[0].mxu0 %v4356
      %v4505 = vpop.f32.mrb[0].mxu0
      %v4506 = vadd.f32 0.0, %v4505
      %v4507 = vpop.f32.mrb[0].mxu0
      %v4508 = vpop.f32.mrb[0].mxu0
      %v4509 = vadd.f32 0.0, %v4508
      %v4510 = vpop.f32.mrb[0].mxu0
      %4511 = vmatprep.mubr.bf16.mxu0 0
      %4512 = vmatmul.mubr.bf16.gmra.mrb[0].mxu0 %v4359
      %v4513 = vpop.f32.mrb[0].mxu0
      %v4514 = vadd.f32 0.0, %v4513
      %v4515 = vpop.f32.mrb[0].mxu0
      %v4516 = vpop.f32.mrb[0].mxu0
      %v4517 = vadd.f32 0.0, %v4516
      %v4518 = vpop.f32.mrb[0].mxu0
      %4519 = vmatprep.mubr.bf16.mxu0 0
      %4520 = vmatmul.mubr.bf16.gmra.mrb[0].mxu0 %v4362
      %v4521 = vpop.f32.mrb[0].mxu0
      %v4522 = vadd.f32 0.0, %v4521
      %v4523 = vpop.f32.mrb[0].mxu0
      %v4524 = vpop.f32.mrb[0].mxu0
      %v4525 = vadd.f32 0.0, %v4524
      %v4526 = vpop.f32.mrb[0].mxu0
      %4527 = vdwg.mxu0
      %v4528 = vadd.f32 %v4235, %v4402
      %v4529 = vadd.f32 %v4236, %v4405
      %v4530 = vadd.f32 %v4237, %v4410
      %v4531 = vadd.f32 %v4238, %v4413
      %v4532 = vadd.f32 %v4239, %v4418
      %v4533 = vadd.f32 %v4240, %v4421
      %v4534 = vadd.f32 %v4241, %v4426
      %v4535 = vadd.f32 %v4242, %v4429
      %v4536 = vadd.f32 %v4243, %v4434
      %v4537 = vadd.f32 %v4244, %v4437
      %v4538 = vadd.f32 %v4245, %v4442
      %v4539 = vadd.f32 %v4246, %v4445
      %v4540 = vadd.f32 %v4247, %v4450
      %v4541 = vadd.f32 %v4248, %v4453
      %v4542 = vadd.f32 %v4249, %v4458
      %v4543 = vadd.f32 %v4250, %v4461
      %v4544 = vadd.f32 %v4251, %v4466
      %v4545 = vadd.f32 %v4252, %v4469
      %v4546 = vadd.f32 %v4253, %v4474
      %v4547 = vadd.f32 %v4254, %v4477
      %v4548 = vadd.f32 %v4255, %v4482
      %v4549 = vadd.f32 %v4256, %v4485
      %v4550 = vadd.f32 %v4257, %v4490
      %v4551 = vadd.f32 %v4258, %v4493
      %v4552 = vadd.f32 %v4259, %v4498
      %v4553 = vadd.f32 %v4260, %v4501
      %v4554 = vadd.f32 %v4261, %v4506
      %v4555 = vadd.f32 %v4262, %v4509
      %v4556 = vadd.f32 %v4263, %v4514
      %v4557 = vadd.f32 %v4264, %v4517
      %v4558 = vadd.f32 %v4265, %v4522
      %v4559 = vadd.f32 %v4266, %v4525
      %s4560 = scalar_lea.vmem %s165, 400
      %v4561 = vld [vmem:[%s4560] sm:$0xff]
      %v4562 = vld [vmem:[%s4560 + $0x8] sm:$0xff]
      %v4563 = vld [vmem:[%s4560 + $0x10] sm:$0xff]
      %v4564 = vld [vmem:[%s4560 + $0x18] sm:$0xff]
      %v4565 = vld [vmem:[%s4560 + $0x28] sm:$0xff]
      %v4566 = vld [vmem:[%s4560 + $0x30] sm:$0xff]
      %v4567 = vld [vmem:[%s4560 + $0x38] sm:$0xff]
      %v4568 = vld [vmem:[%s4560 + $0x40] sm:$0xff]
      %v4569 = vld [vmem:[%s4560 + $0x50] sm:$0xff]
      %v4570 = vld [vmem:[%s4560 + $0x58] sm:$0xff]
      %v4571 = vld [vmem:[%s4560 + $0x60] sm:$0xff]
      %v4572 = vld [vmem:[%s4560 + $0x68] sm:$0xff]
      %v4573 = vld [vmem:[%s4560 + $0x78] sm:$0xff]
      %v4574 = vld [vmem:[%s4560 + $0x80] sm:$0xff]
      %v4575 = vld [vmem:[%s4560 + $0x88] sm:$0xff]
      %v4576 = vld [vmem:[%s4560 + $0x90] sm:$0xff]
      %v4577 = vld [vmem:[%s4560 + $0xa0] sm:$0xff]
      %v4578 = vld [vmem:[%s4560 + $0xa8] sm:$0xff]
      %v4579 = vld [vmem:[%s4560 + $0xb0] sm:$0xff]
      %v4580 = vld [vmem:[%s4560 + $0xb8] sm:$0xff]
      %v4581 = vld [vmem:[%s4560 + $0xc8] sm:$0xff]
      %v4582 = vld [vmem:[%s4560 + $0xd0] sm:$0xff]
      %v4583 = vld [vmem:[%s4560 + $0xd8] sm:$0xff]
      %v4584 = vld [vmem:[%s4560 + $0xe0] sm:$0xff]
      %v4585 = vld [vmem:[%s4560 + $0xf0] sm:$0xff]
      %v4586 = vld [vmem:[%s4560 + $0xf8] sm:$0xff]
      %v4587 = vld [vmem:[%s4560 + $0x100] sm:$0xff]
      %v4588 = vld [vmem:[%s4560 + $0x108] sm:$0xff]
      %v4589 = vld [vmem:[%s4560 + $0x118] sm:$0xff]
      %v4590 = vld [vmem:[%s4560 + $0x120] sm:$0xff]
      %v4591 = vld [vmem:[%s4560 + $0x128] sm:$0xff]
      %v4592 = vld [vmem:[%s4560 + $0x130] sm:$0xff]
      %v4593 = vpack.c.bf16 %v4562, %v4561
      %v4594 = vpack.c.bf16 %v4564, %v4563
      %v4595 = vpack.c.bf16 %v4566, %v4565
      %v4596 = vpack.c.bf16 %v4568, %v4567
      %v4597 = vpack.c.bf16 %v4570, %v4569
      %v4598 = vpack.c.bf16 %v4572, %v4571
      %v4599 = vpack.c.bf16 %v4574, %v4573
      %v4600 = vpack.c.bf16 %v4576, %v4575
      %v4601 = vpack.c.bf16 %v4578, %v4577
      %v4602 = vpack.c.bf16 %v4580, %v4579
      %v4603 = vpack.c.bf16 %v4582, %v4581
      %v4604 = vpack.c.bf16 %v4584, %v4583
      %v4605 = vpack.c.bf16 %v4586, %v4585
      %v4606 = vpack.c.bf16 %v4588, %v4587
      %v4607 = vpack.c.bf16 %v4590, %v4589
      %v4608 = vpack.c.bf16 %v4592, %v4591
      %v4609 = vld [vmem:[%s1927] sm:$0x3]
      %v4611 = vsel %vm272, %v4593, 0
      %v4614 = vsel %vm272, %v4594, 0
      %v4617 = vsel %vm272, %v4595, 0
      %v4620 = vsel %vm272, %v4596, 0
      %v4623 = vsel %vm272, %v4597, 0
      %v4626 = vsel %vm272, %v4598, 0
      %v4629 = vsel %vm272, %v4599, 0
      %v4632 = vsel %vm272, %v4600, 0
      %v4635 = vsel %vm272, %v4601, 0
      %v4638 = vsel %vm272, %v4602, 0
      %v4641 = vsel %vm272, %v4603, 0
      %v4644 = vsel %vm272, %v4604, 0
      %v4647 = vsel %vm272, %v4605, 0
      %v4650 = vsel %vm272, %v4606, 0
      %v4653 = vsel %vm272, %v4607, 0
      %v4656 = vsel %vm272, %v4608, 0
      %v4659 = vand.u32 %v4609, %v324
      %4661 = vmatprep.subr.bf16.mxu0 0
      %4662 = vmatpush1.bf16.msra.mxu0 %v4659
      %4663 = vmatprep.subr.bf16.mxu0 0
      %4664 = vmatpush1.bf16.msra.mxu0 0
      %4665 = vmatprep.subr.bf16.mxu0 0
      %4666 = vmatpush1.bf16.msra.mxu0 0
      %4667 = vmatprep.subr.bf16.mxu0 0
      %4668 = vmatpush1.bf16.msra.mxu0 0
      %4669 = vmatprep.subr.bf16.mxu0 0
      %4670 = vmatpush1.bf16.msra.mxu0 0
      %4671 = vmatprep.subr.bf16.mxu0 0
      %4672 = vmatpush1.bf16.msra.mxu0 0
      %4673 = vmatprep.subr.bf16.mxu0 0
      %4674 = vmatpush1.bf16.msra.mxu0 0
      %4675 = vmatprep.subr.bf16.mxu0 0
      %4676 = vmatpush1.bf16.msra.mxu0 0
      %4677 = vmatprep.subr.bf16.mxu0 0
      %4678 = vmatpush1.bf16.msra.mxu0 0
      %4679 = vmatprep.subr.bf16.mxu0 0
      %4680 = vmatpush1.bf16.msra.mxu0 0
      %4681 = vmatprep.subr.bf16.mxu0 0
      %4682 = vmatpush1.bf16.msra.mxu0 0
      %4683 = vmatprep.subr.bf16.mxu0 0
      %4684 = vmatpush1.bf16.msra.mxu0 0
      %4685 = vmatprep.subr.bf16.mxu0 0
      %4686 = vmatpush1.bf16.msra.mxu0 0
      %4687 = vmatprep.subr.bf16.mxu0 0
      %4688 = vmatpush1.bf16.msra.mxu0 0
      %4689 = vmatprep.subr.bf16.mxu0 0
      %4690 = vmatpush1.bf16.msra.mxu0 0
      %4691 = vmatprep.subr.bf16.mxu0 0
      %4692 = vmatpush1.bf16.msra.mxu0 0
      %4693 = vmatprep.mubr.bf16.mxu0 0
      %4694 = vmatmul.mubr.bf16.gmra.mrb[0].mxu0 %v4611
      %v4695 = vpop.f32.mrb[0].mxu0
      %v4696 = vadd.f32 0.0, %v4695
      %v4697 = vpop.f32.mrb[0].mxu0
      %v4698 = vpop.f32.mrb[0].mxu0
      %v4699 = vadd.f32 0.0, %v4698
      %v4700 = vpop.f32.mrb[0].mxu0
      %4701 = vmatprep.mubr.bf16.mxu0 0
      %4702 = vmatmul.mubr.bf16.gmra.mrb[0].mxu0 %v4614
      %v4703 = vpop.f32.mrb[0].mxu0
      %v4704 = vadd.f32 0.0, %v4703
      %v4705 = vpop.f32.mrb[0].mxu0
      %v4706 = vpop.f32.mrb[0].mxu0
      %v4707 = vadd.f32 0.0, %v4706
      %v4708 = vpop.f32.mrb[0].mxu0
      %4709 = vmatprep.mubr.bf16.mxu0 0
      %4710 = vmatmul.mubr.bf16.gmra.mrb[0].mxu0 %v4617
      %v4711 = vpop.f32.mrb[0].mxu0
      %v4712 = vadd.f32 0.0, %v4711
      %v4713 = vpop.f32.mrb[0].mxu0
      %v4714 = vpop.f32.mrb[0].mxu0
      %v4715 = vadd.f32 0.0, %v4714
      %v4716 = vpop.f32.mrb[0].mxu0
      %4717 = vmatprep.mubr.bf16.mxu0 0
      %4718 = vmatmul.mubr.bf16.gmra.mrb[0].mxu0 %v4620
      %v4719 = vpop.f32.mrb[0].mxu0
      %v4720 = vadd.f32 0.0, %v4719
      %v4721 = vpop.f32.mrb[0].mxu0
      %v4722 = vpop.f32.mrb[0].mxu0
      %v4723 = vadd.f32 0.0, %v4722
      %v4724 = vpop.f32.mrb[0].mxu0
      %4725 = vmatprep.mubr.bf16.mxu0 0
      %4726 = vmatmul.mubr.bf16.gmra.mrb[0].mxu0 %v4623
      %v4727 = vpop.f32.mrb[0].mxu0
      %v4728 = vadd.f32 0.0, %v4727
      %v4729 = vpop.f32.mrb[0].mxu0
      %v4730 = vpop.f32.mrb[0].mxu0
      %v4731 = vadd.f32 0.0, %v4730
      %v4732 = vpop.f32.mrb[0].mxu0
      %4733 = vmatprep.mubr.bf16.mxu0 0
      %4734 = vmatmul.mubr.bf16.gmra.mrb[0].mxu0 %v4626
      %v4735 = vpop.f32.mrb[0].mxu0
      %v4736 = vadd.f32 0.0, %v4735
      %v4737 = vpop.f32.mrb[0].mxu0
      %v4738 = vpop.f32.mrb[0].mxu0
      %v4739 = vadd.f32 0.0, %v4738
      %v4740 = vpop.f32.mrb[0].mxu0
      %4741 = vmatprep.mubr.bf16.mxu0 0
      %4742 = vmatmul.mubr.bf16.gmra.mrb[0].mxu0 %v4629
      %v4743 = vpop.f32.mrb[0].mxu0
      %v4744 = vadd.f32 0.0, %v4743
      %v4745 = vpop.f32.mrb[0].mxu0
      %v4746 = vpop.f32.mrb[0].mxu0
      %v4747 = vadd.f32 0.0, %v4746
      %v4748 = vpop.f32.mrb[0].mxu0
      %4749 = vmatprep.mubr.bf16.mxu0 0
      %4750 = vmatmul.mubr.bf16.gmra.mrb[0].mxu0 %v4632
      %v4751 = vpop.f32.mrb[0].mxu0
      %v4752 = vadd.f32 0.0, %v4751
      %v4753 = vpop.f32.mrb[0].mxu0
      %v4754 = vpop.f32.mrb[0].mxu0
      %v4755 = vadd.f32 0.0, %v4754
      %v4756 = vpop.f32.mrb[0].mxu0
      %4757 = vmatprep.mubr.bf16.mxu0 0
      %4758 = vmatmul.mubr.bf16.gmra.mrb[0].mxu0 %v4635
      %v4759 = vpop.f32.mrb[0].mxu0
      %v4760 = vadd.f32 0.0, %v4759
      %v4761 = vpop.f32.mrb[0].mxu0
      %v4762 = vpop.f32.mrb[0].mxu0
      %v4763 = vadd.f32 0.0, %v4762
      %v4764 = vpop.f32.mrb[0].mxu0
      %4765 = vmatprep.mubr.bf16.mxu0 0
      %4766 = vmatmul.mubr.bf16.gmra.mrb[0].mxu0 %v4638
      %v4767 = vpop.f32.mrb[0].mxu0
      %v4768 = vadd.f32 0.0, %v4767
      %v4769 = vpop.f32.mrb[0].mxu0
      %v4770 = vpop.f32.mrb[0].mxu0
      %v4771 = vadd.f32 0.0, %v4770
      %v4772 = vpop.f32.mrb[0].mxu0
      %4773 = vmatprep.mubr.bf16.mxu0 0
      %4774 = vmatmul.mubr.bf16.gmra.mrb[0].mxu0 %v4641
      %v4775 = vpop.f32.mrb[0].mxu0
      %v4776 = vadd.f32 0.0, %v4775
      %v4777 = vpop.f32.mrb[0].mxu0
      %v4778 = vpop.f32.mrb[0].mxu0
      %v4779 = vadd.f32 0.0, %v4778
      %v4780 = vpop.f32.mrb[0].mxu0
      %4781 = vmatprep.mubr.bf16.mxu0 0
      %4782 = vmatmul.mubr.bf16.gmra.mrb[0].mxu0 %v4644
      %v4783 = vpop.f32.mrb[0].mxu0
      %v4784 = vadd.f32 0.0, %v4783
      %v4785 = vpop.f32.mrb[0].mxu0
      %v4786 = vpop.f32.mrb[0].mxu0
      %v4787 = vadd.f32 0.0, %v4786
      %v4788 = vpop.f32.mrb[0].mxu0
      %4789 = vmatprep.mubr.bf16.mxu0 0
      %4790 = vmatmul.mubr.bf16.gmra.mrb[0].mxu0 %v4647
      %v4791 = vpop.f32.mrb[0].mxu0
      %v4792 = vadd.f32 0.0, %v4791
      %v4793 = vpop.f32.mrb[0].mxu0
      %v4794 = vpop.f32.mrb[0].mxu0
      %v4795 = vadd.f32 0.0, %v4794
      %v4796 = vpop.f32.mrb[0].mxu0
      %4797 = vmatprep.mubr.bf16.mxu0 0
      %4798 = vmatmul.mubr.bf16.gmra.mrb[0].mxu0 %v4650
      %v4799 = vpop.f32.mrb[0].mxu0
      %v4800 = vadd.f32 0.0, %v4799
      %v4801 = vpop.f32.mrb[0].mxu0
      %v4802 = vpop.f32.mrb[0].mxu0
      %v4803 = vadd.f32 0.0, %v4802
      %v4804 = vpop.f32.mrb[0].mxu0
      %4805 = vmatprep.mubr.bf16.mxu0 0
      %4806 = vmatmul.mubr.bf16.gmra.mrb[0].mxu0 %v4653
      %v4807 = vpop.f32.mrb[0].mxu0
      %v4808 = vadd.f32 0.0, %v4807
      %v4809 = vpop.f32.mrb[0].mxu0
      %v4810 = vpop.f32.mrb[0].mxu0
      %v4811 = vadd.f32 0.0, %v4810
      %v4812 = vpop.f32.mrb[0].mxu0
      %4813 = vmatprep.mubr.bf16.mxu0 0
      %4814 = vmatmul.mubr.bf16.gmra.mrb[0].mxu0 %v4656
      %v4815 = vpop.f32.mrb[0].mxu0
      %v4816 = vadd.f32 0.0, %v4815
      %v4817 = vpop.f32.mrb[0].mxu0
      %v4818 = vpop.f32.mrb[0].mxu0
      %v4819 = vadd.f32 0.0, %v4818
      %v4820 = vpop.f32.mrb[0].mxu0
      %4821 = vdwg.mxu0
      %v4822 = vadd.f32 %v4528, %v4696
      %v4823 = vadd.f32 %v4529, %v4699
      %v4824 = vadd.f32 %v4530, %v4704
      %v4825 = vadd.f32 %v4531, %v4707
      %v4826 = vadd.f32 %v4532, %v4712
      %v4827 = vadd.f32 %v4533, %v4715
      %v4828 = vadd.f32 %v4534, %v4720
      %v4829 = vadd.f32 %v4535, %v4723
      %v4830 = vadd.f32 %v4536, %v4728
      %v4831 = vadd.f32 %v4537, %v4731
      %v4832 = vadd.f32 %v4538, %v4736
      %v4833 = vadd.f32 %v4539, %v4739
      %v4834 = vadd.f32 %v4540, %v4744
      %v4835 = vadd.f32 %v4541, %v4747
      %v4836 = vadd.f32 %v4542, %v4752
      %v4837 = vadd.f32 %v4543, %v4755
      %v4838 = vadd.f32 %v4544, %v4760
      %v4839 = vadd.f32 %v4545, %v4763
      %v4840 = vadd.f32 %v4546, %v4768
      %v4841 = vadd.f32 %v4547, %v4771
      %v4842 = vadd.f32 %v4548, %v4776
      %v4843 = vadd.f32 %v4549, %v4779
      %v4844 = vadd.f32 %v4550, %v4784
      %v4845 = vadd.f32 %v4551, %v4787
      %v4846 = vadd.f32 %v4552, %v4792
      %v4847 = vadd.f32 %v4553, %v4795
      %v4848 = vadd.f32 %v4554, %v4800
      %v4849 = vadd.f32 %v4555, %v4803
      %v4850 = vadd.f32 %v4556, %v4808
      %v4851 = vadd.f32 %v4557, %v4811
      %v4852 = vadd.f32 %v4558, %v4816
      %v4853 = vadd.f32 %v4559, %v4819
      %v4854 = vld [vmem:[%s4560 + $0x1] sm:$0xff]
      %v4855 = vld [vmem:[%s4560 + $0x9] sm:$0xff]
      %v4856 = vld [vmem:[%s4560 + $0x11] sm:$0xff]
      %v4857 = vld [vmem:[%s4560 + $0x19] sm:$0xff]
      %v4858 = vld [vmem:[%s4560 + $0x29] sm:$0xff]
      %v4859 = vld [vmem:[%s4560 + $0x31] sm:$0xff]
      %v4860 = vld [vmem:[%s4560 + $0x39] sm:$0xff]
      %v4861 = vld [vmem:[%s4560 + $0x41] sm:$0xff]
      %v4862 = vld [vmem:[%s4560 + $0x51] sm:$0xff]
      %v4863 = vld [vmem:[%s4560 + $0x59] sm:$0xff]
      %v4864 = vld [vmem:[%s4560 + $0x61] sm:$0xff]
      %v4865 = vld [vmem:[%s4560 + $0x69] sm:$0xff]
      %v4866 = vld [vmem:[%s4560 + $0x79] sm:$0xff]
      %v4867 = vld [vmem:[%s4560 + $0x81] sm:$0xff]
      %v4868 = vld [vmem:[%s4560 + $0x89] sm:$0xff]
      %v4869 = vld [vmem:[%s4560 + $0x91] sm:$0xff]
      %v4870 = vld [vmem:[%s4560 + $0xa1] sm:$0xff]
      %v4871 = vld [vmem:[%s4560 + $0xa9] sm:$0xff]
      %v4872 = vld [vmem:[%s4560 + $0xb1] sm:$0xff]
      %v4873 = vld [vmem:[%s4560 + $0xb9] sm:$0xff]
      %v4874 = vld [vmem:[%s4560 + $0xc9] sm:$0xff]
      %v4875 = vld [vmem:[%s4560 + $0xd1] sm:$0xff]
      %v4876 = vld [vmem:[%s4560 + $0xd9] sm:$0xff]
      %v4877 = vld [vmem:[%s4560 + $0xe1] sm:$0xff]
      %v4878 = vld [vmem:[%s4560 + $0xf1] sm:$0xff]
      %v4879 = vld [vmem:[%s4560 + $0xf9] sm:$0xff]
      %v4880 = vld [vmem:[%s4560 + $0x101] sm:$0xff]
      %v4881 = vld [vmem:[%s4560 + $0x109] sm:$0xff]
      %v4882 = vld [vmem:[%s4560 + $0x119] sm:$0xff]
      %v4883 = vld [vmem:[%s4560 + $0x121] sm:$0xff]
      %v4884 = vld [vmem:[%s4560 + $0x129] sm:$0xff]
      %v4885 = vld [vmem:[%s4560 + $0x131] sm:$0xff]
      %v4886 = vpack.c.bf16 %v4855, %v4854
      %v4887 = vpack.c.bf16 %v4857, %v4856
      %v4888 = vpack.c.bf16 %v4859, %v4858
      %v4889 = vpack.c.bf16 %v4861, %v4860
      %v4890 = vpack.c.bf16 %v4863, %v4862
      %v4891 = vpack.c.bf16 %v4865, %v4864
      %v4892 = vpack.c.bf16 %v4867, %v4866
      %v4893 = vpack.c.bf16 %v4869, %v4868
      %v4894 = vpack.c.bf16 %v4871, %v4870
      %v4895 = vpack.c.bf16 %v4873, %v4872
      %v4896 = vpack.c.bf16 %v4875, %v4874
      %v4897 = vpack.c.bf16 %v4877, %v4876
      %v4898 = vpack.c.bf16 %v4879, %v4878
      %v4899 = vpack.c.bf16 %v4881, %v4880
      %v4900 = vpack.c.bf16 %v4883, %v4882
      %v4901 = vpack.c.bf16 %v4885, %v4884
      %v4902 = vld [vmem:[%s2221] sm:$0x3]
      %v4904 = vsel %vm272, %v4886, 0
      %v4907 = vsel %vm272, %v4887, 0
      %v4910 = vsel %vm272, %v4888, 0
      %v4913 = vsel %vm272, %v4889, 0
      %v4916 = vsel %vm272, %v4890, 0
      %v4919 = vsel %vm272, %v4891, 0
      %v4922 = vsel %vm272, %v4892, 0
      %v4925 = vsel %vm272, %v4893, 0
      %v4928 = vsel %vm272, %v4894, 0
      %v4931 = vsel %vm272, %v4895, 0
      %v4934 = vsel %vm272, %v4896, 0
      %v4937 = vsel %vm272, %v4897, 0
      %v4940 = vsel %vm272, %v4898, 0
      %v4943 = vsel %vm272, %v4899, 0
      %v4946 = vsel %vm272, %v4900, 0
      %v4949 = vsel %vm272, %v4901, 0
      %v4952 = vand.u32 %v4902, %v324
      %4954 = vmatprep.subr.bf16.mxu0 0
      %4955 = vmatpush1.bf16.msra.mxu0 %v4952
      %4956 = vmatprep.subr.bf16.mxu0 0
      %4957 = vmatpush1.bf16.msra.mxu0 0
      %4958 = vmatprep.subr.bf16.mxu0 0
      %4959 = vmatpush1.bf16.msra.mxu0 0
      %4960 = vmatprep.subr.bf16.mxu0 0
      %4961 = vmatpush1.bf16.msra.mxu0 0
      %4962 = vmatprep.subr.bf16.mxu0 0
      %4963 = vmatpush1.bf16.msra.mxu0 0
      %4964 = vmatprep.subr.bf16.mxu0 0
      %4965 = vmatpush1.bf16.msra.mxu0 0
      %4966 = vmatprep.subr.bf16.mxu0 0
      %4967 = vmatpush1.bf16.msra.mxu0 0
      %4968 = vmatprep.subr.bf16.mxu0 0
      %4969 = vmatpush1.bf16.msra.mxu0 0
      %4970 = vmatprep.subr.bf16.mxu0 0
      %4971 = vmatpush1.bf16.msra.mxu0 0
      %4972 = vmatprep.subr.bf16.mxu0 0
      %4973 = vmatpush1.bf16.msra.mxu0 0
      %4974 = vmatprep.subr.bf16.mxu0 0
      %4975 = vmatpush1.bf16.msra.mxu0 0
      %4976 = vmatprep.subr.bf16.mxu0 0
      %4977 = vmatpush1.bf16.msra.mxu0 0
      %4978 = vmatprep.subr.bf16.mxu0 0
      %4979 = vmatpush1.bf16.msra.mxu0 0
      %4980 = vmatprep.subr.bf16.mxu0 0
      %4981 = vmatpush1.bf16.msra.mxu0 0
      %4982 = vmatprep.subr.bf16.mxu0 0
      %4983 = vmatpush1.bf16.msra.mxu0 0
      %4984 = vmatprep.subr.bf16.mxu0 0
      %4985 = vmatpush1.bf16.msra.mxu0 0
      %4986 = vmatprep.mubr.bf16.mxu0 0
      %4987 = vmatmul.mubr.bf16.gmra.mrb[0].mxu0 %v4904
      %v4988 = vpop.f32.mrb[0].mxu0
      %v4989 = vadd.f32 0.0, %v4988
      %v4990 = vpop.f32.mrb[0].mxu0
      %v4991 = vpop.f32.mrb[0].mxu0
      %v4992 = vadd.f32 0.0, %v4991
      %v4993 = vpop.f32.mrb[0].mxu0
      %4994 = vmatprep.mubr.bf16.mxu0 0
      %4995 = vmatmul.mubr.bf16.gmra.mrb[0].mxu0 %v4907
      %v4996 = vpop.f32.mrb[0].mxu0
      %v4997 = vadd.f32 0.0, %v4996
      %v4998 = vpop.f32.mrb[0].mxu0
      %v4999 = vpop.f32.mrb[0].mxu0
      %v5000 = vadd.f32 0.0, %v4999
      %v5001 = vpop.f32.mrb[0].mxu0
      %5002 = vmatprep.mubr.bf16.mxu0 0
      %5003 = vmatmul.mubr.bf16.gmra.mrb[0].mxu0 %v4910
      %v5004 = vpop.f32.mrb[0].mxu0
      %v5005 = vadd.f32 0.0, %v5004
      %v5006 = vpop.f32.mrb[0].mxu0
      %v5007 = vpop.f32.mrb[0].mxu0
      %v5008 = vadd.f32 0.0, %v5007
      %v5009 = vpop.f32.mrb[0].mxu0
      %5010 = vmatprep.mubr.bf16.mxu0 0
      %5011 = vmatmul.mubr.bf16.gmra.mrb[0].mxu0 %v4913
      %v5012 = vpop.f32.mrb[0].mxu0
      %v5013 = vadd.f32 0.0, %v5012
      %v5014 = vpop.f32.mrb[0].mxu0
      %v5015 = vpop.f32.mrb[0].mxu0
      %v5016 = vadd.f32 0.0, %v5015
      %v5017 = vpop.f32.mrb[0].mxu0
      %5018 = vmatprep.mubr.bf16.mxu0 0
      %5019 = vmatmul.mubr.bf16.gmra.mrb[0].mxu0 %v4916
      %v5020 = vpop.f32.mrb[0].mxu0
      %v5021 = vadd.f32 0.0, %v5020
      %v5022 = vpop.f32.mrb[0].mxu0
      %v5023 = vpop.f32.mrb[0].mxu0
      %v5024 = vadd.f32 0.0, %v5023
      %v5025 = vpop.f32.mrb[0].mxu0
      %5026 = vmatprep.mubr.bf16.mxu0 0
      %5027 = vmatmul.mubr.bf16.gmra.mrb[0].mxu0 %v4919
      %v5028 = vpop.f32.mrb[0].mxu0
      %v5029 = vadd.f32 0.0, %v5028
      %v5030 = vpop.f32.mrb[0].mxu0
      %v5031 = vpop.f32.mrb[0].mxu0
      %v5032 = vadd.f32 0.0, %v5031
      %v5033 = vpop.f32.mrb[0].mxu0
      %5034 = vmatprep.mubr.bf16.mxu0 0
      %5035 = vmatmul.mubr.bf16.gmra.mrb[0].mxu0 %v4922
      %v5036 = vpop.f32.mrb[0].mxu0
      %v5037 = vadd.f32 0.0, %v5036
      %v5038 = vpop.f32.mrb[0].mxu0
      %v5039 = vpop.f32.mrb[0].mxu0
      %v5040 = vadd.f32 0.0, %v5039
      %v5041 = vpop.f32.mrb[0].mxu0
      %5042 = vmatprep.mubr.bf16.mxu0 0
      %5043 = vmatmul.mubr.bf16.gmra.mrb[0].mxu0 %v4925
      %v5044 = vpop.f32.mrb[0].mxu0
      %v5045 = vadd.f32 0.0, %v5044
      %v5046 = vpop.f32.mrb[0].mxu0
      %v5047 = vpop.f32.mrb[0].mxu0
      %v5048 = vadd.f32 0.0, %v5047
      %v5049 = vpop.f32.mrb[0].mxu0
      %5050 = vmatprep.mubr.bf16.mxu0 0
      %5051 = vmatmul.mubr.bf16.gmra.mrb[0].mxu0 %v4928
      %v5052 = vpop.f32.mrb[0].mxu0
      %v5053 = vadd.f32 0.0, %v5052
      %v5054 = vpop.f32.mrb[0].mxu0
      %v5055 = vpop.f32.mrb[0].mxu0
      %v5056 = vadd.f32 0.0, %v5055
      %v5057 = vpop.f32.mrb[0].mxu0
      %5058 = vmatprep.mubr.bf16.mxu0 0
      %5059 = vmatmul.mubr.bf16.gmra.mrb[0].mxu0 %v4931
      %v5060 = vpop.f32.mrb[0].mxu0
      %v5061 = vadd.f32 0.0, %v5060
      %v5062 = vpop.f32.mrb[0].mxu0
      %v5063 = vpop.f32.mrb[0].mxu0
      %v5064 = vadd.f32 0.0, %v5063
      %v5065 = vpop.f32.mrb[0].mxu0
      %5066 = vmatprep.mubr.bf16.mxu0 0
      %5067 = vmatmul.mubr.bf16.gmra.mrb[0].mxu0 %v4934
      %v5068 = vpop.f32.mrb[0].mxu0
      %v5069 = vadd.f32 0.0, %v5068
      %v5070 = vpop.f32.mrb[0].mxu0
      %v5071 = vpop.f32.mrb[0].mxu0
      %v5072 = vadd.f32 0.0, %v5071
      %v5073 = vpop.f32.mrb[0].mxu0
      %5074 = vmatprep.mubr.bf16.mxu0 0
      %5075 = vmatmul.mubr.bf16.gmra.mrb[0].mxu0 %v4937
      %v5076 = vpop.f32.mrb[0].mxu0
      %v5077 = vadd.f32 0.0, %v5076
      %v5078 = vpop.f32.mrb[0].mxu0
      %v5079 = vpop.f32.mrb[0].mxu0
      %v5080 = vadd.f32 0.0, %v5079
      %v5081 = vpop.f32.mrb[0].mxu0
      %5082 = vmatprep.mubr.bf16.mxu0 0
      %5083 = vmatmul.mubr.bf16.gmra.mrb[0].mxu0 %v4940
      %v5084 = vpop.f32.mrb[0].mxu0
      %v5085 = vadd.f32 0.0, %v5084
      %v5086 = vpop.f32.mrb[0].mxu0
      %v5087 = vpop.f32.mrb[0].mxu0
      %v5088 = vadd.f32 0.0, %v5087
      %v5089 = vpop.f32.mrb[0].mxu0
      %5090 = vmatprep.mubr.bf16.mxu0 0
      %5091 = vmatmul.mubr.bf16.gmra.mrb[0].mxu0 %v4943
      %v5092 = vpop.f32.mrb[0].mxu0
      %v5093 = vadd.f32 0.0, %v5092
      %v5094 = vpop.f32.mrb[0].mxu0
      %v5095 = vpop.f32.mrb[0].mxu0
      %v5096 = vadd.f32 0.0, %v5095
      %v5097 = vpop.f32.mrb[0].mxu0
      %5098 = vmatprep.mubr.bf16.mxu0 0
      %5099 = vmatmul.mubr.bf16.gmra.mrb[0].mxu0 %v4946
      %v5100 = vpop.f32.mrb[0].mxu0
      %v5101 = vadd.f32 0.0, %v5100
      %v5102 = vpop.f32.mrb[0].mxu0
      %v5103 = vpop.f32.mrb[0].mxu0
      %v5104 = vadd.f32 0.0, %v5103
      %v5105 = vpop.f32.mrb[0].mxu0
      %5106 = vmatprep.mubr.bf16.mxu0 0
      %5107 = vmatmul.mubr.bf16.gmra.mrb[0].mxu0 %v4949
      %v5108 = vpop.f32.mrb[0].mxu0
      %v5109 = vadd.f32 0.0, %v5108
      %v5110 = vpop.f32.mrb[0].mxu0
      %v5111 = vpop.f32.mrb[0].mxu0
      %v5112 = vadd.f32 0.0, %v5111
      %v5113 = vpop.f32.mrb[0].mxu0
      %5114 = vdwg.mxu0
      %v5115 = vadd.f32 %v4822, %v4989
      %v5116 = vadd.f32 %v4823, %v4992
      %v5117 = vadd.f32 %v4824, %v4997
      %v5118 = vadd.f32 %v4825, %v5000
      %v5119 = vadd.f32 %v4826, %v5005
      %v5120 = vadd.f32 %v4827, %v5008
      %v5121 = vadd.f32 %v4828, %v5013
      %v5122 = vadd.f32 %v4829, %v5016
      %v5123 = vadd.f32 %v4830, %v5021
      %v5124 = vadd.f32 %v4831, %v5024
      %v5125 = vadd.f32 %v4832, %v5029
      %v5126 = vadd.f32 %v4833, %v5032
      %v5127 = vadd.f32 %v4834, %v5037
      %v5128 = vadd.f32 %v4835, %v5040
      %v5129 = vadd.f32 %v4836, %v5045
      %v5130 = vadd.f32 %v4837, %v5048
      %v5131 = vadd.f32 %v4838, %v5053
      %v5132 = vadd.f32 %v4839, %v5056
      %v5133 = vadd.f32 %v4840, %v5061
      %v5134 = vadd.f32 %v4841, %v5064
      %v5135 = vadd.f32 %v4842, %v5069
      %v5136 = vadd.f32 %v4843, %v5072
      %v5137 = vadd.f32 %v4844, %v5077
      %v5138 = vadd.f32 %v4845, %v5080
      %v5139 = vadd.f32 %v4846, %v5085
      %v5140 = vadd.f32 %v4847, %v5088
      %v5141 = vadd.f32 %v4848, %v5093
      %v5142 = vadd.f32 %v4849, %v5096
      %v5143 = vadd.f32 %v4850, %v5101
      %v5144 = vadd.f32 %v4851, %v5104
      %v5145 = vadd.f32 %v4852, %v5109
      %v5146 = vadd.f32 %v4853, %v5112
      %v5147 = vld [vmem:[%s4560 + $0x2] sm:$0xff]
      %v5148 = vld [vmem:[%s4560 + $0xa] sm:$0xff]
      %v5149 = vld [vmem:[%s4560 + $0x12] sm:$0xff]
      %v5150 = vld [vmem:[%s4560 + $0x1a] sm:$0xff]
      %v5151 = vld [vmem:[%s4560 + $0x2a] sm:$0xff]
      %v5152 = vld [vmem:[%s4560 + $0x32] sm:$0xff]
      %v5153 = vld [vmem:[%s4560 + $0x3a] sm:$0xff]
      %v5154 = vld [vmem:[%s4560 + $0x42] sm:$0xff]
      %v5155 = vld [vmem:[%s4560 + $0x52] sm:$0xff]
      %v5156 = vld [vmem:[%s4560 + $0x5a] sm:$0xff]
      %v5157 = vld [vmem:[%s4560 + $0x62] sm:$0xff]
      %v5158 = vld [vmem:[%s4560 + $0x6a] sm:$0xff]
      %v5159 = vld [vmem:[%s4560 + $0x7a] sm:$0xff]
      %v5160 = vld [vmem:[%s4560 + $0x82] sm:$0xff]
      %v5161 = vld [vmem:[%s4560 + $0x8a] sm:$0xff]
      %v5162 = vld [vmem:[%s4560 + $0x92] sm:$0xff]
      %v5163 = vld [vmem:[%s4560 + $0xa2] sm:$0xff]
      %v5164 = vld [vmem:[%s4560 + $0xaa] sm:$0xff]
      %v5165 = vld [vmem:[%s4560 + $0xb2] sm:$0xff]
      %v5166 = vld [vmem:[%s4560 + $0xba] sm:$0xff]
      %v5167 = vld [vmem:[%s4560 + $0xca] sm:$0xff]
      %v5168 = vld [vmem:[%s4560 + $0xd2] sm:$0xff]
      %v5169 = vld [vmem:[%s4560 + $0xda] sm:$0xff]
      %v5170 = vld [vmem:[%s4560 + $0xe2] sm:$0xff]
      %v5171 = vld [vmem:[%s4560 + $0xf2] sm:$0xff]
      %v5172 = vld [vmem:[%s4560 + $0xfa] sm:$0xff]
      %v5173 = vld [vmem:[%s4560 + $0x102] sm:$0xff]
      %v5174 = vld [vmem:[%s4560 + $0x10a] sm:$0xff]
      %v5175 = vld [vmem:[%s4560 + $0x11a] sm:$0xff]
      %v5176 = vld [vmem:[%s4560 + $0x122] sm:$0xff]
      %v5177 = vld [vmem:[%s4560 + $0x12a] sm:$0xff]
      %v5178 = vld [vmem:[%s4560 + $0x132] sm:$0xff]
      %v5179 = vpack.c.bf16 %v5148, %v5147
      %v5180 = vpack.c.bf16 %v5150, %v5149
      %v5181 = vpack.c.bf16 %v5152, %v5151
      %v5182 = vpack.c.bf16 %v5154, %v5153
      %v5183 = vpack.c.bf16 %v5156, %v5155
      %v5184 = vpack.c.bf16 %v5158, %v5157
      %v5185 = vpack.c.bf16 %v5160, %v5159
      %v5186 = vpack.c.bf16 %v5162, %v5161
      %v5187 = vpack.c.bf16 %v5164, %v5163
      %v5188 = vpack.c.bf16 %v5166, %v5165
      %v5189 = vpack.c.bf16 %v5168, %v5167
      %v5190 = vpack.c.bf16 %v5170, %v5169
      %v5191 = vpack.c.bf16 %v5172, %v5171
      %v5192 = vpack.c.bf16 %v5174, %v5173
      %v5193 = vpack.c.bf16 %v5176, %v5175
      %v5194 = vpack.c.bf16 %v5178, %v5177
      %v5195 = vld [vmem:[%s2515] sm:$0x3]
      %v5197 = vsel %vm272, %v5179, 0
      %v5200 = vsel %vm272, %v5180, 0
      %v5203 = vsel %vm272, %v5181, 0
      %v5206 = vsel %vm272, %v5182, 0
      %v5209 = vsel %vm272, %v5183, 0
      %v5212 = vsel %vm272, %v5184, 0
      %v5215 = vsel %vm272, %v5185, 0
      %v5218 = vsel %vm272, %v5186, 0
      %v5221 = vsel %vm272, %v5187, 0
      %v5224 = vsel %vm272, %v5188, 0
      %v5227 = vsel %vm272, %v5189, 0
      %v5230 = vsel %vm272, %v5190, 0
      %v5233 = vsel %vm272, %v5191, 0
      %v5236 = vsel %vm272, %v5192, 0
      %v5239 = vsel %vm272, %v5193, 0
      %v5242 = vsel %vm272, %v5194, 0
      %v5245 = vand.u32 %v5195, %v324
      %5247 = vmatprep.subr.bf16.mxu0 0
      %5248 = vmatpush1.bf16.msra.mxu0 %v5245
      %5249 = vmatprep.subr.bf16.mxu0 0
      %5250 = vmatpush1.bf16.msra.mxu0 0
      %5251 = vmatprep.subr.bf16.mxu0 0
      %5252 = vmatpush1.bf16.msra.mxu0 0
      %5253 = vmatprep.subr.bf16.mxu0 0
      %5254 = vmatpush1.bf16.msra.mxu0 0
      %5255 = vmatprep.subr.bf16.mxu0 0
      %5256 = vmatpush1.bf16.msra.mxu0 0
      %5257 = vmatprep.subr.bf16.mxu0 0
      %5258 = vmatpush1.bf16.msra.mxu0 0
      %5259 = vmatprep.subr.bf16.mxu0 0
      %5260 = vmatpush1.bf16.msra.mxu0 0
      %5261 = vmatprep.subr.bf16.mxu0 0
      %5262 = vmatpush1.bf16.msra.mxu0 0
      %5263 = vmatprep.subr.bf16.mxu0 0
      %5264 = vmatpush1.bf16.msra.mxu0 0
      %5265 = vmatprep.subr.bf16.mxu0 0
      %5266 = vmatpush1.bf16.msra.mxu0 0
      %5267 = vmatprep.subr.bf16.mxu0 0
      %5268 = vmatpush1.bf16.msra.mxu0 0
      %5269 = vmatprep.subr.bf16.mxu0 0
      %5270 = vmatpush1.bf16.msra.mxu0 0
      %5271 = vmatprep.subr.bf16.mxu0 0
      %5272 = vmatpush1.bf16.msra.mxu0 0
      %5273 = vmatprep.subr.bf16.mxu0 0
      %5274 = vmatpush1.bf16.msra.mxu0 0
      %5275 = vmatprep.subr.bf16.mxu0 0
      %5276 = vmatpush1.bf16.msra.mxu0 0
      %5277 = vmatprep.subr.bf16.mxu0 0
      %5278 = vmatpush1.bf16.msra.mxu0 0
      %5279 = vmatprep.mubr.bf16.mxu0 0
      %5280 = vmatmul.mubr.bf16.gmra.mrb[0].mxu0 %v5197
      %v5281 = vpop.f32.mrb[0].mxu0
      %v5282 = vadd.f32 0.0, %v5281
      %v5283 = vpop.f32.mrb[0].mxu0
      %v5284 = vpop.f32.mrb[0].mxu0
      %v5285 = vadd.f32 0.0, %v5284
      %v5286 = vpop.f32.mrb[0].mxu0
      %5287 = vmatprep.mubr.bf16.mxu0 0
      %5288 = vmatmul.mubr.bf16.gmra.mrb[0].mxu0 %v5200
      %v5289 = vpop.f32.mrb[0].mxu0
      %v5290 = vadd.f32 0.0, %v5289
      %v5291 = vpop.f32.mrb[0].mxu0
      %v5292 = vpop.f32.mrb[0].mxu0
      %v5293 = vadd.f32 0.0, %v5292
      %v5294 = vpop.f32.mrb[0].mxu0
      %5295 = vmatprep.mubr.bf16.mxu0 0
      %5296 = vmatmul.mubr.bf16.gmra.mrb[0].mxu0 %v5203
      %v5297 = vpop.f32.mrb[0].mxu0
      %v5298 = vadd.f32 0.0, %v5297
      %v5299 = vpop.f32.mrb[0].mxu0
      %v5300 = vpop.f32.mrb[0].mxu0
      %v5301 = vadd.f32 0.0, %v5300
      %v5302 = vpop.f32.mrb[0].mxu0
      %5303 = vmatprep.mubr.bf16.mxu0 0
      %5304 = vmatmul.mubr.bf16.gmra.mrb[0].mxu0 %v5206
      %v5305 = vpop.f32.mrb[0].mxu0
      %v5306 = vadd.f32 0.0, %v5305
      %v5307 = vpop.f32.mrb[0].mxu0
      %v5308 = vpop.f32.mrb[0].mxu0
      %v5309 = vadd.f32 0.0, %v5308
      %v5310 = vpop.f32.mrb[0].mxu0
      %5311 = vmatprep.mubr.bf16.mxu0 0
      %5312 = vmatmul.mubr.bf16.gmra.mrb[0].mxu0 %v5209
      %v5313 = vpop.f32.mrb[0].mxu0
      %v5314 = vadd.f32 0.0, %v5313
      %v5315 = vpop.f32.mrb[0].mxu0
      %v5316 = vpop.f32.mrb[0].mxu0
      %v5317 = vadd.f32 0.0, %v5316
      %v5318 = vpop.f32.mrb[0].mxu0
      %5319 = vmatprep.mubr.bf16.mxu0 0
      %5320 = vmatmul.mubr.bf16.gmra.mrb[0].mxu0 %v5212
      %v5321 = vpop.f32.mrb[0].mxu0
      %v5322 = vadd.f32 0.0, %v5321
      %v5323 = vpop.f32.mrb[0].mxu0
      %v5324 = vpop.f32.mrb[0].mxu0
      %v5325 = vadd.f32 0.0, %v5324
      %v5326 = vpop.f32.mrb[0].mxu0
      %5327 = vmatprep.mubr.bf16.mxu0 0
      %5328 = vmatmul.mubr.bf16.gmra.mrb[0].mxu0 %v5215
      %v5329 = vpop.f32.mrb[0].mxu0
      %v5330 = vadd.f32 0.0, %v5329
      %v5331 = vpop.f32.mrb[0].mxu0
      %v5332 = vpop.f32.mrb[0].mxu0
      %v5333 = vadd.f32 0.0, %v5332
      %v5334 = vpop.f32.mrb[0].mxu0
      %5335 = vmatprep.mubr.bf16.mxu0 0
      %5336 = vmatmul.mubr.bf16.gmra.mrb[0].mxu0 %v5218
      %v5337 = vpop.f32.mrb[0].mxu0
      %v5338 = vadd.f32 0.0, %v5337
      %v5339 = vpop.f32.mrb[0].mxu0
      %v5340 = vpop.f32.mrb[0].mxu0
      %v5341 = vadd.f32 0.0, %v5340
      %v5342 = vpop.f32.mrb[0].mxu0
      %5343 = vmatprep.mubr.bf16.mxu0 0
      %5344 = vmatmul.mubr.bf16.gmra.mrb[0].mxu0 %v5221
      %v5345 = vpop.f32.mrb[0].mxu0
      %v5346 = vadd.f32 0.0, %v5345
      %v5347 = vpop.f32.mrb[0].mxu0
      %v5348 = vpop.f32.mrb[0].mxu0
      %v5349 = vadd.f32 0.0, %v5348
      %v5350 = vpop.f32.mrb[0].mxu0
      %5351 = vmatprep.mubr.bf16.mxu0 0
      %5352 = vmatmul.mubr.bf16.gmra.mrb[0].mxu0 %v5224
      %v5353 = vpop.f32.mrb[0].mxu0
      %v5354 = vadd.f32 0.0, %v5353
      %v5355 = vpop.f32.mrb[0].mxu0
      %v5356 = vpop.f32.mrb[0].mxu0
      %v5357 = vadd.f32 0.0, %v5356
      %v5358 = vpop.f32.mrb[0].mxu0
      %5359 = vmatprep.mubr.bf16.mxu0 0
      %5360 = vmatmul.mubr.bf16.gmra.mrb[0].mxu0 %v5227
      %v5361 = vpop.f32.mrb[0].mxu0
      %v5362 = vadd.f32 0.0, %v5361
      %v5363 = vpop.f32.mrb[0].mxu0
      %v5364 = vpop.f32.mrb[0].mxu0
      %v5365 = vadd.f32 0.0, %v5364
      %v5366 = vpop.f32.mrb[0].mxu0
      %5367 = vmatprep.mubr.bf16.mxu0 0
      %5368 = vmatmul.mubr.bf16.gmra.mrb[0].mxu0 %v5230
      %v5369 = vpop.f32.mrb[0].mxu0
      %v5370 = vadd.f32 0.0, %v5369
      %v5371 = vpop.f32.mrb[0].mxu0
      %v5372 = vpop.f32.mrb[0].mxu0
      %v5373 = vadd.f32 0.0, %v5372
      %v5374 = vpop.f32.mrb[0].mxu0
      %5375 = vmatprep.mubr.bf16.mxu0 0
      %5376 = vmatmul.mubr.bf16.gmra.mrb[0].mxu0 %v5233
      %v5377 = vpop.f32.mrb[0].mxu0
      %v5378 = vadd.f32 0.0, %v5377
      %v5379 = vpop.f32.mrb[0].mxu0
      %v5380 = vpop.f32.mrb[0].mxu0
      %v5381 = vadd.f32 0.0, %v5380
      %v5382 = vpop.f32.mrb[0].mxu0
      %5383 = vmatprep.mubr.bf16.mxu0 0
      %5384 = vmatmul.mubr.bf16.gmra.mrb[0].mxu0 %v5236
      %v5385 = vpop.f32.mrb[0].mxu0
      %v5386 = vadd.f32 0.0, %v5385
      %v5387 = vpop.f32.mrb[0].mxu0
      %v5388 = vpop.f32.mrb[0].mxu0
      %v5389 = vadd.f32 0.0, %v5388
      %v5390 = vpop.f32.mrb[0].mxu0
      %5391 = vmatprep.mubr.bf16.mxu0 0
      %5392 = vmatmul.mubr.bf16.gmra.mrb[0].mxu0 %v5239
      %v5393 = vpop.f32.mrb[0].mxu0
      %v5394 = vadd.f32 0.0, %v5393
      %v5395 = vpop.f32.mrb[0].mxu0
      %v5396 = vpop.f32.mrb[0].mxu0
      %v5397 = vadd.f32 0.0, %v5396
      %v5398 = vpop.f32.mrb[0].mxu0
      %5399 = vmatprep.mubr.bf16.mxu0 0
      %5400 = vmatmul.mubr.bf16.gmra.mrb[0].mxu0 %v5242
      %v5401 = vpop.f32.mrb[0].mxu0
      %v5402 = vadd.f32 0.0, %v5401
      %v5403 = vpop.f32.mrb[0].mxu0
      %v5404 = vpop.f32.mrb[0].mxu0
      %v5405 = vadd.f32 0.0, %v5404
      %v5406 = vpop.f32.mrb[0].mxu0
      %5407 = vdwg.mxu0
      %v5408 = vadd.f32 %v5115, %v5282
      %v5409 = vadd.f32 %v5116, %v5285
      %v5410 = vadd.f32 %v5117, %v5290
      %v5411 = vadd.f32 %v5118, %v5293
      %v5412 = vadd.f32 %v5119, %v5298
      %v5413 = vadd.f32 %v5120, %v5301
      %v5414 = vadd.f32 %v5121, %v5306
      %v5415 = vadd.f32 %v5122, %v5309
      %v5416 = vadd.f32 %v5123, %v5314
      %v5417 = vadd.f32 %v5124, %v5317
      %v5418 = vadd.f32 %v5125, %v5322
      %v5419 = vadd.f32 %v5126, %v5325
      %v5420 = vadd.f32 %v5127, %v5330
      %v5421 = vadd.f32 %v5128, %v5333
      %v5422 = vadd.f32 %v5129, %v5338
      %v5423 = vadd.f32 %v5130, %v5341
      %v5424 = vadd.f32 %v5131, %v5346
      %v5425 = vadd.f32 %v5132, %v5349
      %v5426 = vadd.f32 %v5133, %v5354
      %v5427 = vadd.f32 %v5134, %v5357
      %v5428 = vadd.f32 %v5135, %v5362
      %v5429 = vadd.f32 %v5136, %v5365
      %v5430 = vadd.f32 %v5137, %v5370
      %v5431 = vadd.f32 %v5138, %v5373
      %v5432 = vadd.f32 %v5139, %v5378
      %v5433 = vadd.f32 %v5140, %v5381
      %v5434 = vadd.f32 %v5141, %v5386
      %v5435 = vadd.f32 %v5142, %v5389
      %v5436 = vadd.f32 %v5143, %v5394
      %v5437 = vadd.f32 %v5144, %v5397
      %v5438 = vadd.f32 %v5145, %v5402
      %v5439 = vadd.f32 %v5146, %v5405
      %v5440 = vadd.f32 %v5408, %v2765
      %v5441 = vadd.f32 %v5409, %v2765
      %v5442 = vadd.f32 %v5410, %v2765
      %v5443 = vadd.f32 %v5411, %v2765
      %v5444 = vadd.f32 %v5412, %v2765
      %v5445 = vadd.f32 %v5413, %v2765
      %v5446 = vadd.f32 %v5414, %v2765
      %v5447 = vadd.f32 %v5415, %v2765
      %v5448 = vadd.f32 %v5416, %v2765
      %v5449 = vadd.f32 %v5417, %v2765
      %v5450 = vadd.f32 %v5418, %v2765
      %v5451 = vadd.f32 %v5419, %v2765
      %v5452 = vadd.f32 %v5420, %v2765
      %v5453 = vadd.f32 %v5421, %v2765
      %v5454 = vadd.f32 %v5422, %v2765
      %v5455 = vadd.f32 %v5423, %v2765
      %v5456 = vadd.f32 %v5424, %v2765
      %v5457 = vadd.f32 %v5425, %v2765
      %v5458 = vadd.f32 %v5426, %v2765
      %v5459 = vadd.f32 %v5427, %v2765
      %v5460 = vadd.f32 %v5428, %v2765
      %v5461 = vadd.f32 %v5429, %v2765
      %v5462 = vadd.f32 %v5430, %v2765
      %v5463 = vadd.f32 %v5431, %v2765
      %v5464 = vadd.f32 %v5432, %v2765
      %v5465 = vadd.f32 %v5433, %v2765
      %v5466 = vadd.f32 %v5434, %v2765
      %v5467 = vadd.f32 %v5435, %v2765
      %v5468 = vadd.f32 %v5436, %v2765
      %v5469 = vadd.f32 %v5437, %v2765
      %v5470 = vadd.f32 %v5438, %v2765
      %v5471 = vadd.f32 %v5439, %v2765
      %v5472 = vmax.f32 %v5440, 0.0
      %v5473 = vmax.f32 %v5441, 0.0
      %v5474 = vmax.f32 %v5442, 0.0
      %v5475 = vmax.f32 %v5443, 0.0
      %v5476 = vmax.f32 %v5444, 0.0
      %v5477 = vmax.f32 %v5445, 0.0
      %v5478 = vmax.f32 %v5446, 0.0
      %v5479 = vmax.f32 %v5447, 0.0
      %v5480 = vmax.f32 %v5448, 0.0
      %v5481 = vmax.f32 %v5449, 0.0
      %v5482 = vmax.f32 %v5450, 0.0
      %v5483 = vmax.f32 %v5451, 0.0
      %v5484 = vmax.f32 %v5452, 0.0
      %v5485 = vmax.f32 %v5453, 0.0
      %v5486 = vmax.f32 %v5454, 0.0
      %v5487 = vmax.f32 %v5455, 0.0
      %v5488 = vmax.f32 %v5456, 0.0
      %v5489 = vmax.f32 %v5457, 0.0
      %v5490 = vmax.f32 %v5458, 0.0
      %v5491 = vmax.f32 %v5459, 0.0
      %v5492 = vmax.f32 %v5460, 0.0
      %v5493 = vmax.f32 %v5461, 0.0
      %v5494 = vmax.f32 %v5462, 0.0
      %v5495 = vmax.f32 %v5463, 0.0
      %v5496 = vmax.f32 %v5464, 0.0
      %v5497 = vmax.f32 %v5465, 0.0
      %v5498 = vmax.f32 %v5466, 0.0
      %v5499 = vmax.f32 %v5467, 0.0
      %v5500 = vmax.f32 %v5468, 0.0
      %v5501 = vmax.f32 %v5469, 0.0
      %v5502 = vmax.f32 %v5470, 0.0
      %v5503 = vmax.f32 %v5471, 0.0
      %5504 = vst.msk [vmem:[%s170 + $0x100] sm:$0xff] %vm2831, %v5472
      %5505 = vst.msk [vmem:[%s170 + $0x108] sm:$0xff] %vm2831, %v5473
      %5506 = vst.msk [vmem:[%s170 + $0x110] sm:$0xff] %vm2831, %v5474
      %5507 = vst.msk [vmem:[%s170 + $0x118] sm:$0xff] %vm2831, %v5475
      %5508 = vst.msk [vmem:[%s170 + $0x120] sm:$0xff] %vm2831, %v5476
      %5509 = vst.msk [vmem:[%s170 + $0x128] sm:$0xff] %vm2831, %v5477
      %5510 = vst.msk [vmem:[%s170 + $0x130] sm:$0xff] %vm2831, %v5478
      %5511 = vst.msk [vmem:[%s170 + $0x138] sm:$0xff] %vm2831, %v5479
      %5512 = vst.msk [vmem:[%s170 + $0x140] sm:$0xff] %vm2831, %v5480
      %5513 = vst.msk [vmem:[%s170 + $0x148] sm:$0xff] %vm2831, %v5481
      %5514 = vst.msk [vmem:[%s170 + $0x150] sm:$0xff] %vm2831, %v5482
      %5515 = vst.msk [vmem:[%s170 + $0x158] sm:$0xff] %vm2831, %v5483
      %5516 = vst.msk [vmem:[%s170 + $0x160] sm:$0xff] %vm2831, %v5484
      %5517 = vst.msk [vmem:[%s170 + $0x168] sm:$0xff] %vm2831, %v5485
      %5518 = vst.msk [vmem:[%s170 + $0x170] sm:$0xff] %vm2831, %v5486
      %5519 = vst.msk [vmem:[%s170 + $0x178] sm:$0xff] %vm2831, %v5487
      %5520 = vst.msk [vmem:[%s170 + $0x180] sm:$0xff] %vm2831, %v5488
      %5521 = vst.msk [vmem:[%s170 + $0x188] sm:$0xff] %vm2831, %v5489
      %5522 = vst.msk [vmem:[%s170 + $0x190] sm:$0xff] %vm2831, %v5490
      %5523 = vst.msk [vmem:[%s170 + $0x198] sm:$0xff] %vm2831, %v5491
      %5524 = vst.msk [vmem:[%s170 + $0x1a0] sm:$0xff] %vm2831, %v5492
      %5525 = vst.msk [vmem:[%s170 + $0x1a8] sm:$0xff] %vm2831, %v5493
      %5526 = vst.msk [vmem:[%s170 + $0x1b0] sm:$0xff] %vm2831, %v5494
      %5527 = vst.msk [vmem:[%s170 + $0x1b8] sm:$0xff] %vm2831, %v5495
      %5528 = vst.msk [vmem:[%s170 + $0x1c0] sm:$0xff] %vm2831, %v5496
      %5529 = vst.msk [vmem:[%s170 + $0x1c8] sm:$0xff] %vm2831, %v5497
      %5530 = vst.msk [vmem:[%s170 + $0x1d0] sm:$0xff] %vm2831, %v5498
      %5531 = vst.msk [vmem:[%s170 + $0x1d8] sm:$0xff] %vm2831, %v5499
      %5532 = vst.msk [vmem:[%s170 + $0x1e0] sm:$0xff] %vm2831, %v5500
      %5533 = vst.msk [vmem:[%s170 + $0x1e8] sm:$0xff] %vm2831, %v5501
      %5534 = vst.msk [vmem:[%s170 + $0x1f0] sm:$0xff] %vm2831, %v5502
      %5535 = vst.msk [vmem:[%s170 + $0x1f8] sm:$0xff] %vm2831, %v5503
      %s5536 = scalar_lea.vmem %s165, 640
      %v5537 = vld [vmem:[%s5536] sm:$0xff]
      %v5538 = vld [vmem:[%s5536 + $0x8] sm:$0xff]
      %v5539 = vld [vmem:[%s5536 + $0x10] sm:$0xff]
      %v5540 = vld [vmem:[%s5536 + $0x18] sm:$0xff]
      %v5541 = vld [vmem:[%s5536 + $0x28] sm:$0xff]
      %v5542 = vld [vmem:[%s5536 + $0x30] sm:$0xff]
      %v5543 = vld [vmem:[%s5536 + $0x38] sm:$0xff]
      %v5544 = vld [vmem:[%s5536 + $0x40] sm:$0xff]
      %v5545 = vld [vmem:[%s5536 + $0x50] sm:$0xff]
      %v5546 = vld [vmem:[%s5536 + $0x58] sm:$0xff]
      %v5547 = vld [vmem:[%s5536 + $0x60] sm:$0xff]
      %v5548 = vld [vmem:[%s5536 + $0x68] sm:$0xff]
      %v5549 = vld [vmem:[%s5536 + $0x78] sm:$0xff]
      %v5550 = vld [vmem:[%s5536 + $0x80] sm:$0xff]
      %v5551 = vld [vmem:[%s5536 + $0x88] sm:$0xff]
      %v5552 = vld [vmem:[%s5536 + $0x90] sm:$0xff]
      %v5553 = vld [vmem:[%s5536 + $0xa0] sm:$0xff]
      %v5554 = vld [vmem:[%s5536 + $0xa8] sm:$0xff]
      %v5555 = vld [vmem:[%s5536 + $0xb0] sm:$0xff]
      %v5556 = vld [vmem:[%s5536 + $0xb8] sm:$0xff]
      %v5557 = vld [vmem:[%s5536 + $0xc8] sm:$0xff]
      %v5558 = vld [vmem:[%s5536 + $0xd0] sm:$0xff]
      %v5559 = vld [vmem:[%s5536 + $0xd8] sm:$0xff]
      %v5560 = vld [vmem:[%s5536 + $0xe0] sm:$0xff]
      %v5561 = vld [vmem:[%s5536 + $0xf0] sm:$0xff]
      %v5562 = vld [vmem:[%s5536 + $0xf8] sm:$0xff]
      %v5563 = vld [vmem:[%s5536 + $0x100] sm:$0xff]
      %v5564 = vld [vmem:[%s5536 + $0x108] sm:$0xff]
      %v5565 = vld [vmem:[%s5536 + $0x118] sm:$0xff]
      %v5566 = vld [vmem:[%s5536 + $0x120] sm:$0xff]
      %v5567 = vld [vmem:[%s5536 + $0x128] sm:$0xff]
      %v5568 = vld [vmem:[%s5536 + $0x130] sm:$0xff]
      %v5569 = vpack.c.bf16 %v5538, %v5537
      %v5570 = vpack.c.bf16 %v5540, %v5539
      %v5571 = vpack.c.bf16 %v5542, %v5541
      %v5572 = vpack.c.bf16 %v5544, %v5543
      %v5573 = vpack.c.bf16 %v5546, %v5545
      %v5574 = vpack.c.bf16 %v5548, %v5547
      %v5575 = vpack.c.bf16 %v5550, %v5549
      %v5576 = vpack.c.bf16 %v5552, %v5551
      %v5577 = vpack.c.bf16 %v5554, %v5553
      %v5578 = vpack.c.bf16 %v5556, %v5555
      %v5579 = vpack.c.bf16 %v5558, %v5557
      %v5580 = vpack.c.bf16 %v5560, %v5559
      %v5581 = vpack.c.bf16 %v5562, %v5561
      %v5582 = vpack.c.bf16 %v5564, %v5563
      %v5583 = vpack.c.bf16 %v5566, %v5565
      %v5584 = vpack.c.bf16 %v5568, %v5567
      %v5585 = vld [vmem:[%s1] sm:$0x3]
      %v5586 = vld [vmem:[%s5536 + $0x1] sm:$0xff]
      %v5587 = vld [vmem:[%s5536 + $0x9] sm:$0xff]
      %v5588 = vld [vmem:[%s5536 + $0x11] sm:$0xff]
      %v5589 = vld [vmem:[%s5536 + $0x19] sm:$0xff]
      %v5590 = vld [vmem:[%s5536 + $0x29] sm:$0xff]
      %v5591 = vld [vmem:[%s5536 + $0x31] sm:$0xff]
      %v5592 = vld [vmem:[%s5536 + $0x39] sm:$0xff]
      %v5593 = vld [vmem:[%s5536 + $0x41] sm:$0xff]
      %v5594 = vld [vmem:[%s5536 + $0x51] sm:$0xff]
      %v5595 = vld [vmem:[%s5536 + $0x59] sm:$0xff]
      %v5596 = vld [vmem:[%s5536 + $0x61] sm:$0xff]
      %v5597 = vld [vmem:[%s5536 + $0x69] sm:$0xff]
      %v5598 = vld [vmem:[%s5536 + $0x79] sm:$0xff]
      %v5599 = vld [vmem:[%s5536 + $0x81] sm:$0xff]
      %v5600 = vld [vmem:[%s5536 + $0x89] sm:$0xff]
      %v5601 = vld [vmem:[%s5536 + $0x91] sm:$0xff]
      %v5602 = vld [vmem:[%s5536 + $0xa1] sm:$0xff]
      %v5603 = vld [vmem:[%s5536 + $0xa9] sm:$0xff]
      %v5604 = vld [vmem:[%s5536 + $0xb1] sm:$0xff]
      %v5605 = vld [vmem:[%s5536 + $0xb9] sm:$0xff]
      %v5606 = vld [vmem:[%s5536 + $0xc9] sm:$0xff]
      %v5607 = vld [vmem:[%s5536 + $0xd1] sm:$0xff]
      %v5608 = vld [vmem:[%s5536 + $0xd9] sm:$0xff]
      %v5609 = vld [vmem:[%s5536 + $0xe1] sm:$0xff]
      %v5610 = vld [vmem:[%s5536 + $0xf1] sm:$0xff]
      %v5611 = vld [vmem:[%s5536 + $0xf9] sm:$0xff]
      %v5612 = vld [vmem:[%s5536 + $0x101] sm:$0xff]
      %v5613 = vld [vmem:[%s5536 + $0x109] sm:$0xff]
      %v5614 = vld [vmem:[%s5536 + $0x119] sm:$0xff]
      %v5615 = vld [vmem:[%s5536 + $0x121] sm:$0xff]
      %v5616 = vld [vmem:[%s5536 + $0x129] sm:$0xff]
      %v5617 = vld [vmem:[%s5536 + $0x131] sm:$0xff]
      %v5618 = vpack.c.bf16 %v5587, %v5586
      %v5619 = vpack.c.bf16 %v5589, %v5588
      %v5620 = vpack.c.bf16 %v5591, %v5590
      %v5621 = vpack.c.bf16 %v5593, %v5592
      %v5622 = vpack.c.bf16 %v5595, %v5594
      %v5623 = vpack.c.bf16 %v5597, %v5596
      %v5624 = vpack.c.bf16 %v5599, %v5598
      %v5625 = vpack.c.bf16 %v5601, %v5600
      %v5626 = vpack.c.bf16 %v5603, %v5602
      %v5627 = vpack.c.bf16 %v5605, %v5604
      %v5628 = vpack.c.bf16 %v5607, %v5606
      %v5629 = vpack.c.bf16 %v5609, %v5608
      %v5630 = vpack.c.bf16 %v5611, %v5610
      %v5631 = vpack.c.bf16 %v5613, %v5612
      %v5632 = vpack.c.bf16 %v5615, %v5614
      %v5633 = vpack.c.bf16 %v5617, %v5616
      %v5634 = vld [vmem:[%s270] sm:$0x3]
      %v5636 = vsel %vm272, %v5618, 0
      %v5639 = vsel %vm272, %v5619, 0
      %v5642 = vsel %vm272, %v5620, 0
      %v5645 = vsel %vm272, %v5621, 0
      %v5648 = vsel %vm272, %v5622, 0
      %v5651 = vsel %vm272, %v5623, 0
      %v5654 = vsel %vm272, %v5624, 0
      %v5657 = vsel %vm272, %v5625, 0
      %v5660 = vsel %vm272, %v5626, 0
      %v5663 = vsel %vm272, %v5627, 0
      %v5666 = vsel %vm272, %v5628, 0
      %v5669 = vsel %vm272, %v5629, 0
      %v5672 = vsel %vm272, %v5630, 0
      %v5675 = vsel %vm272, %v5631, 0
      %v5678 = vsel %vm272, %v5632, 0
      %v5681 = vsel %vm272, %v5633, 0
      %v5684 = vand.u32 %v5634, %v324
      %5686 = vmatprep.subr.bf16.mxu0 0
      %5687 = vmatpush1.bf16.msra.mxu0 %v5684
      %5688 = vmatprep.subr.bf16.mxu0 0
      %5689 = vmatpush1.bf16.msra.mxu0 0
      %5690 = vmatprep.subr.bf16.mxu0 0
      %5691 = vmatpush1.bf16.msra.mxu0 0
      %5692 = vmatprep.subr.bf16.mxu0 0
      %5693 = vmatpush1.bf16.msra.mxu0 0
      %5694 = vmatprep.subr.bf16.mxu0 0
      %5695 = vmatpush1.bf16.msra.mxu0 0
      %5696 = vmatprep.subr.bf16.mxu0 0
      %5697 = vmatpush1.bf16.msra.mxu0 0
      %5698 = vmatprep.subr.bf16.mxu0 0
      %5699 = vmatpush1.bf16.msra.mxu0 0
      %5700 = vmatprep.subr.bf16.mxu0 0
      %5701 = vmatpush1.bf16.msra.mxu0 0
      %5702 = vmatprep.subr.bf16.mxu0 0
      %5703 = vmatpush1.bf16.msra.mxu0 0
      %5704 = vmatprep.subr.bf16.mxu0 0
      %5705 = vmatpush1.bf16.msra.mxu0 0
      %5706 = vmatprep.subr.bf16.mxu0 0
      %5707 = vmatpush1.bf16.msra.mxu0 0
      %5708 = vmatprep.subr.bf16.mxu0 0
      %5709 = vmatpush1.bf16.msra.mxu0 0
      %5710 = vmatprep.subr.bf16.mxu0 0
      %5711 = vmatpush1.bf16.msra.mxu0 0
      %5712 = vmatprep.subr.bf16.mxu0 0
      %5713 = vmatpush1.bf16.msra.mxu0 0
      %5714 = vmatprep.subr.bf16.mxu0 0
      %5715 = vmatpush1.bf16.msra.mxu0 0
      %5716 = vmatprep.subr.bf16.mxu0 0
      %5717 = vmatpush1.bf16.msra.mxu0 0
      %5718 = vmatprep.mubr.bf16.mxu0 0
      %5719 = vmatmul.mubr.bf16.gmra.mrb[0].mxu0 %v5636
      %v5720 = vpop.f32.mrb[0].mxu0
      %v5721 = vadd.f32 0.0, %v5720
      %v5722 = vpop.f32.mrb[0].mxu0
      %v5723 = vpop.f32.mrb[0].mxu0
      %v5724 = vadd.f32 0.0, %v5723
      %v5725 = vpop.f32.mrb[0].mxu0
      %5726 = vmatprep.mubr.bf16.mxu0 0
      %5727 = vmatmul.mubr.bf16.gmra.mrb[0].mxu0 %v5639
      %v5728 = vpop.f32.mrb[0].mxu0
      %v5729 = vadd.f32 0.0, %v5728
      %v5730 = vpop.f32.mrb[0].mxu0
      %v5731 = vpop.f32.mrb[0].mxu0
      %v5732 = vadd.f32 0.0, %v5731
      %v5733 = vpop.f32.mrb[0].mxu0
      %5734 = vmatprep.mubr.bf16.mxu0 0
      %5735 = vmatmul.mubr.bf16.gmra.mrb[0].mxu0 %v5642
      %v5736 = vpop.f32.mrb[0].mxu0
      %v5737 = vadd.f32 0.0, %v5736
      %v5738 = vpop.f32.mrb[0].mxu0
      %v5739 = vpop.f32.mrb[0].mxu0
      %v5740 = vadd.f32 0.0, %v5739
      %v5741 = vpop.f32.mrb[0].mxu0
      %5742 = vmatprep.mubr.bf16.mxu0 0
      %5743 = vmatmul.mubr.bf16.gmra.mrb[0].mxu0 %v5645
      %v5744 = vpop.f32.mrb[0].mxu0
      %v5745 = vadd.f32 0.0, %v5744
      %v5746 = vpop.f32.mrb[0].mxu0
      %v5747 = vpop.f32.mrb[0].mxu0
      %v5748 = vadd.f32 0.0, %v5747
      %v5749 = vpop.f32.mrb[0].mxu0
      %5750 = vmatprep.mubr.bf16.mxu0 0
      %5751 = vmatmul.mubr.bf16.gmra.mrb[0].mxu0 %v5648
      %v5752 = vpop.f32.mrb[0].mxu0
      %v5753 = vadd.f32 0.0, %v5752
      %v5754 = vpop.f32.mrb[0].mxu0
      %v5755 = vpop.f32.mrb[0].mxu0
      %v5756 = vadd.f32 0.0, %v5755
      %v5757 = vpop.f32.mrb[0].mxu0
      %5758 = vmatprep.mubr.bf16.mxu0 0
      %5759 = vmatmul.mubr.bf16.gmra.mrb[0].mxu0 %v5651
      %v5760 = vpop.f32.mrb[0].mxu0
      %v5761 = vadd.f32 0.0, %v5760
      %v5762 = vpop.f32.mrb[0].mxu0
      %v5763 = vpop.f32.mrb[0].mxu0
      %v5764 = vadd.f32 0.0, %v5763
      %v5765 = vpop.f32.mrb[0].mxu0
      %5766 = vmatprep.mubr.bf16.mxu0 0
      %5767 = vmatmul.mubr.bf16.gmra.mrb[0].mxu0 %v5654
      %v5768 = vpop.f32.mrb[0].mxu0
      %v5769 = vadd.f32 0.0, %v5768
      %v5770 = vpop.f32.mrb[0].mxu0
      %v5771 = vpop.f32.mrb[0].mxu0
      %v5772 = vadd.f32 0.0, %v5771
      %v5773 = vpop.f32.mrb[0].mxu0
      %5774 = vmatprep.mubr.bf16.mxu0 0
      %5775 = vmatmul.mubr.bf16.gmra.mrb[0].mxu0 %v5657
      %v5776 = vpop.f32.mrb[0].mxu0
      %v5777 = vadd.f32 0.0, %v5776
      %v5778 = vpop.f32.mrb[0].mxu0
      %v5779 = vpop.f32.mrb[0].mxu0
      %v5780 = vadd.f32 0.0, %v5779
      %v5781 = vpop.f32.mrb[0].mxu0
      %5782 = vmatprep.mubr.bf16.mxu0 0
      %5783 = vmatmul.mubr.bf16.gmra.mrb[0].mxu0 %v5660
      %v5784 = vpop.f32.mrb[0].mxu0
      %v5785 = vadd.f32 0.0, %v5784
      %v5786 = vpop.f32.mrb[0].mxu0
      %v5787 = vpop.f32.mrb[0].mxu0
      %v5788 = vadd.f32 0.0, %v5787
      %v5789 = vpop.f32.mrb[0].mxu0
      %5790 = vmatprep.mubr.bf16.mxu0 0
      %5791 = vmatmul.mubr.bf16.gmra.mrb[0].mxu0 %v5663
      %v5792 = vpop.f32.mrb[0].mxu0
      %v5793 = vadd.f32 0.0, %v5792
      %v5794 = vpop.f32.mrb[0].mxu0
      %v5795 = vpop.f32.mrb[0].mxu0
      %v5796 = vadd.f32 0.0, %v5795
      %v5797 = vpop.f32.mrb[0].mxu0
      %5798 = vmatprep.mubr.bf16.mxu0 0
      %5799 = vmatmul.mubr.bf16.gmra.mrb[0].mxu0 %v5666
      %v5800 = vpop.f32.mrb[0].mxu0
      %v5801 = vadd.f32 0.0, %v5800
      %v5802 = vpop.f32.mrb[0].mxu0
      %v5803 = vpop.f32.mrb[0].mxu0
      %v5804 = vadd.f32 0.0, %v5803
      %v5805 = vpop.f32.mrb[0].mxu0
      %5806 = vmatprep.mubr.bf16.mxu0 0
      %5807 = vmatmul.mubr.bf16.gmra.mrb[0].mxu0 %v5669
      %v5808 = vpop.f32.mrb[0].mxu0
      %v5809 = vadd.f32 0.0, %v5808
      %v5810 = vpop.f32.mrb[0].mxu0
      %v5811 = vpop.f32.mrb[0].mxu0
      %v5812 = vadd.f32 0.0, %v5811
      %v5813 = vpop.f32.mrb[0].mxu0
      %5814 = vmatprep.mubr.bf16.mxu0 0
      %5815 = vmatmul.mubr.bf16.gmra.mrb[0].mxu0 %v5672
      %v5816 = vpop.f32.mrb[0].mxu0
      %v5817 = vadd.f32 0.0, %v5816
      %v5818 = vpop.f32.mrb[0].mxu0
      %v5819 = vpop.f32.mrb[0].mxu0
      %v5820 = vadd.f32 0.0, %v5819
      %v5821 = vpop.f32.mrb[0].mxu0
      %5822 = vmatprep.mubr.bf16.mxu0 0
      %5823 = vmatmul.mubr.bf16.gmra.mrb[0].mxu0 %v5675
      %v5824 = vpop.f32.mrb[0].mxu0
      %v5825 = vadd.f32 0.0, %v5824
      %v5826 = vpop.f32.mrb[0].mxu0
      %v5827 = vpop.f32.mrb[0].mxu0
      %v5828 = vadd.f32 0.0, %v5827
      %v5829 = vpop.f32.mrb[0].mxu0
      %5830 = vmatprep.mubr.bf16.mxu0 0
      %5831 = vmatmul.mubr.bf16.gmra.mrb[0].mxu0 %v5678
      %v5832 = vpop.f32.mrb[0].mxu0
      %v5833 = vadd.f32 0.0, %v5832
      %v5834 = vpop.f32.mrb[0].mxu0
      %v5835 = vpop.f32.mrb[0].mxu0
      %v5836 = vadd.f32 0.0, %v5835
      %v5837 = vpop.f32.mrb[0].mxu0
      %5838 = vmatprep.mubr.bf16.mxu0 0
      %5839 = vmatmul.mubr.bf16.gmra.mrb[0].mxu0 %v5681
      %v5840 = vpop.f32.mrb[0].mxu0
      %v5841 = vadd.f32 0.0, %v5840
      %v5842 = vpop.f32.mrb[0].mxu0
      %v5843 = vpop.f32.mrb[0].mxu0
      %v5844 = vadd.f32 0.0, %v5843
      %v5845 = vpop.f32.mrb[0].mxu0
      %5846 = vdwg.mxu0
      %v5848 = vsel %vm272, %v5569, 0
      %v5851 = vsel %vm272, %v5570, 0
      %v5854 = vsel %vm272, %v5571, 0
      %v5857 = vsel %vm272, %v5572, 0
      %v5860 = vsel %vm272, %v5573, 0
      %v5863 = vsel %vm272, %v5574, 0
      %v5866 = vsel %vm272, %v5575, 0
      %v5869 = vsel %vm272, %v5576, 0
      %v5872 = vsel %vm272, %v5577, 0
      %v5875 = vsel %vm272, %v5578, 0
      %v5878 = vsel %vm272, %v5579, 0
      %v5881 = vsel %vm272, %v5580, 0
      %v5884 = vsel %vm272, %v5581, 0
      %v5887 = vsel %vm272, %v5582, 0
      %v5890 = vsel %vm272, %v5583, 0
      %v5893 = vsel %vm272, %v5584, 0
      %v5896 = vand.u32 %v5585, %v324
      %5898 = vmatprep.subr.bf16.mxu0 0
      %5899 = vmatpush1.bf16.msra.mxu0 %v5896
      %5900 = vmatprep.subr.bf16.mxu0 0
      %5901 = vmatpush1.bf16.msra.mxu0 0
      %5902 = vmatprep.subr.bf16.mxu0 0
      %5903 = vmatpush1.bf16.msra.mxu0 0
      %5904 = vmatprep.subr.bf16.mxu0 0
      %5905 = vmatpush1.bf16.msra.mxu0 0
      %5906 = vmatprep.subr.bf16.mxu0 0
      %5907 = vmatpush1.bf16.msra.mxu0 0
      %5908 = vmatprep.subr.bf16.mxu0 0
      %5909 = vmatpush1.bf16.msra.mxu0 0
      %5910 = vmatprep.subr.bf16.mxu0 0
      %5911 = vmatpush1.bf16.msra.mxu0 0
      %5912 = vmatprep.subr.bf16.mxu0 0
      %5913 = vmatpush1.bf16.msra.mxu0 0
      %5914 = vmatprep.subr.bf16.mxu0 0
      %5915 = vmatpush1.bf16.msra.mxu0 0
      %5916 = vmatprep.subr.bf16.mxu0 0
      %5917 = vmatpush1.bf16.msra.mxu0 0
      %5918 = vmatprep.subr.bf16.mxu0 0
      %5919 = vmatpush1.bf16.msra.mxu0 0
      %5920 = vmatprep.subr.bf16.mxu0 0
      %5921 = vmatpush1.bf16.msra.mxu0 0
      %5922 = vmatprep.subr.bf16.mxu0 0
      %5923 = vmatpush1.bf16.msra.mxu0 0
      %5924 = vmatprep.subr.bf16.mxu0 0
      %5925 = vmatpush1.bf16.msra.mxu0 0
      %5926 = vmatprep.subr.bf16.mxu0 0
      %5927 = vmatpush1.bf16.msra.mxu0 0
      %5928 = vmatprep.subr.bf16.mxu0 0
      %5929 = vmatpush1.bf16.msra.mxu0 0
      %5930 = vmatprep.mubr.bf16.mxu0 0
      %5931 = vmatmul.mubr.bf16.gmra.mrb[0].mxu0 %v5848
      %v5932 = vpop.f32.mrb[0].mxu0
      %v5933 = vadd.f32 %v5721, %v5932
      %v5934 = vpop.f32.mrb[0].mxu0
      %v5935 = vpop.f32.mrb[0].mxu0
      %v5936 = vadd.f32 %v5724, %v5935
      %v5937 = vpop.f32.mrb[0].mxu0
      %5938 = vmatprep.mubr.bf16.mxu0 0
      %5939 = vmatmul.mubr.bf16.gmra.mrb[0].mxu0 %v5851
      %v5940 = vpop.f32.mrb[0].mxu0
      %v5941 = vadd.f32 %v5729, %v5940
      %v5942 = vpop.f32.mrb[0].mxu0
      %v5943 = vpop.f32.mrb[0].mxu0
      %v5944 = vadd.f32 %v5732, %v5943
      %v5945 = vpop.f32.mrb[0].mxu0
      %5946 = vmatprep.mubr.bf16.mxu0 0
      %5947 = vmatmul.mubr.bf16.gmra.mrb[0].mxu0 %v5854
      %v5948 = vpop.f32.mrb[0].mxu0
      %v5949 = vadd.f32 %v5737, %v5948
      %v5950 = vpop.f32.mrb[0].mxu0
      %v5951 = vpop.f32.mrb[0].mxu0
      %v5952 = vadd.f32 %v5740, %v5951
      %v5953 = vpop.f32.mrb[0].mxu0
      %5954 = vmatprep.mubr.bf16.mxu0 0
      %5955 = vmatmul.mubr.bf16.gmra.mrb[0].mxu0 %v5857
      %v5956 = vpop.f32.mrb[0].mxu0
      %v5957 = vadd.f32 %v5745, %v5956
      %v5958 = vpop.f32.mrb[0].mxu0
      %v5959 = vpop.f32.mrb[0].mxu0
      %v5960 = vadd.f32 %v5748, %v5959
      %v5961 = vpop.f32.mrb[0].mxu0
      %5962 = vmatprep.mubr.bf16.mxu0 0
      %5963 = vmatmul.mubr.bf16.gmra.mrb[0].mxu0 %v5860
      %v5964 = vpop.f32.mrb[0].mxu0
      %v5965 = vadd.f32 %v5753, %v5964
      %v5966 = vpop.f32.mrb[0].mxu0
      %v5967 = vpop.f32.mrb[0].mxu0
      %v5968 = vadd.f32 %v5756, %v5967
      %v5969 = vpop.f32.mrb[0].mxu0
      %5970 = vmatprep.mubr.bf16.mxu0 0
      %5971 = vmatmul.mubr.bf16.gmra.mrb[0].mxu0 %v5863
      %v5972 = vpop.f32.mrb[0].mxu0
      %v5973 = vadd.f32 %v5761, %v5972
      %v5974 = vpop.f32.mrb[0].mxu0
      %v5975 = vpop.f32.mrb[0].mxu0
      %v5976 = vadd.f32 %v5764, %v5975
      %v5977 = vpop.f32.mrb[0].mxu0
      %5978 = vmatprep.mubr.bf16.mxu0 0
      %5979 = vmatmul.mubr.bf16.gmra.mrb[0].mxu0 %v5866
      %v5980 = vpop.f32.mrb[0].mxu0
      %v5981 = vadd.f32 %v5769, %v5980
      %v5982 = vpop.f32.mrb[0].mxu0
      %v5983 = vpop.f32.mrb[0].mxu0
      %v5984 = vadd.f32 %v5772, %v5983
      %v5985 = vpop.f32.mrb[0].mxu0
      %5986 = vmatprep.mubr.bf16.mxu0 0
      %5987 = vmatmul.mubr.bf16.gmra.mrb[0].mxu0 %v5869
      %v5988 = vpop.f32.mrb[0].mxu0
      %v5989 = vadd.f32 %v5777, %v5988
      %v5990 = vpop.f32.mrb[0].mxu0
      %v5991 = vpop.f32.mrb[0].mxu0
      %v5992 = vadd.f32 %v5780, %v5991
      %v5993 = vpop.f32.mrb[0].mxu0
      %5994 = vmatprep.mubr.bf16.mxu0 0
      %5995 = vmatmul.mubr.bf16.gmra.mrb[0].mxu0 %v5872
      %v5996 = vpop.f32.mrb[0].mxu0
      %v5997 = vadd.f32 %v5785, %v5996
      %v5998 = vpop.f32.mrb[0].mxu0
      %v5999 = vpop.f32.mrb[0].mxu0
      %v6000 = vadd.f32 %v5788, %v5999
      %v6001 = vpop.f32.mrb[0].mxu0
      %6002 = vmatprep.mubr.bf16.mxu0 0
      %6003 = vmatmul.mubr.bf16.gmra.mrb[0].mxu0 %v5875
      %v6004 = vpop.f32.mrb[0].mxu0
      %v6005 = vadd.f32 %v5793, %v6004
      %v6006 = vpop.f32.mrb[0].mxu0
      %v6007 = vpop.f32.mrb[0].mxu0
      %v6008 = vadd.f32 %v5796, %v6007
      %v6009 = vpop.f32.mrb[0].mxu0
      %6010 = vmatprep.mubr.bf16.mxu0 0
      %6011 = vmatmul.mubr.bf16.gmra.mrb[0].mxu0 %v5878
      %v6012 = vpop.f32.mrb[0].mxu0
      %v6013 = vadd.f32 %v5801, %v6012
      %v6014 = vpop.f32.mrb[0].mxu0
      %v6015 = vpop.f32.mrb[0].mxu0
      %v6016 = vadd.f32 %v5804, %v6015
      %v6017 = vpop.f32.mrb[0].mxu0
      %6018 = vmatprep.mubr.bf16.mxu0 0
      %6019 = vmatmul.mubr.bf16.gmra.mrb[0].mxu0 %v5881
      %v6020 = vpop.f32.mrb[0].mxu0
      %v6021 = vadd.f32 %v5809, %v6020
      %v6022 = vpop.f32.mrb[0].mxu0
      %v6023 = vpop.f32.mrb[0].mxu0
      %v6024 = vadd.f32 %v5812, %v6023
      %v6025 = vpop.f32.mrb[0].mxu0
      %6026 = vmatprep.mubr.bf16.mxu0 0
      %6027 = vmatmul.mubr.bf16.gmra.mrb[0].mxu0 %v5884
      %v6028 = vpop.f32.mrb[0].mxu0
      %v6029 = vadd.f32 %v5817, %v6028
      %v6030 = vpop.f32.mrb[0].mxu0
      %v6031 = vpop.f32.mrb[0].mxu0
      %v6032 = vadd.f32 %v5820, %v6031
      %v6033 = vpop.f32.mrb[0].mxu0
      %6034 = vmatprep.mubr.bf16.mxu0 0
      %6035 = vmatmul.mubr.bf16.gmra.mrb[0].mxu0 %v5887
      %v6036 = vpop.f32.mrb[0].mxu0
      %v6037 = vadd.f32 %v5825, %v6036
      %v6038 = vpop.f32.mrb[0].mxu0
      %v6039 = vpop.f32.mrb[0].mxu0
      %v6040 = vadd.f32 %v5828, %v6039
      %v6041 = vpop.f32.mrb[0].mxu0
      %6042 = vmatprep.mubr.bf16.mxu0 0
      %6043 = vmatmul.mubr.bf16.gmra.mrb[0].mxu0 %v5890
      %v6044 = vpop.f32.mrb[0].mxu0
      %v6045 = vadd.f32 %v5833, %v6044
      %v6046 = vpop.f32.mrb[0].mxu0
      %v6047 = vpop.f32.mrb[0].mxu0
      %v6048 = vadd.f32 %v5836, %v6047
      %v6049 = vpop.f32.mrb[0].mxu0
      %6050 = vmatprep.mubr.bf16.mxu0 0
      %6051 = vmatmul.mubr.bf16.gmra.mrb[0].mxu0 %v5893
      %v6052 = vpop.f32.mrb[0].mxu0
      %v6053 = vadd.f32 %v5841, %v6052
      %v6054 = vpop.f32.mrb[0].mxu0
      %v6055 = vpop.f32.mrb[0].mxu0
      %v6056 = vadd.f32 %v5844, %v6055
      %v6057 = vpop.f32.mrb[0].mxu0
      %6058 = vdwg.mxu0
      %v6059 = vld [vmem:[%s5536 + $0x2] sm:$0xff]
      %v6060 = vld [vmem:[%s5536 + $0xa] sm:$0xff]
      %v6061 = vld [vmem:[%s5536 + $0x12] sm:$0xff]
      %v6062 = vld [vmem:[%s5536 + $0x1a] sm:$0xff]
      %v6063 = vld [vmem:[%s5536 + $0x2a] sm:$0xff]
      %v6064 = vld [vmem:[%s5536 + $0x32] sm:$0xff]
      %v6065 = vld [vmem:[%s5536 + $0x3a] sm:$0xff]
      %v6066 = vld [vmem:[%s5536 + $0x42] sm:$0xff]
      %v6067 = vld [vmem:[%s5536 + $0x52] sm:$0xff]
      %v6068 = vld [vmem:[%s5536 + $0x5a] sm:$0xff]
      %v6069 = vld [vmem:[%s5536 + $0x62] sm:$0xff]
      %v6070 = vld [vmem:[%s5536 + $0x6a] sm:$0xff]
      %v6071 = vld [vmem:[%s5536 + $0x7a] sm:$0xff]
      %v6072 = vld [vmem:[%s5536 + $0x82] sm:$0xff]
      %v6073 = vld [vmem:[%s5536 + $0x8a] sm:$0xff]
      %v6074 = vld [vmem:[%s5536 + $0x92] sm:$0xff]
      %v6075 = vld [vmem:[%s5536 + $0xa2] sm:$0xff]
      %v6076 = vld [vmem:[%s5536 + $0xaa] sm:$0xff]
      %v6077 = vld [vmem:[%s5536 + $0xb2] sm:$0xff]
      %v6078 = vld [vmem:[%s5536 + $0xba] sm:$0xff]
      %v6079 = vld [vmem:[%s5536 + $0xca] sm:$0xff]
      %v6080 = vld [vmem:[%s5536 + $0xd2] sm:$0xff]
      %v6081 = vld [vmem:[%s5536 + $0xda] sm:$0xff]
      %v6082 = vld [vmem:[%s5536 + $0xe2] sm:$0xff]
      %v6083 = vld [vmem:[%s5536 + $0xf2] sm:$0xff]
      %v6084 = vld [vmem:[%s5536 + $0xfa] sm:$0xff]
      %v6085 = vld [vmem:[%s5536 + $0x102] sm:$0xff]
      %v6086 = vld [vmem:[%s5536 + $0x10a] sm:$0xff]
      %v6087 = vld [vmem:[%s5536 + $0x11a] sm:$0xff]
      %v6088 = vld [vmem:[%s5536 + $0x122] sm:$0xff]
      %v6089 = vld [vmem:[%s5536 + $0x12a] sm:$0xff]
      %v6090 = vld [vmem:[%s5536 + $0x132] sm:$0xff]
      %v6091 = vpack.c.bf16 %v6060, %v6059
      %v6092 = vpack.c.bf16 %v6062, %v6061
      %v6093 = vpack.c.bf16 %v6064, %v6063
      %v6094 = vpack.c.bf16 %v6066, %v6065
      %v6095 = vpack.c.bf16 %v6068, %v6067
      %v6096 = vpack.c.bf16 %v6070, %v6069
      %v6097 = vpack.c.bf16 %v6072, %v6071
      %v6098 = vpack.c.bf16 %v6074, %v6073
      %v6099 = vpack.c.bf16 %v6076, %v6075
      %v6100 = vpack.c.bf16 %v6078, %v6077
      %v6101 = vpack.c.bf16 %v6080, %v6079
      %v6102 = vpack.c.bf16 %v6082, %v6081
      %v6103 = vpack.c.bf16 %v6084, %v6083
      %v6104 = vpack.c.bf16 %v6086, %v6085
      %v6105 = vpack.c.bf16 %v6088, %v6087
      %v6106 = vpack.c.bf16 %v6090, %v6089
      %v6107 = vld [vmem:[%s749] sm:$0x3]
      %v6109 = vsel %vm272, %v6091, 0
      %v6112 = vsel %vm272, %v6092, 0
      %v6115 = vsel %vm272, %v6093, 0
      %v6118 = vsel %vm272, %v6094, 0
      %v6121 = vsel %vm272, %v6095, 0
      %v6124 = vsel %vm272, %v6096, 0
      %v6127 = vsel %vm272, %v6097, 0
      %v6130 = vsel %vm272, %v6098, 0
      %v6133 = vsel %vm272, %v6099, 0
      %v6136 = vsel %vm272, %v6100, 0
      %v6139 = vsel %vm272, %v6101, 0
      %v6142 = vsel %vm272, %v6102, 0
      %v6145 = vsel %vm272, %v6103, 0
      %v6148 = vsel %vm272, %v6104, 0
      %v6151 = vsel %vm272, %v6105, 0
      %v6154 = vsel %vm272, %v6106, 0
      %v6157 = vand.u32 %v6107, %v324
      %6159 = vmatprep.subr.bf16.mxu0 0
      %6160 = vmatpush1.bf16.msra.mxu0 %v6157
      %6161 = vmatprep.subr.bf16.mxu0 0
      %6162 = vmatpush1.bf16.msra.mxu0 0
      %6163 = vmatprep.subr.bf16.mxu0 0
      %6164 = vmatpush1.bf16.msra.mxu0 0
      %6165 = vmatprep.subr.bf16.mxu0 0
      %6166 = vmatpush1.bf16.msra.mxu0 0
      %6167 = vmatprep.subr.bf16.mxu0 0
      %6168 = vmatpush1.bf16.msra.mxu0 0
      %6169 = vmatprep.subr.bf16.mxu0 0
      %6170 = vmatpush1.bf16.msra.mxu0 0
      %6171 = vmatprep.subr.bf16.mxu0 0
      %6172 = vmatpush1.bf16.msra.mxu0 0
      %6173 = vmatprep.subr.bf16.mxu0 0
      %6174 = vmatpush1.bf16.msra.mxu0 0
      %6175 = vmatprep.subr.bf16.mxu0 0
      %6176 = vmatpush1.bf16.msra.mxu0 0
      %6177 = vmatprep.subr.bf16.mxu0 0
      %6178 = vmatpush1.bf16.msra.mxu0 0
      %6179 = vmatprep.subr.bf16.mxu0 0
      %6180 = vmatpush1.bf16.msra.mxu0 0
      %6181 = vmatprep.subr.bf16.mxu0 0
      %6182 = vmatpush1.bf16.msra.mxu0 0
      %6183 = vmatprep.subr.bf16.mxu0 0
      %6184 = vmatpush1.bf16.msra.mxu0 0
      %6185 = vmatprep.subr.bf16.mxu0 0
      %6186 = vmatpush1.bf16.msra.mxu0 0
      %6187 = vmatprep.subr.bf16.mxu0 0
      %6188 = vmatpush1.bf16.msra.mxu0 0
      %6189 = vmatprep.subr.bf16.mxu0 0
      %6190 = vmatpush1.bf16.msra.mxu0 0
      %6191 = vmatprep.mubr.bf16.mxu0 0
      %6192 = vmatmul.mubr.bf16.gmra.mrb[0].mxu0 %v6109
      %v6193 = vpop.f32.mrb[0].mxu0
      %v6194 = vadd.f32 0.0, %v6193
      %v6195 = vpop.f32.mrb[0].mxu0
      %v6196 = vpop.f32.mrb[0].mxu0
      %v6197 = vadd.f32 0.0, %v6196
      %v6198 = vpop.f32.mrb[0].mxu0
      %6199 = vmatprep.mubr.bf16.mxu0 0
      %6200 = vmatmul.mubr.bf16.gmra.mrb[0].mxu0 %v6112
      %v6201 = vpop.f32.mrb[0].mxu0
      %v6202 = vadd.f32 0.0, %v6201
      %v6203 = vpop.f32.mrb[0].mxu0
      %v6204 = vpop.f32.mrb[0].mxu0
      %v6205 = vadd.f32 0.0, %v6204
      %v6206 = vpop.f32.mrb[0].mxu0
      %6207 = vmatprep.mubr.bf16.mxu0 0
      %6208 = vmatmul.mubr.bf16.gmra.mrb[0].mxu0 %v6115
      %v6209 = vpop.f32.mrb[0].mxu0
      %v6210 = vadd.f32 0.0, %v6209
      %v6211 = vpop.f32.mrb[0].mxu0
      %v6212 = vpop.f32.mrb[0].mxu0
      %v6213 = vadd.f32 0.0, %v6212
      %v6214 = vpop.f32.mrb[0].mxu0
      %6215 = vmatprep.mubr.bf16.mxu0 0
      %6216 = vmatmul.mubr.bf16.gmra.mrb[0].mxu0 %v6118
      %v6217 = vpop.f32.mrb[0].mxu0
      %v6218 = vadd.f32 0.0, %v6217
      %v6219 = vpop.f32.mrb[0].mxu0
      %v6220 = vpop.f32.mrb[0].mxu0
      %v6221 = vadd.f32 0.0, %v6220
      %v6222 = vpop.f32.mrb[0].mxu0
      %6223 = vmatprep.mubr.bf16.mxu0 0
      %6224 = vmatmul.mubr.bf16.gmra.mrb[0].mxu0 %v6121
      %v6225 = vpop.f32.mrb[0].mxu0
      %v6226 = vadd.f32 0.0, %v6225
      %v6227 = vpop.f32.mrb[0].mxu0
      %v6228 = vpop.f32.mrb[0].mxu0
      %v6229 = vadd.f32 0.0, %v6228
      %v6230 = vpop.f32.mrb[0].mxu0
      %6231 = vmatprep.mubr.bf16.mxu0 0
      %6232 = vmatmul.mubr.bf16.gmra.mrb[0].mxu0 %v6124
      %v6233 = vpop.f32.mrb[0].mxu0
      %v6234 = vadd.f32 0.0, %v6233
      %v6235 = vpop.f32.mrb[0].mxu0
      %v6236 = vpop.f32.mrb[0].mxu0
      %v6237 = vadd.f32 0.0, %v6236
      %v6238 = vpop.f32.mrb[0].mxu0
      %6239 = vmatprep.mubr.bf16.mxu0 0
      %6240 = vmatmul.mubr.bf16.gmra.mrb[0].mxu0 %v6127
      %v6241 = vpop.f32.mrb[0].mxu0
      %v6242 = vadd.f32 0.0, %v6241
      %v6243 = vpop.f32.mrb[0].mxu0
      %v6244 = vpop.f32.mrb[0].mxu0
      %v6245 = vadd.f32 0.0, %v6244
      %v6246 = vpop.f32.mrb[0].mxu0
      %6247 = vmatprep.mubr.bf16.mxu0 0
      %6248 = vmatmul.mubr.bf16.gmra.mrb[0].mxu0 %v6130
      %v6249 = vpop.f32.mrb[0].mxu0
      %v6250 = vadd.f32 0.0, %v6249
      %v6251 = vpop.f32.mrb[0].mxu0
      %v6252 = vpop.f32.mrb[0].mxu0
      %v6253 = vadd.f32 0.0, %v6252
      %v6254 = vpop.f32.mrb[0].mxu0
      %6255 = vmatprep.mubr.bf16.mxu0 0
      %6256 = vmatmul.mubr.bf16.gmra.mrb[0].mxu0 %v6133
      %v6257 = vpop.f32.mrb[0].mxu0
      %v6258 = vadd.f32 0.0, %v6257
      %v6259 = vpop.f32.mrb[0].mxu0
      %v6260 = vpop.f32.mrb[0].mxu0
      %v6261 = vadd.f32 0.0, %v6260
      %v6262 = vpop.f32.mrb[0].mxu0
      %6263 = vmatprep.mubr.bf16.mxu0 0
      %6264 = vmatmul.mubr.bf16.gmra.mrb[0].mxu0 %v6136
      %v6265 = vpop.f32.mrb[0].mxu0
      %v6266 = vadd.f32 0.0, %v6265
      %v6267 = vpop.f32.mrb[0].mxu0
      %v6268 = vpop.f32.mrb[0].mxu0
      %v6269 = vadd.f32 0.0, %v6268
      %v6270 = vpop.f32.mrb[0].mxu0
      %6271 = vmatprep.mubr.bf16.mxu0 0
      %6272 = vmatmul.mubr.bf16.gmra.mrb[0].mxu0 %v6139
      %v6273 = vpop.f32.mrb[0].mxu0
      %v6274 = vadd.f32 0.0, %v6273
      %v6275 = vpop.f32.mrb[0].mxu0
      %v6276 = vpop.f32.mrb[0].mxu0
      %v6277 = vadd.f32 0.0, %v6276
      %v6278 = vpop.f32.mrb[0].mxu0
      %6279 = vmatprep.mubr.bf16.mxu0 0
      %6280 = vmatmul.mubr.bf16.gmra.mrb[0].mxu0 %v6142
      %v6281 = vpop.f32.mrb[0].mxu0
      %v6282 = vadd.f32 0.0, %v6281
      %v6283 = vpop.f32.mrb[0].mxu0
      %v6284 = vpop.f32.mrb[0].mxu0
      %v6285 = vadd.f32 0.0, %v6284
      %v6286 = vpop.f32.mrb[0].mxu0
      %6287 = vmatprep.mubr.bf16.mxu0 0
      %6288 = vmatmul.mubr.bf16.gmra.mrb[0].mxu0 %v6145
      %v6289 = vpop.f32.mrb[0].mxu0
      %v6290 = vadd.f32 0.0, %v6289
      %v6291 = vpop.f32.mrb[0].mxu0
      %v6292 = vpop.f32.mrb[0].mxu0
      %v6293 = vadd.f32 0.0, %v6292
      %v6294 = vpop.f32.mrb[0].mxu0
      %6295 = vmatprep.mubr.bf16.mxu0 0
      %6296 = vmatmul.mubr.bf16.gmra.mrb[0].mxu0 %v6148
      %v6297 = vpop.f32.mrb[0].mxu0
      %v6298 = vadd.f32 0.0, %v6297
      %v6299 = vpop.f32.mrb[0].mxu0
      %v6300 = vpop.f32.mrb[0].mxu0
      %v6301 = vadd.f32 0.0, %v6300
      %v6302 = vpop.f32.mrb[0].mxu0
      %6303 = vmatprep.mubr.bf16.mxu0 0
      %6304 = vmatmul.mubr.bf16.gmra.mrb[0].mxu0 %v6151
      %v6305 = vpop.f32.mrb[0].mxu0
      %v6306 = vadd.f32 0.0, %v6305
      %v6307 = vpop.f32.mrb[0].mxu0
      %v6308 = vpop.f32.mrb[0].mxu0
      %v6309 = vadd.f32 0.0, %v6308
      %v6310 = vpop.f32.mrb[0].mxu0
      %6311 = vmatprep.mubr.bf16.mxu0 0
      %6312 = vmatmul.mubr.bf16.gmra.mrb[0].mxu0 %v6154
      %v6313 = vpop.f32.mrb[0].mxu0
      %v6314 = vadd.f32 0.0, %v6313
      %v6315 = vpop.f32.mrb[0].mxu0
      %v6316 = vpop.f32.mrb[0].mxu0
      %v6317 = vadd.f32 0.0, %v6316
      %v6318 = vpop.f32.mrb[0].mxu0
      %6319 = vdwg.mxu0
      %v6320 = vadd.f32 %v5933, %v6194
      %v6321 = vadd.f32 %v5936, %v6197
      %v6322 = vadd.f32 %v5941, %v6202
      %v6323 = vadd.f32 %v5944, %v6205
      %v6324 = vadd.f32 %v5949, %v6210
      %v6325 = vadd.f32 %v5952, %v6213
      %v6326 = vadd.f32 %v5957, %v6218
      %v6327 = vadd.f32 %v5960, %v6221
      %v6328 = vadd.f32 %v5965, %v6226
      %v6329 = vadd.f32 %v5968, %v6229
      %v6330 = vadd.f32 %v5973, %v6234
      %v6331 = vadd.f32 %v5976, %v6237
      %v6332 = vadd.f32 %v5981, %v6242
      %v6333 = vadd.f32 %v5984, %v6245
      %v6334 = vadd.f32 %v5989, %v6250
      %v6335 = vadd.f32 %v5992, %v6253
      %v6336 = vadd.f32 %v5997, %v6258
      %v6337 = vadd.f32 %v6000, %v6261
      %v6338 = vadd.f32 %v6005, %v6266
      %v6339 = vadd.f32 %v6008, %v6269
      %v6340 = vadd.f32 %v6013, %v6274
      %v6341 = vadd.f32 %v6016, %v6277
      %v6342 = vadd.f32 %v6021, %v6282
      %v6343 = vadd.f32 %v6024, %v6285
      %v6344 = vadd.f32 %v6029, %v6290
      %v6345 = vadd.f32 %v6032, %v6293
      %v6346 = vadd.f32 %v6037, %v6298
      %v6347 = vadd.f32 %v6040, %v6301
      %v6348 = vadd.f32 %v6045, %v6306
      %v6349 = vadd.f32 %v6048, %v6309
      %v6350 = vadd.f32 %v6053, %v6314
      %v6351 = vadd.f32 %v6056, %v6317
      %s6352 = scalar_lea.vmem %s165, 680
      %v6353 = vld [vmem:[%s6352] sm:$0xff]
      %v6354 = vld [vmem:[%s6352 + $0x8] sm:$0xff]
      %v6355 = vld [vmem:[%s6352 + $0x10] sm:$0xff]
      %v6356 = vld [vmem:[%s6352 + $0x18] sm:$0xff]
      %v6357 = vld [vmem:[%s6352 + $0x28] sm:$0xff]
      %v6358 = vld [vmem:[%s6352 + $0x30] sm:$0xff]
      %v6359 = vld [vmem:[%s6352 + $0x38] sm:$0xff]
      %v6360 = vld [vmem:[%s6352 + $0x40] sm:$0xff]
      %v6361 = vld [vmem:[%s6352 + $0x50] sm:$0xff]
      %v6362 = vld [vmem:[%s6352 + $0x58] sm:$0xff]
      %v6363 = vld [vmem:[%s6352 + $0x60] sm:$0xff]
      %v6364 = vld [vmem:[%s6352 + $0x68] sm:$0xff]
      %v6365 = vld [vmem:[%s6352 + $0x78] sm:$0xff]
      %v6366 = vld [vmem:[%s6352 + $0x80] sm:$0xff]
      %v6367 = vld [vmem:[%s6352 + $0x88] sm:$0xff]
      %v6368 = vld [vmem:[%s6352 + $0x90] sm:$0xff]
      %v6369 = vld [vmem:[%s6352 + $0xa0] sm:$0xff]
      %v6370 = vld [vmem:[%s6352 + $0xa8] sm:$0xff]
      %v6371 = vld [vmem:[%s6352 + $0xb0] sm:$0xff]
      %v6372 = vld [vmem:[%s6352 + $0xb8] sm:$0xff]
      %v6373 = vld [vmem:[%s6352 + $0xc8] sm:$0xff]
      %v6374 = vld [vmem:[%s6352 + $0xd0] sm:$0xff]
      %v6375 = vld [vmem:[%s6352 + $0xd8] sm:$0xff]
      %v6376 = vld [vmem:[%s6352 + $0xe0] sm:$0xff]
      %v6377 = vld [vmem:[%s6352 + $0xf0] sm:$0xff]
      %v6378 = vld [vmem:[%s6352 + $0xf8] sm:$0xff]
      %v6379 = vld [vmem:[%s6352 + $0x100] sm:$0xff]
      %v6380 = vld [vmem:[%s6352 + $0x108] sm:$0xff]
      %v6381 = vld [vmem:[%s6352 + $0x118] sm:$0xff]
      %v6382 = vld [vmem:[%s6352 + $0x120] sm:$0xff]
      %v6383 = vld [vmem:[%s6352 + $0x128] sm:$0xff]
      %v6384 = vld [vmem:[%s6352 + $0x130] sm:$0xff]
      %v6385 = vpack.c.bf16 %v6354, %v6353
      %v6386 = vpack.c.bf16 %v6356, %v6355
      %v6387 = vpack.c.bf16 %v6358, %v6357
      %v6388 = vpack.c.bf16 %v6360, %v6359
      %v6389 = vpack.c.bf16 %v6362, %v6361
      %v6390 = vpack.c.bf16 %v6364, %v6363
      %v6391 = vpack.c.bf16 %v6366, %v6365
      %v6392 = vpack.c.bf16 %v6368, %v6367
      %v6393 = vpack.c.bf16 %v6370, %v6369
      %v6394 = vpack.c.bf16 %v6372, %v6371
      %v6395 = vpack.c.bf16 %v6374, %v6373
      %v6396 = vpack.c.bf16 %v6376, %v6375
      %v6397 = vpack.c.bf16 %v6378, %v6377
      %v6398 = vpack.c.bf16 %v6380, %v6379
      %v6399 = vpack.c.bf16 %v6382, %v6381
      %v6400 = vpack.c.bf16 %v6384, %v6383
      %v6401 = vld [vmem:[%s1044] sm:$0x3]
      %v6403 = vsel %vm272, %v6385, 0
      %v6406 = vsel %vm272, %v6386, 0
      %v6409 = vsel %vm272, %v6387, 0
      %v6412 = vsel %vm272, %v6388, 0
      %v6415 = vsel %vm272, %v6389, 0
      %v6418 = vsel %vm272, %v6390, 0
      %v6421 = vsel %vm272, %v6391, 0
      %v6424 = vsel %vm272, %v6392, 0
      %v6427 = vsel %vm272, %v6393, 0
      %v6430 = vsel %vm272, %v6394, 0
      %v6433 = vsel %vm272, %v6395, 0
      %v6436 = vsel %vm272, %v6396, 0
      %v6439 = vsel %vm272, %v6397, 0
      %v6442 = vsel %vm272, %v6398, 0
      %v6445 = vsel %vm272, %v6399, 0
      %v6448 = vsel %vm272, %v6400, 0
      %v6451 = vand.u32 %v6401, %v324
      %6453 = vmatprep.subr.bf16.mxu0 0
      %6454 = vmatpush1.bf16.msra.mxu0 %v6451
      %6455 = vmatprep.subr.bf16.mxu0 0
      %6456 = vmatpush1.bf16.msra.mxu0 0
      %6457 = vmatprep.subr.bf16.mxu0 0
      %6458 = vmatpush1.bf16.msra.mxu0 0
      %6459 = vmatprep.subr.bf16.mxu0 0
      %6460 = vmatpush1.bf16.msra.mxu0 0
      %6461 = vmatprep.subr.bf16.mxu0 0
      %6462 = vmatpush1.bf16.msra.mxu0 0
      %6463 = vmatprep.subr.bf16.mxu0 0
      %6464 = vmatpush1.bf16.msra.mxu0 0
      %6465 = vmatprep.subr.bf16.mxu0 0
      %6466 = vmatpush1.bf16.msra.mxu0 0
      %6467 = vmatprep.subr.bf16.mxu0 0
      %6468 = vmatpush1.bf16.msra.mxu0 0
      %6469 = vmatprep.subr.bf16.mxu0 0
      %6470 = vmatpush1.bf16.msra.mxu0 0
      %6471 = vmatprep.subr.bf16.mxu0 0
      %6472 = vmatpush1.bf16.msra.mxu0 0
      %6473 = vmatprep.subr.bf16.mxu0 0
      %6474 = vmatpush1.bf16.msra.mxu0 0
      %6475 = vmatprep.subr.bf16.mxu0 0
      %6476 = vmatpush1.bf16.msra.mxu0 0
      %6477 = vmatprep.subr.bf16.mxu0 0
      %6478 = vmatpush1.bf16.msra.mxu0 0
      %6479 = vmatprep.subr.bf16.mxu0 0
      %6480 = vmatpush1.bf16.msra.mxu0 0
      %6481 = vmatprep.subr.bf16.mxu0 0
      %6482 = vmatpush1.bf16.msra.mxu0 0
      %6483 = vmatprep.subr.bf16.mxu0 0
      %6484 = vmatpush1.bf16.msra.mxu0 0
      %6485 = vmatprep.mubr.bf16.mxu0 0
      %6486 = vmatmul.mubr.bf16.gmra.mrb[0].mxu0 %v6403
      %v6487 = vpop.f32.mrb[0].mxu0
      %v6488 = vadd.f32 0.0, %v6487
      %v6489 = vpop.f32.mrb[0].mxu0
      %v6490 = vpop.f32.mrb[0].mxu0
      %v6491 = vadd.f32 0.0, %v6490
      %v6492 = vpop.f32.mrb[0].mxu0
      %6493 = vmatprep.mubr.bf16.mxu0 0
      %6494 = vmatmul.mubr.bf16.gmra.mrb[0].mxu0 %v6406
      %v6495 = vpop.f32.mrb[0].mxu0
      %v6496 = vadd.f32 0.0, %v6495
      %v6497 = vpop.f32.mrb[0].mxu0
      %v6498 = vpop.f32.mrb[0].mxu0
      %v6499 = vadd.f32 0.0, %v6498
      %v6500 = vpop.f32.mrb[0].mxu0
      %6501 = vmatprep.mubr.bf16.mxu0 0
      %6502 = vmatmul.mubr.bf16.gmra.mrb[0].mxu0 %v6409
      %v6503 = vpop.f32.mrb[0].mxu0
      %v6504 = vadd.f32 0.0, %v6503
      %v6505 = vpop.f32.mrb[0].mxu0
      %v6506 = vpop.f32.mrb[0].mxu0
      %v6507 = vadd.f32 0.0, %v6506
      %v6508 = vpop.f32.mrb[0].mxu0
      %6509 = vmatprep.mubr.bf16.mxu0 0
      %6510 = vmatmul.mubr.bf16.gmra.mrb[0].mxu0 %v6412
      %v6511 = vpop.f32.mrb[0].mxu0
      %v6512 = vadd.f32 0.0, %v6511
      %v6513 = vpop.f32.mrb[0].mxu0
      %v6514 = vpop.f32.mrb[0].mxu0
      %v6515 = vadd.f32 0.0, %v6514
      %v6516 = vpop.f32.mrb[0].mxu0
      %6517 = vmatprep.mubr.bf16.mxu0 0
      %6518 = vmatmul.mubr.bf16.gmra.mrb[0].mxu0 %v6415
      %v6519 = vpop.f32.mrb[0].mxu0
      %v6520 = vadd.f32 0.0, %v6519
      %v6521 = vpop.f32.mrb[0].mxu0
      %v6522 = vpop.f32.mrb[0].mxu0
      %v6523 = vadd.f32 0.0, %v6522
      %v6524 = vpop.f32.mrb[0].mxu0
      %6525 = vmatprep.mubr.bf16.mxu0 0
      %6526 = vmatmul.mubr.bf16.gmra.mrb[0].mxu0 %v6418
      %v6527 = vpop.f32.mrb[0].mxu0
      %v6528 = vadd.f32 0.0, %v6527
      %v6529 = vpop.f32.mrb[0].mxu0
      %v6530 = vpop.f32.mrb[0].mxu0
      %v6531 = vadd.f32 0.0, %v6530
      %v6532 = vpop.f32.mrb[0].mxu0
      %6533 = vmatprep.mubr.bf16.mxu0 0
      %6534 = vmatmul.mubr.bf16.gmra.mrb[0].mxu0 %v6421
      %v6535 = vpop.f32.mrb[0].mxu0
      %v6536 = vadd.f32 0.0, %v6535
      %v6537 = vpop.f32.mrb[0].mxu0
      %v6538 = vpop.f32.mrb[0].mxu0
      %v6539 = vadd.f32 0.0, %v6538
      %v6540 = vpop.f32.mrb[0].mxu0
      %6541 = vmatprep.mubr.bf16.mxu0 0
      %6542 = vmatmul.mubr.bf16.gmra.mrb[0].mxu0 %v6424
      %v6543 = vpop.f32.mrb[0].mxu0
      %v6544 = vadd.f32 0.0, %v6543
      %v6545 = vpop.f32.mrb[0].mxu0
      %v6546 = vpop.f32.mrb[0].mxu0
      %v6547 = vadd.f32 0.0, %v6546
      %v6548 = vpop.f32.mrb[0].mxu0
      %6549 = vmatprep.mubr.bf16.mxu0 0
      %6550 = vmatmul.mubr.bf16.gmra.mrb[0].mxu0 %v6427
      %v6551 = vpop.f32.mrb[0].mxu0
      %v6552 = vadd.f32 0.0, %v6551
      %v6553 = vpop.f32.mrb[0].mxu0
      %v6554 = vpop.f32.mrb[0].mxu0
      %v6555 = vadd.f32 0.0, %v6554
      %v6556 = vpop.f32.mrb[0].mxu0
      %6557 = vmatprep.mubr.bf16.mxu0 0
      %6558 = vmatmul.mubr.bf16.gmra.mrb[0].mxu0 %v6430
      %v6559 = vpop.f32.mrb[0].mxu0
      %v6560 = vadd.f32 0.0, %v6559
      %v6561 = vpop.f32.mrb[0].mxu0
      %v6562 = vpop.f32.mrb[0].mxu0
      %v6563 = vadd.f32 0.0, %v6562
      %v6564 = vpop.f32.mrb[0].mxu0
      %6565 = vmatprep.mubr.bf16.mxu0 0
      %6566 = vmatmul.mubr.bf16.gmra.mrb[0].mxu0 %v6433
      %v6567 = vpop.f32.mrb[0].mxu0
      %v6568 = vadd.f32 0.0, %v6567
      %v6569 = vpop.f32.mrb[0].mxu0
      %v6570 = vpop.f32.mrb[0].mxu0
      %v6571 = vadd.f32 0.0, %v6570
      %v6572 = vpop.f32.mrb[0].mxu0
      %6573 = vmatprep.mubr.bf16.mxu0 0
      %6574 = vmatmul.mubr.bf16.gmra.mrb[0].mxu0 %v6436
      %v6575 = vpop.f32.mrb[0].mxu0
      %v6576 = vadd.f32 0.0, %v6575
      %v6577 = vpop.f32.mrb[0].mxu0
      %v6578 = vpop.f32.mrb[0].mxu0
      %v6579 = vadd.f32 0.0, %v6578
      %v6580 = vpop.f32.mrb[0].mxu0
      %6581 = vmatprep.mubr.bf16.mxu0 0
      %6582 = vmatmul.mubr.bf16.gmra.mrb[0].mxu0 %v6439
      %v6583 = vpop.f32.mrb[0].mxu0
      %v6584 = vadd.f32 0.0, %v6583
      %v6585 = vpop.f32.mrb[0].mxu0
      %v6586 = vpop.f32.mrb[0].mxu0
      %v6587 = vadd.f32 0.0, %v6586
      %v6588 = vpop.f32.mrb[0].mxu0
      %6589 = vmatprep.mubr.bf16.mxu0 0
      %6590 = vmatmul.mubr.bf16.gmra.mrb[0].mxu0 %v6442
      %v6591 = vpop.f32.mrb[0].mxu0
      %v6592 = vadd.f32 0.0, %v6591
      %v6593 = vpop.f32.mrb[0].mxu0
      %v6594 = vpop.f32.mrb[0].mxu0
      %v6595 = vadd.f32 0.0, %v6594
      %v6596 = vpop.f32.mrb[0].mxu0
      %6597 = vmatprep.mubr.bf16.mxu0 0
      %6598 = vmatmul.mubr.bf16.gmra.mrb[0].mxu0 %v6445
      %v6599 = vpop.f32.mrb[0].mxu0
      %v6600 = vadd.f32 0.0, %v6599
      %v6601 = vpop.f32.mrb[0].mxu0
      %v6602 = vpop.f32.mrb[0].mxu0
      %v6603 = vadd.f32 0.0, %v6602
      %v6604 = vpop.f32.mrb[0].mxu0
      %6605 = vmatprep.mubr.bf16.mxu0 0
      %6606 = vmatmul.mubr.bf16.gmra.mrb[0].mxu0 %v6448
      %v6607 = vpop.f32.mrb[0].mxu0
      %v6608 = vadd.f32 0.0, %v6607
      %v6609 = vpop.f32.mrb[0].mxu0
      %v6610 = vpop.f32.mrb[0].mxu0
      %v6611 = vadd.f32 0.0, %v6610
      %v6612 = vpop.f32.mrb[0].mxu0
      %6613 = vdwg.mxu0
      %v6614 = vadd.f32 %v6320, %v6488
      %v6615 = vadd.f32 %v6321, %v6491
      %v6616 = vadd.f32 %v6322, %v6496
      %v6617 = vadd.f32 %v6323, %v6499
      %v6618 = vadd.f32 %v6324, %v6504
      %v6619 = vadd.f32 %v6325, %v6507
      %v6620 = vadd.f32 %v6326, %v6512
      %v6621 = vadd.f32 %v6327, %v6515
      %v6622 = vadd.f32 %v6328, %v6520
      %v6623 = vadd.f32 %v6329, %v6523
      %v6624 = vadd.f32 %v6330, %v6528
      %v6625 = vadd.f32 %v6331, %v6531
      %v6626 = vadd.f32 %v6332, %v6536
      %v6627 = vadd.f32 %v6333, %v6539
      %v6628 = vadd.f32 %v6334, %v6544
      %v6629 = vadd.f32 %v6335, %v6547
      %v6630 = vadd.f32 %v6336, %v6552
      %v6631 = vadd.f32 %v6337, %v6555
      %v6632 = vadd.f32 %v6338, %v6560
      %v6633 = vadd.f32 %v6339, %v6563
      %v6634 = vadd.f32 %v6340, %v6568
      %v6635 = vadd.f32 %v6341, %v6571
      %v6636 = vadd.f32 %v6342, %v6576
      %v6637 = vadd.f32 %v6343, %v6579
      %v6638 = vadd.f32 %v6344, %v6584
      %v6639 = vadd.f32 %v6345, %v6587
      %v6640 = vadd.f32 %v6346, %v6592
      %v6641 = vadd.f32 %v6347, %v6595
      %v6642 = vadd.f32 %v6348, %v6600
      %v6643 = vadd.f32 %v6349, %v6603
      %v6644 = vadd.f32 %v6350, %v6608
      %v6645 = vadd.f32 %v6351, %v6611
      %v6646 = vld [vmem:[%s6352 + $0x1] sm:$0xff]
      %v6647 = vld [vmem:[%s6352 + $0x9] sm:$0xff]
      %v6648 = vld [vmem:[%s6352 + $0x11] sm:$0xff]
      %v6649 = vld [vmem:[%s6352 + $0x19] sm:$0xff]
      %v6650 = vld [vmem:[%s6352 + $0x29] sm:$0xff]
      %v6651 = vld [vmem:[%s6352 + $0x31] sm:$0xff]
      %v6652 = vld [vmem:[%s6352 + $0x39] sm:$0xff]
      %v6653 = vld [vmem:[%s6352 + $0x41] sm:$0xff]
      %v6654 = vld [vmem:[%s6352 + $0x51] sm:$0xff]
      %v6655 = vld [vmem:[%s6352 + $0x59] sm:$0xff]
      %v6656 = vld [vmem:[%s6352 + $0x61] sm:$0xff]
      %v6657 = vld [vmem:[%s6352 + $0x69] sm:$0xff]
      %v6658 = vld [vmem:[%s6352 + $0x79] sm:$0xff]
      %v6659 = vld [vmem:[%s6352 + $0x81] sm:$0xff]
      %v6660 = vld [vmem:[%s6352 + $0x89] sm:$0xff]
      %v6661 = vld [vmem:[%s6352 + $0x91] sm:$0xff]
      %v6662 = vld [vmem:[%s6352 + $0xa1] sm:$0xff]
      %v6663 = vld [vmem:[%s6352 + $0xa9] sm:$0xff]
      %v6664 = vld [vmem:[%s6352 + $0xb1] sm:$0xff]
      %v6665 = vld [vmem:[%s6352 + $0xb9] sm:$0xff]
      %v6666 = vld [vmem:[%s6352 + $0xc9] sm:$0xff]
      %v6667 = vld [vmem:[%s6352 + $0xd1] sm:$0xff]
      %v6668 = vld [vmem:[%s6352 + $0xd9] sm:$0xff]
      %v6669 = vld [vmem:[%s6352 + $0xe1] sm:$0xff]
      %v6670 = vld [vmem:[%s6352 + $0xf1] sm:$0xff]
      %v6671 = vld [vmem:[%s6352 + $0xf9] sm:$0xff]
      %v6672 = vld [vmem:[%s6352 + $0x101] sm:$0xff]
      %v6673 = vld [vmem:[%s6352 + $0x109] sm:$0xff]
      %v6674 = vld [vmem:[%s6352 + $0x119] sm:$0xff]
      %v6675 = vld [vmem:[%s6352 + $0x121] sm:$0xff]
      %v6676 = vld [vmem:[%s6352 + $0x129] sm:$0xff]
      %v6677 = vld [vmem:[%s6352 + $0x131] sm:$0xff]
      %v6678 = vpack.c.bf16 %v6647, %v6646
      %v6679 = vpack.c.bf16 %v6649, %v6648
      %v6680 = vpack.c.bf16 %v6651, %v6650
      %v6681 = vpack.c.bf16 %v6653, %v6652
      %v6682 = vpack.c.bf16 %v6655, %v6654
      %v6683 = vpack.c.bf16 %v6657, %v6656
      %v6684 = vpack.c.bf16 %v6659, %v6658
      %v6685 = vpack.c.bf16 %v6661, %v6660
      %v6686 = vpack.c.bf16 %v6663, %v6662
      %v6687 = vpack.c.bf16 %v6665, %v6664
      %v6688 = vpack.c.bf16 %v6667, %v6666
      %v6689 = vpack.c.bf16 %v6669, %v6668
      %v6690 = vpack.c.bf16 %v6671, %v6670
      %v6691 = vpack.c.bf16 %v6673, %v6672
      %v6692 = vpack.c.bf16 %v6675, %v6674
      %v6693 = vpack.c.bf16 %v6677, %v6676
      %v6694 = vld [vmem:[%s1338] sm:$0x3]
      %v6696 = vsel %vm272, %v6678, 0
      %v6699 = vsel %vm272, %v6679, 0
      %v6702 = vsel %vm272, %v6680, 0
      %v6705 = vsel %vm272, %v6681, 0
      %v6708 = vsel %vm272, %v6682, 0
      %v6711 = vsel %vm272, %v6683, 0
      %v6714 = vsel %vm272, %v6684, 0
      %v6717 = vsel %vm272, %v6685, 0
      %v6720 = vsel %vm272, %v6686, 0
      %v6723 = vsel %vm272, %v6687, 0
      %v6726 = vsel %vm272, %v6688, 0
      %v6729 = vsel %vm272, %v6689, 0
      %v6732 = vsel %vm272, %v6690, 0
      %v6735 = vsel %vm272, %v6691, 0
      %v6738 = vsel %vm272, %v6692, 0
      %v6741 = vsel %vm272, %v6693, 0
      %v6744 = vand.u32 %v6694, %v324
      %6746 = vmatprep.subr.bf16.mxu0 0
      %6747 = vmatpush1.bf16.msra.mxu0 %v6744
      %6748 = vmatprep.subr.bf16.mxu0 0
      %6749 = vmatpush1.bf16.msra.mxu0 0
      %6750 = vmatprep.subr.bf16.mxu0 0
      %6751 = vmatpush1.bf16.msra.mxu0 0
      %6752 = vmatprep.subr.bf16.mxu0 0
      %6753 = vmatpush1.bf16.msra.mxu0 0
      %6754 = vmatprep.subr.bf16.mxu0 0
      %6755 = vmatpush1.bf16.msra.mxu0 0
      %6756 = vmatprep.subr.bf16.mxu0 0
      %6757 = vmatpush1.bf16.msra.mxu0 0
      %6758 = vmatprep.subr.bf16.mxu0 0
      %6759 = vmatpush1.bf16.msra.mxu0 0
      %6760 = vmatprep.subr.bf16.mxu0 0
      %6761 = vmatpush1.bf16.msra.mxu0 0
      %6762 = vmatprep.subr.bf16.mxu0 0
      %6763 = vmatpush1.bf16.msra.mxu0 0
      %6764 = vmatprep.subr.bf16.mxu0 0
      %6765 = vmatpush1.bf16.msra.mxu0 0
      %6766 = vmatprep.subr.bf16.mxu0 0
      %6767 = vmatpush1.bf16.msra.mxu0 0
      %6768 = vmatprep.subr.bf16.mxu0 0
      %6769 = vmatpush1.bf16.msra.mxu0 0
      %6770 = vmatprep.subr.bf16.mxu0 0
      %6771 = vmatpush1.bf16.msra.mxu0 0
      %6772 = vmatprep.subr.bf16.mxu0 0
      %6773 = vmatpush1.bf16.msra.mxu0 0
      %6774 = vmatprep.subr.bf16.mxu0 0
      %6775 = vmatpush1.bf16.msra.mxu0 0
      %6776 = vmatprep.subr.bf16.mxu0 0
      %6777 = vmatpush1.bf16.msra.mxu0 0
      %6778 = vmatprep.mubr.bf16.mxu0 0
      %6779 = vmatmul.mubr.bf16.gmra.mrb[0].mxu0 %v6696
      %v6780 = vpop.f32.mrb[0].mxu0
      %v6781 = vadd.f32 0.0, %v6780
      %v6782 = vpop.f32.mrb[0].mxu0
      %v6783 = vpop.f32.mrb[0].mxu0
      %v6784 = vadd.f32 0.0, %v6783
      %v6785 = vpop.f32.mrb[0].mxu0
      %6786 = vmatprep.mubr.bf16.mxu0 0
      %6787 = vmatmul.mubr.bf16.gmra.mrb[0].mxu0 %v6699
      %v6788 = vpop.f32.mrb[0].mxu0
      %v6789 = vadd.f32 0.0, %v6788
      %v6790 = vpop.f32.mrb[0].mxu0
      %v6791 = vpop.f32.mrb[0].mxu0
      %v6792 = vadd.f32 0.0, %v6791
      %v6793 = vpop.f32.mrb[0].mxu0
      %6794 = vmatprep.mubr.bf16.mxu0 0
      %6795 = vmatmul.mubr.bf16.gmra.mrb[0].mxu0 %v6702
      %v6796 = vpop.f32.mrb[0].mxu0
      %v6797 = vadd.f32 0.0, %v6796
      %v6798 = vpop.f32.mrb[0].mxu0
      %v6799 = vpop.f32.mrb[0].mxu0
      %v6800 = vadd.f32 0.0, %v6799
      %v6801 = vpop.f32.mrb[0].mxu0
      %6802 = vmatprep.mubr.bf16.mxu0 0
      %6803 = vmatmul.mubr.bf16.gmra.mrb[0].mxu0 %v6705
      %v6804 = vpop.f32.mrb[0].mxu0
      %v6805 = vadd.f32 0.0, %v6804
      %v6806 = vpop.f32.mrb[0].mxu0
      %v6807 = vpop.f32.mrb[0].mxu0
      %v6808 = vadd.f32 0.0, %v6807
      %v6809 = vpop.f32.mrb[0].mxu0
      %6810 = vmatprep.mubr.bf16.mxu0 0
      %6811 = vmatmul.mubr.bf16.gmra.mrb[0].mxu0 %v6708
      %v6812 = vpop.f32.mrb[0].mxu0
      %v6813 = vadd.f32 0.0, %v6812
      %v6814 = vpop.f32.mrb[0].mxu0
      %v6815 = vpop.f32.mrb[0].mxu0
      %v6816 = vadd.f32 0.0, %v6815
      %v6817 = vpop.f32.mrb[0].mxu0
      %6818 = vmatprep.mubr.bf16.mxu0 0
      %6819 = vmatmul.mubr.bf16.gmra.mrb[0].mxu0 %v6711
      %v6820 = vpop.f32.mrb[0].mxu0
      %v6821 = vadd.f32 0.0, %v6820
      %v6822 = vpop.f32.mrb[0].mxu0
      %v6823 = vpop.f32.mrb[0].mxu0
      %v6824 = vadd.f32 0.0, %v6823
      %v6825 = vpop.f32.mrb[0].mxu0
      %6826 = vmatprep.mubr.bf16.mxu0 0
      %6827 = vmatmul.mubr.bf16.gmra.mrb[0].mxu0 %v6714
      %v6828 = vpop.f32.mrb[0].mxu0
      %v6829 = vadd.f32 0.0, %v6828
      %v6830 = vpop.f32.mrb[0].mxu0
      %v6831 = vpop.f32.mrb[0].mxu0
      %v6832 = vadd.f32 0.0, %v6831
      %v6833 = vpop.f32.mrb[0].mxu0
      %6834 = vmatprep.mubr.bf16.mxu0 0
      %6835 = vmatmul.mubr.bf16.gmra.mrb[0].mxu0 %v6717
      %v6836 = vpop.f32.mrb[0].mxu0
      %v6837 = vadd.f32 0.0, %v6836
      %v6838 = vpop.f32.mrb[0].mxu0
      %v6839 = vpop.f32.mrb[0].mxu0
      %v6840 = vadd.f32 0.0, %v6839
      %v6841 = vpop.f32.mrb[0].mxu0
      %6842 = vmatprep.mubr.bf16.mxu0 0
      %6843 = vmatmul.mubr.bf16.gmra.mrb[0].mxu0 %v6720
      %v6844 = vpop.f32.mrb[0].mxu0
      %v6845 = vadd.f32 0.0, %v6844
      %v6846 = vpop.f32.mrb[0].mxu0
      %v6847 = vpop.f32.mrb[0].mxu0
      %v6848 = vadd.f32 0.0, %v6847
      %v6849 = vpop.f32.mrb[0].mxu0
      %6850 = vmatprep.mubr.bf16.mxu0 0
      %6851 = vmatmul.mubr.bf16.gmra.mrb[0].mxu0 %v6723
      %v6852 = vpop.f32.mrb[0].mxu0
      %v6853 = vadd.f32 0.0, %v6852
      %v6854 = vpop.f32.mrb[0].mxu0
      %v6855 = vpop.f32.mrb[0].mxu0
      %v6856 = vadd.f32 0.0, %v6855
      %v6857 = vpop.f32.mrb[0].mxu0
      %6858 = vmatprep.mubr.bf16.mxu0 0
      %6859 = vmatmul.mubr.bf16.gmra.mrb[0].mxu0 %v6726
      %v6860 = vpop.f32.mrb[0].mxu0
      %v6861 = vadd.f32 0.0, %v6860
      %v6862 = vpop.f32.mrb[0].mxu0
      %v6863 = vpop.f32.mrb[0].mxu0
      %v6864 = vadd.f32 0.0, %v6863
      %v6865 = vpop.f32.mrb[0].mxu0
      %6866 = vmatprep.mubr.bf16.mxu0 0
      %6867 = vmatmul.mubr.bf16.gmra.mrb[0].mxu0 %v6729
      %v6868 = vpop.f32.mrb[0].mxu0
      %v6869 = vadd.f32 0.0, %v6868
      %v6870 = vpop.f32.mrb[0].mxu0
      %v6871 = vpop.f32.mrb[0].mxu0
      %v6872 = vadd.f32 0.0, %v6871
      %v6873 = vpop.f32.mrb[0].mxu0
      %6874 = vmatprep.mubr.bf16.mxu0 0
      %6875 = vmatmul.mubr.bf16.gmra.mrb[0].mxu0 %v6732
      %v6876 = vpop.f32.mrb[0].mxu0
      %v6877 = vadd.f32 0.0, %v6876
      %v6878 = vpop.f32.mrb[0].mxu0
      %v6879 = vpop.f32.mrb[0].mxu0
      %v6880 = vadd.f32 0.0, %v6879
      %v6881 = vpop.f32.mrb[0].mxu0
      %6882 = vmatprep.mubr.bf16.mxu0 0
      %6883 = vmatmul.mubr.bf16.gmra.mrb[0].mxu0 %v6735
      %v6884 = vpop.f32.mrb[0].mxu0
      %v6885 = vadd.f32 0.0, %v6884
      %v6886 = vpop.f32.mrb[0].mxu0
      %v6887 = vpop.f32.mrb[0].mxu0
      %v6888 = vadd.f32 0.0, %v6887
      %v6889 = vpop.f32.mrb[0].mxu0
      %6890 = vmatprep.mubr.bf16.mxu0 0
      %6891 = vmatmul.mubr.bf16.gmra.mrb[0].mxu0 %v6738
      %v6892 = vpop.f32.mrb[0].mxu0
      %v6893 = vadd.f32 0.0, %v6892
      %v6894 = vpop.f32.mrb[0].mxu0
      %v6895 = vpop.f32.mrb[0].mxu0
      %v6896 = vadd.f32 0.0, %v6895
      %v6897 = vpop.f32.mrb[0].mxu0
      %6898 = vmatprep.mubr.bf16.mxu0 0
      %6899 = vmatmul.mubr.bf16.gmra.mrb[0].mxu0 %v6741
      %v6900 = vpop.f32.mrb[0].mxu0
      %v6901 = vadd.f32 0.0, %v6900
      %v6902 = vpop.f32.mrb[0].mxu0
      %v6903 = vpop.f32.mrb[0].mxu0
      %v6904 = vadd.f32 0.0, %v6903
      %v6905 = vpop.f32.mrb[0].mxu0
      %6906 = vdwg.mxu0
      %v6907 = vadd.f32 %v6614, %v6781
      %v6908 = vadd.f32 %v6615, %v6784
      %v6909 = vadd.f32 %v6616, %v6789
      %v6910 = vadd.f32 %v6617, %v6792
      %v6911 = vadd.f32 %v6618, %v6797
      %v6912 = vadd.f32 %v6619, %v6800
      %v6913 = vadd.f32 %v6620, %v6805
      %v6914 = vadd.f32 %v6621, %v6808
      %v6915 = vadd.f32 %v6622, %v6813
      %v6916 = vadd.f32 %v6623, %v6816
      %v6917 = vadd.f32 %v6624, %v6821
      %v6918 = vadd.f32 %v6625, %v6824
      %v6919 = vadd.f32 %v6626, %v6829
      %v6920 = vadd.f32 %v6627, %v6832
      %v6921 = vadd.f32 %v6628, %v6837
      %v6922 = vadd.f32 %v6629, %v6840
      %v6923 = vadd.f32 %v6630, %v6845
      %v6924 = vadd.f32 %v6631, %v6848
      %v6925 = vadd.f32 %v6632, %v6853
      %v6926 = vadd.f32 %v6633, %v6856
      %v6927 = vadd.f32 %v6634, %v6861
      %v6928 = vadd.f32 %v6635, %v6864
      %v6929 = vadd.f32 %v6636, %v6869
      %v6930 = vadd.f32 %v6637, %v6872
      %v6931 = vadd.f32 %v6638, %v6877
      %v6932 = vadd.f32 %v6639, %v6880
      %v6933 = vadd.f32 %v6640, %v6885
      %v6934 = vadd.f32 %v6641, %v6888
      %v6935 = vadd.f32 %v6642, %v6893
      %v6936 = vadd.f32 %v6643, %v6896
      %v6937 = vadd.f32 %v6644, %v6901
      %v6938 = vadd.f32 %v6645, %v6904
      %v6939 = vld [vmem:[%s6352 + $0x2] sm:$0xff]
      %v6940 = vld [vmem:[%s6352 + $0xa] sm:$0xff]
      %v6941 = vld [vmem:[%s6352 + $0x12] sm:$0xff]
      %v6942 = vld [vmem:[%s6352 + $0x1a] sm:$0xff]
      %v6943 = vld [vmem:[%s6352 + $0x2a] sm:$0xff]
      %v6944 = vld [vmem:[%s6352 + $0x32] sm:$0xff]
      %v6945 = vld [vmem:[%s6352 + $0x3a] sm:$0xff]
      %v6946 = vld [vmem:[%s6352 + $0x42] sm:$0xff]
      %v6947 = vld [vmem:[%s6352 + $0x52] sm:$0xff]
      %v6948 = vld [vmem:[%s6352 + $0x5a] sm:$0xff]
      %v6949 = vld [vmem:[%s6352 + $0x62] sm:$0xff]
      %v6950 = vld [vmem:[%s6352 + $0x6a] sm:$0xff]
      %v6951 = vld [vmem:[%s6352 + $0x7a] sm:$0xff]
      %v6952 = vld [vmem:[%s6352 + $0x82] sm:$0xff]
      %v6953 = vld [vmem:[%s6352 + $0x8a] sm:$0xff]
      %v6954 = vld [vmem:[%s6352 + $0x92] sm:$0xff]
      %v6955 = vld [vmem:[%s6352 + $0xa2] sm:$0xff]
      %v6956 = vld [vmem:[%s6352 + $0xaa] sm:$0xff]
      %v6957 = vld [vmem:[%s6352 + $0xb2] sm:$0xff]
      %v6958 = vld [vmem:[%s6352 + $0xba] sm:$0xff]
      %v6959 = vld [vmem:[%s6352 + $0xca] sm:$0xff]
      %v6960 = vld [vmem:[%s6352 + $0xd2] sm:$0xff]
      %v6961 = vld [vmem:[%s6352 + $0xda] sm:$0xff]
      %v6962 = vld [vmem:[%s6352 + $0xe2] sm:$0xff]
      %v6963 = vld [vmem:[%s6352 + $0xf2] sm:$0xff]
      %v6964 = vld [vmem:[%s6352 + $0xfa] sm:$0xff]
      %v6965 = vld [vmem:[%s6352 + $0x102] sm:$0xff]
      %v6966 = vld [vmem:[%s6352 + $0x10a] sm:$0xff]
      %v6967 = vld [vmem:[%s6352 + $0x11a] sm:$0xff]
      %v6968 = vld [vmem:[%s6352 + $0x122] sm:$0xff]
      %v6969 = vld [vmem:[%s6352 + $0x12a] sm:$0xff]
      %v6970 = vld [vmem:[%s6352 + $0x132] sm:$0xff]
      %v6971 = vpack.c.bf16 %v6940, %v6939
      %v6972 = vpack.c.bf16 %v6942, %v6941
      %v6973 = vpack.c.bf16 %v6944, %v6943
      %v6974 = vpack.c.bf16 %v6946, %v6945
      %v6975 = vpack.c.bf16 %v6948, %v6947
      %v6976 = vpack.c.bf16 %v6950, %v6949
      %v6977 = vpack.c.bf16 %v6952, %v6951
      %v6978 = vpack.c.bf16 %v6954, %v6953
      %v6979 = vpack.c.bf16 %v6956, %v6955
      %v6980 = vpack.c.bf16 %v6958, %v6957
      %v6981 = vpack.c.bf16 %v6960, %v6959
      %v6982 = vpack.c.bf16 %v6962, %v6961
      %v6983 = vpack.c.bf16 %v6964, %v6963
      %v6984 = vpack.c.bf16 %v6966, %v6965
      %v6985 = vpack.c.bf16 %v6968, %v6967
      %v6986 = vpack.c.bf16 %v6970, %v6969
      %v6987 = vld [vmem:[%s1632] sm:$0x3]
      %v6989 = vsel %vm272, %v6971, 0
      %v6992 = vsel %vm272, %v6972, 0
      %v6995 = vsel %vm272, %v6973, 0
      %v6998 = vsel %vm272, %v6974, 0
      %v7001 = vsel %vm272, %v6975, 0
      %v7004 = vsel %vm272, %v6976, 0
      %v7007 = vsel %vm272, %v6977, 0
      %v7010 = vsel %vm272, %v6978, 0
      %v7013 = vsel %vm272, %v6979, 0
      %v7016 = vsel %vm272, %v6980, 0
      %v7019 = vsel %vm272, %v6981, 0
      %v7022 = vsel %vm272, %v6982, 0
      %v7025 = vsel %vm272, %v6983, 0
      %v7028 = vsel %vm272, %v6984, 0
      %v7031 = vsel %vm272, %v6985, 0
      %v7034 = vsel %vm272, %v6986, 0
      %v7037 = vand.u32 %v6987, %v324
      %7039 = vmatprep.subr.bf16.mxu0 0
      %7040 = vmatpush1.bf16.msra.mxu0 %v7037
      %7041 = vmatprep.subr.bf16.mxu0 0
      %7042 = vmatpush1.bf16.msra.mxu0 0
      %7043 = vmatprep.subr.bf16.mxu0 0
      %7044 = vmatpush1.bf16.msra.mxu0 0
      %7045 = vmatprep.subr.bf16.mxu0 0
      %7046 = vmatpush1.bf16.msra.mxu0 0
      %7047 = vmatprep.subr.bf16.mxu0 0
      %7048 = vmatpush1.bf16.msra.mxu0 0
      %7049 = vmatprep.subr.bf16.mxu0 0
      %7050 = vmatpush1.bf16.msra.mxu0 0
      %7051 = vmatprep.subr.bf16.mxu0 0
      %7052 = vmatpush1.bf16.msra.mxu0 0
      %7053 = vmatprep.subr.bf16.mxu0 0
      %7054 = vmatpush1.bf16.msra.mxu0 0
      %7055 = vmatprep.subr.bf16.mxu0 0
      %7056 = vmatpush1.bf16.msra.mxu0 0
      %7057 = vmatprep.subr.bf16.mxu0 0
      %7058 = vmatpush1.bf16.msra.mxu0 0
      %7059 = vmatprep.subr.bf16.mxu0 0
      %7060 = vmatpush1.bf16.msra.mxu0 0
      %7061 = vmatprep.subr.bf16.mxu0 0
      %7062 = vmatpush1.bf16.msra.mxu0 0
      %7063 = vmatprep.subr.bf16.mxu0 0
      %7064 = vmatpush1.bf16.msra.mxu0 0
      %7065 = vmatprep.subr.bf16.mxu0 0
      %7066 = vmatpush1.bf16.msra.mxu0 0
      %7067 = vmatprep.subr.bf16.mxu0 0
      %7068 = vmatpush1.bf16.msra.mxu0 0
      %7069 = vmatprep.subr.bf16.mxu0 0
      %7070 = vmatpush1.bf16.msra.mxu0 0
      %7071 = vmatprep.mubr.bf16.mxu0 0
      %7072 = vmatmul.mubr.bf16.gmra.mrb[0].mxu0 %v6989
      %v7073 = vpop.f32.mrb[0].mxu0
      %v7074 = vadd.f32 0.0, %v7073
      %v7075 = vpop.f32.mrb[0].mxu0
      %v7076 = vpop.f32.mrb[0].mxu0
      %v7077 = vadd.f32 0.0, %v7076
      %v7078 = vpop.f32.mrb[0].mxu0
      %7079 = vmatprep.mubr.bf16.mxu0 0
      %7080 = vmatmul.mubr.bf16.gmra.mrb[0].mxu0 %v6992
      %v7081 = vpop.f32.mrb[0].mxu0
      %v7082 = vadd.f32 0.0, %v7081
      %v7083 = vpop.f32.mrb[0].mxu0
      %v7084 = vpop.f32.mrb[0].mxu0
      %v7085 = vadd.f32 0.0, %v7084
      %v7086 = vpop.f32.mrb[0].mxu0
      %7087 = vmatprep.mubr.bf16.mxu0 0
      %7088 = vmatmul.mubr.bf16.gmra.mrb[0].mxu0 %v6995
      %v7089 = vpop.f32.mrb[0].mxu0
      %v7090 = vadd.f32 0.0, %v7089
      %v7091 = vpop.f32.mrb[0].mxu0
      %v7092 = vpop.f32.mrb[0].mxu0
      %v7093 = vadd.f32 0.0, %v7092
      %v7094 = vpop.f32.mrb[0].mxu0
      %7095 = vmatprep.mubr.bf16.mxu0 0
      %7096 = vmatmul.mubr.bf16.gmra.mrb[0].mxu0 %v6998
      %v7097 = vpop.f32.mrb[0].mxu0
      %v7098 = vadd.f32 0.0, %v7097
      %v7099 = vpop.f32.mrb[0].mxu0
      %v7100 = vpop.f32.mrb[0].mxu0
      %v7101 = vadd.f32 0.0, %v7100
      %v7102 = vpop.f32.mrb[0].mxu0
      %7103 = vmatprep.mubr.bf16.mxu0 0
      %7104 = vmatmul.mubr.bf16.gmra.mrb[0].mxu0 %v7001
      %v7105 = vpop.f32.mrb[0].mxu0
      %v7106 = vadd.f32 0.0, %v7105
      %v7107 = vpop.f32.mrb[0].mxu0
      %v7108 = vpop.f32.mrb[0].mxu0
      %v7109 = vadd.f32 0.0, %v7108
      %v7110 = vpop.f32.mrb[0].mxu0
      %7111 = vmatprep.mubr.bf16.mxu0 0
      %7112 = vmatmul.mubr.bf16.gmra.mrb[0].mxu0 %v7004
      %v7113 = vpop.f32.mrb[0].mxu0
      %v7114 = vadd.f32 0.0, %v7113
      %v7115 = vpop.f32.mrb[0].mxu0
      %v7116 = vpop.f32.mrb[0].mxu0
      %v7117 = vadd.f32 0.0, %v7116
      %v7118 = vpop.f32.mrb[0].mxu0
      %7119 = vmatprep.mubr.bf16.mxu0 0
      %7120 = vmatmul.mubr.bf16.gmra.mrb[0].mxu0 %v7007
      %v7121 = vpop.f32.mrb[0].mxu0
      %v7122 = vadd.f32 0.0, %v7121
      %v7123 = vpop.f32.mrb[0].mxu0
      %v7124 = vpop.f32.mrb[0].mxu0
      %v7125 = vadd.f32 0.0, %v7124
      %v7126 = vpop.f32.mrb[0].mxu0
      %7127 = vmatprep.mubr.bf16.mxu0 0
      %7128 = vmatmul.mubr.bf16.gmra.mrb[0].mxu0 %v7010
      %v7129 = vpop.f32.mrb[0].mxu0
      %v7130 = vadd.f32 0.0, %v7129
      %v7131 = vpop.f32.mrb[0].mxu0
      %v7132 = vpop.f32.mrb[0].mxu0
      %v7133 = vadd.f32 0.0, %v7132
      %v7134 = vpop.f32.mrb[0].mxu0
      %7135 = vmatprep.mubr.bf16.mxu0 0
      %7136 = vmatmul.mubr.bf16.gmra.mrb[0].mxu0 %v7013
      %v7137 = vpop.f32.mrb[0].mxu0
      %v7138 = vadd.f32 0.0, %v7137
      %v7139 = vpop.f32.mrb[0].mxu0
      %v7140 = vpop.f32.mrb[0].mxu0
      %v7141 = vadd.f32 0.0, %v7140
      %v7142 = vpop.f32.mrb[0].mxu0
      %7143 = vmatprep.mubr.bf16.mxu0 0
      %7144 = vmatmul.mubr.bf16.gmra.mrb[0].mxu0 %v7016
      %v7145 = vpop.f32.mrb[0].mxu0
      %v7146 = vadd.f32 0.0, %v7145
      %v7147 = vpop.f32.mrb[0].mxu0
      %v7148 = vpop.f32.mrb[0].mxu0
      %v7149 = vadd.f32 0.0, %v7148
      %v7150 = vpop.f32.mrb[0].mxu0
      %7151 = vmatprep.mubr.bf16.mxu0 0
      %7152 = vmatmul.mubr.bf16.gmra.mrb[0].mxu0 %v7019
      %v7153 = vpop.f32.mrb[0].mxu0
      %v7154 = vadd.f32 0.0, %v7153
      %v7155 = vpop.f32.mrb[0].mxu0
      %v7156 = vpop.f32.mrb[0].mxu0
      %v7157 = vadd.f32 0.0, %v7156
      %v7158 = vpop.f32.mrb[0].mxu0
      %7159 = vmatprep.mubr.bf16.mxu0 0
      %7160 = vmatmul.mubr.bf16.gmra.mrb[0].mxu0 %v7022
      %v7161 = vpop.f32.mrb[0].mxu0
      %v7162 = vadd.f32 0.0, %v7161
      %v7163 = vpop.f32.mrb[0].mxu0
      %v7164 = vpop.f32.mrb[0].mxu0
      %v7165 = vadd.f32 0.0, %v7164
      %v7166 = vpop.f32.mrb[0].mxu0
      %7167 = vmatprep.mubr.bf16.mxu0 0
      %7168 = vmatmul.mubr.bf16.gmra.mrb[0].mxu0 %v7025
      %v7169 = vpop.f32.mrb[0].mxu0
      %v7170 = vadd.f32 0.0, %v7169
      %v7171 = vpop.f32.mrb[0].mxu0
      %v7172 = vpop.f32.mrb[0].mxu0
      %v7173 = vadd.f32 0.0, %v7172
      %v7174 = vpop.f32.mrb[0].mxu0
      %7175 = vmatprep.mubr.bf16.mxu0 0
      %7176 = vmatmul.mubr.bf16.gmra.mrb[0].mxu0 %v7028
      %v7177 = vpop.f32.mrb[0].mxu0
      %v7178 = vadd.f32 0.0, %v7177
      %v7179 = vpop.f32.mrb[0].mxu0
      %v7180 = vpop.f32.mrb[0].mxu0
      %v7181 = vadd.f32 0.0, %v7180
      %v7182 = vpop.f32.mrb[0].mxu0
      %7183 = vmatprep.mubr.bf16.mxu0 0
      %7184 = vmatmul.mubr.bf16.gmra.mrb[0].mxu0 %v7031
      %v7185 = vpop.f32.mrb[0].mxu0
      %v7186 = vadd.f32 0.0, %v7185
      %v7187 = vpop.f32.mrb[0].mxu0
      %v7188 = vpop.f32.mrb[0].mxu0
      %v7189 = vadd.f32 0.0, %v7188
      %v7190 = vpop.f32.mrb[0].mxu0
      %7191 = vmatprep.mubr.bf16.mxu0 0
      %7192 = vmatmul.mubr.bf16.gmra.mrb[0].mxu0 %v7034
      %v7193 = vpop.f32.mrb[0].mxu0
      %v7194 = vadd.f32 0.0, %v7193
      %v7195 = vpop.f32.mrb[0].mxu0
      %v7196 = vpop.f32.mrb[0].mxu0
      %v7197 = vadd.f32 0.0, %v7196
      %v7198 = vpop.f32.mrb[0].mxu0
      %7199 = vdwg.mxu0
      %v7200 = vadd.f32 %v6907, %v7074
      %v7201 = vadd.f32 %v6908, %v7077
      %v7202 = vadd.f32 %v6909, %v7082
      %v7203 = vadd.f32 %v6910, %v7085
      %v7204 = vadd.f32 %v6911, %v7090
      %v7205 = vadd.f32 %v6912, %v7093
      %v7206 = vadd.f32 %v6913, %v7098
      %v7207 = vadd.f32 %v6914, %v7101
      %v7208 = vadd.f32 %v6915, %v7106
      %v7209 = vadd.f32 %v6916, %v7109
      %v7210 = vadd.f32 %v6917, %v7114
      %v7211 = vadd.f32 %v6918, %v7117
      %v7212 = vadd.f32 %v6919, %v7122
      %v7213 = vadd.f32 %v6920, %v7125
      %v7214 = vadd.f32 %v6921, %v7130
      %v7215 = vadd.f32 %v6922, %v7133
      %v7216 = vadd.f32 %v6923, %v7138
      %v7217 = vadd.f32 %v6924, %v7141
      %v7218 = vadd.f32 %v6925, %v7146
      %v7219 = vadd.f32 %v6926, %v7149
      %v7220 = vadd.f32 %v6927, %v7154
      %v7221 = vadd.f32 %v6928, %v7157
      %v7222 = vadd.f32 %v6929, %v7162
      %v7223 = vadd.f32 %v6930, %v7165
      %v7224 = vadd.f32 %v6931, %v7170
      %v7225 = vadd.f32 %v6932, %v7173
      %v7226 = vadd.f32 %v6933, %v7178
      %v7227 = vadd.f32 %v6934, %v7181
      %v7228 = vadd.f32 %v6935, %v7186
      %v7229 = vadd.f32 %v6936, %v7189
      %v7230 = vadd.f32 %v6937, %v7194
      %v7231 = vadd.f32 %v6938, %v7197
      %s7232 = scalar_lea.vmem %s165, 720
      %v7233 = vld [vmem:[%s7232] sm:$0xff]
      %v7234 = vld [vmem:[%s7232 + $0x8] sm:$0xff]
      %v7235 = vld [vmem:[%s7232 + $0x10] sm:$0xff]
      %v7236 = vld [vmem:[%s7232 + $0x18] sm:$0xff]
      %v7237 = vld [vmem:[%s7232 + $0x28] sm:$0xff]
      %v7238 = vld [vmem:[%s7232 + $0x30] sm:$0xff]
      %v7239 = vld [vmem:[%s7232 + $0x38] sm:$0xff]
      %v7240 = vld [vmem:[%s7232 + $0x40] sm:$0xff]
      %v7241 = vld [vmem:[%s7232 + $0x50] sm:$0xff]
      %v7242 = vld [vmem:[%s7232 + $0x58] sm:$0xff]
      %v7243 = vld [vmem:[%s7232 + $0x60] sm:$0xff]
      %v7244 = vld [vmem:[%s7232 + $0x68] sm:$0xff]
      %v7245 = vld [vmem:[%s7232 + $0x78] sm:$0xff]
      %v7246 = vld [vmem:[%s7232 + $0x80] sm:$0xff]
      %v7247 = vld [vmem:[%s7232 + $0x88] sm:$0xff]
      %v7248 = vld [vmem:[%s7232 + $0x90] sm:$0xff]
      %v7249 = vld [vmem:[%s7232 + $0xa0] sm:$0xff]
      %v7250 = vld [vmem:[%s7232 + $0xa8] sm:$0xff]
      %v7251 = vld [vmem:[%s7232 + $0xb0] sm:$0xff]
      %v7252 = vld [vmem:[%s7232 + $0xb8] sm:$0xff]
      %v7253 = vld [vmem:[%s7232 + $0xc8] sm:$0xff]
      %v7254 = vld [vmem:[%s7232 + $0xd0] sm:$0xff]
      %v7255 = vld [vmem:[%s7232 + $0xd8] sm:$0xff]
      %v7256 = vld [vmem:[%s7232 + $0xe0] sm:$0xff]
      %v7257 = vld [vmem:[%s7232 + $0xf0] sm:$0xff]
      %v7258 = vld [vmem:[%s7232 + $0xf8] sm:$0xff]
      %v7259 = vld [vmem:[%s7232 + $0x100] sm:$0xff]
      %v7260 = vld [vmem:[%s7232 + $0x108] sm:$0xff]
      %v7261 = vld [vmem:[%s7232 + $0x118] sm:$0xff]
      %v7262 = vld [vmem:[%s7232 + $0x120] sm:$0xff]
      %v7263 = vld [vmem:[%s7232 + $0x128] sm:$0xff]
      %v7264 = vld [vmem:[%s7232 + $0x130] sm:$0xff]
      %v7265 = vpack.c.bf16 %v7234, %v7233
      %v7266 = vpack.c.bf16 %v7236, %v7235
      %v7267 = vpack.c.bf16 %v7238, %v7237
      %v7268 = vpack.c.bf16 %v7240, %v7239
      %v7269 = vpack.c.bf16 %v7242, %v7241
      %v7270 = vpack.c.bf16 %v7244, %v7243
      %v7271 = vpack.c.bf16 %v7246, %v7245
      %v7272 = vpack.c.bf16 %v7248, %v7247
      %v7273 = vpack.c.bf16 %v7250, %v7249
      %v7274 = vpack.c.bf16 %v7252, %v7251
      %v7275 = vpack.c.bf16 %v7254, %v7253
      %v7276 = vpack.c.bf16 %v7256, %v7255
      %v7277 = vpack.c.bf16 %v7258, %v7257
      %v7278 = vpack.c.bf16 %v7260, %v7259
      %v7279 = vpack.c.bf16 %v7262, %v7261
      %v7280 = vpack.c.bf16 %v7264, %v7263
      %v7281 = vld [vmem:[%s1927] sm:$0x3]
      %v7283 = vsel %vm272, %v7265, 0
      %v7286 = vsel %vm272, %v7266, 0
      %v7289 = vsel %vm272, %v7267, 0
      %v7292 = vsel %vm272, %v7268, 0
      %v7295 = vsel %vm272, %v7269, 0
      %v7298 = vsel %vm272, %v7270, 0
      %v7301 = vsel %vm272, %v7271, 0
      %v7304 = vsel %vm272, %v7272, 0
      %v7307 = vsel %vm272, %v7273, 0
      %v7310 = vsel %vm272, %v7274, 0
      %v7313 = vsel %vm272, %v7275, 0
      %v7316 = vsel %vm272, %v7276, 0
      %v7319 = vsel %vm272, %v7277, 0
      %v7322 = vsel %vm272, %v7278, 0
      %v7325 = vsel %vm272, %v7279, 0
      %v7328 = vsel %vm272, %v7280, 0
      %v7331 = vand.u32 %v7281, %v324
      %7333 = vmatprep.subr.bf16.mxu0 0
      %7334 = vmatpush1.bf16.msra.mxu0 %v7331
      %7335 = vmatprep.subr.bf16.mxu0 0
      %7336 = vmatpush1.bf16.msra.mxu0 0
      %7337 = vmatprep.subr.bf16.mxu0 0
      %7338 = vmatpush1.bf16.msra.mxu0 0
      %7339 = vmatprep.subr.bf16.mxu0 0
      %7340 = vmatpush1.bf16.msra.mxu0 0
      %7341 = vmatprep.subr.bf16.mxu0 0
      %7342 = vmatpush1.bf16.msra.mxu0 0
      %7343 = vmatprep.subr.bf16.mxu0 0
      %7344 = vmatpush1.bf16.msra.mxu0 0
      %7345 = vmatprep.subr.bf16.mxu0 0
      %7346 = vmatpush1.bf16.msra.mxu0 0
      %7347 = vmatprep.subr.bf16.mxu0 0
      %7348 = vmatpush1.bf16.msra.mxu0 0
      %7349 = vmatprep.subr.bf16.mxu0 0
      %7350 = vmatpush1.bf16.msra.mxu0 0
      %7351 = vmatprep.subr.bf16.mxu0 0
      %7352 = vmatpush1.bf16.msra.mxu0 0
      %7353 = vmatprep.subr.bf16.mxu0 0
      %7354 = vmatpush1.bf16.msra.mxu0 0
      %7355 = vmatprep.subr.bf16.mxu0 0
      %7356 = vmatpush1.bf16.msra.mxu0 0
      %7357 = vmatprep.subr.bf16.mxu0 0
      %7358 = vmatpush1.bf16.msra.mxu0 0
      %7359 = vmatprep.subr.bf16.mxu0 0
      %7360 = vmatpush1.bf16.msra.mxu0 0
      %7361 = vmatprep.subr.bf16.mxu0 0
      %7362 = vmatpush1.bf16.msra.mxu0 0
      %7363 = vmatprep.subr.bf16.mxu0 0
      %7364 = vmatpush1.bf16.msra.mxu0 0
      %7365 = vmatprep.mubr.bf16.mxu0 0
      %7366 = vmatmul.mubr.bf16.gmra.mrb[0].mxu0 %v7283
      %v7367 = vpop.f32.mrb[0].mxu0
      %v7368 = vadd.f32 0.0, %v7367
      %v7369 = vpop.f32.mrb[0].mxu0
      %v7370 = vpop.f32.mrb[0].mxu0
      %v7371 = vadd.f32 0.0, %v7370
      %v7372 = vpop.f32.mrb[0].mxu0
      %7373 = vmatprep.mubr.bf16.mxu0 0
      %7374 = vmatmul.mubr.bf16.gmra.mrb[0].mxu0 %v7286
      %v7375 = vpop.f32.mrb[0].mxu0
      %v7376 = vadd.f32 0.0, %v7375
      %v7377 = vpop.f32.mrb[0].mxu0
      %v7378 = vpop.f32.mrb[0].mxu0
      %v7379 = vadd.f32 0.0, %v7378
      %v7380 = vpop.f32.mrb[0].mxu0
      %7381 = vmatprep.mubr.bf16.mxu0 0
      %7382 = vmatmul.mubr.bf16.gmra.mrb[0].mxu0 %v7289
      %v7383 = vpop.f32.mrb[0].mxu0
      %v7384 = vadd.f32 0.0, %v7383
      %v7385 = vpop.f32.mrb[0].mxu0
      %v7386 = vpop.f32.mrb[0].mxu0
      %v7387 = vadd.f32 0.0, %v7386
      %v7388 = vpop.f32.mrb[0].mxu0
      %7389 = vmatprep.mubr.bf16.mxu0 0
      %7390 = vmatmul.mubr.bf16.gmra.mrb[0].mxu0 %v7292
      %v7391 = vpop.f32.mrb[0].mxu0
      %v7392 = vadd.f32 0.0, %v7391
      %v7393 = vpop.f32.mrb[0].mxu0
      %v7394 = vpop.f32.mrb[0].mxu0
      %v7395 = vadd.f32 0.0, %v7394
      %v7396 = vpop.f32.mrb[0].mxu0
      %7397 = vmatprep.mubr.bf16.mxu0 0
      %7398 = vmatmul.mubr.bf16.gmra.mrb[0].mxu0 %v7295
      %v7399 = vpop.f32.mrb[0].mxu0
      %v7400 = vadd.f32 0.0, %v7399
      %v7401 = vpop.f32.mrb[0].mxu0
      %v7402 = vpop.f32.mrb[0].mxu0
      %v7403 = vadd.f32 0.0, %v7402
      %v7404 = vpop.f32.mrb[0].mxu0
      %7405 = vmatprep.mubr.bf16.mxu0 0
      %7406 = vmatmul.mubr.bf16.gmra.mrb[0].mxu0 %v7298
      %v7407 = vpop.f32.mrb[0].mxu0
      %v7408 = vadd.f32 0.0, %v7407
      %v7409 = vpop.f32.mrb[0].mxu0
      %v7410 = vpop.f32.mrb[0].mxu0
      %v7411 = vadd.f32 0.0, %v7410
      %v7412 = vpop.f32.mrb[0].mxu0
      %7413 = vmatprep.mubr.bf16.mxu0 0
      %7414 = vmatmul.mubr.bf16.gmra.mrb[0].mxu0 %v7301
      %v7415 = vpop.f32.mrb[0].mxu0
      %v7416 = vadd.f32 0.0, %v7415
      %v7417 = vpop.f32.mrb[0].mxu0
      %v7418 = vpop.f32.mrb[0].mxu0
      %v7419 = vadd.f32 0.0, %v7418
      %v7420 = vpop.f32.mrb[0].mxu0
      %7421 = vmatprep.mubr.bf16.mxu0 0
      %7422 = vmatmul.mubr.bf16.gmra.mrb[0].mxu0 %v7304
      %v7423 = vpop.f32.mrb[0].mxu0
      %v7424 = vadd.f32 0.0, %v7423
      %v7425 = vpop.f32.mrb[0].mxu0
      %v7426 = vpop.f32.mrb[0].mxu0
      %v7427 = vadd.f32 0.0, %v7426
      %v7428 = vpop.f32.mrb[0].mxu0
      %7429 = vmatprep.mubr.bf16.mxu0 0
      %7430 = vmatmul.mubr.bf16.gmra.mrb[0].mxu0 %v7307
      %v7431 = vpop.f32.mrb[0].mxu0
      %v7432 = vadd.f32 0.0, %v7431
      %v7433 = vpop.f32.mrb[0].mxu0
      %v7434 = vpop.f32.mrb[0].mxu0
      %v7435 = vadd.f32 0.0, %v7434
      %v7436 = vpop.f32.mrb[0].mxu0
      %7437 = vmatprep.mubr.bf16.mxu0 0
      %7438 = vmatmul.mubr.bf16.gmra.mrb[0].mxu0 %v7310
      %v7439 = vpop.f32.mrb[0].mxu0
      %v7440 = vadd.f32 0.0, %v7439
      %v7441 = vpop.f32.mrb[0].mxu0
      %v7442 = vpop.f32.mrb[0].mxu0
      %v7443 = vadd.f32 0.0, %v7442
      %v7444 = vpop.f32.mrb[0].mxu0
      %7445 = vmatprep.mubr.bf16.mxu0 0
      %7446 = vmatmul.mubr.bf16.gmra.mrb[0].mxu0 %v7313
      %v7447 = vpop.f32.mrb[0].mxu0
      %v7448 = vadd.f32 0.0, %v7447
      %v7449 = vpop.f32.mrb[0].mxu0
      %v7450 = vpop.f32.mrb[0].mxu0
      %v7451 = vadd.f32 0.0, %v7450
      %v7452 = vpop.f32.mrb[0].mxu0
      %7453 = vmatprep.mubr.bf16.mxu0 0
      %7454 = vmatmul.mubr.bf16.gmra.mrb[0].mxu0 %v7316
      %v7455 = vpop.f32.mrb[0].mxu0
      %v7456 = vadd.f32 0.0, %v7455
      %v7457 = vpop.f32.mrb[0].mxu0
      %v7458 = vpop.f32.mrb[0].mxu0
      %v7459 = vadd.f32 0.0, %v7458
      %v7460 = vpop.f32.mrb[0].mxu0
      %7461 = vmatprep.mubr.bf16.mxu0 0
      %7462 = vmatmul.mubr.bf16.gmra.mrb[0].mxu0 %v7319
      %v7463 = vpop.f32.mrb[0].mxu0
      %v7464 = vadd.f32 0.0, %v7463
      %v7465 = vpop.f32.mrb[0].mxu0
      %v7466 = vpop.f32.mrb[0].mxu0
      %v7467 = vadd.f32 0.0, %v7466
      %v7468 = vpop.f32.mrb[0].mxu0
      %7469 = vmatprep.mubr.bf16.mxu0 0
      %7470 = vmatmul.mubr.bf16.gmra.mrb[0].mxu0 %v7322
      %v7471 = vpop.f32.mrb[0].mxu0
      %v7472 = vadd.f32 0.0, %v7471
      %v7473 = vpop.f32.mrb[0].mxu0
      %v7474 = vpop.f32.mrb[0].mxu0
      %v7475 = vadd.f32 0.0, %v7474
      %v7476 = vpop.f32.mrb[0].mxu0
      %7477 = vmatprep.mubr.bf16.mxu0 0
      %7478 = vmatmul.mubr.bf16.gmra.mrb[0].mxu0 %v7325
      %v7479 = vpop.f32.mrb[0].mxu0
      %v7480 = vadd.f32 0.0, %v7479
      %v7481 = vpop.f32.mrb[0].mxu0
      %v7482 = vpop.f32.mrb[0].mxu0
      %v7483 = vadd.f32 0.0, %v7482
      %v7484 = vpop.f32.mrb[0].mxu0
      %7485 = vmatprep.mubr.bf16.mxu0 0
      %7486 = vmatmul.mubr.bf16.gmra.mrb[0].mxu0 %v7328
      %v7487 = vpop.f32.mrb[0].mxu0
      %v7488 = vadd.f32 0.0, %v7487
      %v7489 = vpop.f32.mrb[0].mxu0
      %v7490 = vpop.f32.mrb[0].mxu0
      %v7491 = vadd.f32 0.0, %v7490
      %v7492 = vpop.f32.mrb[0].mxu0
      %7493 = vdwg.mxu0
      %v7494 = vadd.f32 %v7200, %v7368
      %v7495 = vadd.f32 %v7201, %v7371
      %v7496 = vadd.f32 %v7202, %v7376
      %v7497 = vadd.f32 %v7203, %v7379
      %v7498 = vadd.f32 %v7204, %v7384
      %v7499 = vadd.f32 %v7205, %v7387
      %v7500 = vadd.f32 %v7206, %v7392
      %v7501 = vadd.f32 %v7207, %v7395
      %v7502 = vadd.f32 %v7208, %v7400
      %v7503 = vadd.f32 %v7209, %v7403
      %v7504 = vadd.f32 %v7210, %v7408
      %v7505 = vadd.f32 %v7211, %v7411
      %v7506 = vadd.f32 %v7212, %v7416
      %v7507 = vadd.f32 %v7213, %v7419
      %v7508 = vadd.f32 %v7214, %v7424
      %v7509 = vadd.f32 %v7215, %v7427
      %v7510 = vadd.f32 %v7216, %v7432
      %v7511 = vadd.f32 %v7217, %v7435
      %v7512 = vadd.f32 %v7218, %v7440
      %v7513 = vadd.f32 %v7219, %v7443
      %v7514 = vadd.f32 %v7220, %v7448
      %v7515 = vadd.f32 %v7221, %v7451
      %v7516 = vadd.f32 %v7222, %v7456
      %v7517 = vadd.f32 %v7223, %v7459
      %v7518 = vadd.f32 %v7224, %v7464
      %v7519 = vadd.f32 %v7225, %v7467
      %v7520 = vadd.f32 %v7226, %v7472
      %v7521 = vadd.f32 %v7227, %v7475
      %v7522 = vadd.f32 %v7228, %v7480
      %v7523 = vadd.f32 %v7229, %v7483
      %v7524 = vadd.f32 %v7230, %v7488
      %v7525 = vadd.f32 %v7231, %v7491
      %v7526 = vld [vmem:[%s7232 + $0x1] sm:$0xff]
      %v7527 = vld [vmem:[%s7232 + $0x9] sm:$0xff]
      %v7528 = vld [vmem:[%s7232 + $0x11] sm:$0xff]
      %v7529 = vld [vmem:[%s7232 + $0x19] sm:$0xff]
      %v7530 = vld [vmem:[%s7232 + $0x29] sm:$0xff]
      %v7531 = vld [vmem:[%s7232 + $0x31] sm:$0xff]
      %v7532 = vld [vmem:[%s7232 + $0x39] sm:$0xff]
      %v7533 = vld [vmem:[%s7232 + $0x41] sm:$0xff]
      %v7534 = vld [vmem:[%s7232 + $0x51] sm:$0xff]
      %v7535 = vld [vmem:[%s7232 + $0x59] sm:$0xff]
      %v7536 = vld [vmem:[%s7232 + $0x61] sm:$0xff]
      %v7537 = vld [vmem:[%s7232 + $0x69] sm:$0xff]
      %v7538 = vld [vmem:[%s7232 + $0x79] sm:$0xff]
      %v7539 = vld [vmem:[%s7232 + $0x81] sm:$0xff]
      %v7540 = vld [vmem:[%s7232 + $0x89] sm:$0xff]
      %v7541 = vld [vmem:[%s7232 + $0x91] sm:$0xff]
      %v7542 = vld [vmem:[%s7232 + $0xa1] sm:$0xff]
      %v7543 = vld [vmem:[%s7232 + $0xa9] sm:$0xff]
      %v7544 = vld [vmem:[%s7232 + $0xb1] sm:$0xff]
      %v7545 = vld [vmem:[%s7232 + $0xb9] sm:$0xff]
      %v7546 = vld [vmem:[%s7232 + $0xc9] sm:$0xff]
      %v7547 = vld [vmem:[%s7232 + $0xd1] sm:$0xff]
      %v7548 = vld [vmem:[%s7232 + $0xd9] sm:$0xff]
      %v7549 = vld [vmem:[%s7232 + $0xe1] sm:$0xff]
      %v7550 = vld [vmem:[%s7232 + $0xf1] sm:$0xff]
      %v7551 = vld [vmem:[%s7232 + $0xf9] sm:$0xff]
      %v7552 = vld [vmem:[%s7232 + $0x101] sm:$0xff]
      %v7553 = vld [vmem:[%s7232 + $0x109] sm:$0xff]
      %v7554 = vld [vmem:[%s7232 + $0x119] sm:$0xff]
      %v7555 = vld [vmem:[%s7232 + $0x121] sm:$0xff]
      %v7556 = vld [vmem:[%s7232 + $0x129] sm:$0xff]
      %v7557 = vld [vmem:[%s7232 + $0x131] sm:$0xff]
      %v7558 = vpack.c.bf16 %v7527, %v7526
      %v7559 = vpack.c.bf16 %v7529, %v7528
      %v7560 = vpack.c.bf16 %v7531, %v7530
      %v7561 = vpack.c.bf16 %v7533, %v7532
      %v7562 = vpack.c.bf16 %v7535, %v7534
      %v7563 = vpack.c.bf16 %v7537, %v7536
      %v7564 = vpack.c.bf16 %v7539, %v7538
      %v7565 = vpack.c.bf16 %v7541, %v7540
      %v7566 = vpack.c.bf16 %v7543, %v7542
      %v7567 = vpack.c.bf16 %v7545, %v7544
      %v7568 = vpack.c.bf16 %v7547, %v7546
      %v7569 = vpack.c.bf16 %v7549, %v7548
      %v7570 = vpack.c.bf16 %v7551, %v7550
      %v7571 = vpack.c.bf16 %v7553, %v7552
      %v7572 = vpack.c.bf16 %v7555, %v7554
      %v7573 = vpack.c.bf16 %v7557, %v7556
      %v7574 = vld [vmem:[%s2221] sm:$0x3]
      %v7576 = vsel %vm272, %v7558, 0
      %v7579 = vsel %vm272, %v7559, 0
      %v7582 = vsel %vm272, %v7560, 0
      %v7585 = vsel %vm272, %v7561, 0
      %v7588 = vsel %vm272, %v7562, 0
      %v7591 = vsel %vm272, %v7563, 0
      %v7594 = vsel %vm272, %v7564, 0
      %v7597 = vsel %vm272, %v7565, 0
      %v7600 = vsel %vm272, %v7566, 0
      %v7603 = vsel %vm272, %v7567, 0
      %v7606 = vsel %vm272, %v7568, 0
      %v7609 = vsel %vm272, %v7569, 0
      %v7612 = vsel %vm272, %v7570, 0
      %v7615 = vsel %vm272, %v7571, 0
      %v7618 = vsel %vm272, %v7572, 0
      %v7621 = vsel %vm272, %v7573, 0
      %v7624 = vand.u32 %v7574, %v324
      %7626 = vmatprep.subr.bf16.mxu0 0
      %7627 = vmatpush1.bf16.msra.mxu0 %v7624
      %7628 = vmatprep.subr.bf16.mxu0 0
      %7629 = vmatpush1.bf16.msra.mxu0 0
      %7630 = vmatprep.subr.bf16.mxu0 0
      %7631 = vmatpush1.bf16.msra.mxu0 0
      %7632 = vmatprep.subr.bf16.mxu0 0
      %7633 = vmatpush1.bf16.msra.mxu0 0
      %7634 = vmatprep.subr.bf16.mxu0 0
      %7635 = vmatpush1.bf16.msra.mxu0 0
      %7636 = vmatprep.subr.bf16.mxu0 0
      %7637 = vmatpush1.bf16.msra.mxu0 0
      %7638 = vmatprep.subr.bf16.mxu0 0
      %7639 = vmatpush1.bf16.msra.mxu0 0
      %7640 = vmatprep.subr.bf16.mxu0 0
      %7641 = vmatpush1.bf16.msra.mxu0 0
      %7642 = vmatprep.subr.bf16.mxu0 0
      %7643 = vmatpush1.bf16.msra.mxu0 0
      %7644 = vmatprep.subr.bf16.mxu0 0
      %7645 = vmatpush1.bf16.msra.mxu0 0
      %7646 = vmatprep.subr.bf16.mxu0 0
      %7647 = vmatpush1.bf16.msra.mxu0 0
      %7648 = vmatprep.subr.bf16.mxu0 0
      %7649 = vmatpush1.bf16.msra.mxu0 0
      %7650 = vmatprep.subr.bf16.mxu0 0
      %7651 = vmatpush1.bf16.msra.mxu0 0
      %7652 = vmatprep.subr.bf16.mxu0 0
      %7653 = vmatpush1.bf16.msra.mxu0 0
      %7654 = vmatprep.subr.bf16.mxu0 0
      %7655 = vmatpush1.bf16.msra.mxu0 0
      %7656 = vmatprep.subr.bf16.mxu0 0
      %7657 = vmatpush1.bf16.msra.mxu0 0
      %7658 = vmatprep.mubr.bf16.mxu0 0
      %7659 = vmatmul.mubr.bf16.gmra.mrb[0].mxu0 %v7576
      %v7660 = vpop.f32.mrb[0].mxu0
      %v7661 = vadd.f32 0.0, %v7660
      %v7662 = vpop.f32.mrb[0].mxu0
      %v7663 = vpop.f32.mrb[0].mxu0
      %v7664 = vadd.f32 0.0, %v7663
      %v7665 = vpop.f32.mrb[0].mxu0
      %7666 = vmatprep.mubr.bf16.mxu0 0
      %7667 = vmatmul.mubr.bf16.gmra.mrb[0].mxu0 %v7579
      %v7668 = vpop.f32.mrb[0].mxu0
      %v7669 = vadd.f32 0.0, %v7668
      %v7670 = vpop.f32.mrb[0].mxu0
      %v7671 = vpop.f32.mrb[0].mxu0
      %v7672 = vadd.f32 0.0, %v7671
      %v7673 = vpop.f32.mrb[0].mxu0
      %7674 = vmatprep.mubr.bf16.mxu0 0
      %7675 = vmatmul.mubr.bf16.gmra.mrb[0].mxu0 %v7582
      %v7676 = vpop.f32.mrb[0].mxu0
      %v7677 = vadd.f32 0.0, %v7676
      %v7678 = vpop.f32.mrb[0].mxu0
      %v7679 = vpop.f32.mrb[0].mxu0
      %v7680 = vadd.f32 0.0, %v7679
      %v7681 = vpop.f32.mrb[0].mxu0
      %7682 = vmatprep.mubr.bf16.mxu0 0
      %7683 = vmatmul.mubr.bf16.gmra.mrb[0].mxu0 %v7585
      %v7684 = vpop.f32.mrb[0].mxu0
      %v7685 = vadd.f32 0.0, %v7684
      %v7686 = vpop.f32.mrb[0].mxu0
      %v7687 = vpop.f32.mrb[0].mxu0
      %v7688 = vadd.f32 0.0, %v7687
      %v7689 = vpop.f32.mrb[0].mxu0
      %7690 = vmatprep.mubr.bf16.mxu0 0
      %7691 = vmatmul.mubr.bf16.gmra.mrb[0].mxu0 %v7588
      %v7692 = vpop.f32.mrb[0].mxu0
      %v7693 = vadd.f32 0.0, %v7692
      %v7694 = vpop.f32.mrb[0].mxu0
      %v7695 = vpop.f32.mrb[0].mxu0
      %v7696 = vadd.f32 0.0, %v7695
      %v7697 = vpop.f32.mrb[0].mxu0
      %7698 = vmatprep.mubr.bf16.mxu0 0
      %7699 = vmatmul.mubr.bf16.gmra.mrb[0].mxu0 %v7591
      %v7700 = vpop.f32.mrb[0].mxu0
      %v7701 = vadd.f32 0.0, %v7700
      %v7702 = vpop.f32.mrb[0].mxu0
      %v7703 = vpop.f32.mrb[0].mxu0
      %v7704 = vadd.f32 0.0, %v7703
      %v7705 = vpop.f32.mrb[0].mxu0
      %7706 = vmatprep.mubr.bf16.mxu0 0
      %7707 = vmatmul.mubr.bf16.gmra.mrb[0].mxu0 %v7594
      %v7708 = vpop.f32.mrb[0].mxu0
      %v7709 = vadd.f32 0.0, %v7708
      %v7710 = vpop.f32.mrb[0].mxu0
      %v7711 = vpop.f32.mrb[0].mxu0
      %v7712 = vadd.f32 0.0, %v7711
      %v7713 = vpop.f32.mrb[0].mxu0
      %7714 = vmatprep.mubr.bf16.mxu0 0
      %7715 = vmatmul.mubr.bf16.gmra.mrb[0].mxu0 %v7597
      %v7716 = vpop.f32.mrb[0].mxu0
      %v7717 = vadd.f32 0.0, %v7716
      %v7718 = vpop.f32.mrb[0].mxu0
      %v7719 = vpop.f32.mrb[0].mxu0
      %v7720 = vadd.f32 0.0, %v7719
      %v7721 = vpop.f32.mrb[0].mxu0
      %7722 = vmatprep.mubr.bf16.mxu0 0
      %7723 = vmatmul.mubr.bf16.gmra.mrb[0].mxu0 %v7600
      %v7724 = vpop.f32.mrb[0].mxu0
      %v7725 = vadd.f32 0.0, %v7724
      %v7726 = vpop.f32.mrb[0].mxu0
      %v7727 = vpop.f32.mrb[0].mxu0
      %v7728 = vadd.f32 0.0, %v7727
      %v7729 = vpop.f32.mrb[0].mxu0
      %7730 = vmatprep.mubr.bf16.mxu0 0
      %7731 = vmatmul.mubr.bf16.gmra.mrb[0].mxu0 %v7603
      %v7732 = vpop.f32.mrb[0].mxu0
      %v7733 = vadd.f32 0.0, %v7732
      %v7734 = vpop.f32.mrb[0].mxu0
      %v7735 = vpop.f32.mrb[0].mxu0
      %v7736 = vadd.f32 0.0, %v7735
      %v7737 = vpop.f32.mrb[0].mxu0
      %7738 = vmatprep.mubr.bf16.mxu0 0
      %7739 = vmatmul.mubr.bf16.gmra.mrb[0].mxu0 %v7606
      %v7740 = vpop.f32.mrb[0].mxu0
      %v7741 = vadd.f32 0.0, %v7740
      %v7742 = vpop.f32.mrb[0].mxu0
      %v7743 = vpop.f32.mrb[0].mxu0
      %v7744 = vadd.f32 0.0, %v7743
      %v7745 = vpop.f32.mrb[0].mxu0
      %7746 = vmatprep.mubr.bf16.mxu0 0
      %7747 = vmatmul.mubr.bf16.gmra.mrb[0].mxu0 %v7609
      %v7748 = vpop.f32.mrb[0].mxu0
      %v7749 = vadd.f32 0.0, %v7748
      %v7750 = vpop.f32.mrb[0].mxu0
      %v7751 = vpop.f32.mrb[0].mxu0
      %v7752 = vadd.f32 0.0, %v7751
      %v7753 = vpop.f32.mrb[0].mxu0
      %7754 = vmatprep.mubr.bf16.mxu0 0
      %7755 = vmatmul.mubr.bf16.gmra.mrb[0].mxu0 %v7612
      %v7756 = vpop.f32.mrb[0].mxu0
      %v7757 = vadd.f32 0.0, %v7756
      %v7758 = vpop.f32.mrb[0].mxu0
      %v7759 = vpop.f32.mrb[0].mxu0
      %v7760 = vadd.f32 0.0, %v7759
      %v7761 = vpop.f32.mrb[0].mxu0
      %7762 = vmatprep.mubr.bf16.mxu0 0
      %7763 = vmatmul.mubr.bf16.gmra.mrb[0].mxu0 %v7615
      %v7764 = vpop.f32.mrb[0].mxu0
      %v7765 = vadd.f32 0.0, %v7764
      %v7766 = vpop.f32.mrb[0].mxu0
      %v7767 = vpop.f32.mrb[0].mxu0
      %v7768 = vadd.f32 0.0, %v7767
      %v7769 = vpop.f32.mrb[0].mxu0
      %7770 = vmatprep.mubr.bf16.mxu0 0
      %7771 = vmatmul.mubr.bf16.gmra.mrb[0].mxu0 %v7618
      %v7772 = vpop.f32.mrb[0].mxu0
      %v7773 = vadd.f32 0.0, %v7772
      %v7774 = vpop.f32.mrb[0].mxu0
      %v7775 = vpop.f32.mrb[0].mxu0
      %v7776 = vadd.f32 0.0, %v7775
      %v7777 = vpop.f32.mrb[0].mxu0
      %7778 = vmatprep.mubr.bf16.mxu0 0
      %7779 = vmatmul.mubr.bf16.gmra.mrb[0].mxu0 %v7621
      %v7780 = vpop.f32.mrb[0].mxu0
      %v7781 = vadd.f32 0.0, %v7780
      %v7782 = vpop.f32.mrb[0].mxu0
      %v7783 = vpop.f32.mrb[0].mxu0
      %v7784 = vadd.f32 0.0, %v7783
      %v7785 = vpop.f32.mrb[0].mxu0
      %7786 = vdwg.mxu0
      %v7787 = vadd.f32 %v7494, %v7661
      %v7788 = vadd.f32 %v7495, %v7664
      %v7789 = vadd.f32 %v7496, %v7669
      %v7790 = vadd.f32 %v7497, %v7672
      %v7791 = vadd.f32 %v7498, %v7677
      %v7792 = vadd.f32 %v7499, %v7680
      %v7793 = vadd.f32 %v7500, %v7685
      %v7794 = vadd.f32 %v7501, %v7688
      %v7795 = vadd.f32 %v7502, %v7693
      %v7796 = vadd.f32 %v7503, %v7696
      %v7797 = vadd.f32 %v7504, %v7701
      %v7798 = vadd.f32 %v7505, %v7704
      %v7799 = vadd.f32 %v7506, %v7709
      %v7800 = vadd.f32 %v7507, %v7712
      %v7801 = vadd.f32 %v7508, %v7717
      %v7802 = vadd.f32 %v7509, %v7720
      %v7803 = vadd.f32 %v7510, %v7725
      %v7804 = vadd.f32 %v7511, %v7728
      %v7805 = vadd.f32 %v7512, %v7733
      %v7806 = vadd.f32 %v7513, %v7736
      %v7807 = vadd.f32 %v7514, %v7741
      %v7808 = vadd.f32 %v7515, %v7744
      %v7809 = vadd.f32 %v7516, %v7749
      %v7810 = vadd.f32 %v7517, %v7752
      %v7811 = vadd.f32 %v7518, %v7757
      %v7812 = vadd.f32 %v7519, %v7760
      %v7813 = vadd.f32 %v7520, %v7765
      %v7814 = vadd.f32 %v7521, %v7768
      %v7815 = vadd.f32 %v7522, %v7773
      %v7816 = vadd.f32 %v7523, %v7776
      %v7817 = vadd.f32 %v7524, %v7781
      %v7818 = vadd.f32 %v7525, %v7784
      %v7819 = vld [vmem:[%s7232 + $0x2] sm:$0xff]
      %v7820 = vld [vmem:[%s7232 + $0xa] sm:$0xff]
      %v7821 = vld [vmem:[%s7232 + $0x12] sm:$0xff]
      %v7822 = vld [vmem:[%s7232 + $0x1a] sm:$0xff]
      %v7823 = vld [vmem:[%s7232 + $0x2a] sm:$0xff]
      %v7824 = vld [vmem:[%s7232 + $0x32] sm:$0xff]
      %v7825 = vld [vmem:[%s7232 + $0x3a] sm:$0xff]
      %v7826 = vld [vmem:[%s7232 + $0x42] sm:$0xff]
      %v7827 = vld [vmem:[%s7232 + $0x52] sm:$0xff]
      %v7828 = vld [vmem:[%s7232 + $0x5a] sm:$0xff]
      %v7829 = vld [vmem:[%s7232 + $0x62] sm:$0xff]
      %v7830 = vld [vmem:[%s7232 + $0x6a] sm:$0xff]
      %v7831 = vld [vmem:[%s7232 + $0x7a] sm:$0xff]
      %v7832 = vld [vmem:[%s7232 + $0x82] sm:$0xff]
      %v7833 = vld [vmem:[%s7232 + $0x8a] sm:$0xff]
      %v7834 = vld [vmem:[%s7232 + $0x92] sm:$0xff]
      %v7835 = vld [vmem:[%s7232 + $0xa2] sm:$0xff]
      %v7836 = vld [vmem:[%s7232 + $0xaa] sm:$0xff]
      %v7837 = vld [vmem:[%s7232 + $0xb2] sm:$0xff]
      %v7838 = vld [vmem:[%s7232 + $0xba] sm:$0xff]
      %v7839 = vld [vmem:[%s7232 + $0xca] sm:$0xff]
      %v7840 = vld [vmem:[%s7232 + $0xd2] sm:$0xff]
      %v7841 = vld [vmem:[%s7232 + $0xda] sm:$0xff]
      %v7842 = vld [vmem:[%s7232 + $0xe2] sm:$0xff]
      %v7843 = vld [vmem:[%s7232 + $0xf2] sm:$0xff]
      %v7844 = vld [vmem:[%s7232 + $0xfa] sm:$0xff]
      %v7845 = vld [vmem:[%s7232 + $0x102] sm:$0xff]
      %v7846 = vld [vmem:[%s7232 + $0x10a] sm:$0xff]
      %v7847 = vld [vmem:[%s7232 + $0x11a] sm:$0xff]
      %v7848 = vld [vmem:[%s7232 + $0x122] sm:$0xff]
      %v7849 = vld [vmem:[%s7232 + $0x12a] sm:$0xff]
      %v7850 = vld [vmem:[%s7232 + $0x132] sm:$0xff]
      %v7851 = vpack.c.bf16 %v7820, %v7819
      %v7852 = vpack.c.bf16 %v7822, %v7821
      %v7853 = vpack.c.bf16 %v7824, %v7823
      %v7854 = vpack.c.bf16 %v7826, %v7825
      %v7855 = vpack.c.bf16 %v7828, %v7827
      %v7856 = vpack.c.bf16 %v7830, %v7829
      %v7857 = vpack.c.bf16 %v7832, %v7831
      %v7858 = vpack.c.bf16 %v7834, %v7833
      %v7859 = vpack.c.bf16 %v7836, %v7835
      %v7860 = vpack.c.bf16 %v7838, %v7837
      %v7861 = vpack.c.bf16 %v7840, %v7839
      %v7862 = vpack.c.bf16 %v7842, %v7841
      %v7863 = vpack.c.bf16 %v7844, %v7843
      %v7864 = vpack.c.bf16 %v7846, %v7845
      %v7865 = vpack.c.bf16 %v7848, %v7847
      %v7866 = vpack.c.bf16 %v7850, %v7849
      %v7867 = vld [vmem:[%s2515] sm:$0x3]
      %v7869 = vsel %vm272, %v7851, 0
      %v7872 = vsel %vm272, %v7852, 0
      %v7875 = vsel %vm272, %v7853, 0
      %v7878 = vsel %vm272, %v7854, 0
      %v7881 = vsel %vm272, %v7855, 0
      %v7884 = vsel %vm272, %v7856, 0
      %v7887 = vsel %vm272, %v7857, 0
      %v7890 = vsel %vm272, %v7858, 0
      %v7893 = vsel %vm272, %v7859, 0
      %v7896 = vsel %vm272, %v7860, 0
      %v7899 = vsel %vm272, %v7861, 0
      %v7902 = vsel %vm272, %v7862, 0
      %v7905 = vsel %vm272, %v7863, 0
      %v7908 = vsel %vm272, %v7864, 0
      %v7911 = vsel %vm272, %v7865, 0
      %v7914 = vsel %vm272, %v7866, 0
      %v7917 = vand.u32 %v7867, %v324
      %7919 = vmatprep.subr.bf16.mxu0 0
      %7920 = vmatpush1.bf16.msra.mxu0 %v7917
      %7921 = vmatprep.subr.bf16.mxu0 0
      %7922 = vmatpush1.bf16.msra.mxu0 0
      %7923 = vmatprep.subr.bf16.mxu0 0
      %7924 = vmatpush1.bf16.msra.mxu0 0
      %7925 = vmatprep.subr.bf16.mxu0 0
      %7926 = vmatpush1.bf16.msra.mxu0 0
      %7927 = vmatprep.subr.bf16.mxu0 0
      %7928 = vmatpush1.bf16.msra.mxu0 0
      %7929 = vmatprep.subr.bf16.mxu0 0
      %7930 = vmatpush1.bf16.msra.mxu0 0
      %7931 = vmatprep.subr.bf16.mxu0 0
      %7932 = vmatpush1.bf16.msra.mxu0 0
      %7933 = vmatprep.subr.bf16.mxu0 0
      %7934 = vmatpush1.bf16.msra.mxu0 0
      %7935 = vmatprep.subr.bf16.mxu0 0
      %7936 = vmatpush1.bf16.msra.mxu0 0
      %7937 = vmatprep.subr.bf16.mxu0 0
      %7938 = vmatpush1.bf16.msra.mxu0 0
      %7939 = vmatprep.subr.bf16.mxu0 0
      %7940 = vmatpush1.bf16.msra.mxu0 0
      %7941 = vmatprep.subr.bf16.mxu0 0
      %7942 = vmatpush1.bf16.msra.mxu0 0
      %7943 = vmatprep.subr.bf16.mxu0 0
      %7944 = vmatpush1.bf16.msra.mxu0 0
      %7945 = vmatprep.subr.bf16.mxu0 0
      %7946 = vmatpush1.bf16.msra.mxu0 0
      %7947 = vmatprep.subr.bf16.mxu0 0
      %7948 = vmatpush1.bf16.msra.mxu0 0
      %7949 = vmatprep.subr.bf16.mxu0 0
      %7950 = vmatpush1.bf16.msra.mxu0 0
      %7951 = vmatprep.mubr.bf16.mxu0 0
      %7952 = vmatmul.mubr.bf16.gmra.mrb[0].mxu0 %v7869
      %v7953 = vpop.f32.mrb[0].mxu0
      %v7954 = vadd.f32 0.0, %v7953
      %v7955 = vpop.f32.mrb[0].mxu0
      %v7956 = vpop.f32.mrb[0].mxu0
      %v7957 = vadd.f32 0.0, %v7956
      %v7958 = vpop.f32.mrb[0].mxu0
      %7959 = vmatprep.mubr.bf16.mxu0 0
      %7960 = vmatmul.mubr.bf16.gmra.mrb[0].mxu0 %v7872
      %v7961 = vpop.f32.mrb[0].mxu0
      %v7962 = vadd.f32 0.0, %v7961
      %v7963 = vpop.f32.mrb[0].mxu0
      %v7964 = vpop.f32.mrb[0].mxu0
      %v7965 = vadd.f32 0.0, %v7964
      %v7966 = vpop.f32.mrb[0].mxu0
      %7967 = vmatprep.mubr.bf16.mxu0 0
      %7968 = vmatmul.mubr.bf16.gmra.mrb[0].mxu0 %v7875
      %v7969 = vpop.f32.mrb[0].mxu0
      %v7970 = vadd.f32 0.0, %v7969
      %v7971 = vpop.f32.mrb[0].mxu0
      %v7972 = vpop.f32.mrb[0].mxu0
      %v7973 = vadd.f32 0.0, %v7972
      %v7974 = vpop.f32.mrb[0].mxu0
      %7975 = vmatprep.mubr.bf16.mxu0 0
      %7976 = vmatmul.mubr.bf16.gmra.mrb[0].mxu0 %v7878
      %v7977 = vpop.f32.mrb[0].mxu0
      %v7978 = vadd.f32 0.0, %v7977
      %v7979 = vpop.f32.mrb[0].mxu0
      %v7980 = vpop.f32.mrb[0].mxu0
      %v7981 = vadd.f32 0.0, %v7980
      %v7982 = vpop.f32.mrb[0].mxu0
      %7983 = vmatprep.mubr.bf16.mxu0 0
      %7984 = vmatmul.mubr.bf16.gmra.mrb[0].mxu0 %v7881
      %v7985 = vpop.f32.mrb[0].mxu0
      %v7986 = vadd.f32 0.0, %v7985
      %v7987 = vpop.f32.mrb[0].mxu0
      %v7988 = vpop.f32.mrb[0].mxu0
      %v7989 = vadd.f32 0.0, %v7988
      %v7990 = vpop.f32.mrb[0].mxu0
      %7991 = vmatprep.mubr.bf16.mxu0 0
      %7992 = vmatmul.mubr.bf16.gmra.mrb[0].mxu0 %v7884
      %v7993 = vpop.f32.mrb[0].mxu0
      %v7994 = vadd.f32 0.0, %v7993
      %v7995 = vpop.f32.mrb[0].mxu0
      %v7996 = vpop.f32.mrb[0].mxu0
      %v7997 = vadd.f32 0.0, %v7996
      %v7998 = vpop.f32.mrb[0].mxu0
      %7999 = vmatprep.mubr.bf16.mxu0 0
      %8000 = vmatmul.mubr.bf16.gmra.mrb[0].mxu0 %v7887
      %v8001 = vpop.f32.mrb[0].mxu0
      %v8002 = vadd.f32 0.0, %v8001
      %v8003 = vpop.f32.mrb[0].mxu0
      %v8004 = vpop.f32.mrb[0].mxu0
      %v8005 = vadd.f32 0.0, %v8004
      %v8006 = vpop.f32.mrb[0].mxu0
      %8007 = vmatprep.mubr.bf16.mxu0 0
      %8008 = vmatmul.mubr.bf16.gmra.mrb[0].mxu0 %v7890
      %v8009 = vpop.f32.mrb[0].mxu0
      %v8010 = vadd.f32 0.0, %v8009
      %v8011 = vpop.f32.mrb[0].mxu0
      %v8012 = vpop.f32.mrb[0].mxu0
      %v8013 = vadd.f32 0.0, %v8012
      %v8014 = vpop.f32.mrb[0].mxu0
      %8015 = vmatprep.mubr.bf16.mxu0 0
      %8016 = vmatmul.mubr.bf16.gmra.mrb[0].mxu0 %v7893
      %v8017 = vpop.f32.mrb[0].mxu0
      %v8018 = vadd.f32 0.0, %v8017
      %v8019 = vpop.f32.mrb[0].mxu0
      %v8020 = vpop.f32.mrb[0].mxu0
      %v8021 = vadd.f32 0.0, %v8020
      %v8022 = vpop.f32.mrb[0].mxu0
      %8023 = vmatprep.mubr.bf16.mxu0 0
      %8024 = vmatmul.mubr.bf16.gmra.mrb[0].mxu0 %v7896
      %v8025 = vpop.f32.mrb[0].mxu0
      %v8026 = vadd.f32 0.0, %v8025
      %v8027 = vpop.f32.mrb[0].mxu0
      %v8028 = vpop.f32.mrb[0].mxu0
      %v8029 = vadd.f32 0.0, %v8028
      %v8030 = vpop.f32.mrb[0].mxu0
      %8031 = vmatprep.mubr.bf16.mxu0 0
      %8032 = vmatmul.mubr.bf16.gmra.mrb[0].mxu0 %v7899
      %v8033 = vpop.f32.mrb[0].mxu0
      %v8034 = vadd.f32 0.0, %v8033
      %v8035 = vpop.f32.mrb[0].mxu0
      %v8036 = vpop.f32.mrb[0].mxu0
      %v8037 = vadd.f32 0.0, %v8036
      %v8038 = vpop.f32.mrb[0].mxu0
      %8039 = vmatprep.mubr.bf16.mxu0 0
      %8040 = vmatmul.mubr.bf16.gmra.mrb[0].mxu0 %v7902
      %v8041 = vpop.f32.mrb[0].mxu0
      %v8042 = vadd.f32 0.0, %v8041
      %v8043 = vpop.f32.mrb[0].mxu0
      %v8044 = vpop.f32.mrb[0].mxu0
      %v8045 = vadd.f32 0.0, %v8044
      %v8046 = vpop.f32.mrb[0].mxu0
      %8047 = vmatprep.mubr.bf16.mxu0 0
      %8048 = vmatmul.mubr.bf16.gmra.mrb[0].mxu0 %v7905
      %v8049 = vpop.f32.mrb[0].mxu0
      %v8050 = vadd.f32 0.0, %v8049
      %v8051 = vpop.f32.mrb[0].mxu0
      %v8052 = vpop.f32.mrb[0].mxu0
      %v8053 = vadd.f32 0.0, %v8052
      %v8054 = vpop.f32.mrb[0].mxu0
      %8055 = vmatprep.mubr.bf16.mxu0 0
      %8056 = vmatmul.mubr.bf16.gmra.mrb[0].mxu0 %v7908
      %v8057 = vpop.f32.mrb[0].mxu0
      %v8058 = vadd.f32 0.0, %v8057
      %v8059 = vpop.f32.mrb[0].mxu0
      %v8060 = vpop.f32.mrb[0].mxu0
      %v8061 = vadd.f32 0.0, %v8060
      %v8062 = vpop.f32.mrb[0].mxu0
      %8063 = vmatprep.mubr.bf16.mxu0 0
      %8064 = vmatmul.mubr.bf16.gmra.mrb[0].mxu0 %v7911
      %v8065 = vpop.f32.mrb[0].mxu0
      %v8066 = vadd.f32 0.0, %v8065
      %v8067 = vpop.f32.mrb[0].mxu0
      %v8068 = vpop.f32.mrb[0].mxu0
      %v8069 = vadd.f32 0.0, %v8068
      %v8070 = vpop.f32.mrb[0].mxu0
      %8071 = vmatprep.mubr.bf16.mxu0 0
      %8072 = vmatmul.mubr.bf16.gmra.mrb[0].mxu0 %v7914
      %v8073 = vpop.f32.mrb[0].mxu0
      %v8074 = vadd.f32 0.0, %v8073
      %v8075 = vpop.f32.mrb[0].mxu0
      %v8076 = vpop.f32.mrb[0].mxu0
      %v8077 = vadd.f32 0.0, %v8076
      %v8078 = vpop.f32.mrb[0].mxu0
      %8079 = vdwg.mxu0
      %v8080 = vadd.f32 %v7787, %v7954
      %v8081 = vadd.f32 %v7788, %v7957
      %v8082 = vadd.f32 %v7789, %v7962
      %v8083 = vadd.f32 %v7790, %v7965
      %v8084 = vadd.f32 %v7791, %v7970
      %v8085 = vadd.f32 %v7792, %v7973
      %v8086 = vadd.f32 %v7793, %v7978
      %v8087 = vadd.f32 %v7794, %v7981
      %v8088 = vadd.f32 %v7795, %v7986
      %v8089 = vadd.f32 %v7796, %v7989
      %v8090 = vadd.f32 %v7797, %v7994
      %v8091 = vadd.f32 %v7798, %v7997
      %v8092 = vadd.f32 %v7799, %v8002
      %v8093 = vadd.f32 %v7800, %v8005
      %v8094 = vadd.f32 %v7801, %v8010
      %v8095 = vadd.f32 %v7802, %v8013
      %v8096 = vadd.f32 %v7803, %v8018
      %v8097 = vadd.f32 %v7804, %v8021
      %v8098 = vadd.f32 %v7805, %v8026
      %v8099 = vadd.f32 %v7806, %v8029
      %v8100 = vadd.f32 %v7807, %v8034
      %v8101 = vadd.f32 %v7808, %v8037
      %v8102 = vadd.f32 %v7809, %v8042
      %v8103 = vadd.f32 %v7810, %v8045
      %v8104 = vadd.f32 %v7811, %v8050
      %v8105 = vadd.f32 %v7812, %v8053
      %v8106 = vadd.f32 %v7813, %v8058
      %v8107 = vadd.f32 %v7814, %v8061
      %v8108 = vadd.f32 %v7815, %v8066
      %v8109 = vadd.f32 %v7816, %v8069
      %v8110 = vadd.f32 %v7817, %v8074
      %v8111 = vadd.f32 %v7818, %v8077
      %v8112 = vadd.f32 %v8080, %v2765
      %v8113 = vadd.f32 %v8081, %v2765
      %v8114 = vadd.f32 %v8082, %v2765
      %v8115 = vadd.f32 %v8083, %v2765
      %v8116 = vadd.f32 %v8084, %v2765
      %v8117 = vadd.f32 %v8085, %v2765
      %v8118 = vadd.f32 %v8086, %v2765
      %v8119 = vadd.f32 %v8087, %v2765
      %v8120 = vadd.f32 %v8088, %v2765
      %v8121 = vadd.f32 %v8089, %v2765
      %v8122 = vadd.f32 %v8090, %v2765
      %v8123 = vadd.f32 %v8091, %v2765
      %v8124 = vadd.f32 %v8092, %v2765
      %v8125 = vadd.f32 %v8093, %v2765
      %v8126 = vadd.f32 %v8094, %v2765
      %v8127 = vadd.f32 %v8095, %v2765
      %v8128 = vadd.f32 %v8096, %v2765
      %v8129 = vadd.f32 %v8097, %v2765
      %v8130 = vadd.f32 %v8098, %v2765
      %v8131 = vadd.f32 %v8099, %v2765
      %v8132 = vadd.f32 %v8100, %v2765
      %v8133 = vadd.f32 %v8101, %v2765
      %v8134 = vadd.f32 %v8102, %v2765
      %v8135 = vadd.f32 %v8103, %v2765
      %v8136 = vadd.f32 %v8104, %v2765
      %v8137 = vadd.f32 %v8105, %v2765
      %v8138 = vadd.f32 %v8106, %v2765
      %v8139 = vadd.f32 %v8107, %v2765
      %v8140 = vadd.f32 %v8108, %v2765
      %v8141 = vadd.f32 %v8109, %v2765
      %v8142 = vadd.f32 %v8110, %v2765
      %v8143 = vadd.f32 %v8111, %v2765
      %v8144 = vmax.f32 %v8112, 0.0
      %v8145 = vmax.f32 %v8113, 0.0
      %v8146 = vmax.f32 %v8114, 0.0
      %v8147 = vmax.f32 %v8115, 0.0
      %v8148 = vmax.f32 %v8116, 0.0
      %v8149 = vmax.f32 %v8117, 0.0
      %v8150 = vmax.f32 %v8118, 0.0
      %v8151 = vmax.f32 %v8119, 0.0
      %v8152 = vmax.f32 %v8120, 0.0
      %v8153 = vmax.f32 %v8121, 0.0
      %v8154 = vmax.f32 %v8122, 0.0
      %v8155 = vmax.f32 %v8123, 0.0
      %v8156 = vmax.f32 %v8124, 0.0
      %v8157 = vmax.f32 %v8125, 0.0
      %v8158 = vmax.f32 %v8126, 0.0
      %v8159 = vmax.f32 %v8127, 0.0
      %v8160 = vmax.f32 %v8128, 0.0
      %v8161 = vmax.f32 %v8129, 0.0
      %v8162 = vmax.f32 %v8130, 0.0
      %v8163 = vmax.f32 %v8131, 0.0
      %v8164 = vmax.f32 %v8132, 0.0
      %v8165 = vmax.f32 %v8133, 0.0
      %v8166 = vmax.f32 %v8134, 0.0
      %v8167 = vmax.f32 %v8135, 0.0
      %v8168 = vmax.f32 %v8136, 0.0
      %v8169 = vmax.f32 %v8137, 0.0
      %v8170 = vmax.f32 %v8138, 0.0
      %v8171 = vmax.f32 %v8139, 0.0
      %v8172 = vmax.f32 %v8140, 0.0
      %v8173 = vmax.f32 %v8141, 0.0
      %v8174 = vmax.f32 %v8142, 0.0
      %v8175 = vmax.f32 %v8143, 0.0
      %8176 = vst.msk [vmem:[%s170 + $0x200] sm:$0xff] %vm2831, %v8144
      %8177 = vst.msk [vmem:[%s170 + $0x208] sm:$0xff] %vm2831, %v8145
      %8178 = vst.msk [vmem:[%s170 + $0x210] sm:$0xff] %vm2831, %v8146
      %8179 = vst.msk [vmem:[%s170 + $0x218] sm:$0xff] %vm2831, %v8147
      %8180 = vst.msk [vmem:[%s170 + $0x220] sm:$0xff] %vm2831, %v8148
      %8181 = vst.msk [vmem:[%s170 + $0x228] sm:$0xff] %vm2831, %v8149
      %8182 = vst.msk [vmem:[%s170 + $0x230] sm:$0xff] %vm2831, %v8150
      %8183 = vst.msk [vmem:[%s170 + $0x238] sm:$0xff] %vm2831, %v8151
      %8184 = vst.msk [vmem:[%s170 + $0x240] sm:$0xff] %vm2831, %v8152
      %8185 = vst.msk [vmem:[%s170 + $0x248] sm:$0xff] %vm2831, %v8153
      %8186 = vst.msk [vmem:[%s170 + $0x250] sm:$0xff] %vm2831, %v8154
      %8187 = vst.msk [vmem:[%s170 + $0x258] sm:$0xff] %vm2831, %v8155
      %8188 = vst.msk [vmem:[%s170 + $0x260] sm:$0xff] %vm2831, %v8156
      %8189 = vst.msk [vmem:[%s170 + $0x268] sm:$0xff] %vm2831, %v8157
      %8190 = vst.msk [vmem:[%s170 + $0x270] sm:$0xff] %vm2831, %v8158
      %8191 = vst.msk [vmem:[%s170 + $0x278] sm:$0xff] %vm2831, %v8159
      %8192 = vst.msk [vmem:[%s170 + $0x280] sm:$0xff] %vm2831, %v8160
      %8193 = vst.msk [vmem:[%s170 + $0x288] sm:$0xff] %vm2831, %v8161
      %8194 = vst.msk [vmem:[%s170 + $0x290] sm:$0xff] %vm2831, %v8162
      %8195 = vst.msk [vmem:[%s170 + $0x298] sm:$0xff] %vm2831, %v8163
      %8196 = vst.msk [vmem:[%s170 + $0x2a0] sm:$0xff] %vm2831, %v8164
      %8197 = vst.msk [vmem:[%s170 + $0x2a8] sm:$0xff] %vm2831, %v8165
      %8198 = vst.msk [vmem:[%s170 + $0x2b0] sm:$0xff] %vm2831, %v8166
      %8199 = vst.msk [vmem:[%s170 + $0x2b8] sm:$0xff] %vm2831, %v8167
      %8200 = vst.msk [vmem:[%s170 + $0x2c0] sm:$0xff] %vm2831, %v8168
      %8201 = vst.msk [vmem:[%s170 + $0x2c8] sm:$0xff] %vm2831, %v8169
      %8202 = vst.msk [vmem:[%s170 + $0x2d0] sm:$0xff] %vm2831, %v8170
      %8203 = vst.msk [vmem:[%s170 + $0x2d8] sm:$0xff] %vm2831, %v8171
      %8204 = vst.msk [vmem:[%s170 + $0x2e0] sm:$0xff] %vm2831, %v8172
      %8205 = vst.msk [vmem:[%s170 + $0x2e8] sm:$0xff] %vm2831, %v8173
      %8206 = vst.msk [vmem:[%s170 + $0x2f0] sm:$0xff] %vm2831, %v8174
      %8207 = vst.msk [vmem:[%s170 + $0x2f8] sm:$0xff] %vm2831, %v8175
      %s8208 = scalar_lea.vmem %s165, 960
      %v8209 = vld [vmem:[%s8208] sm:$0xff]
      %v8210 = vld [vmem:[%s8208 + $0x8] sm:$0xff]
      %v8211 = vld [vmem:[%s8208 + $0x10] sm:$0xff]
      %v8212 = vld [vmem:[%s8208 + $0x18] sm:$0xff]
      %v8213 = vld [vmem:[%s8208 + $0x28] sm:$0xff]
      %v8214 = vld [vmem:[%s8208 + $0x30] sm:$0xff]
      %v8215 = vld [vmem:[%s8208 + $0x38] sm:$0xff]
      %v8216 = vld [vmem:[%s8208 + $0x40] sm:$0xff]
      %v8217 = vld [vmem:[%s8208 + $0x50] sm:$0xff]
      %v8218 = vld [vmem:[%s8208 + $0x58] sm:$0xff]
      %v8219 = vld [vmem:[%s8208 + $0x60] sm:$0xff]
      %v8220 = vld [vmem:[%s8208 + $0x68] sm:$0xff]
      %v8221 = vld [vmem:[%s8208 + $0x78] sm:$0xff]
      %v8222 = vld [vmem:[%s8208 + $0x80] sm:$0xff]
      %v8223 = vld [vmem:[%s8208 + $0x88] sm:$0xff]
      %v8224 = vld [vmem:[%s8208 + $0x90] sm:$0xff]
      %v8225 = vld [vmem:[%s8208 + $0xa0] sm:$0xff]
      %v8226 = vld [vmem:[%s8208 + $0xa8] sm:$0xff]
      %v8227 = vld [vmem:[%s8208 + $0xb0] sm:$0xff]
      %v8228 = vld [vmem:[%s8208 + $0xb8] sm:$0xff]
      %v8229 = vld [vmem:[%s8208 + $0xc8] sm:$0xff]
      %v8230 = vld [vmem:[%s8208 + $0xd0] sm:$0xff]
      %v8231 = vld [vmem:[%s8208 + $0xd8] sm:$0xff]
      %v8232 = vld [vmem:[%s8208 + $0xe0] sm:$0xff]
      %v8233 = vld [vmem:[%s8208 + $0xf0] sm:$0xff]
      %v8234 = vld [vmem:[%s8208 + $0xf8] sm:$0xff]
      %v8235 = vld [vmem:[%s8208 + $0x100] sm:$0xff]
      %v8236 = vld [vmem:[%s8208 + $0x108] sm:$0xff]
      %v8237 = vld [vmem:[%s8208 + $0x118] sm:$0xff]
      %v8238 = vld [vmem:[%s8208 + $0x120] sm:$0xff]
      %v8239 = vld [vmem:[%s8208 + $0x128] sm:$0xff]
      %v8240 = vld [vmem:[%s8208 + $0x130] sm:$0xff]
      %v8241 = vpack.c.bf16 %v8210, %v8209
      %v8242 = vpack.c.bf16 %v8212, %v8211
      %v8243 = vpack.c.bf16 %v8214, %v8213
      %v8244 = vpack.c.bf16 %v8216, %v8215
      %v8245 = vpack.c.bf16 %v8218, %v8217
      %v8246 = vpack.c.bf16 %v8220, %v8219
      %v8247 = vpack.c.bf16 %v8222, %v8221
      %v8248 = vpack.c.bf16 %v8224, %v8223
      %v8249 = vpack.c.bf16 %v8226, %v8225
      %v8250 = vpack.c.bf16 %v8228, %v8227
      %v8251 = vpack.c.bf16 %v8230, %v8229
      %v8252 = vpack.c.bf16 %v8232, %v8231
      %v8253 = vpack.c.bf16 %v8234, %v8233
      %v8254 = vpack.c.bf16 %v8236, %v8235
      %v8255 = vpack.c.bf16 %v8238, %v8237
      %v8256 = vpack.c.bf16 %v8240, %v8239
      %v8257 = vld [vmem:[%s1] sm:$0x3]
      %v8258 = vld [vmem:[%s8208 + $0x1] sm:$0xff]
      %v8259 = vld [vmem:[%s8208 + $0x9] sm:$0xff]
      %v8260 = vld [vmem:[%s8208 + $0x11] sm:$0xff]
      %v8261 = vld [vmem:[%s8208 + $0x19] sm:$0xff]
      %v8262 = vld [vmem:[%s8208 + $0x29] sm:$0xff]
      %v8263 = vld [vmem:[%s8208 + $0x31] sm:$0xff]
      %v8264 = vld [vmem:[%s8208 + $0x39] sm:$0xff]
      %v8265 = vld [vmem:[%s8208 + $0x41] sm:$0xff]
      %v8266 = vld [vmem:[%s8208 + $0x51] sm:$0xff]
      %v8267 = vld [vmem:[%s8208 + $0x59] sm:$0xff]
      %v8268 = vld [vmem:[%s8208 + $0x61] sm:$0xff]
      %v8269 = vld [vmem:[%s8208 + $0x69] sm:$0xff]
      %v8270 = vld [vmem:[%s8208 + $0x79] sm:$0xff]
      %v8271 = vld [vmem:[%s8208 + $0x81] sm:$0xff]
      %v8272 = vld [vmem:[%s8208 + $0x89] sm:$0xff]
      %v8273 = vld [vmem:[%s8208 + $0x91] sm:$0xff]
      %v8274 = vld [vmem:[%s8208 + $0xa1] sm:$0xff]
      %v8275 = vld [vmem:[%s8208 + $0xa9] sm:$0xff]
      %v8276 = vld [vmem:[%s8208 + $0xb1] sm:$0xff]
      %v8277 = vld [vmem:[%s8208 + $0xb9] sm:$0xff]
      %v8278 = vld [vmem:[%s8208 + $0xc9] sm:$0xff]
      %v8279 = vld [vmem:[%s8208 + $0xd1] sm:$0xff]
      %v8280 = vld [vmem:[%s8208 + $0xd9] sm:$0xff]
      %v8281 = vld [vmem:[%s8208 + $0xe1] sm:$0xff]
      %v8282 = vld [vmem:[%s8208 + $0xf1] sm:$0xff]
      %v8283 = vld [vmem:[%s8208 + $0xf9] sm:$0xff]
      %v8284 = vld [vmem:[%s8208 + $0x101] sm:$0xff]
      %v8285 = vld [vmem:[%s8208 + $0x109] sm:$0xff]
      %v8286 = vld [vmem:[%s8208 + $0x119] sm:$0xff]
      %v8287 = vld [vmem:[%s8208 + $0x121] sm:$0xff]
      %v8288 = vld [vmem:[%s8208 + $0x129] sm:$0xff]
      %v8289 = vld [vmem:[%s8208 + $0x131] sm:$0xff]
      %v8290 = vpack.c.bf16 %v8259, %v8258
      %v8291 = vpack.c.bf16 %v8261, %v8260
      %v8292 = vpack.c.bf16 %v8263, %v8262
      %v8293 = vpack.c.bf16 %v8265, %v8264
      %v8294 = vpack.c.bf16 %v8267, %v8266
      %v8295 = vpack.c.bf16 %v8269, %v8268
      %v8296 = vpack.c.bf16 %v8271, %v8270
      %v8297 = vpack.c.bf16 %v8273, %v8272
      %v8298 = vpack.c.bf16 %v8275, %v8274
      %v8299 = vpack.c.bf16 %v8277, %v8276
      %v8300 = vpack.c.bf16 %v8279, %v8278
      %v8301 = vpack.c.bf16 %v8281, %v8280
      %v8302 = vpack.c.bf16 %v8283, %v8282
      %v8303 = vpack.c.bf16 %v8285, %v8284
      %v8304 = vpack.c.bf16 %v8287, %v8286
      %v8305 = vpack.c.bf16 %v8289, %v8288
      %v8306 = vld [vmem:[%s270] sm:$0x3]
      %v8308 = vsel %vm272, %v8290, 0
      %v8311 = vsel %vm272, %v8291, 0
      %v8314 = vsel %vm272, %v8292, 0
      %v8317 = vsel %vm272, %v8293, 0
      %v8320 = vsel %vm272, %v8294, 0
      %v8323 = vsel %vm272, %v8295, 0
      %v8326 = vsel %vm272, %v8296, 0
      %v8329 = vsel %vm272, %v8297, 0
      %v8332 = vsel %vm272, %v8298, 0
      %v8335 = vsel %vm272, %v8299, 0
      %v8338 = vsel %vm272, %v8300, 0
      %v8341 = vsel %vm272, %v8301, 0
      %v8344 = vsel %vm272, %v8302, 0
      %v8347 = vsel %vm272, %v8303, 0
      %v8350 = vsel %vm272, %v8304, 0
      %v8353 = vsel %vm272, %v8305, 0
      %v8356 = vand.u32 %v8306, %v324
      %8358 = vmatprep.subr.bf16.mxu0 0
      %8359 = vmatpush1.bf16.msra.mxu0 %v8356
      %8360 = vmatprep.subr.bf16.mxu0 0
      %8361 = vmatpush1.bf16.msra.mxu0 0
      %8362 = vmatprep.subr.bf16.mxu0 0
      %8363 = vmatpush1.bf16.msra.mxu0 0
      %8364 = vmatprep.subr.bf16.mxu0 0
      %8365 = vmatpush1.bf16.msra.mxu0 0
      %8366 = vmatprep.subr.bf16.mxu0 0
      %8367 = vmatpush1.bf16.msra.mxu0 0
      %8368 = vmatprep.subr.bf16.mxu0 0
      %8369 = vmatpush1.bf16.msra.mxu0 0
      %8370 = vmatprep.subr.bf16.mxu0 0
      %8371 = vmatpush1.bf16.msra.mxu0 0
      %8372 = vmatprep.subr.bf16.mxu0 0
      %8373 = vmatpush1.bf16.msra.mxu0 0
      %8374 = vmatprep.subr.bf16.mxu0 0
      %8375 = vmatpush1.bf16.msra.mxu0 0
      %8376 = vmatprep.subr.bf16.mxu0 0
      %8377 = vmatpush1.bf16.msra.mxu0 0
      %8378 = vmatprep.subr.bf16.mxu0 0
      %8379 = vmatpush1.bf16.msra.mxu0 0
      %8380 = vmatprep.subr.bf16.mxu0 0
      %8381 = vmatpush1.bf16.msra.mxu0 0
      %8382 = vmatprep.subr.bf16.mxu0 0
      %8383 = vmatpush1.bf16.msra.mxu0 0
      %8384 = vmatprep.subr.bf16.mxu0 0
      %8385 = vmatpush1.bf16.msra.mxu0 0
      %8386 = vmatprep.subr.bf16.mxu0 0
      %8387 = vmatpush1.bf16.msra.mxu0 0
      %8388 = vmatprep.subr.bf16.mxu0 0
      %8389 = vmatpush1.bf16.msra.mxu0 0
      %8390 = vmatprep.mubr.bf16.mxu0 0
      %8391 = vmatmul.mubr.bf16.gmra.mrb[0].mxu0 %v8308
      %v8392 = vpop.f32.mrb[0].mxu0
      %v8393 = vadd.f32 0.0, %v8392
      %v8394 = vpop.f32.mrb[0].mxu0
      %v8395 = vpop.f32.mrb[0].mxu0
      %v8396 = vadd.f32 0.0, %v8395
      %v8397 = vpop.f32.mrb[0].mxu0
      %8398 = vmatprep.mubr.bf16.mxu0 0
      %8399 = vmatmul.mubr.bf16.gmra.mrb[0].mxu0 %v8311
      %v8400 = vpop.f32.mrb[0].mxu0
      %v8401 = vadd.f32 0.0, %v8400
      %v8402 = vpop.f32.mrb[0].mxu0
      %v8403 = vpop.f32.mrb[0].mxu0
      %v8404 = vadd.f32 0.0, %v8403
      %v8405 = vpop.f32.mrb[0].mxu0
      %8406 = vmatprep.mubr.bf16.mxu0 0
      %8407 = vmatmul.mubr.bf16.gmra.mrb[0].mxu0 %v8314
      %v8408 = vpop.f32.mrb[0].mxu0
      %v8409 = vadd.f32 0.0, %v8408
      %v8410 = vpop.f32.mrb[0].mxu0
      %v8411 = vpop.f32.mrb[0].mxu0
      %v8412 = vadd.f32 0.0, %v8411
      %v8413 = vpop.f32.mrb[0].mxu0
      %8414 = vmatprep.mubr.bf16.mxu0 0
      %8415 = vmatmul.mubr.bf16.gmra.mrb[0].mxu0 %v8317
      %v8416 = vpop.f32.mrb[0].mxu0
      %v8417 = vadd.f32 0.0, %v8416
      %v8418 = vpop.f32.mrb[0].mxu0
      %v8419 = vpop.f32.mrb[0].mxu0
      %v8420 = vadd.f32 0.0, %v8419
      %v8421 = vpop.f32.mrb[0].mxu0
      %8422 = vmatprep.mubr.bf16.mxu0 0
      %8423 = vmatmul.mubr.bf16.gmra.mrb[0].mxu0 %v8320
      %v8424 = vpop.f32.mrb[0].mxu0
      %v8425 = vadd.f32 0.0, %v8424
      %v8426 = vpop.f32.mrb[0].mxu0
      %v8427 = vpop.f32.mrb[0].mxu0
      %v8428 = vadd.f32 0.0, %v8427
      %v8429 = vpop.f32.mrb[0].mxu0
      %8430 = vmatprep.mubr.bf16.mxu0 0
      %8431 = vmatmul.mubr.bf16.gmra.mrb[0].mxu0 %v8323
      %v8432 = vpop.f32.mrb[0].mxu0
      %v8433 = vadd.f32 0.0, %v8432
      %v8434 = vpop.f32.mrb[0].mxu0
      %v8435 = vpop.f32.mrb[0].mxu0
      %v8436 = vadd.f32 0.0, %v8435
      %v8437 = vpop.f32.mrb[0].mxu0
      %8438 = vmatprep.mubr.bf16.mxu0 0
      %8439 = vmatmul.mubr.bf16.gmra.mrb[0].mxu0 %v8326
      %v8440 = vpop.f32.mrb[0].mxu0
      %v8441 = vadd.f32 0.0, %v8440
      %v8442 = vpop.f32.mrb[0].mxu0
      %v8443 = vpop.f32.mrb[0].mxu0
      %v8444 = vadd.f32 0.0, %v8443
      %v8445 = vpop.f32.mrb[0].mxu0
      %8446 = vmatprep.mubr.bf16.mxu0 0
      %8447 = vmatmul.mubr.bf16.gmra.mrb[0].mxu0 %v8329
      %v8448 = vpop.f32.mrb[0].mxu0
      %v8449 = vadd.f32 0.0, %v8448
      %v8450 = vpop.f32.mrb[0].mxu0
      %v8451 = vpop.f32.mrb[0].mxu0
      %v8452 = vadd.f32 0.0, %v8451
      %v8453 = vpop.f32.mrb[0].mxu0
      %8454 = vmatprep.mubr.bf16.mxu0 0
      %8455 = vmatmul.mubr.bf16.gmra.mrb[0].mxu0 %v8332
      %v8456 = vpop.f32.mrb[0].mxu0
      %v8457 = vadd.f32 0.0, %v8456
      %v8458 = vpop.f32.mrb[0].mxu0
      %v8459 = vpop.f32.mrb[0].mxu0
      %v8460 = vadd.f32 0.0, %v8459
      %v8461 = vpop.f32.mrb[0].mxu0
      %8462 = vmatprep.mubr.bf16.mxu0 0
      %8463 = vmatmul.mubr.bf16.gmra.mrb[0].mxu0 %v8335
      %v8464 = vpop.f32.mrb[0].mxu0
      %v8465 = vadd.f32 0.0, %v8464
      %v8466 = vpop.f32.mrb[0].mxu0
      %v8467 = vpop.f32.mrb[0].mxu0
      %v8468 = vadd.f32 0.0, %v8467
      %v8469 = vpop.f32.mrb[0].mxu0
      %8470 = vmatprep.mubr.bf16.mxu0 0
      %8471 = vmatmul.mubr.bf16.gmra.mrb[0].mxu0 %v8338
      %v8472 = vpop.f32.mrb[0].mxu0
      %v8473 = vadd.f32 0.0, %v8472
      %v8474 = vpop.f32.mrb[0].mxu0
      %v8475 = vpop.f32.mrb[0].mxu0
      %v8476 = vadd.f32 0.0, %v8475
      %v8477 = vpop.f32.mrb[0].mxu0
      %8478 = vmatprep.mubr.bf16.mxu0 0
      %8479 = vmatmul.mubr.bf16.gmra.mrb[0].mxu0 %v8341
      %v8480 = vpop.f32.mrb[0].mxu0
      %v8481 = vadd.f32 0.0, %v8480
      %v8482 = vpop.f32.mrb[0].mxu0
      %v8483 = vpop.f32.mrb[0].mxu0
      %v8484 = vadd.f32 0.0, %v8483
      %v8485 = vpop.f32.mrb[0].mxu0
      %8486 = vmatprep.mubr.bf16.mxu0 0
      %8487 = vmatmul.mubr.bf16.gmra.mrb[0].mxu0 %v8344
      %v8488 = vpop.f32.mrb[0].mxu0
      %v8489 = vadd.f32 0.0, %v8488
      %v8490 = vpop.f32.mrb[0].mxu0
      %v8491 = vpop.f32.mrb[0].mxu0
      %v8492 = vadd.f32 0.0, %v8491
      %v8493 = vpop.f32.mrb[0].mxu0
      %8494 = vmatprep.mubr.bf16.mxu0 0
      %8495 = vmatmul.mubr.bf16.gmra.mrb[0].mxu0 %v8347
      %v8496 = vpop.f32.mrb[0].mxu0
      %v8497 = vadd.f32 0.0, %v8496
      %v8498 = vpop.f32.mrb[0].mxu0
      %v8499 = vpop.f32.mrb[0].mxu0
      %v8500 = vadd.f32 0.0, %v8499
      %v8501 = vpop.f32.mrb[0].mxu0
      %8502 = vmatprep.mubr.bf16.mxu0 0
      %8503 = vmatmul.mubr.bf16.gmra.mrb[0].mxu0 %v8350
      %v8504 = vpop.f32.mrb[0].mxu0
      %v8505 = vadd.f32 0.0, %v8504
      %v8506 = vpop.f32.mrb[0].mxu0
      %v8507 = vpop.f32.mrb[0].mxu0
      %v8508 = vadd.f32 0.0, %v8507
      %v8509 = vpop.f32.mrb[0].mxu0
      %8510 = vmatprep.mubr.bf16.mxu0 0
      %8511 = vmatmul.mubr.bf16.gmra.mrb[0].mxu0 %v8353
      %v8512 = vpop.f32.mrb[0].mxu0
      %v8513 = vadd.f32 0.0, %v8512
      %v8514 = vpop.f32.mrb[0].mxu0
      %v8515 = vpop.f32.mrb[0].mxu0
      %v8516 = vadd.f32 0.0, %v8515
      %v8517 = vpop.f32.mrb[0].mxu0
      %8518 = vdwg.mxu0
      %v8520 = vsel %vm272, %v8241, 0
      %v8523 = vsel %vm272, %v8242, 0
      %v8526 = vsel %vm272, %v8243, 0
      %v8529 = vsel %vm272, %v8244, 0
      %v8532 = vsel %vm272, %v8245, 0
      %v8535 = vsel %vm272, %v8246, 0
      %v8538 = vsel %vm272, %v8247, 0
      %v8541 = vsel %vm272, %v8248, 0
      %v8544 = vsel %vm272, %v8249, 0
      %v8547 = vsel %vm272, %v8250, 0
      %v8550 = vsel %vm272, %v8251, 0
      %v8553 = vsel %vm272, %v8252, 0
      %v8556 = vsel %vm272, %v8253, 0
      %v8559 = vsel %vm272, %v8254, 0
      %v8562 = vsel %vm272, %v8255, 0
      %v8565 = vsel %vm272, %v8256, 0
      %v8568 = vand.u32 %v8257, %v324
      %8570 = vmatprep.subr.bf16.mxu0 0
      %8571 = vmatpush1.bf16.msra.mxu0 %v8568
      %8572 = vmatprep.subr.bf16.mxu0 0
      %8573 = vmatpush1.bf16.msra.mxu0 0
      %8574 = vmatprep.subr.bf16.mxu0 0
      %8575 = vmatpush1.bf16.msra.mxu0 0
      %8576 = vmatprep.subr.bf16.mxu0 0
      %8577 = vmatpush1.bf16.msra.mxu0 0
      %8578 = vmatprep.subr.bf16.mxu0 0
      %8579 = vmatpush1.bf16.msra.mxu0 0
      %8580 = vmatprep.subr.bf16.mxu0 0
      %8581 = vmatpush1.bf16.msra.mxu0 0
      %8582 = vmatprep.subr.bf16.mxu0 0
      %8583 = vmatpush1.bf16.msra.mxu0 0
      %8584 = vmatprep.subr.bf16.mxu0 0
      %8585 = vmatpush1.bf16.msra.mxu0 0
      %8586 = vmatprep.subr.bf16.mxu0 0
      %8587 = vmatpush1.bf16.msra.mxu0 0
      %8588 = vmatprep.subr.bf16.mxu0 0
      %8589 = vmatpush1.bf16.msra.mxu0 0
      %8590 = vmatprep.subr.bf16.mxu0 0
      %8591 = vmatpush1.bf16.msra.mxu0 0
      %8592 = vmatprep.subr.bf16.mxu0 0
      %8593 = vmatpush1.bf16.msra.mxu0 0
      %8594 = vmatprep.subr.bf16.mxu0 0
      %8595 = vmatpush1.bf16.msra.mxu0 0
      %8596 = vmatprep.subr.bf16.mxu0 0
      %8597 = vmatpush1.bf16.msra.mxu0 0
      %8598 = vmatprep.subr.bf16.mxu0 0
      %8599 = vmatpush1.bf16.msra.mxu0 0
      %8600 = vmatprep.subr.bf16.mxu0 0
      %8601 = vmatpush1.bf16.msra.mxu0 0
      %8602 = vmatprep.mubr.bf16.mxu0 0
      %8603 = vmatmul.mubr.bf16.gmra.mrb[0].mxu0 %v8520
      %v8604 = vpop.f32.mrb[0].mxu0
      %v8605 = vadd.f32 %v8393, %v8604
      %v8606 = vpop.f32.mrb[0].mxu0
      %v8607 = vpop.f32.mrb[0].mxu0
      %v8608 = vadd.f32 %v8396, %v8607
      %v8609 = vpop.f32.mrb[0].mxu0
      %8610 = vmatprep.mubr.bf16.mxu0 0
      %8611 = vmatmul.mubr.bf16.gmra.mrb[0].mxu0 %v8523
      %v8612 = vpop.f32.mrb[0].mxu0
      %v8613 = vadd.f32 %v8401, %v8612
      %v8614 = vpop.f32.mrb[0].mxu0
      %v8615 = vpop.f32.mrb[0].mxu0
      %v8616 = vadd.f32 %v8404, %v8615
      %v8617 = vpop.f32.mrb[0].mxu0
      %8618 = vmatprep.mubr.bf16.mxu0 0
      %8619 = vmatmul.mubr.bf16.gmra.mrb[0].mxu0 %v8526
      %v8620 = vpop.f32.mrb[0].mxu0
      %v8621 = vadd.f32 %v8409, %v8620
      %v8622 = vpop.f32.mrb[0].mxu0
      %v8623 = vpop.f32.mrb[0].mxu0
      %v8624 = vadd.f32 %v8412, %v8623
      %v8625 = vpop.f32.mrb[0].mxu0
      %8626 = vmatprep.mubr.bf16.mxu0 0
      %8627 = vmatmul.mubr.bf16.gmra.mrb[0].mxu0 %v8529
      %v8628 = vpop.f32.mrb[0].mxu0
      %v8629 = vadd.f32 %v8417, %v8628
      %v8630 = vpop.f32.mrb[0].mxu0
      %v8631 = vpop.f32.mrb[0].mxu0
      %v8632 = vadd.f32 %v8420, %v8631
      %v8633 = vpop.f32.mrb[0].mxu0
      %8634 = vmatprep.mubr.bf16.mxu0 0
      %8635 = vmatmul.mubr.bf16.gmra.mrb[0].mxu0 %v8532
      %v8636 = vpop.f32.mrb[0].mxu0
      %v8637 = vadd.f32 %v8425, %v8636
      %v8638 = vpop.f32.mrb[0].mxu0
      %v8639 = vpop.f32.mrb[0].mxu0
      %v8640 = vadd.f32 %v8428, %v8639
      %v8641 = vpop.f32.mrb[0].mxu0
      %8642 = vmatprep.mubr.bf16.mxu0 0
      %8643 = vmatmul.mubr.bf16.gmra.mrb[0].mxu0 %v8535
      %v8644 = vpop.f32.mrb[0].mxu0
      %v8645 = vadd.f32 %v8433, %v8644
      %v8646 = vpop.f32.mrb[0].mxu0
      %v8647 = vpop.f32.mrb[0].mxu0
      %v8648 = vadd.f32 %v8436, %v8647
      %v8649 = vpop.f32.mrb[0].mxu0
      %8650 = vmatprep.mubr.bf16.mxu0 0
      %8651 = vmatmul.mubr.bf16.gmra.mrb[0].mxu0 %v8538
      %v8652 = vpop.f32.mrb[0].mxu0
      %v8653 = vadd.f32 %v8441, %v8652
      %v8654 = vpop.f32.mrb[0].mxu0
      %v8655 = vpop.f32.mrb[0].mxu0
      %v8656 = vadd.f32 %v8444, %v8655
      %v8657 = vpop.f32.mrb[0].mxu0
      %8658 = vmatprep.mubr.bf16.mxu0 0
      %8659 = vmatmul.mubr.bf16.gmra.mrb[0].mxu0 %v8541
      %v8660 = vpop.f32.mrb[0].mxu0
      %v8661 = vadd.f32 %v8449, %v8660
      %v8662 = vpop.f32.mrb[0].mxu0
      %v8663 = vpop.f32.mrb[0].mxu0
      %v8664 = vadd.f32 %v8452, %v8663
      %v8665 = vpop.f32.mrb[0].mxu0
      %8666 = vmatprep.mubr.bf16.mxu0 0
      %8667 = vmatmul.mubr.bf16.gmra.mrb[0].mxu0 %v8544
      %v8668 = vpop.f32.mrb[0].mxu0
      %v8669 = vadd.f32 %v8457, %v8668
      %v8670 = vpop.f32.mrb[0].mxu0
      %v8671 = vpop.f32.mrb[0].mxu0
      %v8672 = vadd.f32 %v8460, %v8671
      %v8673 = vpop.f32.mrb[0].mxu0
      %8674 = vmatprep.mubr.bf16.mxu0 0
      %8675 = vmatmul.mubr.bf16.gmra.mrb[0].mxu0 %v8547
      %v8676 = vpop.f32.mrb[0].mxu0
      %v8677 = vadd.f32 %v8465, %v8676
      %v8678 = vpop.f32.mrb[0].mxu0
      %v8679 = vpop.f32.mrb[0].mxu0
      %v8680 = vadd.f32 %v8468, %v8679
      %v8681 = vpop.f32.mrb[0].mxu0
      %8682 = vmatprep.mubr.bf16.mxu0 0
      %8683 = vmatmul.mubr.bf16.gmra.mrb[0].mxu0 %v8550
      %v8684 = vpop.f32.mrb[0].mxu0
      %v8685 = vadd.f32 %v8473, %v8684
      %v8686 = vpop.f32.mrb[0].mxu0
      %v8687 = vpop.f32.mrb[0].mxu0
      %v8688 = vadd.f32 %v8476, %v8687
      %v8689 = vpop.f32.mrb[0].mxu0
      %8690 = vmatprep.mubr.bf16.mxu0 0
      %8691 = vmatmul.mubr.bf16.gmra.mrb[0].mxu0 %v8553
      %v8692 = vpop.f32.mrb[0].mxu0
      %v8693 = vadd.f32 %v8481, %v8692
      %v8694 = vpop.f32.mrb[0].mxu0
      %v8695 = vpop.f32.mrb[0].mxu0
      %v8696 = vadd.f32 %v8484, %v8695
      %v8697 = vpop.f32.mrb[0].mxu0
      %8698 = vmatprep.mubr.bf16.mxu0 0
      %8699 = vmatmul.mubr.bf16.gmra.mrb[0].mxu0 %v8556
      %v8700 = vpop.f32.mrb[0].mxu0
      %v8701 = vadd.f32 %v8489, %v8700
      %v8702 = vpop.f32.mrb[0].mxu0
      %v8703 = vpop.f32.mrb[0].mxu0
      %v8704 = vadd.f32 %v8492, %v8703
      %v8705 = vpop.f32.mrb[0].mxu0
      %8706 = vmatprep.mubr.bf16.mxu0 0
      %8707 = vmatmul.mubr.bf16.gmra.mrb[0].mxu0 %v8559
      %v8708 = vpop.f32.mrb[0].mxu0
      %v8709 = vadd.f32 %v8497, %v8708
      %v8710 = vpop.f32.mrb[0].mxu0
      %v8711 = vpop.f32.mrb[0].mxu0
      %v8712 = vadd.f32 %v8500, %v8711
      %v8713 = vpop.f32.mrb[0].mxu0
      %8714 = vmatprep.mubr.bf16.mxu0 0
      %8715 = vmatmul.mubr.bf16.gmra.mrb[0].mxu0 %v8562
      %v8716 = vpop.f32.mrb[0].mxu0
      %v8717 = vadd.f32 %v8505, %v8716
      %v8718 = vpop.f32.mrb[0].mxu0
      %v8719 = vpop.f32.mrb[0].mxu0
      %v8720 = vadd.f32 %v8508, %v8719
      %v8721 = vpop.f32.mrb[0].mxu0
      %8722 = vmatprep.mubr.bf16.mxu0 0
      %8723 = vmatmul.mubr.bf16.gmra.mrb[0].mxu0 %v8565
      %v8724 = vpop.f32.mrb[0].mxu0
      %v8725 = vadd.f32 %v8513, %v8724
      %v8726 = vpop.f32.mrb[0].mxu0
      %v8727 = vpop.f32.mrb[0].mxu0
      %v8728 = vadd.f32 %v8516, %v8727
      %v8729 = vpop.f32.mrb[0].mxu0
      %8730 = vdwg.mxu0
      %v8731 = vld [vmem:[%s8208 + $0x2] sm:$0xff]
      %v8732 = vld [vmem:[%s8208 + $0xa] sm:$0xff]
      %v8733 = vld [vmem:[%s8208 + $0x12] sm:$0xff]
      %v8734 = vld [vmem:[%s8208 + $0x1a] sm:$0xff]
      %v8735 = vld [vmem:[%s8208 + $0x2a] sm:$0xff]
      %v8736 = vld [vmem:[%s8208 + $0x32] sm:$0xff]
      %v8737 = vld [vmem:[%s8208 + $0x3a] sm:$0xff]
      %v8738 = vld [vmem:[%s8208 + $0x42] sm:$0xff]
      %v8739 = vld [vmem:[%s8208 + $0x52] sm:$0xff]
      %v8740 = vld [vmem:[%s8208 + $0x5a] sm:$0xff]
      %v8741 = vld [vmem:[%s8208 + $0x62] sm:$0xff]
      %v8742 = vld [vmem:[%s8208 + $0x6a] sm:$0xff]
      %v8743 = vld [vmem:[%s8208 + $0x7a] sm:$0xff]
      %v8744 = vld [vmem:[%s8208 + $0x82] sm:$0xff]
      %v8745 = vld [vmem:[%s8208 + $0x8a] sm:$0xff]
      %v8746 = vld [vmem:[%s8208 + $0x92] sm:$0xff]
      %v8747 = vld [vmem:[%s8208 + $0xa2] sm:$0xff]
      %v8748 = vld [vmem:[%s8208 + $0xaa] sm:$0xff]
      %v8749 = vld [vmem:[%s8208 + $0xb2] sm:$0xff]
      %v8750 = vld [vmem:[%s8208 + $0xba] sm:$0xff]
      %v8751 = vld [vmem:[%s8208 + $0xca] sm:$0xff]
      %v8752 = vld [vmem:[%s8208 + $0xd2] sm:$0xff]
      %v8753 = vld [vmem:[%s8208 + $0xda] sm:$0xff]
      %v8754 = vld [vmem:[%s8208 + $0xe2] sm:$0xff]
      %v8755 = vld [vmem:[%s8208 + $0xf2] sm:$0xff]
      %v8756 = vld [vmem:[%s8208 + $0xfa] sm:$0xff]
      %v8757 = vld [vmem:[%s8208 + $0x102] sm:$0xff]
      %v8758 = vld [vmem:[%s8208 + $0x10a] sm:$0xff]
      %v8759 = vld [vmem:[%s8208 + $0x11a] sm:$0xff]
      %v8760 = vld [vmem:[%s8208 + $0x122] sm:$0xff]
      %v8761 = vld [vmem:[%s8208 + $0x12a] sm:$0xff]
      %v8762 = vld [vmem:[%s8208 + $0x132] sm:$0xff]
      %v8763 = vpack.c.bf16 %v8732, %v8731
      %v8764 = vpack.c.bf16 %v8734, %v8733
      %v8765 = vpack.c.bf16 %v8736, %v8735
      %v8766 = vpack.c.bf16 %v8738, %v8737
      %v8767 = vpack.c.bf16 %v8740, %v8739
      %v8768 = vpack.c.bf16 %v8742, %v8741
      %v8769 = vpack.c.bf16 %v8744, %v8743
      %v8770 = vpack.c.bf16 %v8746, %v8745
      %v8771 = vpack.c.bf16 %v8748, %v8747
      %v8772 = vpack.c.bf16 %v8750, %v8749
      %v8773 = vpack.c.bf16 %v8752, %v8751
      %v8774 = vpack.c.bf16 %v8754, %v8753
      %v8775 = vpack.c.bf16 %v8756, %v8755
      %v8776 = vpack.c.bf16 %v8758, %v8757
      %v8777 = vpack.c.bf16 %v8760, %v8759
      %v8778 = vpack.c.bf16 %v8762, %v8761
      %v8779 = vld [vmem:[%s749] sm:$0x3]
      %v8781 = vsel %vm272, %v8763, 0
      %v8784 = vsel %vm272, %v8764, 0
      %v8787 = vsel %vm272, %v8765, 0
      %v8790 = vsel %vm272, %v8766, 0
      %v8793 = vsel %vm272, %v8767, 0
      %v8796 = vsel %vm272, %v8768, 0
      %v8799 = vsel %vm272, %v8769, 0
      %v8802 = vsel %vm272, %v8770, 0
      %v8805 = vsel %vm272, %v8771, 0
      %v8808 = vsel %vm272, %v8772, 0
      %v8811 = vsel %vm272, %v8773, 0
      %v8814 = vsel %vm272, %v8774, 0
      %v8817 = vsel %vm272, %v8775, 0
      %v8820 = vsel %vm272, %v8776, 0
      %v8823 = vsel %vm272, %v8777, 0
      %v8826 = vsel %vm272, %v8778, 0
      %v8829 = vand.u32 %v8779, %v324
      %8831 = vmatprep.subr.bf16.mxu0 0
      %8832 = vmatpush1.bf16.msra.mxu0 %v8829
      %8833 = vmatprep.subr.bf16.mxu0 0
      %8834 = vmatpush1.bf16.msra.mxu0 0
      %8835 = vmatprep.subr.bf16.mxu0 0
      %8836 = vmatpush1.bf16.msra.mxu0 0
      %8837 = vmatprep.subr.bf16.mxu0 0
      %8838 = vmatpush1.bf16.msra.mxu0 0
      %8839 = vmatprep.subr.bf16.mxu0 0
      %8840 = vmatpush1.bf16.msra.mxu0 0
      %8841 = vmatprep.subr.bf16.mxu0 0
      %8842 = vmatpush1.bf16.msra.mxu0 0
      %8843 = vmatprep.subr.bf16.mxu0 0
      %8844 = vmatpush1.bf16.msra.mxu0 0
      %8845 = vmatprep.subr.bf16.mxu0 0
      %8846 = vmatpush1.bf16.msra.mxu0 0
      %8847 = vmatprep.subr.bf16.mxu0 0
      %8848 = vmatpush1.bf16.msra.mxu0 0
      %8849 = vmatprep.subr.bf16.mxu0 0
      %8850 = vmatpush1.bf16.msra.mxu0 0
      %8851 = vmatprep.subr.bf16.mxu0 0
      %8852 = vmatpush1.bf16.msra.mxu0 0
      %8853 = vmatprep.subr.bf16.mxu0 0
      %8854 = vmatpush1.bf16.msra.mxu0 0
      %8855 = vmatprep.subr.bf16.mxu0 0
      %8856 = vmatpush1.bf16.msra.mxu0 0
      %8857 = vmatprep.subr.bf16.mxu0 0
      %8858 = vmatpush1.bf16.msra.mxu0 0
      %8859 = vmatprep.subr.bf16.mxu0 0
      %8860 = vmatpush1.bf16.msra.mxu0 0
      %8861 = vmatprep.subr.bf16.mxu0 0
      %8862 = vmatpush1.bf16.msra.mxu0 0
      %8863 = vmatprep.mubr.bf16.mxu0 0
      %8864 = vmatmul.mubr.bf16.gmra.mrb[0].mxu0 %v8781
      %v8865 = vpop.f32.mrb[0].mxu0
      %v8866 = vadd.f32 0.0, %v8865
      %v8867 = vpop.f32.mrb[0].mxu0
      %v8868 = vpop.f32.mrb[0].mxu0
      %v8869 = vadd.f32 0.0, %v8868
      %v8870 = vpop.f32.mrb[0].mxu0
      %8871 = vmatprep.mubr.bf16.mxu0 0
      %8872 = vmatmul.mubr.bf16.gmra.mrb[0].mxu0 %v8784
      %v8873 = vpop.f32.mrb[0].mxu0
      %v8874 = vadd.f32 0.0, %v8873
      %v8875 = vpop.f32.mrb[0].mxu0
      %v8876 = vpop.f32.mrb[0].mxu0
      %v8877 = vadd.f32 0.0, %v8876
      %v8878 = vpop.f32.mrb[0].mxu0
      %8879 = vmatprep.mubr.bf16.mxu0 0
      %8880 = vmatmul.mubr.bf16.gmra.mrb[0].mxu0 %v8787
      %v8881 = vpop.f32.mrb[0].mxu0
      %v8882 = vadd.f32 0.0, %v8881
      %v8883 = vpop.f32.mrb[0].mxu0
      %v8884 = vpop.f32.mrb[0].mxu0
      %v8885 = vadd.f32 0.0, %v8884
      %v8886 = vpop.f32.mrb[0].mxu0
      %8887 = vmatprep.mubr.bf16.mxu0 0
      %8888 = vmatmul.mubr.bf16.gmra.mrb[0].mxu0 %v8790
      %v8889 = vpop.f32.mrb[0].mxu0
      %v8890 = vadd.f32 0.0, %v8889
      %v8891 = vpop.f32.mrb[0].mxu0
      %v8892 = vpop.f32.mrb[0].mxu0
      %v8893 = vadd.f32 0.0, %v8892
      %v8894 = vpop.f32.mrb[0].mxu0
      %8895 = vmatprep.mubr.bf16.mxu0 0
      %8896 = vmatmul.mubr.bf16.gmra.mrb[0].mxu0 %v8793
      %v8897 = vpop.f32.mrb[0].mxu0
      %v8898 = vadd.f32 0.0, %v8897
      %v8899 = vpop.f32.mrb[0].mxu0
      %v8900 = vpop.f32.mrb[0].mxu0
      %v8901 = vadd.f32 0.0, %v8900
      %v8902 = vpop.f32.mrb[0].mxu0
      %8903 = vmatprep.mubr.bf16.mxu0 0
      %8904 = vmatmul.mubr.bf16.gmra.mrb[0].mxu0 %v8796
      %v8905 = vpop.f32.mrb[0].mxu0
      %v8906 = vadd.f32 0.0, %v8905
      %v8907 = vpop.f32.mrb[0].mxu0
      %v8908 = vpop.f32.mrb[0].mxu0
      %v8909 = vadd.f32 0.0, %v8908
      %v8910 = vpop.f32.mrb[0].mxu0
      %8911 = vmatprep.mubr.bf16.mxu0 0
      %8912 = vmatmul.mubr.bf16.gmra.mrb[0].mxu0 %v8799
      %v8913 = vpop.f32.mrb[0].mxu0
      %v8914 = vadd.f32 0.0, %v8913
      %v8915 = vpop.f32.mrb[0].mxu0
      %v8916 = vpop.f32.mrb[0].mxu0
      %v8917 = vadd.f32 0.0, %v8916
      %v8918 = vpop.f32.mrb[0].mxu0
      %8919 = vmatprep.mubr.bf16.mxu0 0
      %8920 = vmatmul.mubr.bf16.gmra.mrb[0].mxu0 %v8802
      %v8921 = vpop.f32.mrb[0].mxu0
      %v8922 = vadd.f32 0.0, %v8921
      %v8923 = vpop.f32.mrb[0].mxu0
      %v8924 = vpop.f32.mrb[0].mxu0
      %v8925 = vadd.f32 0.0, %v8924
      %v8926 = vpop.f32.mrb[0].mxu0
      %8927 = vmatprep.mubr.bf16.mxu0 0
      %8928 = vmatmul.mubr.bf16.gmra.mrb[0].mxu0 %v8805
      %v8929 = vpop.f32.mrb[0].mxu0
      %v8930 = vadd.f32 0.0, %v8929
      %v8931 = vpop.f32.mrb[0].mxu0
      %v8932 = vpop.f32.mrb[0].mxu0
      %v8933 = vadd.f32 0.0, %v8932
      %v8934 = vpop.f32.mrb[0].mxu0
      %8935 = vmatprep.mubr.bf16.mxu0 0
      %8936 = vmatmul.mubr.bf16.gmra.mrb[0].mxu0 %v8808
      %v8937 = vpop.f32.mrb[0].mxu0
      %v8938 = vadd.f32 0.0, %v8937
      %v8939 = vpop.f32.mrb[0].mxu0
      %v8940 = vpop.f32.mrb[0].mxu0
      %v8941 = vadd.f32 0.0, %v8940
      %v8942 = vpop.f32.mrb[0].mxu0
      %8943 = vmatprep.mubr.bf16.mxu0 0
      %8944 = vmatmul.mubr.bf16.gmra.mrb[0].mxu0 %v8811
      %v8945 = vpop.f32.mrb[0].mxu0
      %v8946 = vadd.f32 0.0, %v8945
      %v8947 = vpop.f32.mrb[0].mxu0
      %v8948 = vpop.f32.mrb[0].mxu0
      %v8949 = vadd.f32 0.0, %v8948
      %v8950 = vpop.f32.mrb[0].mxu0
      %8951 = vmatprep.mubr.bf16.mxu0 0
      %8952 = vmatmul.mubr.bf16.gmra.mrb[0].mxu0 %v8814
      %v8953 = vpop.f32.mrb[0].mxu0
      %v8954 = vadd.f32 0.0, %v8953
      %v8955 = vpop.f32.mrb[0].mxu0
      %v8956 = vpop.f32.mrb[0].mxu0
      %v8957 = vadd.f32 0.0, %v8956
      %v8958 = vpop.f32.mrb[0].mxu0
      %8959 = vmatprep.mubr.bf16.mxu0 0
      %8960 = vmatmul.mubr.bf16.gmra.mrb[0].mxu0 %v8817
      %v8961 = vpop.f32.mrb[0].mxu0
      %v8962 = vadd.f32 0.0, %v8961
      %v8963 = vpop.f32.mrb[0].mxu0
      %v8964 = vpop.f32.mrb[0].mxu0
      %v8965 = vadd.f32 0.0, %v8964
      %v8966 = vpop.f32.mrb[0].mxu0
      %8967 = vmatprep.mubr.bf16.mxu0 0
      %8968 = vmatmul.mubr.bf16.gmra.mrb[0].mxu0 %v8820
      %v8969 = vpop.f32.mrb[0].mxu0
      %v8970 = vadd.f32 0.0, %v8969
      %v8971 = vpop.f32.mrb[0].mxu0
      %v8972 = vpop.f32.mrb[0].mxu0
      %v8973 = vadd.f32 0.0, %v8972
      %v8974 = vpop.f32.mrb[0].mxu0
      %8975 = vmatprep.mubr.bf16.mxu0 0
      %8976 = vmatmul.mubr.bf16.gmra.mrb[0].mxu0 %v8823
      %v8977 = vpop.f32.mrb[0].mxu0
      %v8978 = vadd.f32 0.0, %v8977
      %v8979 = vpop.f32.mrb[0].mxu0
      %v8980 = vpop.f32.mrb[0].mxu0
      %v8981 = vadd.f32 0.0, %v8980
      %v8982 = vpop.f32.mrb[0].mxu0
      %8983 = vmatprep.mubr.bf16.mxu0 0
      %8984 = vmatmul.mubr.bf16.gmra.mrb[0].mxu0 %v8826
      %v8985 = vpop.f32.mrb[0].mxu0
      %v8986 = vadd.f32 0.0, %v8985
      %v8987 = vpop.f32.mrb[0].mxu0
      %v8988 = vpop.f32.mrb[0].mxu0
      %v8989 = vadd.f32 0.0, %v8988
      %v8990 = vpop.f32.mrb[0].mxu0
      %8991 = vdwg.mxu0
      %v8992 = vadd.f32 %v8605, %v8866
      %v8993 = vadd.f32 %v8608, %v8869
      %v8994 = vadd.f32 %v8613, %v8874
      %v8995 = vadd.f32 %v8616, %v8877
      %v8996 = vadd.f32 %v8621, %v8882
      %v8997 = vadd.f32 %v8624, %v8885
      %v8998 = vadd.f32 %v8629, %v8890
      %v8999 = vadd.f32 %v8632, %v8893
      %v9000 = vadd.f32 %v8637, %v8898
      %v9001 = vadd.f32 %v8640, %v8901
      %v9002 = vadd.f32 %v8645, %v8906
      %v9003 = vadd.f32 %v8648, %v8909
      %v9004 = vadd.f32 %v8653, %v8914
      %v9005 = vadd.f32 %v8656, %v8917
      %v9006 = vadd.f32 %v8661, %v8922
      %v9007 = vadd.f32 %v8664, %v8925
      %v9008 = vadd.f32 %v8669, %v8930
      %v9009 = vadd.f32 %v8672, %v8933
      %v9010 = vadd.f32 %v8677, %v8938
      %v9011 = vadd.f32 %v8680, %v8941
      %v9012 = vadd.f32 %v8685, %v8946
      %v9013 = vadd.f32 %v8688, %v8949
      %v9014 = vadd.f32 %v8693, %v8954
      %v9015 = vadd.f32 %v8696, %v8957
      %v9016 = vadd.f32 %v8701, %v8962
      %v9017 = vadd.f32 %v8704, %v8965
      %v9018 = vadd.f32 %v8709, %v8970
      %v9019 = vadd.f32 %v8712, %v8973
      %v9020 = vadd.f32 %v8717, %v8978
      %v9021 = vadd.f32 %v8720, %v8981
      %v9022 = vadd.f32 %v8725, %v8986
      %v9023 = vadd.f32 %v8728, %v8989
      %s9024 = scalar_lea.vmem %s165, 1000
      %v9025 = vld [vmem:[%s9024] sm:$0xff]
      %v9026 = vld [vmem:[%s9024 + $0x8] sm:$0xff]
      %v9027 = vld [vmem:[%s9024 + $0x10] sm:$0xff]
      %v9028 = vld [vmem:[%s9024 + $0x18] sm:$0xff]
      %v9029 = vld [vmem:[%s9024 + $0x28] sm:$0xff]
      %v9030 = vld [vmem:[%s9024 + $0x30] sm:$0xff]
      %v9031 = vld [vmem:[%s9024 + $0x38] sm:$0xff]
      %v9032 = vld [vmem:[%s9024 + $0x40] sm:$0xff]
      %v9033 = vld [vmem:[%s9024 + $0x50] sm:$0xff]
      %v9034 = vld [vmem:[%s9024 + $0x58] sm:$0xff]
      %v9035 = vld [vmem:[%s9024 + $0x60] sm:$0xff]
      %v9036 = vld [vmem:[%s9024 + $0x68] sm:$0xff]
      %v9037 = vld [vmem:[%s9024 + $0x78] sm:$0xff]
      %v9038 = vld [vmem:[%s9024 + $0x80] sm:$0xff]
      %v9039 = vld [vmem:[%s9024 + $0x88] sm:$0xff]
      %v9040 = vld [vmem:[%s9024 + $0x90] sm:$0xff]
      %v9041 = vld [vmem:[%s9024 + $0xa0] sm:$0xff]
      %v9042 = vld [vmem:[%s9024 + $0xa8] sm:$0xff]
      %v9043 = vld [vmem:[%s9024 + $0xb0] sm:$0xff]
      %v9044 = vld [vmem:[%s9024 + $0xb8] sm:$0xff]
      %v9045 = vld [vmem:[%s9024 + $0xc8] sm:$0xff]
      %v9046 = vld [vmem:[%s9024 + $0xd0] sm:$0xff]
      %v9047 = vld [vmem:[%s9024 + $0xd8] sm:$0xff]
      %v9048 = vld [vmem:[%s9024 + $0xe0] sm:$0xff]
      %v9049 = vld [vmem:[%s9024 + $0xf0] sm:$0xff]
      %v9050 = vld [vmem:[%s9024 + $0xf8] sm:$0xff]
      %v9051 = vld [vmem:[%s9024 + $0x100] sm:$0xff]
      %v9052 = vld [vmem:[%s9024 + $0x108] sm:$0xff]
      %v9053 = vld [vmem:[%s9024 + $0x118] sm:$0xff]
      %v9054 = vld [vmem:[%s9024 + $0x120] sm:$0xff]
      %v9055 = vld [vmem:[%s9024 + $0x128] sm:$0xff]
      %v9056 = vld [vmem:[%s9024 + $0x130] sm:$0xff]
      %v9057 = vpack.c.bf16 %v9026, %v9025
      %v9058 = vpack.c.bf16 %v9028, %v9027
      %v9059 = vpack.c.bf16 %v9030, %v9029
      %v9060 = vpack.c.bf16 %v9032, %v9031
      %v9061 = vpack.c.bf16 %v9034, %v9033
      %v9062 = vpack.c.bf16 %v9036, %v9035
      %v9063 = vpack.c.bf16 %v9038, %v9037
      %v9064 = vpack.c.bf16 %v9040, %v9039
      %v9065 = vpack.c.bf16 %v9042, %v9041
      %v9066 = vpack.c.bf16 %v9044, %v9043
      %v9067 = vpack.c.bf16 %v9046, %v9045
      %v9068 = vpack.c.bf16 %v9048, %v9047
      %v9069 = vpack.c.bf16 %v9050, %v9049
      %v9070 = vpack.c.bf16 %v9052, %v9051
      %v9071 = vpack.c.bf16 %v9054, %v9053
      %v9072 = vpack.c.bf16 %v9056, %v9055
      %v9073 = vld [vmem:[%s1044] sm:$0x3]
      %v9075 = vsel %vm272, %v9057, 0
      %v9078 = vsel %vm272, %v9058, 0
      %v9081 = vsel %vm272, %v9059, 0
      %v9084 = vsel %vm272, %v9060, 0
      %v9087 = vsel %vm272, %v9061, 0
      %v9090 = vsel %vm272, %v9062, 0
      %v9093 = vsel %vm272, %v9063, 0
      %v9096 = vsel %vm272, %v9064, 0
      %v9099 = vsel %vm272, %v9065, 0
      %v9102 = vsel %vm272, %v9066, 0
      %v9105 = vsel %vm272, %v9067, 0
      %v9108 = vsel %vm272, %v9068, 0
      %v9111 = vsel %vm272, %v9069, 0
      %v9114 = vsel %vm272, %v9070, 0
      %v9117 = vsel %vm272, %v9071, 0
      %v9120 = vsel %vm272, %v9072, 0
      %v9123 = vand.u32 %v9073, %v324
      %9125 = vmatprep.subr.bf16.mxu0 0
      %9126 = vmatpush1.bf16.msra.mxu0 %v9123
      %9127 = vmatprep.subr.bf16.mxu0 0
      %9128 = vmatpush1.bf16.msra.mxu0 0
      %9129 = vmatprep.subr.bf16.mxu0 0
      %9130 = vmatpush1.bf16.msra.mxu0 0
      %9131 = vmatprep.subr.bf16.mxu0 0
      %9132 = vmatpush1.bf16.msra.mxu0 0
      %9133 = vmatprep.subr.bf16.mxu0 0
      %9134 = vmatpush1.bf16.msra.mxu0 0
      %9135 = vmatprep.subr.bf16.mxu0 0
      %9136 = vmatpush1.bf16.msra.mxu0 0
      %9137 = vmatprep.subr.bf16.mxu0 0
      %9138 = vmatpush1.bf16.msra.mxu0 0
      %9139 = vmatprep.subr.bf16.mxu0 0
      %9140 = vmatpush1.bf16.msra.mxu0 0
      %9141 = vmatprep.subr.bf16.mxu0 0
      %9142 = vmatpush1.bf16.msra.mxu0 0
      %9143 = vmatprep.subr.bf16.mxu0 0
      %9144 = vmatpush1.bf16.msra.mxu0 0
      %9145 = vmatprep.subr.bf16.mxu0 0
      %9146 = vmatpush1.bf16.msra.mxu0 0
      %9147 = vmatprep.subr.bf16.mxu0 0
      %9148 = vmatpush1.bf16.msra.mxu0 0
      %9149 = vmatprep.subr.bf16.mxu0 0
      %9150 = vmatpush1.bf16.msra.mxu0 0
      %9151 = vmatprep.subr.bf16.mxu0 0
      %9152 = vmatpush1.bf16.msra.mxu0 0
      %9153 = vmatprep.subr.bf16.mxu0 0
      %9154 = vmatpush1.bf16.msra.mxu0 0
      %9155 = vmatprep.subr.bf16.mxu0 0
      %9156 = vmatpush1.bf16.msra.mxu0 0
      %9157 = vmatprep.mubr.bf16.mxu0 0
      %9158 = vmatmul.mubr.bf16.gmra.mrb[0].mxu0 %v9075
      %v9159 = vpop.f32.mrb[0].mxu0
      %v9160 = vadd.f32 0.0, %v9159
      %v9161 = vpop.f32.mrb[0].mxu0
      %v9162 = vpop.f32.mrb[0].mxu0
      %v9163 = vadd.f32 0.0, %v9162
      %v9164 = vpop.f32.mrb[0].mxu0
      %9165 = vmatprep.mubr.bf16.mxu0 0
      %9166 = vmatmul.mubr.bf16.gmra.mrb[0].mxu0 %v9078
      %v9167 = vpop.f32.mrb[0].mxu0
      %v9168 = vadd.f32 0.0, %v9167
      %v9169 = vpop.f32.mrb[0].mxu0
      %v9170 = vpop.f32.mrb[0].mxu0
      %v9171 = vadd.f32 0.0, %v9170
      %v9172 = vpop.f32.mrb[0].mxu0
      %9173 = vmatprep.mubr.bf16.mxu0 0
      %9174 = vmatmul.mubr.bf16.gmra.mrb[0].mxu0 %v9081
      %v9175 = vpop.f32.mrb[0].mxu0
      %v9176 = vadd.f32 0.0, %v9175
      %v9177 = vpop.f32.mrb[0].mxu0
      %v9178 = vpop.f32.mrb[0].mxu0
      %v9179 = vadd.f32 0.0, %v9178
      %v9180 = vpop.f32.mrb[0].mxu0
      %9181 = vmatprep.mubr.bf16.mxu0 0
      %9182 = vmatmul.mubr.bf16.gmra.mrb[0].mxu0 %v9084
      %v9183 = vpop.f32.mrb[0].mxu0
      %v9184 = vadd.f32 0.0, %v9183
      %v9185 = vpop.f32.mrb[0].mxu0
      %v9186 = vpop.f32.mrb[0].mxu0
      %v9187 = vadd.f32 0.0, %v9186
      %v9188 = vpop.f32.mrb[0].mxu0
      %9189 = vmatprep.mubr.bf16.mxu0 0
      %9190 = vmatmul.mubr.bf16.gmra.mrb[0].mxu0 %v9087
      %v9191 = vpop.f32.mrb[0].mxu0
      %v9192 = vadd.f32 0.0, %v9191
      %v9193 = vpop.f32.mrb[0].mxu0
      %v9194 = vpop.f32.mrb[0].mxu0
      %v9195 = vadd.f32 0.0, %v9194
      %v9196 = vpop.f32.mrb[0].mxu0
      %9197 = vmatprep.mubr.bf16.mxu0 0
      %9198 = vmatmul.mubr.bf16.gmra.mrb[0].mxu0 %v9090
      %v9199 = vpop.f32.mrb[0].mxu0
      %v9200 = vadd.f32 0.0, %v9199
      %v9201 = vpop.f32.mrb[0].mxu0
      %v9202 = vpop.f32.mrb[0].mxu0
      %v9203 = vadd.f32 0.0, %v9202
      %v9204 = vpop.f32.mrb[0].mxu0
      %9205 = vmatprep.mubr.bf16.mxu0 0
      %9206 = vmatmul.mubr.bf16.gmra.mrb[0].mxu0 %v9093
      %v9207 = vpop.f32.mrb[0].mxu0
      %v9208 = vadd.f32 0.0, %v9207
      %v9209 = vpop.f32.mrb[0].mxu0
      %v9210 = vpop.f32.mrb[0].mxu0
      %v9211 = vadd.f32 0.0, %v9210
      %v9212 = vpop.f32.mrb[0].mxu0
      %9213 = vmatprep.mubr.bf16.mxu0 0
      %9214 = vmatmul.mubr.bf16.gmra.mrb[0].mxu0 %v9096
      %v9215 = vpop.f32.mrb[0].mxu0
      %v9216 = vadd.f32 0.0, %v9215
      %v9217 = vpop.f32.mrb[0].mxu0
      %v9218 = vpop.f32.mrb[0].mxu0
      %v9219 = vadd.f32 0.0, %v9218
      %v9220 = vpop.f32.mrb[0].mxu0
      %9221 = vmatprep.mubr.bf16.mxu0 0
      %9222 = vmatmul.mubr.bf16.gmra.mrb[0].mxu0 %v9099
      %v9223 = vpop.f32.mrb[0].mxu0
      %v9224 = vadd.f32 0.0, %v9223
      %v9225 = vpop.f32.mrb[0].mxu0
      %v9226 = vpop.f32.mrb[0].mxu0
      %v9227 = vadd.f32 0.0, %v9226
      %v9228 = vpop.f32.mrb[0].mxu0
      %9229 = vmatprep.mubr.bf16.mxu0 0
      %9230 = vmatmul.mubr.bf16.gmra.mrb[0].mxu0 %v9102
      %v9231 = vpop.f32.mrb[0].mxu0
      %v9232 = vadd.f32 0.0, %v9231
      %v9233 = vpop.f32.mrb[0].mxu0
      %v9234 = vpop.f32.mrb[0].mxu0
      %v9235 = vadd.f32 0.0, %v9234
      %v9236 = vpop.f32.mrb[0].mxu0
      %9237 = vmatprep.mubr.bf16.mxu0 0
      %9238 = vmatmul.mubr.bf16.gmra.mrb[0].mxu0 %v9105
      %v9239 = vpop.f32.mrb[0].mxu0
      %v9240 = vadd.f32 0.0, %v9239
      %v9241 = vpop.f32.mrb[0].mxu0
      %v9242 = vpop.f32.mrb[0].mxu0
      %v9243 = vadd.f32 0.0, %v9242
      %v9244 = vpop.f32.mrb[0].mxu0
      %9245 = vmatprep.mubr.bf16.mxu0 0
      %9246 = vmatmul.mubr.bf16.gmra.mrb[0].mxu0 %v9108
      %v9247 = vpop.f32.mrb[0].mxu0
      %v9248 = vadd.f32 0.0, %v9247
      %v9249 = vpop.f32.mrb[0].mxu0
      %v9250 = vpop.f32.mrb[0].mxu0
      %v9251 = vadd.f32 0.0, %v9250
      %v9252 = vpop.f32.mrb[0].mxu0
      %9253 = vmatprep.mubr.bf16.mxu0 0
      %9254 = vmatmul.mubr.bf16.gmra.mrb[0].mxu0 %v9111
      %v9255 = vpop.f32.mrb[0].mxu0
      %v9256 = vadd.f32 0.0, %v9255
      %v9257 = vpop.f32.mrb[0].mxu0
      %v9258 = vpop.f32.mrb[0].mxu0
      %v9259 = vadd.f32 0.0, %v9258
      %v9260 = vpop.f32.mrb[0].mxu0
      %9261 = vmatprep.mubr.bf16.mxu0 0
      %9262 = vmatmul.mubr.bf16.gmra.mrb[0].mxu0 %v9114
      %v9263 = vpop.f32.mrb[0].mxu0
      %v9264 = vadd.f32 0.0, %v9263
      %v9265 = vpop.f32.mrb[0].mxu0
      %v9266 = vpop.f32.mrb[0].mxu0
      %v9267 = vadd.f32 0.0, %v9266
      %v9268 = vpop.f32.mrb[0].mxu0
      %9269 = vmatprep.mubr.bf16.mxu0 0
      %9270 = vmatmul.mubr.bf16.gmra.mrb[0].mxu0 %v9117
      %v9271 = vpop.f32.mrb[0].mxu0
      %v9272 = vadd.f32 0.0, %v9271
      %v9273 = vpop.f32.mrb[0].mxu0
      %v9274 = vpop.f32.mrb[0].mxu0
      %v9275 = vadd.f32 0.0, %v9274
      %v9276 = vpop.f32.mrb[0].mxu0
      %9277 = vmatprep.mubr.bf16.mxu0 0
      %9278 = vmatmul.mubr.bf16.gmra.mrb[0].mxu0 %v9120
      %v9279 = vpop.f32.mrb[0].mxu0
      %v9280 = vadd.f32 0.0, %v9279
      %v9281 = vpop.f32.mrb[0].mxu0
      %v9282 = vpop.f32.mrb[0].mxu0
      %v9283 = vadd.f32 0.0, %v9282
      %v9284 = vpop.f32.mrb[0].mxu0
      %9285 = vdwg.mxu0
      %v9286 = vadd.f32 %v8992, %v9160
      %v9287 = vadd.f32 %v8993, %v9163
      %v9288 = vadd.f32 %v8994, %v9168
      %v9289 = vadd.f32 %v8995, %v9171
      %v9290 = vadd.f32 %v8996, %v9176
      %v9291 = vadd.f32 %v8997, %v9179
      %v9292 = vadd.f32 %v8998, %v9184
      %v9293 = vadd.f32 %v8999, %v9187
      %v9294 = vadd.f32 %v9000, %v9192
      %v9295 = vadd.f32 %v9001, %v9195
      %v9296 = vadd.f32 %v9002, %v9200
      %v9297 = vadd.f32 %v9003, %v9203
      %v9298 = vadd.f32 %v9004, %v9208
      %v9299 = vadd.f32 %v9005, %v9211
      %v9300 = vadd.f32 %v9006, %v9216
      %v9301 = vadd.f32 %v9007, %v9219
      %v9302 = vadd.f32 %v9008, %v9224
      %v9303 = vadd.f32 %v9009, %v9227
      %v9304 = vadd.f32 %v9010, %v9232
      %v9305 = vadd.f32 %v9011, %v9235
      %v9306 = vadd.f32 %v9012, %v9240
      %v9307 = vadd.f32 %v9013, %v9243
      %v9308 = vadd.f32 %v9014, %v9248
      %v9309 = vadd.f32 %v9015, %v9251
      %v9310 = vadd.f32 %v9016, %v9256
      %v9311 = vadd.f32 %v9017, %v9259
      %v9312 = vadd.f32 %v9018, %v9264
      %v9313 = vadd.f32 %v9019, %v9267
      %v9314 = vadd.f32 %v9020, %v9272
      %v9315 = vadd.f32 %v9021, %v9275
      %v9316 = vadd.f32 %v9022, %v9280
      %v9317 = vadd.f32 %v9023, %v9283
      %v9318 = vld [vmem:[%s9024 + $0x1] sm:$0xff]
      %v9319 = vld [vmem:[%s9024 + $0x9] sm:$0xff]
      %v9320 = vld [vmem:[%s9024 + $0x11] sm:$0xff]
      %v9321 = vld [vmem:[%s9024 + $0x19] sm:$0xff]
      %v9322 = vld [vmem:[%s9024 + $0x29] sm:$0xff]
      %v9323 = vld [vmem:[%s9024 + $0x31] sm:$0xff]
      %v9324 = vld [vmem:[%s9024 + $0x39] sm:$0xff]
      %v9325 = vld [vmem:[%s9024 + $0x41] sm:$0xff]
      %v9326 = vld [vmem:[%s9024 + $0x51] sm:$0xff]
      %v9327 = vld [vmem:[%s9024 + $0x59] sm:$0xff]
      %v9328 = vld [vmem:[%s9024 + $0x61] sm:$0xff]
      %v9329 = vld [vmem:[%s9024 + $0x69] sm:$0xff]
      %v9330 = vld [vmem:[%s9024 + $0x79] sm:$0xff]
      %v9331 = vld [vmem:[%s9024 + $0x81] sm:$0xff]
      %v9332 = vld [vmem:[%s9024 + $0x89] sm:$0xff]
      %v9333 = vld [vmem:[%s9024 + $0x91] sm:$0xff]
      %v9334 = vld [vmem:[%s9024 + $0xa1] sm:$0xff]
      %v9335 = vld [vmem:[%s9024 + $0xa9] sm:$0xff]
      %v9336 = vld [vmem:[%s9024 + $0xb1] sm:$0xff]
      %v9337 = vld [vmem:[%s9024 + $0xb9] sm:$0xff]
      %v9338 = vld [vmem:[%s9024 + $0xc9] sm:$0xff]
      %v9339 = vld [vmem:[%s9024 + $0xd1] sm:$0xff]
      %v9340 = vld [vmem:[%s9024 + $0xd9] sm:$0xff]
      %v9341 = vld [vmem:[%s9024 + $0xe1] sm:$0xff]
      %v9342 = vld [vmem:[%s9024 + $0xf1] sm:$0xff]
      %v9343 = vld [vmem:[%s9024 + $0xf9] sm:$0xff]
      %v9344 = vld [vmem:[%s9024 + $0x101] sm:$0xff]
      %v9345 = vld [vmem:[%s9024 + $0x109] sm:$0xff]
      %v9346 = vld [vmem:[%s9024 + $0x119] sm:$0xff]
      %v9347 = vld [vmem:[%s9024 + $0x121] sm:$0xff]
      %v9348 = vld [vmem:[%s9024 + $0x129] sm:$0xff]
      %v9349 = vld [vmem:[%s9024 + $0x131] sm:$0xff]
      %v9350 = vpack.c.bf16 %v9319, %v9318
      %v9351 = vpack.c.bf16 %v9321, %v9320
      %v9352 = vpack.c.bf16 %v9323, %v9322
      %v9353 = vpack.c.bf16 %v9325, %v9324
      %v9354 = vpack.c.bf16 %v9327, %v9326
      %v9355 = vpack.c.bf16 %v9329, %v9328
      %v9356 = vpack.c.bf16 %v9331, %v9330
      %v9357 = vpack.c.bf16 %v9333, %v9332
      %v9358 = vpack.c.bf16 %v9335, %v9334
      %v9359 = vpack.c.bf16 %v9337, %v9336
      %v9360 = vpack.c.bf16 %v9339, %v9338
      %v9361 = vpack.c.bf16 %v9341, %v9340
      %v9362 = vpack.c.bf16 %v9343, %v9342
      %v9363 = vpack.c.bf16 %v9345, %v9344
      %v9364 = vpack.c.bf16 %v9347, %v9346
      %v9365 = vpack.c.bf16 %v9349, %v9348
      %v9366 = vld [vmem:[%s1338] sm:$0x3]
      %v9368 = vsel %vm272, %v9350, 0
      %v9371 = vsel %vm272, %v9351, 0
      %v9374 = vsel %vm272, %v9352, 0
      %v9377 = vsel %vm272, %v9353, 0
      %v9380 = vsel %vm272, %v9354, 0
      %v9383 = vsel %vm272, %v9355, 0
      %v9386 = vsel %vm272, %v9356, 0
      %v9389 = vsel %vm272, %v9357, 0
      %v9392 = vsel %vm272, %v9358, 0
      %v9395 = vsel %vm272, %v9359, 0
      %v9398 = vsel %vm272, %v9360, 0
      %v9401 = vsel %vm272, %v9361, 0
      %v9404 = vsel %vm272, %v9362, 0
      %v9407 = vsel %vm272, %v9363, 0
      %v9410 = vsel %vm272, %v9364, 0
      %v9413 = vsel %vm272, %v9365, 0
      %v9416 = vand.u32 %v9366, %v324
      %9418 = vmatprep.subr.bf16.mxu0 0
      %9419 = vmatpush1.bf16.msra.mxu0 %v9416
      %9420 = vmatprep.subr.bf16.mxu0 0
      %9421 = vmatpush1.bf16.msra.mxu0 0
      %9422 = vmatprep.subr.bf16.mxu0 0
      %9423 = vmatpush1.bf16.msra.mxu0 0
      %9424 = vmatprep.subr.bf16.mxu0 0
      %9425 = vmatpush1.bf16.msra.mxu0 0
      %9426 = vmatprep.subr.bf16.mxu0 0
      %9427 = vmatpush1.bf16.msra.mxu0 0
      %9428 = vmatprep.subr.bf16.mxu0 0
      %9429 = vmatpush1.bf16.msra.mxu0 0
      %9430 = vmatprep.subr.bf16.mxu0 0
      %9431 = vmatpush1.bf16.msra.mxu0 0
      %9432 = vmatprep.subr.bf16.mxu0 0
      %9433 = vmatpush1.bf16.msra.mxu0 0
      %9434 = vmatprep.subr.bf16.mxu0 0
      %9435 = vmatpush1.bf16.msra.mxu0 0
      %9436 = vmatprep.subr.bf16.mxu0 0
      %9437 = vmatpush1.bf16.msra.mxu0 0
      %9438 = vmatprep.subr.bf16.mxu0 0
      %9439 = vmatpush1.bf16.msra.mxu0 0
      %9440 = vmatprep.subr.bf16.mxu0 0
      %9441 = vmatpush1.bf16.msra.mxu0 0
      %9442 = vmatprep.subr.bf16.mxu0 0
      %9443 = vmatpush1.bf16.msra.mxu0 0
      %9444 = vmatprep.subr.bf16.mxu0 0
      %9445 = vmatpush1.bf16.msra.mxu0 0
      %9446 = vmatprep.subr.bf16.mxu0 0
      %9447 = vmatpush1.bf16.msra.mxu0 0
      %9448 = vmatprep.subr.bf16.mxu0 0
      %9449 = vmatpush1.bf16.msra.mxu0 0
      %9450 = vmatprep.mubr.bf16.mxu0 0
      %9451 = vmatmul.mubr.bf16.gmra.mrb[0].mxu0 %v9368
      %v9452 = vpop.f32.mrb[0].mxu0
      %v9453 = vadd.f32 0.0, %v9452
      %v9454 = vpop.f32.mrb[0].mxu0
      %v9455 = vpop.f32.mrb[0].mxu0
      %v9456 = vadd.f32 0.0, %v9455
      %v9457 = vpop.f32.mrb[0].mxu0
      %9458 = vmatprep.mubr.bf16.mxu0 0
      %9459 = vmatmul.mubr.bf16.gmra.mrb[0].mxu0 %v9371
      %v9460 = vpop.f32.mrb[0].mxu0
      %v9461 = vadd.f32 0.0, %v9460
      %v9462 = vpop.f32.mrb[0].mxu0
      %v9463 = vpop.f32.mrb[0].mxu0
      %v9464 = vadd.f32 0.0, %v9463
      %v9465 = vpop.f32.mrb[0].mxu0
      %9466 = vmatprep.mubr.bf16.mxu0 0
      %9467 = vmatmul.mubr.bf16.gmra.mrb[0].mxu0 %v9374
      %v9468 = vpop.f32.mrb[0].mxu0
      %v9469 = vadd.f32 0.0, %v9468
      %v9470 = vpop.f32.mrb[0].mxu0
      %v9471 = vpop.f32.mrb[0].mxu0
      %v9472 = vadd.f32 0.0, %v9471
      %v9473 = vpop.f32.mrb[0].mxu0
      %9474 = vmatprep.mubr.bf16.mxu0 0
      %9475 = vmatmul.mubr.bf16.gmra.mrb[0].mxu0 %v9377
      %v9476 = vpop.f32.mrb[0].mxu0
      %v9477 = vadd.f32 0.0, %v9476
      %v9478 = vpop.f32.mrb[0].mxu0
      %v9479 = vpop.f32.mrb[0].mxu0
      %v9480 = vadd.f32 0.0, %v9479
      %v9481 = vpop.f32.mrb[0].mxu0
      %9482 = vmatprep.mubr.bf16.mxu0 0
      %9483 = vmatmul.mubr.bf16.gmra.mrb[0].mxu0 %v9380
      %v9484 = vpop.f32.mrb[0].mxu0
      %v9485 = vadd.f32 0.0, %v9484
      %v9486 = vpop.f32.mrb[0].mxu0
      %v9487 = vpop.f32.mrb[0].mxu0
      %v9488 = vadd.f32 0.0, %v9487
      %v9489 = vpop.f32.mrb[0].mxu0
      %9490 = vmatprep.mubr.bf16.mxu0 0
      %9491 = vmatmul.mubr.bf16.gmra.mrb[0].mxu0 %v9383
      %v9492 = vpop.f32.mrb[0].mxu0
      %v9493 = vadd.f32 0.0, %v9492
      %v9494 = vpop.f32.mrb[0].mxu0
      %v9495 = vpop.f32.mrb[0].mxu0
      %v9496 = vadd.f32 0.0, %v9495
      %v9497 = vpop.f32.mrb[0].mxu0
      %9498 = vmatprep.mubr.bf16.mxu0 0
      %9499 = vmatmul.mubr.bf16.gmra.mrb[0].mxu0 %v9386
      %v9500 = vpop.f32.mrb[0].mxu0
      %v9501 = vadd.f32 0.0, %v9500
      %v9502 = vpop.f32.mrb[0].mxu0
      %v9503 = vpop.f32.mrb[0].mxu0
      %v9504 = vadd.f32 0.0, %v9503
      %v9505 = vpop.f32.mrb[0].mxu0
      %9506 = vmatprep.mubr.bf16.mxu0 0
      %9507 = vmatmul.mubr.bf16.gmra.mrb[0].mxu0 %v9389
      %v9508 = vpop.f32.mrb[0].mxu0
      %v9509 = vadd.f32 0.0, %v9508
      %v9510 = vpop.f32.mrb[0].mxu0
      %v9511 = vpop.f32.mrb[0].mxu0
      %v9512 = vadd.f32 0.0, %v9511
      %v9513 = vpop.f32.mrb[0].mxu0
      %9514 = vmatprep.mubr.bf16.mxu0 0
      %9515 = vmatmul.mubr.bf16.gmra.mrb[0].mxu0 %v9392
      %v9516 = vpop.f32.mrb[0].mxu0
      %v9517 = vadd.f32 0.0, %v9516
      %v9518 = vpop.f32.mrb[0].mxu0
      %v9519 = vpop.f32.mrb[0].mxu0
      %v9520 = vadd.f32 0.0, %v9519
      %v9521 = vpop.f32.mrb[0].mxu0
      %9522 = vmatprep.mubr.bf16.mxu0 0
      %9523 = vmatmul.mubr.bf16.gmra.mrb[0].mxu0 %v9395
      %v9524 = vpop.f32.mrb[0].mxu0
      %v9525 = vadd.f32 0.0, %v9524
      %v9526 = vpop.f32.mrb[0].mxu0
      %v9527 = vpop.f32.mrb[0].mxu0
      %v9528 = vadd.f32 0.0, %v9527
      %v9529 = vpop.f32.mrb[0].mxu0
      %9530 = vmatprep.mubr.bf16.mxu0 0
      %9531 = vmatmul.mubr.bf16.gmra.mrb[0].mxu0 %v9398
      %v9532 = vpop.f32.mrb[0].mxu0
      %v9533 = vadd.f32 0.0, %v9532
      %v9534 = vpop.f32.mrb[0].mxu0
      %v9535 = vpop.f32.mrb[0].mxu0
      %v9536 = vadd.f32 0.0, %v9535
      %v9537 = vpop.f32.mrb[0].mxu0
      %9538 = vmatprep.mubr.bf16.mxu0 0
      %9539 = vmatmul.mubr.bf16.gmra.mrb[0].mxu0 %v9401
      %v9540 = vpop.f32.mrb[0].mxu0
      %v9541 = vadd.f32 0.0, %v9540
      %v9542 = vpop.f32.mrb[0].mxu0
      %v9543 = vpop.f32.mrb[0].mxu0
      %v9544 = vadd.f32 0.0, %v9543
      %v9545 = vpop.f32.mrb[0].mxu0
      %9546 = vmatprep.mubr.bf16.mxu0 0
      %9547 = vmatmul.mubr.bf16.gmra.mrb[0].mxu0 %v9404
      %v9548 = vpop.f32.mrb[0].mxu0
      %v9549 = vadd.f32 0.0, %v9548
      %v9550 = vpop.f32.mrb[0].mxu0
      %v9551 = vpop.f32.mrb[0].mxu0
      %v9552 = vadd.f32 0.0, %v9551
      %v9553 = vpop.f32.mrb[0].mxu0
      %9554 = vmatprep.mubr.bf16.mxu0 0
      %9555 = vmatmul.mubr.bf16.gmra.mrb[0].mxu0 %v9407
      %v9556 = vpop.f32.mrb[0].mxu0
      %v9557 = vadd.f32 0.0, %v9556
      %v9558 = vpop.f32.mrb[0].mxu0
      %v9559 = vpop.f32.mrb[0].mxu0
      %v9560 = vadd.f32 0.0, %v9559
      %v9561 = vpop.f32.mrb[0].mxu0
      %9562 = vmatprep.mubr.bf16.mxu0 0
      %9563 = vmatmul.mubr.bf16.gmra.mrb[0].mxu0 %v9410
      %v9564 = vpop.f32.mrb[0].mxu0
      %v9565 = vadd.f32 0.0, %v9564
      %v9566 = vpop.f32.mrb[0].mxu0
      %v9567 = vpop.f32.mrb[0].mxu0
      %v9568 = vadd.f32 0.0, %v9567
      %v9569 = vpop.f32.mrb[0].mxu0
      %9570 = vmatprep.mubr.bf16.mxu0 0
      %9571 = vmatmul.mubr.bf16.gmra.mrb[0].mxu0 %v9413
      %v9572 = vpop.f32.mrb[0].mxu0
      %v9573 = vadd.f32 0.0, %v9572
      %v9574 = vpop.f32.mrb[0].mxu0
      %v9575 = vpop.f32.mrb[0].mxu0
      %v9576 = vadd.f32 0.0, %v9575
      %v9577 = vpop.f32.mrb[0].mxu0
      %9578 = vdwg.mxu0
      %v9579 = vadd.f32 %v9286, %v9453
      %v9580 = vadd.f32 %v9287, %v9456
      %v9581 = vadd.f32 %v9288, %v9461
      %v9582 = vadd.f32 %v9289, %v9464
      %v9583 = vadd.f32 %v9290, %v9469
      %v9584 = vadd.f32 %v9291, %v9472
      %v9585 = vadd.f32 %v9292, %v9477
      %v9586 = vadd.f32 %v9293, %v9480
      %v9587 = vadd.f32 %v9294, %v9485
      %v9588 = vadd.f32 %v9295, %v9488
      %v9589 = vadd.f32 %v9296, %v9493
      %v9590 = vadd.f32 %v9297, %v9496
      %v9591 = vadd.f32 %v9298, %v9501
      %v9592 = vadd.f32 %v9299, %v9504
      %v9593 = vadd.f32 %v9300, %v9509
      %v9594 = vadd.f32 %v9301, %v9512
      %v9595 = vadd.f32 %v9302, %v9517
      %v9596 = vadd.f32 %v9303, %v9520
      %v9597 = vadd.f32 %v9304, %v9525
      %v9598 = vadd.f32 %v9305, %v9528
      %v9599 = vadd.f32 %v9306, %v9533
      %v9600 = vadd.f32 %v9307, %v9536
      %v9601 = vadd.f32 %v9308, %v9541
      %v9602 = vadd.f32 %v9309, %v9544
      %v9603 = vadd.f32 %v9310, %v9549
      %v9604 = vadd.f32 %v9311, %v9552
      %v9605 = vadd.f32 %v9312, %v9557
      %v9606 = vadd.f32 %v9313, %v9560
      %v9607 = vadd.f32 %v9314, %v9565
      %v9608 = vadd.f32 %v9315, %v9568
      %v9609 = vadd.f32 %v9316, %v9573
      %v9610 = vadd.f32 %v9317, %v9576
      %v9611 = vld [vmem:[%s9024 + $0x2] sm:$0xff]
      %v9612 = vld [vmem:[%s9024 + $0xa] sm:$0xff]
      %v9613 = vld [vmem:[%s9024 + $0x12] sm:$0xff]
      %v9614 = vld [vmem:[%s9024 + $0x1a] sm:$0xff]
      %v9615 = vld [vmem:[%s9024 + $0x2a] sm:$0xff]
      %v9616 = vld [vmem:[%s9024 + $0x32] sm:$0xff]
      %v9617 = vld [vmem:[%s9024 + $0x3a] sm:$0xff]
      %v9618 = vld [vmem:[%s9024 + $0x42] sm:$0xff]
      %v9619 = vld [vmem:[%s9024 + $0x52] sm:$0xff]
      %v9620 = vld [vmem:[%s9024 + $0x5a] sm:$0xff]
      %v9621 = vld [vmem:[%s9024 + $0x62] sm:$0xff]
      %v9622 = vld [vmem:[%s9024 + $0x6a] sm:$0xff]
      %v9623 = vld [vmem:[%s9024 + $0x7a] sm:$0xff]
      %v9624 = vld [vmem:[%s9024 + $0x82] sm:$0xff]
      %v9625 = vld [vmem:[%s9024 + $0x8a] sm:$0xff]
      %v9626 = vld [vmem:[%s9024 + $0x92] sm:$0xff]
      %v9627 = vld [vmem:[%s9024 + $0xa2] sm:$0xff]
      %v9628 = vld [vmem:[%s9024 + $0xaa] sm:$0xff]
      %v9629 = vld [vmem:[%s9024 + $0xb2] sm:$0xff]
      %v9630 = vld [vmem:[%s9024 + $0xba] sm:$0xff]
      %v9631 = vld [vmem:[%s9024 + $0xca] sm:$0xff]
      %v9632 = vld [vmem:[%s9024 + $0xd2] sm:$0xff]
      %v9633 = vld [vmem:[%s9024 + $0xda] sm:$0xff]
      %v9634 = vld [vmem:[%s9024 + $0xe2] sm:$0xff]
      %v9635 = vld [vmem:[%s9024 + $0xf2] sm:$0xff]
      %v9636 = vld [vmem:[%s9024 + $0xfa] sm:$0xff]
      %v9637 = vld [vmem:[%s9024 + $0x102] sm:$0xff]
      %v9638 = vld [vmem:[%s9024 + $0x10a] sm:$0xff]
      %v9639 = vld [vmem:[%s9024 + $0x11a] sm:$0xff]
      %v9640 = vld [vmem:[%s9024 + $0x122] sm:$0xff]
      %v9641 = vld [vmem:[%s9024 + $0x12a] sm:$0xff]
      %v9642 = vld [vmem:[%s9024 + $0x132] sm:$0xff]
      %v9643 = vpack.c.bf16 %v9612, %v9611
      %v9644 = vpack.c.bf16 %v9614, %v9613
      %v9645 = vpack.c.bf16 %v9616, %v9615
      %v9646 = vpack.c.bf16 %v9618, %v9617
      %v9647 = vpack.c.bf16 %v9620, %v9619
      %v9648 = vpack.c.bf16 %v9622, %v9621
      %v9649 = vpack.c.bf16 %v9624, %v9623
      %v9650 = vpack.c.bf16 %v9626, %v9625
      %v9651 = vpack.c.bf16 %v9628, %v9627
      %v9652 = vpack.c.bf16 %v9630, %v9629
      %v9653 = vpack.c.bf16 %v9632, %v9631
      %v9654 = vpack.c.bf16 %v9634, %v9633
      %v9655 = vpack.c.bf16 %v9636, %v9635
      %v9656 = vpack.c.bf16 %v9638, %v9637
      %v9657 = vpack.c.bf16 %v9640, %v9639
      %v9658 = vpack.c.bf16 %v9642, %v9641
      %v9659 = vld [vmem:[%s1632] sm:$0x3]
      %v9661 = vsel %vm272, %v9643, 0
      %v9664 = vsel %vm272, %v9644, 0
      %v9667 = vsel %vm272, %v9645, 0
      %v9670 = vsel %vm272, %v9646, 0
      %v9673 = vsel %vm272, %v9647, 0
      %v9676 = vsel %vm272, %v9648, 0
      %v9679 = vsel %vm272, %v9649, 0
      %v9682 = vsel %vm272, %v9650, 0
      %v9685 = vsel %vm272, %v9651, 0
      %v9688 = vsel %vm272, %v9652, 0
      %v9691 = vsel %vm272, %v9653, 0
      %v9694 = vsel %vm272, %v9654, 0
      %v9697 = vsel %vm272, %v9655, 0
      %v9700 = vsel %vm272, %v9656, 0
      %v9703 = vsel %vm272, %v9657, 0
      %v9706 = vsel %vm272, %v9658, 0
      %v9709 = vand.u32 %v9659, %v324
      %9711 = vmatprep.subr.bf16.mxu0 0
      %9712 = vmatpush1.bf16.msra.mxu0 %v9709
      %9713 = vmatprep.subr.bf16.mxu0 0
      %9714 = vmatpush1.bf16.msra.mxu0 0
      %9715 = vmatprep.subr.bf16.mxu0 0
      %9716 = vmatpush1.bf16.msra.mxu0 0
      %9717 = vmatprep.subr.bf16.mxu0 0
      %9718 = vmatpush1.bf16.msra.mxu0 0
      %9719 = vmatprep.subr.bf16.mxu0 0
      %9720 = vmatpush1.bf16.msra.mxu0 0
      %9721 = vmatprep.subr.bf16.mxu0 0
      %9722 = vmatpush1.bf16.msra.mxu0 0
      %9723 = vmatprep.subr.bf16.mxu0 0
      %9724 = vmatpush1.bf16.msra.mxu0 0
      %9725 = vmatprep.subr.bf16.mxu0 0
      %9726 = vmatpush1.bf16.msra.mxu0 0
      %9727 = vmatprep.subr.bf16.mxu0 0
      %9728 = vmatpush1.bf16.msra.mxu0 0
      %9729 = vmatprep.subr.bf16.mxu0 0
      %9730 = vmatpush1.bf16.msra.mxu0 0
      %9731 = vmatprep.subr.bf16.mxu0 0
      %9732 = vmatpush1.bf16.msra.mxu0 0
      %9733 = vmatprep.subr.bf16.mxu0 0
      %9734 = vmatpush1.bf16.msra.mxu0 0
      %9735 = vmatprep.subr.bf16.mxu0 0
      %9736 = vmatpush1.bf16.msra.mxu0 0
      %9737 = vmatprep.subr.bf16.mxu0 0
      %9738 = vmatpush1.bf16.msra.mxu0 0
      %9739 = vmatprep.subr.bf16.mxu0 0
      %9740 = vmatpush1.bf16.msra.mxu0 0
      %9741 = vmatprep.subr.bf16.mxu0 0
      %9742 = vmatpush1.bf16.msra.mxu0 0
      %9743 = vmatprep.mubr.bf16.mxu0 0
      %9744 = vmatmul.mubr.bf16.gmra.mrb[0].mxu0 %v9661
      %v9745 = vpop.f32.mrb[0].mxu0
      %v9746 = vadd.f32 0.0, %v9745
      %v9747 = vpop.f32.mrb[0].mxu0
      %v9748 = vpop.f32.mrb[0].mxu0
      %v9749 = vadd.f32 0.0, %v9748
      %v9750 = vpop.f32.mrb[0].mxu0
      %9751 = vmatprep.mubr.bf16.mxu0 0
      %9752 = vmatmul.mubr.bf16.gmra.mrb[0].mxu0 %v9664
      %v9753 = vpop.f32.mrb[0].mxu0
      %v9754 = vadd.f32 0.0, %v9753
      %v9755 = vpop.f32.mrb[0].mxu0
      %v9756 = vpop.f32.mrb[0].mxu0
      %v9757 = vadd.f32 0.0, %v9756
      %v9758 = vpop.f32.mrb[0].mxu0
      %9759 = vmatprep.mubr.bf16.mxu0 0
      %9760 = vmatmul.mubr.bf16.gmra.mrb[0].mxu0 %v9667
      %v9761 = vpop.f32.mrb[0].mxu0
      %v9762 = vadd.f32 0.0, %v9761
      %v9763 = vpop.f32.mrb[0].mxu0
      %v9764 = vpop.f32.mrb[0].mxu0
      %v9765 = vadd.f32 0.0, %v9764
      %v9766 = vpop.f32.mrb[0].mxu0
      %9767 = vmatprep.mubr.bf16.mxu0 0
      %9768 = vmatmul.mubr.bf16.gmra.mrb[0].mxu0 %v9670
      %v9769 = vpop.f32.mrb[0].mxu0
      %v9770 = vadd.f32 0.0, %v9769
      %v9771 = vpop.f32.mrb[0].mxu0
      %v9772 = vpop.f32.mrb[0].mxu0
      %v9773 = vadd.f32 0.0, %v9772
      %v9774 = vpop.f32.mrb[0].mxu0
      %9775 = vmatprep.mubr.bf16.mxu0 0
      %9776 = vmatmul.mubr.bf16.gmra.mrb[0].mxu0 %v9673
      %v9777 = vpop.f32.mrb[0].mxu0
      %v9778 = vadd.f32 0.0, %v9777
      %v9779 = vpop.f32.mrb[0].mxu0
      %v9780 = vpop.f32.mrb[0].mxu0
      %v9781 = vadd.f32 0.0, %v9780
      %v9782 = vpop.f32.mrb[0].mxu0
      %9783 = vmatprep.mubr.bf16.mxu0 0
      %9784 = vmatmul.mubr.bf16.gmra.mrb[0].mxu0 %v9676
      %v9785 = vpop.f32.mrb[0].mxu0
      %v9786 = vadd.f32 0.0, %v9785
      %v9787 = vpop.f32.mrb[0].mxu0
      %v9788 = vpop.f32.mrb[0].mxu0
      %v9789 = vadd.f32 0.0, %v9788
      %v9790 = vpop.f32.mrb[0].mxu0
      %9791 = vmatprep.mubr.bf16.mxu0 0
      %9792 = vmatmul.mubr.bf16.gmra.mrb[0].mxu0 %v9679
      %v9793 = vpop.f32.mrb[0].mxu0
      %v9794 = vadd.f32 0.0, %v9793
      %v9795 = vpop.f32.mrb[0].mxu0
      %v9796 = vpop.f32.mrb[0].mxu0
      %v9797 = vadd.f32 0.0, %v9796
      %v9798 = vpop.f32.mrb[0].mxu0
      %9799 = vmatprep.mubr.bf16.mxu0 0
      %9800 = vmatmul.mubr.bf16.gmra.mrb[0].mxu0 %v9682
      %v9801 = vpop.f32.mrb[0].mxu0
      %v9802 = vadd.f32 0.0, %v9801
      %v9803 = vpop.f32.mrb[0].mxu0
      %v9804 = vpop.f32.mrb[0].mxu0
      %v9805 = vadd.f32 0.0, %v9804
      %v9806 = vpop.f32.mrb[0].mxu0
      %9807 = vmatprep.mubr.bf16.mxu0 0
      %9808 = vmatmul.mubr.bf16.gmra.mrb[0].mxu0 %v9685
      %v9809 = vpop.f32.mrb[0].mxu0
      %v9810 = vadd.f32 0.0, %v9809
      %v9811 = vpop.f32.mrb[0].mxu0
      %v9812 = vpop.f32.mrb[0].mxu0
      %v9813 = vadd.f32 0.0, %v9812
      %v9814 = vpop.f32.mrb[0].mxu0
      %9815 = vmatprep.mubr.bf16.mxu0 0
      %9816 = vmatmul.mubr.bf16.gmra.mrb[0].mxu0 %v9688
      %v9817 = vpop.f32.mrb[0].mxu0
      %v9818 = vadd.f32 0.0, %v9817
      %v9819 = vpop.f32.mrb[0].mxu0
      %v9820 = vpop.f32.mrb[0].mxu0
      %v9821 = vadd.f32 0.0, %v9820
      %v9822 = vpop.f32.mrb[0].mxu0
      %9823 = vmatprep.mubr.bf16.mxu0 0
      %9824 = vmatmul.mubr.bf16.gmra.mrb[0].mxu0 %v9691
      %v9825 = vpop.f32.mrb[0].mxu0
      %v9826 = vadd.f32 0.0, %v9825
      %v9827 = vpop.f32.mrb[0].mxu0
      %v9828 = vpop.f32.mrb[0].mxu0
      %v9829 = vadd.f32 0.0, %v9828
      %v9830 = vpop.f32.mrb[0].mxu0
      %9831 = vmatprep.mubr.bf16.mxu0 0
      %9832 = vmatmul.mubr.bf16.gmra.mrb[0].mxu0 %v9694
      %v9833 = vpop.f32.mrb[0].mxu0
      %v9834 = vadd.f32 0.0, %v9833
      %v9835 = vpop.f32.mrb[0].mxu0
      %v9836 = vpop.f32.mrb[0].mxu0
      %v9837 = vadd.f32 0.0, %v9836
      %v9838 = vpop.f32.mrb[0].mxu0
      %9839 = vmatprep.mubr.bf16.mxu0 0
      %9840 = vmatmul.mubr.bf16.gmra.mrb[0].mxu0 %v9697
      %v9841 = vpop.f32.mrb[0].mxu0
      %v9842 = vadd.f32 0.0, %v9841
      %v9843 = vpop.f32.mrb[0].mxu0
      %v9844 = vpop.f32.mrb[0].mxu0
      %v9845 = vadd.f32 0.0, %v9844
      %v9846 = vpop.f32.mrb[0].mxu0
      %9847 = vmatprep.mubr.bf16.mxu0 0
      %9848 = vmatmul.mubr.bf16.gmra.mrb[0].mxu0 %v9700
      %v9849 = vpop.f32.mrb[0].mxu0
      %v9850 = vadd.f32 0.0, %v9849
      %v9851 = vpop.f32.mrb[0].mxu0
      %v9852 = vpop.f32.mrb[0].mxu0
      %v9853 = vadd.f32 0.0, %v9852
      %v9854 = vpop.f32.mrb[0].mxu0
      %9855 = vmatprep.mubr.bf16.mxu0 0
      %9856 = vmatmul.mubr.bf16.gmra.mrb[0].mxu0 %v9703
      %v9857 = vpop.f32.mrb[0].mxu0
      %v9858 = vadd.f32 0.0, %v9857
      %v9859 = vpop.f32.mrb[0].mxu0
      %v9860 = vpop.f32.mrb[0].mxu0
      %v9861 = vadd.f32 0.0, %v9860
      %v9862 = vpop.f32.mrb[0].mxu0
      %9863 = vmatprep.mubr.bf16.mxu0 0
      %9864 = vmatmul.mubr.bf16.gmra.mrb[0].mxu0 %v9706
      %v9865 = vpop.f32.mrb[0].mxu0
      %v9866 = vadd.f32 0.0, %v9865
      %v9867 = vpop.f32.mrb[0].mxu0
      %v9868 = vpop.f32.mrb[0].mxu0
      %v9869 = vadd.f32 0.0, %v9868
      %v9870 = vpop.f32.mrb[0].mxu0
      %9871 = vdwg.mxu0
      %v9872 = vadd.f32 %v9579, %v9746
      %v9873 = vadd.f32 %v9580, %v9749
      %v9874 = vadd.f32 %v9581, %v9754
      %v9875 = vadd.f32 %v9582, %v9757
      %v9876 = vadd.f32 %v9583, %v9762
      %v9877 = vadd.f32 %v9584, %v9765
      %v9878 = vadd.f32 %v9585, %v9770
      %v9879 = vadd.f32 %v9586, %v9773
      %v9880 = vadd.f32 %v9587, %v9778
      %v9881 = vadd.f32 %v9588, %v9781
      %v9882 = vadd.f32 %v9589, %v9786
      %v9883 = vadd.f32 %v9590, %v9789
      %v9884 = vadd.f32 %v9591, %v9794
      %v9885 = vadd.f32 %v9592, %v9797
      %v9886 = vadd.f32 %v9593, %v9802
      %v9887 = vadd.f32 %v9594, %v9805
      %v9888 = vadd.f32 %v9595, %v9810
      %v9889 = vadd.f32 %v9596, %v9813
      %v9890 = vadd.f32 %v9597, %v9818
      %v9891 = vadd.f32 %v9598, %v9821
      %v9892 = vadd.f32 %v9599, %v9826
      %v9893 = vadd.f32 %v9600, %v9829
      %v9894 = vadd.f32 %v9601, %v9834
      %v9895 = vadd.f32 %v9602, %v9837
      %v9896 = vadd.f32 %v9603, %v9842
      %v9897 = vadd.f32 %v9604, %v9845
      %v9898 = vadd.f32 %v9605, %v9850
      %v9899 = vadd.f32 %v9606, %v9853
      %v9900 = vadd.f32 %v9607, %v9858
      %v9901 = vadd.f32 %v9608, %v9861
      %v9902 = vadd.f32 %v9609, %v9866
      %v9903 = vadd.f32 %v9610, %v9869
      %s9904 = scalar_lea.vmem %s165, 1040
      %v9905 = vld [vmem:[%s9904] sm:$0xff]
      %v9906 = vld [vmem:[%s9904 + $0x8] sm:$0xff]
      %v9907 = vld [vmem:[%s9904 + $0x10] sm:$0xff]
      %v9908 = vld [vmem:[%s9904 + $0x18] sm:$0xff]
      %v9909 = vld [vmem:[%s9904 + $0x28] sm:$0xff]
      %v9910 = vld [vmem:[%s9904 + $0x30] sm:$0xff]
      %v9911 = vld [vmem:[%s9904 + $0x38] sm:$0xff]
      %v9912 = vld [vmem:[%s9904 + $0x40] sm:$0xff]
      %v9913 = vld [vmem:[%s9904 + $0x50] sm:$0xff]
      %v9914 = vld [vmem:[%s9904 + $0x58] sm:$0xff]
      %v9915 = vld [vmem:[%s9904 + $0x60] sm:$0xff]
      %v9916 = vld [vmem:[%s9904 + $0x68] sm:$0xff]
      %v9917 = vld [vmem:[%s9904 + $0x78] sm:$0xff]
      %v9918 = vld [vmem:[%s9904 + $0x80] sm:$0xff]
      %v9919 = vld [vmem:[%s9904 + $0x88] sm:$0xff]
      %v9920 = vld [vmem:[%s9904 + $0x90] sm:$0xff]
      %v9921 = vld [vmem:[%s9904 + $0xa0] sm:$0xff]
      %v9922 = vld [vmem:[%s9904 + $0xa8] sm:$0xff]
      %v9923 = vld [vmem:[%s9904 + $0xb0] sm:$0xff]
      %v9924 = vld [vmem:[%s9904 + $0xb8] sm:$0xff]
      %v9925 = vld [vmem:[%s9904 + $0xc8] sm:$0xff]
      %v9926 = vld [vmem:[%s9904 + $0xd0] sm:$0xff]
      %v9927 = vld [vmem:[%s9904 + $0xd8] sm:$0xff]
      %v9928 = vld [vmem:[%s9904 + $0xe0] sm:$0xff]
      %v9929 = vld [vmem:[%s9904 + $0xf0] sm:$0xff]
      %v9930 = vld [vmem:[%s9904 + $0xf8] sm:$0xff]
      %v9931 = vld [vmem:[%s9904 + $0x100] sm:$0xff]
      %v9932 = vld [vmem:[%s9904 + $0x108] sm:$0xff]
      %v9933 = vld [vmem:[%s9904 + $0x118] sm:$0xff]
      %v9934 = vld [vmem:[%s9904 + $0x120] sm:$0xff]
      %v9935 = vld [vmem:[%s9904 + $0x128] sm:$0xff]
      %v9936 = vld [vmem:[%s9904 + $0x130] sm:$0xff]
      %v9937 = vpack.c.bf16 %v9906, %v9905
      %v9938 = vpack.c.bf16 %v9908, %v9907
      %v9939 = vpack.c.bf16 %v9910, %v9909
      %v9940 = vpack.c.bf16 %v9912, %v9911
      %v9941 = vpack.c.bf16 %v9914, %v9913
      %v9942 = vpack.c.bf16 %v9916, %v9915
      %v9943 = vpack.c.bf16 %v9918, %v9917
      %v9944 = vpack.c.bf16 %v9920, %v9919
      %v9945 = vpack.c.bf16 %v9922, %v9921
      %v9946 = vpack.c.bf16 %v9924, %v9923
      %v9947 = vpack.c.bf16 %v9926, %v9925
      %v9948 = vpack.c.bf16 %v9928, %v9927
      %v9949 = vpack.c.bf16 %v9930, %v9929
      %v9950 = vpack.c.bf16 %v9932, %v9931
      %v9951 = vpack.c.bf16 %v9934, %v9933
      %v9952 = vpack.c.bf16 %v9936, %v9935
      %v9953 = vld [vmem:[%s1927] sm:$0x3]
      %v9955 = vsel %vm272, %v9937, 0
      %v9958 = vsel %vm272, %v9938, 0
      %v9961 = vsel %vm272, %v9939, 0
      %v9964 = vsel %vm272, %v9940, 0
      %v9967 = vsel %vm272, %v9941, 0
      %v9970 = vsel %vm272, %v9942, 0
      %v9973 = vsel %vm272, %v9943, 0
      %v9976 = vsel %vm272, %v9944, 0
      %v9979 = vsel %vm272, %v9945, 0
      %v9982 = vsel %vm272, %v9946, 0
      %v9985 = vsel %vm272, %v9947, 0
      %v9988 = vsel %vm272, %v9948, 0
      %v9991 = vsel %vm272, %v9949, 0
      %v9994 = vsel %vm272, %v9950, 0
      %v9997 = vsel %vm272, %v9951, 0
      %v10000 = vsel %vm272, %v9952, 0
      %v10003 = vand.u32 %v9953, %v324
      %10005 = vmatprep.subr.bf16.mxu0 0
      %10006 = vmatpush1.bf16.msra.mxu0 %v10003
      %10007 = vmatprep.subr.bf16.mxu0 0
      %10008 = vmatpush1.bf16.msra.mxu0 0
      %10009 = vmatprep.subr.bf16.mxu0 0
      %10010 = vmatpush1.bf16.msra.mxu0 0
      %10011 = vmatprep.subr.bf16.mxu0 0
      %10012 = vmatpush1.bf16.msra.mxu0 0
      %10013 = vmatprep.subr.bf16.mxu0 0
      %10014 = vmatpush1.bf16.msra.mxu0 0
      %10015 = vmatprep.subr.bf16.mxu0 0
      %10016 = vmatpush1.bf16.msra.mxu0 0
      %10017 = vmatprep.subr.bf16.mxu0 0
      %10018 = vmatpush1.bf16.msra.mxu0 0
      %10019 = vmatprep.subr.bf16.mxu0 0
      %10020 = vmatpush1.bf16.msra.mxu0 0
      %10021 = vmatprep.subr.bf16.mxu0 0
      %10022 = vmatpush1.bf16.msra.mxu0 0
      %10023 = vmatprep.subr.bf16.mxu0 0
      %10024 = vmatpush1.bf16.msra.mxu0 0
      %10025 = vmatprep.subr.bf16.mxu0 0
      %10026 = vmatpush1.bf16.msra.mxu0 0
      %10027 = vmatprep.subr.bf16.mxu0 0
      %10028 = vmatpush1.bf16.msra.mxu0 0
      %10029 = vmatprep.subr.bf16.mxu0 0
      %10030 = vmatpush1.bf16.msra.mxu0 0
      %10031 = vmatprep.subr.bf16.mxu0 0
      %10032 = vmatpush1.bf16.msra.mxu0 0
      %10033 = vmatprep.subr.bf16.mxu0 0
      %10034 = vmatpush1.bf16.msra.mxu0 0
      %10035 = vmatprep.subr.bf16.mxu0 0
      %10036 = vmatpush1.bf16.msra.mxu0 0
      %10037 = vmatprep.mubr.bf16.mxu0 0
      %10038 = vmatmul.mubr.bf16.gmra.mrb[0].mxu0 %v9955
      %v10039 = vpop.f32.mrb[0].mxu0
      %v10040 = vadd.f32 0.0, %v10039
      %v10041 = vpop.f32.mrb[0].mxu0
      %v10042 = vpop.f32.mrb[0].mxu0
      %v10043 = vadd.f32 0.0, %v10042
      %v10044 = vpop.f32.mrb[0].mxu0
      %10045 = vmatprep.mubr.bf16.mxu0 0
      %10046 = vmatmul.mubr.bf16.gmra.mrb[0].mxu0 %v9958
      %v10047 = vpop.f32.mrb[0].mxu0
      %v10048 = vadd.f32 0.0, %v10047
      %v10049 = vpop.f32.mrb[0].mxu0
      %v10050 = vpop.f32.mrb[0].mxu0
      %v10051 = vadd.f32 0.0, %v10050
      %v10052 = vpop.f32.mrb[0].mxu0
      %10053 = vmatprep.mubr.bf16.mxu0 0
      %10054 = vmatmul.mubr.bf16.gmra.mrb[0].mxu0 %v9961
      %v10055 = vpop.f32.mrb[0].mxu0
      %v10056 = vadd.f32 0.0, %v10055
      %v10057 = vpop.f32.mrb[0].mxu0
      %v10058 = vpop.f32.mrb[0].mxu0
      %v10059 = vadd.f32 0.0, %v10058
      %v10060 = vpop.f32.mrb[0].mxu0
      %10061 = vmatprep.mubr.bf16.mxu0 0
      %10062 = vmatmul.mubr.bf16.gmra.mrb[0].mxu0 %v9964
      %v10063 = vpop.f32.mrb[0].mxu0
      %v10064 = vadd.f32 0.0, %v10063
      %v10065 = vpop.f32.mrb[0].mxu0
      %v10066 = vpop.f32.mrb[0].mxu0
      %v10067 = vadd.f32 0.0, %v10066
      %v10068 = vpop.f32.mrb[0].mxu0
      %10069 = vmatprep.mubr.bf16.mxu0 0
      %10070 = vmatmul.mubr.bf16.gmra.mrb[0].mxu0 %v9967
      %v10071 = vpop.f32.mrb[0].mxu0
      %v10072 = vadd.f32 0.0, %v10071
      %v10073 = vpop.f32.mrb[0].mxu0
      %v10074 = vpop.f32.mrb[0].mxu0
      %v10075 = vadd.f32 0.0, %v10074
      %v10076 = vpop.f32.mrb[0].mxu0
      %10077 = vmatprep.mubr.bf16.mxu0 0
      %10078 = vmatmul.mubr.bf16.gmra.mrb[0].mxu0 %v9970
      %v10079 = vpop.f32.mrb[0].mxu0
      %v10080 = vadd.f32 0.0, %v10079
      %v10081 = vpop.f32.mrb[0].mxu0
      %v10082 = vpop.f32.mrb[0].mxu0
      %v10083 = vadd.f32 0.0, %v10082
      %v10084 = vpop.f32.mrb[0].mxu0
      %10085 = vmatprep.mubr.bf16.mxu0 0
      %10086 = vmatmul.mubr.bf16.gmra.mrb[0].mxu0 %v9973
      %v10087 = vpop.f32.mrb[0].mxu0
      %v10088 = vadd.f32 0.0, %v10087
      %v10089 = vpop.f32.mrb[0].mxu0
      %v10090 = vpop.f32.mrb[0].mxu0
      %v10091 = vadd.f32 0.0, %v10090
      %v10092 = vpop.f32.mrb[0].mxu0
      %10093 = vmatprep.mubr.bf16.mxu0 0
      %10094 = vmatmul.mubr.bf16.gmra.mrb[0].mxu0 %v9976
      %v10095 = vpop.f32.mrb[0].mxu0
      %v10096 = vadd.f32 0.0, %v10095
      %v10097 = vpop.f32.mrb[0].mxu0
      %v10098 = vpop.f32.mrb[0].mxu0
      %v10099 = vadd.f32 0.0, %v10098
      %v10100 = vpop.f32.mrb[0].mxu0
      %10101 = vmatprep.mubr.bf16.mxu0 0
      %10102 = vmatmul.mubr.bf16.gmra.mrb[0].mxu0 %v9979
      %v10103 = vpop.f32.mrb[0].mxu0
      %v10104 = vadd.f32 0.0, %v10103
      %v10105 = vpop.f32.mrb[0].mxu0
      %v10106 = vpop.f32.mrb[0].mxu0
      %v10107 = vadd.f32 0.0, %v10106
      %v10108 = vpop.f32.mrb[0].mxu0
      %10109 = vmatprep.mubr.bf16.mxu0 0
      %10110 = vmatmul.mubr.bf16.gmra.mrb[0].mxu0 %v9982
      %v10111 = vpop.f32.mrb[0].mxu0
      %v10112 = vadd.f32 0.0, %v10111
      %v10113 = vpop.f32.mrb[0].mxu0
      %v10114 = vpop.f32.mrb[0].mxu0
      %v10115 = vadd.f32 0.0, %v10114
      %v10116 = vpop.f32.mrb[0].mxu0
      %10117 = vmatprep.mubr.bf16.mxu0 0
      %10118 = vmatmul.mubr.bf16.gmra.mrb[0].mxu0 %v9985
      %v10119 = vpop.f32.mrb[0].mxu0
      %v10120 = vadd.f32 0.0, %v10119
      %v10121 = vpop.f32.mrb[0].mxu0
      %v10122 = vpop.f32.mrb[0].mxu0
      %v10123 = vadd.f32 0.0, %v10122
      %v10124 = vpop.f32.mrb[0].mxu0
      %10125 = vmatprep.mubr.bf16.mxu0 0
      %10126 = vmatmul.mubr.bf16.gmra.mrb[0].mxu0 %v9988
      %v10127 = vpop.f32.mrb[0].mxu0
      %v10128 = vadd.f32 0.0, %v10127
      %v10129 = vpop.f32.mrb[0].mxu0
      %v10130 = vpop.f32.mrb[0].mxu0
      %v10131 = vadd.f32 0.0, %v10130
      %v10132 = vpop.f32.mrb[0].mxu0
      %10133 = vmatprep.mubr.bf16.mxu0 0
      %10134 = vmatmul.mubr.bf16.gmra.mrb[0].mxu0 %v9991
      %v10135 = vpop.f32.mrb[0].mxu0
      %v10136 = vadd.f32 0.0, %v10135
      %v10137 = vpop.f32.mrb[0].mxu0
      %v10138 = vpop.f32.mrb[0].mxu0
      %v10139 = vadd.f32 0.0, %v10138
      %v10140 = vpop.f32.mrb[0].mxu0
      %10141 = vmatprep.mubr.bf16.mxu0 0
      %10142 = vmatmul.mubr.bf16.gmra.mrb[0].mxu0 %v9994
      %v10143 = vpop.f32.mrb[0].mxu0
      %v10144 = vadd.f32 0.0, %v10143
      %v10145 = vpop.f32.mrb[0].mxu0
      %v10146 = vpop.f32.mrb[0].mxu0
      %v10147 = vadd.f32 0.0, %v10146
      %v10148 = vpop.f32.mrb[0].mxu0
      %10149 = vmatprep.mubr.bf16.mxu0 0
      %10150 = vmatmul.mubr.bf16.gmra.mrb[0].mxu0 %v9997
      %v10151 = vpop.f32.mrb[0].mxu0
      %v10152 = vadd.f32 0.0, %v10151
      %v10153 = vpop.f32.mrb[0].mxu0
      %v10154 = vpop.f32.mrb[0].mxu0
      %v10155 = vadd.f32 0.0, %v10154
      %v10156 = vpop.f32.mrb[0].mxu0
      %10157 = vmatprep.mubr.bf16.mxu0 0
      %10158 = vmatmul.mubr.bf16.gmra.mrb[0].mxu0 %v10000
      %v10159 = vpop.f32.mrb[0].mxu0
      %v10160 = vadd.f32 0.0, %v10159
      %v10161 = vpop.f32.mrb[0].mxu0
      %v10162 = vpop.f32.mrb[0].mxu0
      %v10163 = vadd.f32 0.0, %v10162
      %v10164 = vpop.f32.mrb[0].mxu0
      %10165 = vdwg.mxu0
      %v10166 = vadd.f32 %v9872, %v10040
      %v10167 = vadd.f32 %v9873, %v10043
      %v10168 = vadd.f32 %v9874, %v10048
      %v10169 = vadd.f32 %v9875, %v10051
      %v10170 = vadd.f32 %v9876, %v10056
      %v10171 = vadd.f32 %v9877, %v10059
      %v10172 = vadd.f32 %v9878, %v10064
      %v10173 = vadd.f32 %v9879, %v10067
      %v10174 = vadd.f32 %v9880, %v10072
      %v10175 = vadd.f32 %v9881, %v10075
      %v10176 = vadd.f32 %v9882, %v10080
      %v10177 = vadd.f32 %v9883, %v10083
      %v10178 = vadd.f32 %v9884, %v10088
      %v10179 = vadd.f32 %v9885, %v10091
      %v10180 = vadd.f32 %v9886, %v10096
      %v10181 = vadd.f32 %v9887, %v10099
      %v10182 = vadd.f32 %v9888, %v10104
      %v10183 = vadd.f32 %v9889, %v10107
      %v10184 = vadd.f32 %v9890, %v10112
      %v10185 = vadd.f32 %v9891, %v10115
      %v10186 = vadd.f32 %v9892, %v10120
      %v10187 = vadd.f32 %v9893, %v10123
      %v10188 = vadd.f32 %v9894, %v10128
      %v10189 = vadd.f32 %v9895, %v10131
      %v10190 = vadd.f32 %v9896, %v10136
      %v10191 = vadd.f32 %v9897, %v10139
      %v10192 = vadd.f32 %v9898, %v10144
      %v10193 = vadd.f32 %v9899, %v10147
      %v10194 = vadd.f32 %v9900, %v10152
      %v10195 = vadd.f32 %v9901, %v10155
      %v10196 = vadd.f32 %v9902, %v10160
      %v10197 = vadd.f32 %v9903, %v10163
      %v10198 = vld [vmem:[%s9904 + $0x1] sm:$0xff]
      %v10199 = vld [vmem:[%s9904 + $0x9] sm:$0xff]
      %v10200 = vld [vmem:[%s9904 + $0x11] sm:$0xff]
      %v10201 = vld [vmem:[%s9904 + $0x19] sm:$0xff]
      %v10202 = vld [vmem:[%s9904 + $0x29] sm:$0xff]
      %v10203 = vld [vmem:[%s9904 + $0x31] sm:$0xff]
      %v10204 = vld [vmem:[%s9904 + $0x39] sm:$0xff]
      %v10205 = vld [vmem:[%s9904 + $0x41] sm:$0xff]
      %v10206 = vld [vmem:[%s9904 + $0x51] sm:$0xff]
      %v10207 = vld [vmem:[%s9904 + $0x59] sm:$0xff]
      %v10208 = vld [vmem:[%s9904 + $0x61] sm:$0xff]
      %v10209 = vld [vmem:[%s9904 + $0x69] sm:$0xff]
      %v10210 = vld [vmem:[%s9904 + $0x79] sm:$0xff]
      %v10211 = vld [vmem:[%s9904 + $0x81] sm:$0xff]
      %v10212 = vld [vmem:[%s9904 + $0x89] sm:$0xff]
      %v10213 = vld [vmem:[%s9904 + $0x91] sm:$0xff]
      %v10214 = vld [vmem:[%s9904 + $0xa1] sm:$0xff]
      %v10215 = vld [vmem:[%s9904 + $0xa9] sm:$0xff]
      %v10216 = vld [vmem:[%s9904 + $0xb1] sm:$0xff]
      %v10217 = vld [vmem:[%s9904 + $0xb9] sm:$0xff]
      %v10218 = vld [vmem:[%s9904 + $0xc9] sm:$0xff]
      %v10219 = vld [vmem:[%s9904 + $0xd1] sm:$0xff]
      %v10220 = vld [vmem:[%s9904 + $0xd9] sm:$0xff]
      %v10221 = vld [vmem:[%s9904 + $0xe1] sm:$0xff]
      %v10222 = vld [vmem:[%s9904 + $0xf1] sm:$0xff]
      %v10223 = vld [vmem:[%s9904 + $0xf9] sm:$0xff]
      %v10224 = vld [vmem:[%s9904 + $0x101] sm:$0xff]
      %v10225 = vld [vmem:[%s9904 + $0x109] sm:$0xff]
      %v10226 = vld [vmem:[%s9904 + $0x119] sm:$0xff]
      %v10227 = vld [vmem:[%s9904 + $0x121] sm:$0xff]
      %v10228 = vld [vmem:[%s9904 + $0x129] sm:$0xff]
      %v10229 = vld [vmem:[%s9904 + $0x131] sm:$0xff]
      %v10230 = vpack.c.bf16 %v10199, %v10198
      %v10231 = vpack.c.bf16 %v10201, %v10200
      %v10232 = vpack.c.bf16 %v10203, %v10202
      %v10233 = vpack.c.bf16 %v10205, %v10204
      %v10234 = vpack.c.bf16 %v10207, %v10206
      %v10235 = vpack.c.bf16 %v10209, %v10208
      %v10236 = vpack.c.bf16 %v10211, %v10210
      %v10237 = vpack.c.bf16 %v10213, %v10212
      %v10238 = vpack.c.bf16 %v10215, %v10214
      %v10239 = vpack.c.bf16 %v10217, %v10216
      %v10240 = vpack.c.bf16 %v10219, %v10218
      %v10241 = vpack.c.bf16 %v10221, %v10220
      %v10242 = vpack.c.bf16 %v10223, %v10222
      %v10243 = vpack.c.bf16 %v10225, %v10224
      %v10244 = vpack.c.bf16 %v10227, %v10226
      %v10245 = vpack.c.bf16 %v10229, %v10228
      %v10246 = vld [vmem:[%s2221] sm:$0x3]
      %v10248 = vsel %vm272, %v10230, 0
      %v10251 = vsel %vm272, %v10231, 0
      %v10254 = vsel %vm272, %v10232, 0
      %v10257 = vsel %vm272, %v10233, 0
      %v10260 = vsel %vm272, %v10234, 0
      %v10263 = vsel %vm272, %v10235, 0
      %v10266 = vsel %vm272, %v10236, 0
      %v10269 = vsel %vm272, %v10237, 0
      %v10272 = vsel %vm272, %v10238, 0
      %v10275 = vsel %vm272, %v10239, 0
      %v10278 = vsel %vm272, %v10240, 0
      %v10281 = vsel %vm272, %v10241, 0
      %v10284 = vsel %vm272, %v10242, 0
      %v10287 = vsel %vm272, %v10243, 0
      %v10290 = vsel %vm272, %v10244, 0
      %v10293 = vsel %vm272, %v10245, 0
      %v10296 = vand.u32 %v10246, %v324
      %10298 = vmatprep.subr.bf16.mxu0 0
      %10299 = vmatpush1.bf16.msra.mxu0 %v10296
      %10300 = vmatprep.subr.bf16.mxu0 0
      %10301 = vmatpush1.bf16.msra.mxu0 0
      %10302 = vmatprep.subr.bf16.mxu0 0
      %10303 = vmatpush1.bf16.msra.mxu0 0
      %10304 = vmatprep.subr.bf16.mxu0 0
      %10305 = vmatpush1.bf16.msra.mxu0 0
      %10306 = vmatprep.subr.bf16.mxu0 0
      %10307 = vmatpush1.bf16.msra.mxu0 0
      %10308 = vmatprep.subr.bf16.mxu0 0
      %10309 = vmatpush1.bf16.msra.mxu0 0
      %10310 = vmatprep.subr.bf16.mxu0 0
      %10311 = vmatpush1.bf16.msra.mxu0 0
      %10312 = vmatprep.subr.bf16.mxu0 0
      %10313 = vmatpush1.bf16.msra.mxu0 0
      %10314 = vmatprep.subr.bf16.mxu0 0
      %10315 = vmatpush1.bf16.msra.mxu0 0
      %10316 = vmatprep.subr.bf16.mxu0 0
      %10317 = vmatpush1.bf16.msra.mxu0 0
      %10318 = vmatprep.subr.bf16.mxu0 0
      %10319 = vmatpush1.bf16.msra.mxu0 0
      %10320 = vmatprep.subr.bf16.mxu0 0
      %10321 = vmatpush1.bf16.msra.mxu0 0
      %10322 = vmatprep.subr.bf16.mxu0 0
      %10323 = vmatpush1.bf16.msra.mxu0 0
      %10324 = vmatprep.subr.bf16.mxu0 0
      %10325 = vmatpush1.bf16.msra.mxu0 0
      %10326 = vmatprep.subr.bf16.mxu0 0
      %10327 = vmatpush1.bf16.msra.mxu0 0
      %10328 = vmatprep.subr.bf16.mxu0 0
      %10329 = vmatpush1.bf16.msra.mxu0 0
      %10330 = vmatprep.mubr.bf16.mxu0 0
      %10331 = vmatmul.mubr.bf16.gmra.mrb[0].mxu0 %v10248
      %v10332 = vpop.f32.mrb[0].mxu0
      %v10333 = vadd.f32 0.0, %v10332
      %v10334 = vpop.f32.mrb[0].mxu0
      %v10335 = vpop.f32.mrb[0].mxu0
      %v10336 = vadd.f32 0.0, %v10335
      %v10337 = vpop.f32.mrb[0].mxu0
      %10338 = vmatprep.mubr.bf16.mxu0 0
      %10339 = vmatmul.mubr.bf16.gmra.mrb[0].mxu0 %v10251
      %v10340 = vpop.f32.mrb[0].mxu0
      %v10341 = vadd.f32 0.0, %v10340
      %v10342 = vpop.f32.mrb[0].mxu0
      %v10343 = vpop.f32.mrb[0].mxu0
      %v10344 = vadd.f32 0.0, %v10343
      %v10345 = vpop.f32.mrb[0].mxu0
      %10346 = vmatprep.mubr.bf16.mxu0 0
      %10347 = vmatmul.mubr.bf16.gmra.mrb[0].mxu0 %v10254
      %v10348 = vpop.f32.mrb[0].mxu0
      %v10349 = vadd.f32 0.0, %v10348
      %v10350 = vpop.f32.mrb[0].mxu0
      %v10351 = vpop.f32.mrb[0].mxu0
      %v10352 = vadd.f32 0.0, %v10351
      %v10353 = vpop.f32.mrb[0].mxu0
      %10354 = vmatprep.mubr.bf16.mxu0 0
      %10355 = vmatmul.mubr.bf16.gmra.mrb[0].mxu0 %v10257
      %v10356 = vpop.f32.mrb[0].mxu0
      %v10357 = vadd.f32 0.0, %v10356
      %v10358 = vpop.f32.mrb[0].mxu0
      %v10359 = vpop.f32.mrb[0].mxu0
      %v10360 = vadd.f32 0.0, %v10359
      %v10361 = vpop.f32.mrb[0].mxu0
      %10362 = vmatprep.mubr.bf16.mxu0 0
      %10363 = vmatmul.mubr.bf16.gmra.mrb[0].mxu0 %v10260
      %v10364 = vpop.f32.mrb[0].mxu0
      %v10365 = vadd.f32 0.0, %v10364
      %v10366 = vpop.f32.mrb[0].mxu0
      %v10367 = vpop.f32.mrb[0].mxu0
      %v10368 = vadd.f32 0.0, %v10367
      %v10369 = vpop.f32.mrb[0].mxu0
      %10370 = vmatprep.mubr.bf16.mxu0 0
      %10371 = vmatmul.mubr.bf16.gmra.mrb[0].mxu0 %v10263
      %v10372 = vpop.f32.mrb[0].mxu0
      %v10373 = vadd.f32 0.0, %v10372
      %v10374 = vpop.f32.mrb[0].mxu0
      %v10375 = vpop.f32.mrb[0].mxu0
      %v10376 = vadd.f32 0.0, %v10375
      %v10377 = vpop.f32.mrb[0].mxu0
      %10378 = vmatprep.mubr.bf16.mxu0 0
      %10379 = vmatmul.mubr.bf16.gmra.mrb[0].mxu0 %v10266
      %v10380 = vpop.f32.mrb[0].mxu0
      %v10381 = vadd.f32 0.0, %v10380
      %v10382 = vpop.f32.mrb[0].mxu0
      %v10383 = vpop.f32.mrb[0].mxu0
      %v10384 = vadd.f32 0.0, %v10383
      %v10385 = vpop.f32.mrb[0].mxu0
      %10386 = vmatprep.mubr.bf16.mxu0 0
      %10387 = vmatmul.mubr.bf16.gmra.mrb[0].mxu0 %v10269
      %v10388 = vpop.f32.mrb[0].mxu0
      %v10389 = vadd.f32 0.0, %v10388
      %v10390 = vpop.f32.mrb[0].mxu0
      %v10391 = vpop.f32.mrb[0].mxu0
      %v10392 = vadd.f32 0.0, %v10391
      %v10393 = vpop.f32.mrb[0].mxu0
      %10394 = vmatprep.mubr.bf16.mxu0 0
      %10395 = vmatmul.mubr.bf16.gmra.mrb[0].mxu0 %v10272
      %v10396 = vpop.f32.mrb[0].mxu0
      %v10397 = vadd.f32 0.0, %v10396
      %v10398 = vpop.f32.mrb[0].mxu0
      %v10399 = vpop.f32.mrb[0].mxu0
      %v10400 = vadd.f32 0.0, %v10399
      %v10401 = vpop.f32.mrb[0].mxu0
      %10402 = vmatprep.mubr.bf16.mxu0 0
      %10403 = vmatmul.mubr.bf16.gmra.mrb[0].mxu0 %v10275
      %v10404 = vpop.f32.mrb[0].mxu0
      %v10405 = vadd.f32 0.0, %v10404
      %v10406 = vpop.f32.mrb[0].mxu0
      %v10407 = vpop.f32.mrb[0].mxu0
      %v10408 = vadd.f32 0.0, %v10407
      %v10409 = vpop.f32.mrb[0].mxu0
      %10410 = vmatprep.mubr.bf16.mxu0 0
      %10411 = vmatmul.mubr.bf16.gmra.mrb[0].mxu0 %v10278
      %v10412 = vpop.f32.mrb[0].mxu0
      %v10413 = vadd.f32 0.0, %v10412
      %v10414 = vpop.f32.mrb[0].mxu0
      %v10415 = vpop.f32.mrb[0].mxu0
      %v10416 = vadd.f32 0.0, %v10415
      %v10417 = vpop.f32.mrb[0].mxu0
      %10418 = vmatprep.mubr.bf16.mxu0 0
      %10419 = vmatmul.mubr.bf16.gmra.mrb[0].mxu0 %v10281
      %v10420 = vpop.f32.mrb[0].mxu0
      %v10421 = vadd.f32 0.0, %v10420
      %v10422 = vpop.f32.mrb[0].mxu0
      %v10423 = vpop.f32.mrb[0].mxu0
      %v10424 = vadd.f32 0.0, %v10423
      %v10425 = vpop.f32.mrb[0].mxu0
      %10426 = vmatprep.mubr.bf16.mxu0 0
      %10427 = vmatmul.mubr.bf16.gmra.mrb[0].mxu0 %v10284
      %v10428 = vpop.f32.mrb[0].mxu0
      %v10429 = vadd.f32 0.0, %v10428
      %v10430 = vpop.f32.mrb[0].mxu0
      %v10431 = vpop.f32.mrb[0].mxu0
      %v10432 = vadd.f32 0.0, %v10431
      %v10433 = vpop.f32.mrb[0].mxu0
      %10434 = vmatprep.mubr.bf16.mxu0 0
      %10435 = vmatmul.mubr.bf16.gmra.mrb[0].mxu0 %v10287
      %v10436 = vpop.f32.mrb[0].mxu0
      %v10437 = vadd.f32 0.0, %v10436
      %v10438 = vpop.f32.mrb[0].mxu0
      %v10439 = vpop.f32.mrb[0].mxu0
      %v10440 = vadd.f32 0.0, %v10439
      %v10441 = vpop.f32.mrb[0].mxu0
      %10442 = vmatprep.mubr.bf16.mxu0 0
      %10443 = vmatmul.mubr.bf16.gmra.mrb[0].mxu0 %v10290
      %v10444 = vpop.f32.mrb[0].mxu0
      %v10445 = vadd.f32 0.0, %v10444
      %v10446 = vpop.f32.mrb[0].mxu0
      %v10447 = vpop.f32.mrb[0].mxu0
      %v10448 = vadd.f32 0.0, %v10447
      %v10449 = vpop.f32.mrb[0].mxu0
      %10450 = vmatprep.mubr.bf16.mxu0 0
      %10451 = vmatmul.mubr.bf16.gmra.mrb[0].mxu0 %v10293
      %v10452 = vpop.f32.mrb[0].mxu0
      %v10453 = vadd.f32 0.0, %v10452
      %v10454 = vpop.f32.mrb[0].mxu0
      %v10455 = vpop.f32.mrb[0].mxu0
      %v10456 = vadd.f32 0.0, %v10455
      %v10457 = vpop.f32.mrb[0].mxu0
      %10458 = vdwg.mxu0
      %v10459 = vadd.f32 %v10166, %v10333
      %v10460 = vadd.f32 %v10167, %v10336
      %v10461 = vadd.f32 %v10168, %v10341
      %v10462 = vadd.f32 %v10169, %v10344
      %v10463 = vadd.f32 %v10170, %v10349
      %v10464 = vadd.f32 %v10171, %v10352
      %v10465 = vadd.f32 %v10172, %v10357
      %v10466 = vadd.f32 %v10173, %v10360
      %v10467 = vadd.f32 %v10174, %v10365
      %v10468 = vadd.f32 %v10175, %v10368
      %v10469 = vadd.f32 %v10176, %v10373
      %v10470 = vadd.f32 %v10177, %v10376
      %v10471 = vadd.f32 %v10178, %v10381
      %v10472 = vadd.f32 %v10179, %v10384
      %v10473 = vadd.f32 %v10180, %v10389
      %v10474 = vadd.f32 %v10181, %v10392
      %v10475 = vadd.f32 %v10182, %v10397
      %v10476 = vadd.f32 %v10183, %v10400
      %v10477 = vadd.f32 %v10184, %v10405
      %v10478 = vadd.f32 %v10185, %v10408
      %v10479 = vadd.f32 %v10186, %v10413
      %v10480 = vadd.f32 %v10187, %v10416
      %v10481 = vadd.f32 %v10188, %v10421
      %v10482 = vadd.f32 %v10189, %v10424
      %v10483 = vadd.f32 %v10190, %v10429
      %v10484 = vadd.f32 %v10191, %v10432
      %v10485 = vadd.f32 %v10192, %v10437
      %v10486 = vadd.f32 %v10193, %v10440
      %v10487 = vadd.f32 %v10194, %v10445
      %v10488 = vadd.f32 %v10195, %v10448
      %v10489 = vadd.f32 %v10196, %v10453
      %v10490 = vadd.f32 %v10197, %v10456
      %v10491 = vld [vmem:[%s9904 + $0x2] sm:$0xff]
      %v10492 = vld [vmem:[%s9904 + $0xa] sm:$0xff]
      %v10493 = vld [vmem:[%s9904 + $0x12] sm:$0xff]
      %v10494 = vld [vmem:[%s9904 + $0x1a] sm:$0xff]
      %v10495 = vld [vmem:[%s9904 + $0x2a] sm:$0xff]
      %v10496 = vld [vmem:[%s9904 + $0x32] sm:$0xff]
      %v10497 = vld [vmem:[%s9904 + $0x3a] sm:$0xff]
      %v10498 = vld [vmem:[%s9904 + $0x42] sm:$0xff]
      %v10499 = vld [vmem:[%s9904 + $0x52] sm:$0xff]
      %v10500 = vld [vmem:[%s9904 + $0x5a] sm:$0xff]
      %v10501 = vld [vmem:[%s9904 + $0x62] sm:$0xff]
      %v10502 = vld [vmem:[%s9904 + $0x6a] sm:$0xff]
      %v10503 = vld [vmem:[%s9904 + $0x7a] sm:$0xff]
      %v10504 = vld [vmem:[%s9904 + $0x82] sm:$0xff]
      %v10505 = vld [vmem:[%s9904 + $0x8a] sm:$0xff]
      %v10506 = vld [vmem:[%s9904 + $0x92] sm:$0xff]
      %v10507 = vld [vmem:[%s9904 + $0xa2] sm:$0xff]
      %v10508 = vld [vmem:[%s9904 + $0xaa] sm:$0xff]
      %v10509 = vld [vmem:[%s9904 + $0xb2] sm:$0xff]
      %v10510 = vld [vmem:[%s9904 + $0xba] sm:$0xff]
      %v10511 = vld [vmem:[%s9904 + $0xca] sm:$0xff]
      %v10512 = vld [vmem:[%s9904 + $0xd2] sm:$0xff]
      %v10513 = vld [vmem:[%s9904 + $0xda] sm:$0xff]
      %v10514 = vld [vmem:[%s9904 + $0xe2] sm:$0xff]
      %v10515 = vld [vmem:[%s9904 + $0xf2] sm:$0xff]
      %v10516 = vld [vmem:[%s9904 + $0xfa] sm:$0xff]
      %v10517 = vld [vmem:[%s9904 + $0x102] sm:$0xff]
      %v10518 = vld [vmem:[%s9904 + $0x10a] sm:$0xff]
      %v10519 = vld [vmem:[%s9904 + $0x11a] sm:$0xff]
      %v10520 = vld [vmem:[%s9904 + $0x122] sm:$0xff]
      %v10521 = vld [vmem:[%s9904 + $0x12a] sm:$0xff]
      %v10522 = vld [vmem:[%s9904 + $0x132] sm:$0xff]
      %v10523 = vpack.c.bf16 %v10492, %v10491
      %v10524 = vpack.c.bf16 %v10494, %v10493
      %v10525 = vpack.c.bf16 %v10496, %v10495
      %v10526 = vpack.c.bf16 %v10498, %v10497
      %v10527 = vpack.c.bf16 %v10500, %v10499
      %v10528 = vpack.c.bf16 %v10502, %v10501
      %v10529 = vpack.c.bf16 %v10504, %v10503
      %v10530 = vpack.c.bf16 %v10506, %v10505
      %v10531 = vpack.c.bf16 %v10508, %v10507
      %v10532 = vpack.c.bf16 %v10510, %v10509
      %v10533 = vpack.c.bf16 %v10512, %v10511
      %v10534 = vpack.c.bf16 %v10514, %v10513
      %v10535 = vpack.c.bf16 %v10516, %v10515
      %v10536 = vpack.c.bf16 %v10518, %v10517
      %v10537 = vpack.c.bf16 %v10520, %v10519
      %v10538 = vpack.c.bf16 %v10522, %v10521
      %v10539 = vld [vmem:[%s2515] sm:$0x3]
      %v10541 = vsel %vm272, %v10523, 0
      %v10544 = vsel %vm272, %v10524, 0
      %v10547 = vsel %vm272, %v10525, 0
      %v10550 = vsel %vm272, %v10526, 0
      %v10553 = vsel %vm272, %v10527, 0
      %v10556 = vsel %vm272, %v10528, 0
      %v10559 = vsel %vm272, %v10529, 0
      %v10562 = vsel %vm272, %v10530, 0
      %v10565 = vsel %vm272, %v10531, 0
      %v10568 = vsel %vm272, %v10532, 0
      %v10571 = vsel %vm272, %v10533, 0
      %v10574 = vsel %vm272, %v10534, 0
      %v10577 = vsel %vm272, %v10535, 0
      %v10580 = vsel %vm272, %v10536, 0
      %v10583 = vsel %vm272, %v10537, 0
      %v10586 = vsel %vm272, %v10538, 0
      %v10589 = vand.u32 %v10539, %v324
      %10591 = vmatprep.subr.bf16.mxu0 0
      %10592 = vmatpush1.bf16.msra.mxu0 %v10589
      %10593 = vmatprep.subr.bf16.mxu0 0
      %10594 = vmatpush1.bf16.msra.mxu0 0
      %10595 = vmatprep.subr.bf16.mxu0 0
      %10596 = vmatpush1.bf16.msra.mxu0 0
      %10597 = vmatprep.subr.bf16.mxu0 0
      %10598 = vmatpush1.bf16.msra.mxu0 0
      %10599 = vmatprep.subr.bf16.mxu0 0
      %10600 = vmatpush1.bf16.msra.mxu0 0
      %10601 = vmatprep.subr.bf16.mxu0 0
      %10602 = vmatpush1.bf16.msra.mxu0 0
      %10603 = vmatprep.subr.bf16.mxu0 0
      %10604 = vmatpush1.bf16.msra.mxu0 0
      %10605 = vmatprep.subr.bf16.mxu0 0
      %10606 = vmatpush1.bf16.msra.mxu0 0
      %10607 = vmatprep.subr.bf16.mxu0 0
      %10608 = vmatpush1.bf16.msra.mxu0 0
      %10609 = vmatprep.subr.bf16.mxu0 0
      %10610 = vmatpush1.bf16.msra.mxu0 0
      %10611 = vmatprep.subr.bf16.mxu0 0
      %10612 = vmatpush1.bf16.msra.mxu0 0
      %10613 = vmatprep.subr.bf16.mxu0 0
      %10614 = vmatpush1.bf16.msra.mxu0 0
      %10615 = vmatprep.subr.bf16.mxu0 0
      %10616 = vmatpush1.bf16.msra.mxu0 0
      %10617 = vmatprep.subr.bf16.mxu0 0
      %10618 = vmatpush1.bf16.msra.mxu0 0
      %10619 = vmatprep.subr.bf16.mxu0 0
      %10620 = vmatpush1.bf16.msra.mxu0 0
      %10621 = vmatprep.subr.bf16.mxu0 0
      %10622 = vmatpush1.bf16.msra.mxu0 0
      %10623 = vmatprep.mubr.bf16.mxu0 0
      %10624 = vmatmul.mubr.bf16.gmra.mrb[0].mxu0 %v10541
      %v10625 = vpop.f32.mrb[0].mxu0
      %v10626 = vadd.f32 0.0, %v10625
      %v10627 = vpop.f32.mrb[0].mxu0
      %v10628 = vpop.f32.mrb[0].mxu0
      %v10629 = vadd.f32 0.0, %v10628
      %v10630 = vpop.f32.mrb[0].mxu0
      %10631 = vmatprep.mubr.bf16.mxu0 0
      %10632 = vmatmul.mubr.bf16.gmra.mrb[0].mxu0 %v10544
      %v10633 = vpop.f32.mrb[0].mxu0
      %v10634 = vadd.f32 0.0, %v10633
      %v10635 = vpop.f32.mrb[0].mxu0
      %v10636 = vpop.f32.mrb[0].mxu0
      %v10637 = vadd.f32 0.0, %v10636
      %v10638 = vpop.f32.mrb[0].mxu0
      %10639 = vmatprep.mubr.bf16.mxu0 0
      %10640 = vmatmul.mubr.bf16.gmra.mrb[0].mxu0 %v10547
      %v10641 = vpop.f32.mrb[0].mxu0
      %v10642 = vadd.f32 0.0, %v10641
      %v10643 = vpop.f32.mrb[0].mxu0
      %v10644 = vpop.f32.mrb[0].mxu0
      %v10645 = vadd.f32 0.0, %v10644
      %v10646 = vpop.f32.mrb[0].mxu0
      %10647 = vmatprep.mubr.bf16.mxu0 0
      %10648 = vmatmul.mubr.bf16.gmra.mrb[0].mxu0 %v10550
      %v10649 = vpop.f32.mrb[0].mxu0
      %v10650 = vadd.f32 0.0, %v10649
      %v10651 = vpop.f32.mrb[0].mxu0
      %v10652 = vpop.f32.mrb[0].mxu0
      %v10653 = vadd.f32 0.0, %v10652
      %v10654 = vpop.f32.mrb[0].mxu0
      %10655 = vmatprep.mubr.bf16.mxu0 0
      %10656 = vmatmul.mubr.bf16.gmra.mrb[0].mxu0 %v10553
      %v10657 = vpop.f32.mrb[0].mxu0
      %v10658 = vadd.f32 0.0, %v10657
      %v10659 = vpop.f32.mrb[0].mxu0
      %v10660 = vpop.f32.mrb[0].mxu0
      %v10661 = vadd.f32 0.0, %v10660
      %v10662 = vpop.f32.mrb[0].mxu0
      %10663 = vmatprep.mubr.bf16.mxu0 0
      %10664 = vmatmul.mubr.bf16.gmra.mrb[0].mxu0 %v10556
      %v10665 = vpop.f32.mrb[0].mxu0
      %v10666 = vadd.f32 0.0, %v10665
      %v10667 = vpop.f32.mrb[0].mxu0
      %v10668 = vpop.f32.mrb[0].mxu0
      %v10669 = vadd.f32 0.0, %v10668
      %v10670 = vpop.f32.mrb[0].mxu0
      %10671 = vmatprep.mubr.bf16.mxu0 0
      %10672 = vmatmul.mubr.bf16.gmra.mrb[0].mxu0 %v10559
      %v10673 = vpop.f32.mrb[0].mxu0
      %v10674 = vadd.f32 0.0, %v10673
      %v10675 = vpop.f32.mrb[0].mxu0
      %v10676 = vpop.f32.mrb[0].mxu0
      %v10677 = vadd.f32 0.0, %v10676
      %v10678 = vpop.f32.mrb[0].mxu0
      %10679 = vmatprep.mubr.bf16.mxu0 0
      %10680 = vmatmul.mubr.bf16.gmra.mrb[0].mxu0 %v10562
      %v10681 = vpop.f32.mrb[0].mxu0
      %v10682 = vadd.f32 0.0, %v10681
      %v10683 = vpop.f32.mrb[0].mxu0
      %v10684 = vpop.f32.mrb[0].mxu0
      %v10685 = vadd.f32 0.0, %v10684
      %v10686 = vpop.f32.mrb[0].mxu0
      %10687 = vmatprep.mubr.bf16.mxu0 0
      %10688 = vmatmul.mubr.bf16.gmra.mrb[0].mxu0 %v10565
      %v10689 = vpop.f32.mrb[0].mxu0
      %v10690 = vadd.f32 0.0, %v10689
      %v10691 = vpop.f32.mrb[0].mxu0
      %v10692 = vpop.f32.mrb[0].mxu0
      %v10693 = vadd.f32 0.0, %v10692
      %v10694 = vpop.f32.mrb[0].mxu0
      %10695 = vmatprep.mubr.bf16.mxu0 0
      %10696 = vmatmul.mubr.bf16.gmra.mrb[0].mxu0 %v10568
      %v10697 = vpop.f32.mrb[0].mxu0
      %v10698 = vadd.f32 0.0, %v10697
      %v10699 = vpop.f32.mrb[0].mxu0
      %v10700 = vpop.f32.mrb[0].mxu0
      %v10701 = vadd.f32 0.0, %v10700
      %v10702 = vpop.f32.mrb[0].mxu0
      %10703 = vmatprep.mubr.bf16.mxu0 0
      %10704 = vmatmul.mubr.bf16.gmra.mrb[0].mxu0 %v10571
      %v10705 = vpop.f32.mrb[0].mxu0
      %v10706 = vadd.f32 0.0, %v10705
      %v10707 = vpop.f32.mrb[0].mxu0
      %v10708 = vpop.f32.mrb[0].mxu0
      %v10709 = vadd.f32 0.0, %v10708
      %v10710 = vpop.f32.mrb[0].mxu0
      %10711 = vmatprep.mubr.bf16.mxu0 0
      %10712 = vmatmul.mubr.bf16.gmra.mrb[0].mxu0 %v10574
      %v10713 = vpop.f32.mrb[0].mxu0
      %v10714 = vadd.f32 0.0, %v10713
      %v10715 = vpop.f32.mrb[0].mxu0
      %v10716 = vpop.f32.mrb[0].mxu0
      %v10717 = vadd.f32 0.0, %v10716
      %v10718 = vpop.f32.mrb[0].mxu0
      %10719 = vmatprep.mubr.bf16.mxu0 0
      %10720 = vmatmul.mubr.bf16.gmra.mrb[0].mxu0 %v10577
      %v10721 = vpop.f32.mrb[0].mxu0
      %v10722 = vadd.f32 0.0, %v10721
      %v10723 = vpop.f32.mrb[0].mxu0
      %v10724 = vpop.f32.mrb[0].mxu0
      %v10725 = vadd.f32 0.0, %v10724
      %v10726 = vpop.f32.mrb[0].mxu0
      %10727 = vmatprep.mubr.bf16.mxu0 0
      %10728 = vmatmul.mubr.bf16.gmra.mrb[0].mxu0 %v10580
      %v10729 = vpop.f32.mrb[0].mxu0
      %v10730 = vadd.f32 0.0, %v10729
      %v10731 = vpop.f32.mrb[0].mxu0
      %v10732 = vpop.f32.mrb[0].mxu0
      %v10733 = vadd.f32 0.0, %v10732
      %v10734 = vpop.f32.mrb[0].mxu0
      %10735 = vmatprep.mubr.bf16.mxu0 0
      %10736 = vmatmul.mubr.bf16.gmra.mrb[0].mxu0 %v10583
      %v10737 = vpop.f32.mrb[0].mxu0
      %v10738 = vadd.f32 0.0, %v10737
      %v10739 = vpop.f32.mrb[0].mxu0
      %v10740 = vpop.f32.mrb[0].mxu0
      %v10741 = vadd.f32 0.0, %v10740
      %v10742 = vpop.f32.mrb[0].mxu0
      %10743 = vmatprep.mubr.bf16.mxu0 0
      %10744 = vmatmul.mubr.bf16.gmra.mrb[0].mxu0 %v10586
      %v10745 = vpop.f32.mrb[0].mxu0
      %v10746 = vadd.f32 0.0, %v10745
      %v10747 = vpop.f32.mrb[0].mxu0
      %v10748 = vpop.f32.mrb[0].mxu0
      %v10749 = vadd.f32 0.0, %v10748
      %v10750 = vpop.f32.mrb[0].mxu0
      %10751 = vdwg.mxu0
      %v10752 = vadd.f32 %v10459, %v10626
      %v10753 = vadd.f32 %v10460, %v10629
      %v10754 = vadd.f32 %v10461, %v10634
      %v10755 = vadd.f32 %v10462, %v10637
      %v10756 = vadd.f32 %v10463, %v10642
      %v10757 = vadd.f32 %v10464, %v10645
      %v10758 = vadd.f32 %v10465, %v10650
      %v10759 = vadd.f32 %v10466, %v10653
      %v10760 = vadd.f32 %v10467, %v10658
      %v10761 = vadd.f32 %v10468, %v10661
      %v10762 = vadd.f32 %v10469, %v10666
      %v10763 = vadd.f32 %v10470, %v10669
      %v10764 = vadd.f32 %v10471, %v10674
      %v10765 = vadd.f32 %v10472, %v10677
      %v10766 = vadd.f32 %v10473, %v10682
      %v10767 = vadd.f32 %v10474, %v10685
      %v10768 = vadd.f32 %v10475, %v10690
      %v10769 = vadd.f32 %v10476, %v10693
      %v10770 = vadd.f32 %v10477, %v10698
      %v10771 = vadd.f32 %v10478, %v10701
      %v10772 = vadd.f32 %v10479, %v10706
      %v10773 = vadd.f32 %v10480, %v10709
      %v10774 = vadd.f32 %v10481, %v10714
      %v10775 = vadd.f32 %v10482, %v10717
      %v10776 = vadd.f32 %v10483, %v10722
      %v10777 = vadd.f32 %v10484, %v10725
      %v10778 = vadd.f32 %v10485, %v10730
      %v10779 = vadd.f32 %v10486, %v10733
      %v10780 = vadd.f32 %v10487, %v10738
      %v10781 = vadd.f32 %v10488, %v10741
      %v10782 = vadd.f32 %v10489, %v10746
      %v10783 = vadd.f32 %v10490, %v10749
      %v10784 = vadd.f32 %v10752, %v2765
      %v10785 = vadd.f32 %v10753, %v2765
      %v10786 = vadd.f32 %v10754, %v2765
      %v10787 = vadd.f32 %v10755, %v2765
      %v10788 = vadd.f32 %v10756, %v2765
      %v10789 = vadd.f32 %v10757, %v2765
      %v10790 = vadd.f32 %v10758, %v2765
      %v10791 = vadd.f32 %v10759, %v2765
      %v10792 = vadd.f32 %v10760, %v2765
      %v10793 = vadd.f32 %v10761, %v2765
      %v10794 = vadd.f32 %v10762, %v2765
      %v10795 = vadd.f32 %v10763, %v2765
      %v10796 = vadd.f32 %v10764, %v2765
      %v10797 = vadd.f32 %v10765, %v2765
      %v10798 = vadd.f32 %v10766, %v2765
      %v10799 = vadd.f32 %v10767, %v2765
      %v10800 = vadd.f32 %v10768, %v2765
      %v10801 = vadd.f32 %v10769, %v2765
      %v10802 = vadd.f32 %v10770, %v2765
      %v10803 = vadd.f32 %v10771, %v2765
      %v10804 = vadd.f32 %v10772, %v2765
      %v10805 = vadd.f32 %v10773, %v2765
      %v10806 = vadd.f32 %v10774, %v2765
      %v10807 = vadd.f32 %v10775, %v2765
      %v10808 = vadd.f32 %v10776, %v2765
      %v10809 = vadd.f32 %v10777, %v2765
      %v10810 = vadd.f32 %v10778, %v2765
      %v10811 = vadd.f32 %v10779, %v2765
      %v10812 = vadd.f32 %v10780, %v2765
      %v10813 = vadd.f32 %v10781, %v2765
      %v10814 = vadd.f32 %v10782, %v2765
      %v10815 = vadd.f32 %v10783, %v2765
      %v10816 = vmax.f32 %v10784, 0.0
      %v10817 = vmax.f32 %v10785, 0.0
      %v10818 = vmax.f32 %v10786, 0.0
      %v10819 = vmax.f32 %v10787, 0.0
      %v10820 = vmax.f32 %v10788, 0.0
      %v10821 = vmax.f32 %v10789, 0.0
      %v10822 = vmax.f32 %v10790, 0.0
      %v10823 = vmax.f32 %v10791, 0.0
      %v10824 = vmax.f32 %v10792, 0.0
      %v10825 = vmax.f32 %v10793, 0.0
      %v10826 = vmax.f32 %v10794, 0.0
      %v10827 = vmax.f32 %v10795, 0.0
      %v10828 = vmax.f32 %v10796, 0.0
      %v10829 = vmax.f32 %v10797, 0.0
      %v10830 = vmax.f32 %v10798, 0.0
      %v10831 = vmax.f32 %v10799, 0.0
      %v10832 = vmax.f32 %v10800, 0.0
      %v10833 = vmax.f32 %v10801, 0.0
      %v10834 = vmax.f32 %v10802, 0.0
      %v10835 = vmax.f32 %v10803, 0.0
      %v10836 = vmax.f32 %v10804, 0.0
      %v10837 = vmax.f32 %v10805, 0.0
      %v10838 = vmax.f32 %v10806, 0.0
      %v10839 = vmax.f32 %v10807, 0.0
      %v10840 = vmax.f32 %v10808, 0.0
      %v10841 = vmax.f32 %v10809, 0.0
      %v10842 = vmax.f32 %v10810, 0.0
      %v10843 = vmax.f32 %v10811, 0.0
      %v10844 = vmax.f32 %v10812, 0.0
      %v10845 = vmax.f32 %v10813, 0.0
      %v10846 = vmax.f32 %v10814, 0.0
      %v10847 = vmax.f32 %v10815, 0.0
      %10848 = vst.msk [vmem:[%s170 + $0x300] sm:$0xff] %vm2831, %v10816
      %10849 = vst.msk [vmem:[%s170 + $0x308] sm:$0xff] %vm2831, %v10817
      %10850 = vst.msk [vmem:[%s170 + $0x310] sm:$0xff] %vm2831, %v10818
      %10851 = vst.msk [vmem:[%s170 + $0x318] sm:$0xff] %vm2831, %v10819
      %10852 = vst.msk [vmem:[%s170 + $0x320] sm:$0xff] %vm2831, %v10820
      %10853 = vst.msk [vmem:[%s170 + $0x328] sm:$0xff] %vm2831, %v10821
      %10854 = vst.msk [vmem:[%s170 + $0x330] sm:$0xff] %vm2831, %v10822
      %10855 = vst.msk [vmem:[%s170 + $0x338] sm:$0xff] %vm2831, %v10823
      %10856 = vst.msk [vmem:[%s170 + $0x340] sm:$0xff] %vm2831, %v10824
      %10857 = vst.msk [vmem:[%s170 + $0x348] sm:$0xff] %vm2831, %v10825
      %10858 = vst.msk [vmem:[%s170 + $0x350] sm:$0xff] %vm2831, %v10826
      %10859 = vst.msk [vmem:[%s170 + $0x358] sm:$0xff] %vm2831, %v10827
      %10860 = vst.msk [vmem:[%s170 + $0x360] sm:$0xff] %vm2831, %v10828
      %10861 = vst.msk [vmem:[%s170 + $0x368] sm:$0xff] %vm2831, %v10829
      %10862 = vst.msk [vmem:[%s170 + $0x370] sm:$0xff] %vm2831, %v10830
      %10863 = vst.msk [vmem:[%s170 + $0x378] sm:$0xff] %vm2831, %v10831
      %10864 = vst.msk [vmem:[%s170 + $0x380] sm:$0xff] %vm2831, %v10832
      %10865 = vst.msk [vmem:[%s170 + $0x388] sm:$0xff] %vm2831, %v10833
      %10866 = vst.msk [vmem:[%s170 + $0x390] sm:$0xff] %vm2831, %v10834
      %10867 = vst.msk [vmem:[%s170 + $0x398] sm:$0xff] %vm2831, %v10835
      %10868 = vst.msk [vmem:[%s170 + $0x3a0] sm:$0xff] %vm2831, %v10836
      %10869 = vst.msk [vmem:[%s170 + $0x3a8] sm:$0xff] %vm2831, %v10837
      %10870 = vst.msk [vmem:[%s170 + $0x3b0] sm:$0xff] %vm2831, %v10838
      %10871 = vst.msk [vmem:[%s170 + $0x3b8] sm:$0xff] %vm2831, %v10839
      %10872 = vst.msk [vmem:[%s170 + $0x3c0] sm:$0xff] %vm2831, %v10840
      %10873 = vst.msk [vmem:[%s170 + $0x3c8] sm:$0xff] %vm2831, %v10841
      %10874 = vst.msk [vmem:[%s170 + $0x3d0] sm:$0xff] %vm2831, %v10842
      %10875 = vst.msk [vmem:[%s170 + $0x3d8] sm:$0xff] %vm2831, %v10843
      %10876 = vst.msk [vmem:[%s170 + $0x3e0] sm:$0xff] %vm2831, %v10844
      %10877 = vst.msk [vmem:[%s170 + $0x3e8] sm:$0xff] %vm2831, %v10845
      %10878 = vst.msk [vmem:[%s170 + $0x3f0] sm:$0xff] %vm2831, %v10846
      %10879 = vst.msk [vmem:[%s170 + $0x3f8] sm:$0xff] %vm2831, %v10847
      %p10880 = scmp.lt.s32.totalorder %s14, 1
      %s10881 = scalar_select %p10880, %s14, 1
      %s10882 = smul.addr %s10881, 128
      %s10883 = smul.addr %s10882, 8
      %s10884 = scalar_lea.vmem %s3, %s10883
      // Predicated region
      $region33: #{tpu_custom_call.1} parent=31 // pred_check
        %p10885 = pneg %p100
      $region34: #{tpu_custom_call.1} parent=31 // pred_check_branch
        %10887 = sbr.rel (%p10885) target = $region36
      $region35: #{tpu_custom_call.1} parent=31 // pred_region
        _
      $region36: #{tpu_custom_call.1} parent=31 // pred_fallthru
        _
    $region32: #{tpu_custom_call.1} parent=5 // pred_fallthru
      _
    %p10888 = scmp.le.s32.totalorder 2, %s9
    // Predicated region
    $region37: #{tpu_custom_call.1} parent=5 // pred_check
      %p10889 = pneg %p10888
    $region38: #{tpu_custom_call.1} parent=5 // pred_check_branch
      %10891 = sbr.rel (%p10889) target = $region40
    $region39: #{tpu_custom_call.1} parent=5 // pred_region
      %s10892 = ssub.s32 %s9, 2
      // Predicated region
      $region41: #{tpu_custom_call.1} parent=39 // pred_check
        %p10893 = pneg %p106
      $region42: #{tpu_custom_call.1} parent=39 // pred_check_branch
        %10895 = sbr.rel (%p10893) target = $region44
      $region43: #{tpu_custom_call.1} parent=39 // pred_region
        %p10896 = scmp.lt.s32.totalorder %s15, 1
        %s10897 = scalar_select %p10896, %s15, 1
        %s10898 = smul.addr %s10897, 128
        %s10899 = smul.addr %s10898, 8
        %s10900 = scalar_lea.vmem %s3, %s10899
      $region44: #{tpu_custom_call.1} parent=39 // pred_fallthru
        _
    $region40: #{tpu_custom_call.1} parent=5 // pred_fallthru
      _
  $region6: #{tpu_custom_call.1} parent=0 // loop_footer
    %s13 = sadd.s32 1, %s9
  $region7: #{tpu_custom_call.1} parent=0 // loop_footer_branch
    %8 = sbr.rel target = $region3
  $region8: #{tpu_custom_call.1} parent=0 // loop_exit
    _

</llo_original>
